<compile_context>
chip_gen: v5e
topology: v5e:2x2
jax: 0.10.0
libtpu: 0.0.40
codegen_flags: <defaults>
</compile_context>

<pallas_src>
import functools

import jax
import jax.numpy as jnp
from jax.experimental import pallas as pl
from jax.experimental.pallas import tpu as pltpu


# --------------------------------------------------------------------------- #
# Fused bottleneck kernel (one invocation == one batch image)
# --------------------------------------------------------------------------- #
_XOFF = 8  # sublane-aligned column offset of the image inside the padded scratch


def _bottleneck_kernel(x_ref, w1_ref, b1_ref, w2_ref, b2_ref, w3_ref, b3_ref,
                       *rest, stride, has_conv_shortcut):
    if has_conv_shortcut:
        ws_ref, bs_ref, o_ref, pad_ref = rest
    else:
        ws_ref = bs_ref = None
        o_ref, pad_ref = rest

    H, W, Cin = x_ref.shape
    Cmid = w1_ref.shape[1]
    Ho, Wo, Cout = o_ref.shape
    Hp, Wp, _ = pad_ref.shape

    x = x_ref[...]                                   # (H, W, Cin)
    xf = x.reshape(H * W, Cin)

    # --- conv1 (1x1) + BN1 (scale folded into w1) + ReLU --------------------
    y1 = jnp.dot(xf, w1_ref[...], preferred_element_type=jnp.float32)
    y1 = jnp.maximum(y1 + b1_ref[...], 0.0)          # (H*W, Cmid)

    # --- conv2 (3x3, pad=1, stride) + BN2 + ReLU -----------------------------
    # Zero-padded buffer lives entirely in VMEM scratch. Only the halo strips that the taps
    # actually read are cleared (sublane-aligned stores); the interior is overwritten by the
    # aligned full-tile store of y1 (image at row offset 1, column offset _XOFF).
    pad_ref[:, 0:_XOFF, :] = jnp.zeros((Hp, _XOFF, Cmid), jnp.float32)
    pad_ref[:, _XOFF + W:Wp, :] = jnp.zeros((Hp, Wp - _XOFF - W, Cmid), jnp.float32)
    pad_ref[0:1, _XOFF:_XOFF + W, :] = jnp.zeros((1, W, Cmid), jnp.float32)
    pad_ref[H + 1:H + 2, _XOFF:_XOFF + W, :] = jnp.zeros((1, W, Cmid), jnp.float32)
    pad_ref[1:H + 1, _XOFF:_XOFF + W, :] = y1.reshape(H, W, Cmid)

    acc = None
    for dy in range(3):
        for dx in range(3):
            col0 = _XOFF - 1 + dx
            if stride == 1:
                tap = pad_ref[dy:dy + Ho, col0:col0 + Wo, :]
            else:
                # stride>1: read only the needed output positions (no compute-then-subsample)
                tap = pad_ref[pl.ds(dy, Ho, stride=stride),
                              pl.ds(col0, Wo, stride=stride), :]
            contrib = jnp.dot(tap.reshape(Ho * Wo, Cmid), w2_ref[dy, dx],
                              preferred_element_type=jnp.float32)
            acc = contrib if acc is None else acc + contrib
    y2 = jnp.maximum(acc + b2_ref[...], 0.0)          # (Ho*Wo, Cmid)

    # --- conv3 (1x1) + BN3 (no ReLU yet) -------------------------------------
    y3 = jnp.dot(y2, w3_ref[...], preferred_element_type=jnp.float32) + b3_ref[...]

    # --- shortcut -------------------------------------------------------------
    if has_conv_shortcut:
        if stride == 1:
            xs = xf
        else:
            xs = x_ref[pl.ds(0, Ho, stride=stride),
                       pl.ds(0, Wo, stride=stride), :].reshape(Ho * Wo, Cin)
        sc = jnp.dot(xs, ws_ref[...], preferred_element_type=jnp.float32) + bs_ref[...]
    else:
        sc = xf                                       # identity (Cin == Cout, stride == 1)

    # --- residual add + final ReLU, lane-dense (Cout = 128) store -------------
    o_ref[...] = jnp.maximum(y3 + sc, 0.0).reshape(Ho, Wo, Cout).astype(o_ref.dtype)


# --------------------------------------------------------------------------- #
# Wrapper: one pallas_call for the whole bottleneck block
# --------------------------------------------------------------------------- #
def analog_bottleneck_forward(x_nchw, p, *, stride=1):
    """x_nchw: (B, Cin, H, W) float32 (PyTorch layout). Returns (B, Cout, Ho, Wo)."""
    x = jnp.transpose(x_nchw, (0, 2, 3, 1)).astype(jnp.float32)   # -> NHWC (C on lanes)
    B, H, W, Cin = x.shape
    Cmid = p["w1"].shape[1]
    Cout = p["w3"].shape[1]
    Ho = (H - 1) // stride + 1                        # k=3, pad=1 conv output size
    Wo = (W - 1) // stride + 1
    has_sc = "ws" in p
    if not has_sc:
        assert stride == 1 and Cin == Cout, "identity shortcut needs stride=1 and Cin==Cout"

    # padded scratch width: image at col _XOFF, >=1 zero column each side, 8-aligned strips
    Wp = _XOFF + ((W + 1 + 7) // 8) * 8

    args = [x, p["w1"], p["b1"], p["w2"], p["b2"], p["w3"], p["b3"]]
    in_specs = [
        pl.BlockSpec((None, H, W, Cin), lambda b: (b, 0, 0, 0)),
        pl.BlockSpec((Cin, Cmid), lambda b: (0, 0)),
        pl.BlockSpec((1, Cmid), lambda b: (0, 0)),
        pl.BlockSpec((3, 3, Cmid, Cmid), lambda b: (0, 0, 0, 0)),
        pl.BlockSpec((1, Cmid), lambda b: (0, 0)),
        pl.BlockSpec((Cmid, Cout), lambda b: (0, 0)),
        pl.BlockSpec((1, Cout), lambda b: (0, 0)),
    ]
    if has_sc:
        args += [p["ws"], p["bs"]]
        in_specs += [
            pl.BlockSpec((Cin, Cout), lambda b: (0, 0)),
            pl.BlockSpec((1, Cout), lambda b: (0, 0)),
        ]

    y = pl.pallas_call(
        functools.partial(_bottleneck_kernel, stride=stride, has_conv_shortcut=has_sc),
        out_shape=jax.ShapeDtypeStruct((B, Ho, Wo, Cout), jnp.float32),
        grid=(B,),
        in_specs=in_specs,
        out_specs=pl.BlockSpec((None, Ho, Wo, Cout), lambda b: (b, 0, 0, 0)),
        scratch_shapes=[pltpu.VMEM((H + 2, Wp, Cmid), jnp.float32)],
        compiler_params=pltpu.CompilerParams(dimension_semantics=("parallel",)),
    )(*args)
    return jnp.transpose(y, (0, 3, 1, 2))             # back to NCHW


# --------------------------------------------------------------------------- #
# Pure-JAX reference (eval-mode BN already folded into the prepared params)
# --------------------------------------------------------------------------- #
def _reference_forward(x_nchw, p, *, stride=1):
    x = jnp.transpose(x_nchw, (0, 2, 3, 1)).astype(jnp.float32)   # NHWC
    dn = ("NHWC", "HWIO", "NHWC")
    prec = jax.lax.Precision.HIGHEST
    Cin = x.shape[-1]
    Cmid = p["w1"].shape[1]
    Cout = p["w3"].shape[1]

    y = jax.lax.conv_general_dilated(x, p["w1"].reshape(1, 1, Cin, Cmid), (1, 1), "VALID",
                                     dimension_numbers=dn, precision=prec)
    y = jnp.maximum(y + p["b1"].reshape(1, 1, 1, Cmid), 0.0)
    y = jax.lax.conv_general_dilated(y, p["w2"], (stride, stride), ((1, 1), (1, 1)),
                                     dimension_numbers=dn, precision=prec)
    y = jnp.maximum(y + p["b2"].reshape(1, 1, 1, Cmid), 0.0)
    y = jax.lax.conv_general_dilated(y, p["w3"].reshape(1, 1, Cmid, Cout), (1, 1), "VALID",
                                     dimension_numbers=dn, precision=prec)
    y = y + p["b3"].reshape(1, 1, 1, Cout)
    if "ws" in p:
        s = jax.lax.conv_general_dilated(x, p["ws"].reshape(1, 1, Cin, Cout),
                                         (stride, stride), "VALID",
                                         dimension_numbers=dn, precision=prec)
        s = s + p["bs"].reshape(1, 1, 1, Cout)
    else:
        s = x
    out = jnp.maximum(y + s, 0.0)
    return jnp.transpose(out, (0, 3, 1, 2))


# --------------------------------------------------------------------------- #
# Deterministic parameter init (PyTorch-shaped weights, eval-mode BN folded in)
# --------------------------------------------------------------------------- #
def _fold_bn(gamma, beta, mean, var, eps=1e-5):
    scale = gamma / jnp.sqrt(var + eps)
    shift = beta - mean * scale
    return scale, shift


def init_bottleneck_params(key, in_channels, out_channels, stride=1, use_conv=False,
                           expansion=4):
    cout = out_channels * expansion
    keys = iter(jax.random.split(key, 32))

    def conv_w(co, ci, kh, kw):
        fan_in = ci * kh * kw
        return jax.random.normal(next(keys), (co, ci, kh, kw), jnp.float32) / jnp.sqrt(float(fan_in))

    def bn(c):
        gamma = jax.random.uniform(next(keys), (c,), jnp.float32, 0.8, 1.2)
        beta = jax.random.normal(next(keys), (c,), jnp.float32) * 0.05
        mean = jax.random.normal(next(keys), (c,), jnp.float32) * 0.05
        var = jax.random.uniform(next(keys), (c,), jnp.float32, 0.8, 1.2)
        return _fold_bn(gamma, beta, mean, var)

    w1 = conv_w(out_channels, in_channels, 1, 1)
    s1, h1 = bn(out_channels)
    w2 = conv_w(out_channels, out_channels, 3, 3)
    s2, h2 = bn(out_channels)
    w3 = conv_w(cout, out_channels, 1, 1)
    s3, h3 = bn(cout)

    p = dict(
        # 1x1 convs -> (Cin, Cout) matmul weights with the BN scale folded in.
        w1=jnp.transpose(w1[:, :, 0, 0], (1, 0)) * s1[None, :], b1=h1.reshape(1, -1),
        # 3x3 conv -> (3, 3, Cin, Cout) HWIO taps with the BN scale folded in.
        w2=jnp.transpose(w2, (2, 3, 1, 0)) * s2[None, None, None, :], b2=h2.reshape(1, -1),
        w3=jnp.transpose(w3[:, :, 0, 0], (1, 0)) * s3[None, :], b3=h3.reshape(1, -1),
    )
    if stride != 1 or in_channels != cout or use_conv:   # projection shortcut
        ws = conv_w(cout, in_channels, 1, 1)
        ss, hs = bn(cout)
        p["ws"] = jnp.transpose(ws[:, :, 0, 0], (1, 0)) * ss[None, :]
        p["bs"] = hs.reshape(1, -1)
    return p


# --------------------------------------------------------------------------- #
if __name__ == "__main__":
    key = jax.random.PRNGKey(0)
    k_p1, k_p2, k_x = jax.random.split(key, 3)

    B, Cin, H, W = 2, 64, 16, 16
    out_ch = 32                                        # bottleneck width -> Cout = 128

    # Block 1: in_channels != out_channels*4 -> projection (conv1x1 + BN) shortcut.
    p1 = init_bottleneck_params(k_p1, in_channels=Cin, out_channels=out_ch, stride=1)
    # Block 2: in_channels == out_channels*4, stride=1 -> identity shortcut.
    p2 = init_bottleneck_params(k_p2, in_channels=out_ch * 4, out_channels=out_ch, stride=1)

    x = jax.random.normal(k_x, (B, Cin, H, W), jnp.float32)

    @jax.jit
    def fwd(xin):
        y = analog_bottleneck_forward(xin, p1, stride=1)   # (B, 128, 16, 16)
        y = analog_bottleneck_forward(y, p2, stride=1)     # (B, 128, 16, 16)
        return y

    y = fwd(x)
    jax.block_until_ready(y)

    # correctness vs. pure-JAX reference (two chained blocks)
    y_ref = _reference_forward(_reference_forward(x, p1, stride=1), p2, stride=1)
    max_ref = float(jnp.max(jnp.abs(y_ref)))
    err = float(jnp.max(jnp.abs(y - y_ref)))

    assert y.shape == (B, out_ch * 4, H, W), y.shape
    assert bool(jnp.isfinite(y).all())
    assert bool((y >= 0.0).all())                          # final ReLU
    assert err <= 2e-2 + 2e-2 * max_ref, f"max abs error vs reference: {err}"
    print("KERNEL_OK")
</pallas_src>

<mosaic_0001>
module attributes {stable_mosaic.version = 11 : i64} {
  func.func @_bottleneck_kernel(%arg0: i32, %arg1: memref<1x16x16x128xf32, #tpu.memory_space<vmem>>, %arg2: memref<128x32xf32, #tpu.memory_space<vmem>>, %arg3: memref<1x32xf32, #tpu.memory_space<vmem>>, %arg4: memref<3x3x32x32xf32, #tpu.memory_space<vmem>>, %arg5: memref<1x32xf32, #tpu.memory_space<vmem>>, %arg6: memref<32x128xf32, #tpu.memory_space<vmem>>, %arg7: memref<1x128xf32, #tpu.memory_space<vmem>>, %arg8: memref<1x16x16x128xf32, #tpu.memory_space<vmem>>, %arg9: memref<18x32x32xf32, #tpu.memory_space<vmem>>) attributes {dimension_semantics = [#tpu.dimension_semantics<parallel>], iteration_bounds = array<i64: 2>, scalar_prefetch = 0 : i64, scratch_operands = 1 : i64, tpu.core_type = #tpu.core_type<tc>, window_params = [{transform_indices = @transform_0, window_bounds = array<i64: 1, 16, 16, 128>}, {pipeline_mode = #tpu.pipeline_mode<synchronous>, transform_indices = @transform_1, window_bounds = array<i64: 128, 32>}, {pipeline_mode = #tpu.pipeline_mode<synchronous>, transform_indices = @transform_2, window_bounds = array<i64: 1, 32>}, {pipeline_mode = #tpu.pipeline_mode<synchronous>, transform_indices = @transform_3, window_bounds = array<i64: 3, 3, 32, 32>}, {pipeline_mode = #tpu.pipeline_mode<synchronous>, transform_indices = @transform_4, window_bounds = array<i64: 1, 32>}, {pipeline_mode = #tpu.pipeline_mode<synchronous>, transform_indices = @transform_5, window_bounds = array<i64: 32, 128>}, {pipeline_mode = #tpu.pipeline_mode<synchronous>, transform_indices = @transform_6, window_bounds = array<i64: 1, 128>}, {transform_indices = @transform_7, window_bounds = array<i64: 1, 16, 16, 128>}]} {
    %c0 = arith.constant 0 : index
    %c0_0 = arith.constant 0 : index
    %c0_1 = arith.constant 0 : index
    %c0_2 = arith.constant 0 : index
    %0 = vector.load %arg1[%c0, %c0_0, %c0_1, %c0_2] : memref<1x16x16x128xf32, #tpu.memory_space<vmem>>, vector<1x16x16x128xf32>
    %1 = vector.shape_cast %0 : vector<1x16x16x128xf32> to vector<16x16x128xf32>
    %2 = vector.shape_cast %1 : vector<16x16x128xf32> to vector<256x128xf32>
    %c0_3 = arith.constant 0 : index
    %c0_4 = arith.constant 0 : index
    %3 = vector.load %arg2[%c0_3, %c0_4] : memref<128x32xf32, #tpu.memory_space<vmem>>, vector<128x32xf32>
    %cst = arith.constant dense<0.000000e+00> : vector<256x32xf32>
    %4 = tpu.matmul %2, %3, %cst {dimension_numbers = #tpu.dot_dimension_numbers<[1], [0], [0], [1], [0, 0, 1, 1], [], []>} : vector<256x128xf32>, vector<128x32xf32>, vector<256x32xf32> -> vector<256x32xf32>
    %c0_5 = arith.constant 0 : index
    %c0_6 = arith.constant 0 : index
    %5 = vector.load %arg3[%c0_5, %c0_6] : memref<1x32xf32, #tpu.memory_space<vmem>>, vector<1x32xf32>
    %6 = vector.broadcast %5 : vector<1x32xf32> to vector<256x32xf32>
    %7 = arith.addf %4, %6 : vector<256x32xf32>
    %cst_7 = arith.constant 0.000000e+00 : f32
    %8 = vector.broadcast %cst_7 : f32 to vector<256x32xf32>
    %9 = arith.maximumf %7, %8 : vector<256x32xf32>
    %cst_8 = arith.constant 0.000000e+00 : f32
    %10 = vector.broadcast %cst_8 : f32 to vector<18x8x32xf32>
    %c0_9 = arith.constant 0 : index
    %c0_10 = arith.constant 0 : index
    %c0_11 = arith.constant 0 : index
    %11 = vector.load %arg9[%c0_9, %c0_10, %c0_11] : memref<18x32x32xf32, #tpu.memory_space<vmem>>, vector<18x8x32xf32>
    tpu.vector_store %arg9[%c0_9, %c0_10, %c0_11], %10 {strides = array<i32>} : memref<18x32x32xf32, #tpu.memory_space<vmem>>, vector<18x8x32xf32>,
    %cst_12 = arith.constant 0.000000e+00 : f32
    %12 = vector.broadcast %cst_12 : f32 to vector<18x8x32xf32>
    %c0_13 = arith.constant 0 : index
    %c24 = arith.constant 24 : index
    %c0_14 = arith.constant 0 : index
    %13 = vector.load %arg9[%c0_13, %c24, %c0_14] : memref<18x32x32xf32, #tpu.memory_space<vmem>>, vector<18x8x32xf32>
    tpu.vector_store %arg9[%c0_13, %c24, %c0_14], %12 {strides = array<i32>} : memref<18x32x32xf32, #tpu.memory_space<vmem>>, vector<18x8x32xf32>,
    %cst_15 = arith.constant 0.000000e+00 : f32
    %14 = vector.broadcast %cst_15 : f32 to vector<1x16x32xf32>
    %c0_16 = arith.constant 0 : index
    %c8 = arith.constant 8 : index
    %c0_17 = arith.constant 0 : index
    %15 = vector.load %arg9[%c0_16, %c8, %c0_17] : memref<18x32x32xf32, #tpu.memory_space<vmem>>, vector<1x16x32xf32>
    tpu.vector_store %arg9[%c0_16, %c8, %c0_17], %14 {strides = array<i32>} : memref<18x32x32xf32, #tpu.memory_space<vmem>>, vector<1x16x32xf32>,
    %cst_18 = arith.constant 0.000000e+00 : f32
    %16 = vector.broadcast %cst_18 : f32 to vector<1x16x32xf32>
    %c17 = arith.constant 17 : index
    %c8_19 = arith.constant 8 : index
    %c0_20 = arith.constant 0 : index
    %17 = vector.load %arg9[%c17, %c8_19, %c0_20] : memref<18x32x32xf32, #tpu.memory_space<vmem>>, vector<1x16x32xf32>
    tpu.vector_store %arg9[%c17, %c8_19, %c0_20], %16 {strides = array<i32>} : memref<18x32x32xf32, #tpu.memory_space<vmem>>, vector<1x16x32xf32>,
    %18 = vector.shape_cast %9 : vector<256x32xf32> to vector<16x16x32xf32>
    %c1 = arith.constant 1 : index
    %c8_21 = arith.constant 8 : index
    %c0_22 = arith.constant 0 : index
    %19 = vector.load %arg9[%c1, %c8_21, %c0_22] : memref<18x32x32xf32, #tpu.memory_space<vmem>>, vector<16x16x32xf32>
    tpu.vector_store %arg9[%c1, %c8_21, %c0_22], %18 {strides = array<i32>} : memref<18x32x32xf32, #tpu.memory_space<vmem>>, vector<16x16x32xf32>,
    %c0_23 = arith.constant 0 : index
    %c7 = arith.constant 7 : index
    %c0_24 = arith.constant 0 : index
    %20 = vector.load %arg9[%c0_23, %c7, %c0_24] : memref<18x32x32xf32, #tpu.memory_space<vmem>>, vector<16x16x32xf32>
    %21 = vector.shape_cast %20 : vector<16x16x32xf32> to vector<256x32xf32>
    %c0_25 = arith.constant 0 : index
    %c0_26 = arith.constant 0 : index
    %c0_27 = arith.constant 0 : index
    %c0_28 = arith.constant 0 : index
    %22 = vector.load %arg4[%c0_25, %c0_26, %c0_27, %c0_28] : memref<3x3x32x32xf32, #tpu.memory_space<vmem>>, vector<1x1x32x32xf32>
    %23 = vector.shape_cast %22 : vector<1x1x32x32xf32> to vector<32x32xf32>
    %cst_29 = arith.constant dense<0.000000e+00> : vector<256x32xf32>
    %24 = tpu.matmul %21, %23, %cst_29 {dimension_numbers = #tpu.dot_dimension_numbers<[1], [0], [0], [1], [0, 0, 1, 1], [], []>} : vector<256x32xf32>, vector<32x32xf32>, vector<256x32xf32> -> vector<256x32xf32>
    %c0_30 = arith.constant 0 : index
    %c8_31 = arith.constant 8 : index
    %c0_32 = arith.constant 0 : index
    %25 = vector.load %arg9[%c0_30, %c8_31, %c0_32] : memref<18x32x32xf32, #tpu.memory_space<vmem>>, vector<16x16x32xf32>
    %26 = vector.shape_cast %25 : vector<16x16x32xf32> to vector<256x32xf32>
    %c0_33 = arith.constant 0 : index
    %c1_34 = arith.constant 1 : index
    %c0_35 = arith.constant 0 : index
    %c0_36 = arith.constant 0 : index
    %27 = vector.load %arg4[%c0_33, %c1_34, %c0_35, %c0_36] : memref<3x3x32x32xf32, #tpu.memory_space<vmem>>, vector<1x1x32x32xf32>
    %28 = vector.shape_cast %27 : vector<1x1x32x32xf32> to vector<32x32xf32>
    %cst_37 = arith.constant dense<0.000000e+00> : vector<256x32xf32>
    %29 = tpu.matmul %26, %28, %cst_37 {dimension_numbers = #tpu.dot_dimension_numbers<[1], [0], [0], [1], [0, 0, 1, 1], [], []>} : vector<256x32xf32>, vector<32x32xf32>, vector<256x32xf32> -> vector<256x32xf32>
    %30 = arith.addf %24, %29 : vector<256x32xf32>
    %c0_38 = arith.constant 0 : index
    %c9 = arith.constant 9 : index
    %c0_39 = arith.constant 0 : index
    %31 = vector.load %arg9[%c0_38, %c9, %c0_39] : memref<18x32x32xf32, #tpu.memory_space<vmem>>, vector<16x16x32xf32>
    %32 = vector.shape_cast %31 : vector<16x16x32xf32> to vector<256x32xf32>
    %c0_40 = arith.constant 0 : index
    %c2 = arith.constant 2 : index
    %c0_41 = arith.constant 0 : index
    %c0_42 = arith.constant 0 : index
    %33 = vector.load %arg4[%c0_40, %c2, %c0_41, %c0_42] : memref<3x3x32x32xf32, #tpu.memory_space<vmem>>, vector<1x1x32x32xf32>
    %34 = vector.shape_cast %33 : vector<1x1x32x32xf32> to vector<32x32xf32>
    %cst_43 = arith.constant dense<0.000000e+00> : vector<256x32xf32>
    %35 = tpu.matmul %32, %34, %cst_43 {dimension_numbers = #tpu.dot_dimension_numbers<[1], [0], [0], [1], [0, 0, 1, 1], [], []>} : vector<256x32xf32>, vector<32x32xf32>, vector<256x32xf32> -> vector<256x32xf32>
    %36 = arith.addf %30, %35 : vector<256x32xf32>
    %c1_44 = arith.constant 1 : index
    %c7_45 = arith.constant 7 : index
    %c0_46 = arith.constant 0 : index
    %37 = vector.load %arg9[%c1_44, %c7_45, %c0_46] : memref<18x32x32xf32, #tpu.memory_space<vmem>>, vector<16x16x32xf32>
    %38 = vector.shape_cast %37 : vector<16x16x32xf32> to vector<256x32xf32>
    %c1_47 = arith.constant 1 : index
    %c0_48 = arith.constant 0 : index
    %c0_49 = arith.constant 0 : index
    %c0_50 = arith.constant 0 : index
    %39 = vector.load %arg4[%c1_47, %c0_48, %c0_49, %c0_50] : memref<3x3x32x32xf32, #tpu.memory_space<vmem>>, vector<1x1x32x32xf32>
    %40 = vector.shape_cast %39 : vector<1x1x32x32xf32> to vector<32x32xf32>
    %cst_51 = arith.constant dense<0.000000e+00> : vector<256x32xf32>
    %41 = tpu.matmul %38, %40, %cst_51 {dimension_numbers = #tpu.dot_dimension_numbers<[1], [0], [0], [1], [0, 0, 1, 1], [], []>} : vector<256x32xf32>, vector<32x32xf32>, vector<256x32xf32> -> vector<256x32xf32>
    %42 = arith.addf %36, %41 : vector<256x32xf32>
    %c1_52 = arith.constant 1 : index
    %c8_53 = arith.constant 8 : index
    %c0_54 = arith.constant 0 : index
    %43 = vector.load %arg9[%c1_52, %c8_53, %c0_54] : memref<18x32x32xf32, #tpu.memory_space<vmem>>, vector<16x16x32xf32>
    %44 = vector.shape_cast %43 : vector<16x16x32xf32> to vector<256x32xf32>
    %c1_55 = arith.constant 1 : index
    %c1_56 = arith.constant 1 : index
    %c0_57 = arith.constant 0 : index
    %c0_58 = arith.constant 0 : index
    %45 = vector.load %arg4[%c1_55, %c1_56, %c0_57, %c0_58] : memref<3x3x32x32xf32, #tpu.memory_space<vmem>>, vector<1x1x32x32xf32>
    %46 = vector.shape_cast %45 : vector<1x1x32x32xf32> to vector<32x32xf32>
    %cst_59 = arith.constant dense<0.000000e+00> : vector<256x32xf32>
    %47 = tpu.matmul %44, %46, %cst_59 {dimension_numbers = #tpu.dot_dimension_numbers<[1], [0], [0], [1], [0, 0, 1, 1], [], []>} : vector<256x32xf32>, vector<32x32xf32>, vector<256x32xf32> -> vector<256x32xf32>
    %48 = arith.addf %42, %47 : vector<256x32xf32>
    %c1_60 = arith.constant 1 : index
    %c9_61 = arith.constant 9 : index
    %c0_62 = arith.constant 0 : index
    %49 = vector.load %arg9[%c1_60, %c9_61, %c0_62] : memref<18x32x32xf32, #tpu.memory_space<vmem>>, vector<16x16x32xf32>
    %50 = vector.shape_cast %49 : vector<16x16x32xf32> to vector<256x32xf32>
    %c1_63 = arith.constant 1 : index
    %c2_64 = arith.constant 2 : index
    %c0_65 = arith.constant 0 : index
    %c0_66 = arith.constant 0 : index
    %51 = vector.load %arg4[%c1_63, %c2_64, %c0_65, %c0_66] : memref<3x3x32x32xf32, #tpu.memory_space<vmem>>, vector<1x1x32x32xf32>
    %52 = vector.shape_cast %51 : vector<1x1x32x32xf32> to vector<32x32xf32>
    %cst_67 = arith.constant dense<0.000000e+00> : vector<256x32xf32>
    %53 = tpu.matmul %50, %52, %cst_67 {dimension_numbers = #tpu.dot_dimension_numbers<[1], [0], [0], [1], [0, 0, 1, 1], [], []>} : vector<256x32xf32>, vector<32x32xf32>, vector<256x32xf32> -> vector<256x32xf32>
    %54 = arith.addf %48, %53 : vector<256x32xf32>
    %c2_68 = arith.constant 2 : index
    %c7_69 = arith.constant 7 : index
    %c0_70 = arith.constant 0 : index
    %55 = vector.load %arg9[%c2_68, %c7_69, %c0_70] : memref<18x32x32xf32, #tpu.memory_space<vmem>>, vector<16x16x32xf32>
    %56 = vector.shape_cast %55 : vector<16x16x32xf32> to vector<256x32xf32>
    %c2_71 = arith.constant 2 : index
    %c0_72 = arith.constant 0 : index
    %c0_73 = arith.constant 0 : index
    %c0_74 = arith.constant 0 : index
    %57 = vector.load %arg4[%c2_71, %c0_72, %c0_73, %c0_74] : memref<3x3x32x32xf32, #tpu.memory_space<vmem>>, vector<1x1x32x32xf32>
    %58 = vector.shape_cast %57 : vector<1x1x32x32xf32> to vector<32x32xf32>
    %cst_75 = arith.constant dense<0.000000e+00> : vector<256x32xf32>
    %59 = tpu.matmul %56, %58, %cst_75 {dimension_numbers = #tpu.dot_dimension_numbers<[1], [0], [0], [1], [0, 0, 1, 1], [], []>} : vector<256x32xf32>, vector<32x32xf32>, vector<256x32xf32> -> vector<256x32xf32>
    %60 = arith.addf %54, %59 : vector<256x32xf32>
    %c2_76 = arith.constant 2 : index
    %c8_77 = arith.constant 8 : index
    %c0_78 = arith.constant 0 : index
    %61 = vector.load %arg9[%c2_76, %c8_77, %c0_78] : memref<18x32x32xf32, #tpu.memory_space<vmem>>, vector<16x16x32xf32>
    %62 = vector.shape_cast %61 : vector<16x16x32xf32> to vector<256x32xf32>
    %c2_79 = arith.constant 2 : index
    %c1_80 = arith.constant 1 : index
    %c0_81 = arith.constant 0 : index
    %c0_82 = arith.constant 0 : index
    %63 = vector.load %arg4[%c2_79, %c1_80, %c0_81, %c0_82] : memref<3x3x32x32xf32, #tpu.memory_space<vmem>>, vector<1x1x32x32xf32>
    %64 = vector.shape_cast %63 : vector<1x1x32x32xf32> to vector<32x32xf32>
    %cst_83 = arith.constant dense<0.000000e+00> : vector<256x32xf32>
    %65 = tpu.matmul %62, %64, %cst_83 {dimension_numbers = #tpu.dot_dimension_numbers<[1], [0], [0], [1], [0, 0, 1, 1], [], []>} : vector<256x32xf32>, vector<32x32xf32>, vector<256x32xf32> -> vector<256x32xf32>
    %66 = arith.addf %60, %65 : vector<256x32xf32>
    %c2_84 = arith.constant 2 : index
    %c9_85 = arith.constant 9 : index
    %c0_86 = arith.constant 0 : index
    %67 = vector.load %arg9[%c2_84, %c9_85, %c0_86] : memref<18x32x32xf32, #tpu.memory_space<vmem>>, vector<16x16x32xf32>
    %68 = vector.shape_cast %67 : vector<16x16x32xf32> to vector<256x32xf32>
    %c2_87 = arith.constant 2 : index
    %c2_88 = arith.constant 2 : index
    %c0_89 = arith.constant 0 : index
    %c0_90 = arith.constant 0 : index
    %69 = vector.load %arg4[%c2_87, %c2_88, %c0_89, %c0_90] : memref<3x3x32x32xf32, #tpu.memory_space<vmem>>, vector<1x1x32x32xf32>
    %70 = vector.shape_cast %69 : vector<1x1x32x32xf32> to vector<32x32xf32>
    %cst_91 = arith.constant dense<0.000000e+00> : vector<256x32xf32>
    %71 = tpu.matmul %68, %70, %cst_91 {dimension_numbers = #tpu.dot_dimension_numbers<[1], [0], [0], [1], [0, 0, 1, 1], [], []>} : vector<256x32xf32>, vector<32x32xf32>, vector<256x32xf32> -> vector<256x32xf32>
    %72 = arith.addf %66, %71 : vector<256x32xf32>
    %c0_92 = arith.constant 0 : index
    %c0_93 = arith.constant 0 : index
    %73 = vector.load %arg5[%c0_92, %c0_93] : memref<1x32xf32, #tpu.memory_space<vmem>>, vector<1x32xf32>
    %74 = vector.broadcast %73 : vector<1x32xf32> to vector<256x32xf32>
    %75 = arith.addf %72, %74 : vector<256x32xf32>
    %cst_94 = arith.constant 0.000000e+00 : f32
    %76 = vector.broadcast %cst_94 : f32 to vector<256x32xf32>
    %77 = arith.maximumf %75, %76 : vector<256x32xf32>
    %c0_95 = arith.constant 0 : index
    %c0_96 = arith.constant 0 : index
    %78 = vector.load %arg6[%c0_95, %c0_96] : memref<32x128xf32, #tpu.memory_space<vmem>>, vector<32x128xf32>
    %cst_97 = arith.constant dense<0.000000e+00> : vector<256x128xf32>
    %79 = tpu.matmul %77, %78, %cst_97 {dimension_numbers = #tpu.dot_dimension_numbers<[1], [0], [0], [1], [0, 0, 1, 1], [], []>} : vector<256x32xf32>, vector<32x128xf32>, vector<256x128xf32> -> vector<256x128xf32>
    %c0_98 = arith.constant 0 : index
    %c0_99 = arith.constant 0 : index
    %80 = vector.load %arg7[%c0_98, %c0_99] : memref<1x128xf32, #tpu.memory_space<vmem>>, vector<1x128xf32>
    %81 = vector.broadcast %80 : vector<1x128xf32> to vector<256x128xf32>
    %82 = arith.addf %79, %81 : vector<256x128xf32>
    %83 = arith.addf %82, %2 : vector<256x128xf32>
    %cst_100 = arith.constant 0.000000e+00 : f32
    %84 = vector.broadcast %cst_100 : f32 to vector<256x128xf32>
    %85 = arith.maximumf %83, %84 : vector<256x128xf32>
    %86 = vector.shape_cast %85 : vector<256x128xf32> to vector<16x16x128xf32>
    %c0_101 = arith.constant 0 : index
    %c0_102 = arith.constant 0 : index
    %c0_103 = arith.constant 0 : index
    %c0_104 = arith.constant 0 : index
    %87 = vector.load %arg8[%c0_101, %c0_102, %c0_103, %c0_104] : memref<1x16x16x128xf32, #tpu.memory_space<vmem>>, vector<1x16x16x128xf32>
    %88 = vector.shape_cast %87 : vector<1x16x16x128xf32> to vector<16x16x128xf32>
    %89 = vector.shape_cast %86 : vector<16x16x128xf32> to vector<1x16x16x128xf32>
    tpu.vector_store %arg8[%c0_101, %c0_102, %c0_103, %c0_104], %89 {strides = array<i32>} : memref<1x16x16x128xf32, #tpu.memory_space<vmem>>, vector<1x16x16x128xf32>,
    return
  }
  func.func @transform_0(%arg0: i32) -> (i32, i32, i32, i32) {
    %c0_i32 = arith.constant 0 : i32
    %c0_i32_0 = arith.constant 0 : i32
    %c0_i32_1 = arith.constant 0 : i32
    %c0_i32_2 = arith.constant 0 : i32
    return %arg0, %c0_i32, %c0_i32_0, %c0_i32_1 : i32, i32, i32, i32
  }
  func.func @transform_1(%arg0: i32) -> (i32, i32) {
    %c0_i32 = arith.constant 0 : i32
    %c0_i32_0 = arith.constant 0 : i32
    %c0_i32_1 = arith.constant 0 : i32
    return %c0_i32, %c0_i32_0 : i32, i32
  }
  func.func @transform_2(%arg0: i32) -> (i32, i32) {
    %c0_i32 = arith.constant 0 : i32
    %c0_i32_0 = arith.constant 0 : i32
    %c0_i32_1 = arith.constant 0 : i32
    return %c0_i32, %c0_i32_0 : i32, i32
  }
  func.func @transform_3(%arg0: i32) -> (i32, i32, i32, i32) {
    %c0_i32 = arith.constant 0 : i32
    %c0_i32_0 = arith.constant 0 : i32
    %c0_i32_1 = arith.constant 0 : i32
    %c0_i32_2 = arith.constant 0 : i32
    %c0_i32_3 = arith.constant 0 : i32
    return %c0_i32, %c0_i32_0, %c0_i32_1, %c0_i32_2 : i32, i32, i32, i32
  }
  func.func @transform_4(%arg0: i32) -> (i32, i32) {
    %c0_i32 = arith.constant 0 : i32
    %c0_i32_0 = arith.constant 0 : i32
    %c0_i32_1 = arith.constant 0 : i32
    return %c0_i32, %c0_i32_0 : i32, i32
  }
  func.func @transform_5(%arg0: i32) -> (i32, i32) {
    %c0_i32 = arith.constant 0 : i32
    %c0_i32_0 = arith.constant 0 : i32
    %c0_i32_1 = arith.constant 0 : i32
    return %c0_i32, %c0_i32_0 : i32, i32
  }
  func.func @transform_6(%arg0: i32) -> (i32, i32) {
    %c0_i32 = arith.constant 0 : i32
    %c0_i32_0 = arith.constant 0 : i32
    %c0_i32_1 = arith.constant 0 : i32
    return %c0_i32, %c0_i32_0 : i32, i32
  }
  func.func @transform_7(%arg0: i32) -> (i32, i32, i32, i32) {
    %c0_i32 = arith.constant 0 : i32
    %c0_i32_0 = arith.constant 0 : i32
    %c0_i32_1 = arith.constant 0 : i32
    %c0_i32_2 = arith.constant 0 : i32
    return %arg0, %c0_i32, %c0_i32_0, %c0_i32_1 : i32, i32, i32, i32
  }
}

module attributes {stable_mosaic.version = 11 : i64} {
  func.func @_bottleneck_kernel(%arg0: i32, %arg1: memref<1x16x16x64xf32, #tpu.memory_space<vmem>>, %arg2: memref<64x32xf32, #tpu.memory_space<vmem>>, %arg3: memref<1x32xf32, #tpu.memory_space<vmem>>, %arg4: memref<3x3x32x32xf32, #tpu.memory_space<vmem>>, %arg5: memref<1x32xf32, #tpu.memory_space<vmem>>, %arg6: memref<32x128xf32, #tpu.memory_space<vmem>>, %arg7: memref<1x128xf32, #tpu.memory_space<vmem>>, %arg8: memref<64x128xf32, #tpu.memory_space<vmem>>, %arg9: memref<1x128xf32, #tpu.memory_space<vmem>>, %arg10: memref<1x16x16x128xf32, #tpu.memory_space<vmem>>, %arg11: memref<18x32x32xf32, #tpu.memory_space<vmem>>) attributes {dimension_semantics = [#tpu.dimension_semantics<parallel>], iteration_bounds = array<i64: 2>, scalar_prefetch = 0 : i64, scratch_operands = 1 : i64, tpu.core_type = #tpu.core_type<tc>, window_params = [{transform_indices = @transform_0, window_bounds = array<i64: 1, 16, 16, 64>}, {pipeline_mode = #tpu.pipeline_mode<synchronous>, transform_indices = @transform_1, window_bounds = array<i64: 64, 32>}, {pipeline_mode = #tpu.pipeline_mode<synchronous>, transform_indices = @transform_2, window_bounds = array<i64: 1, 32>}, {pipeline_mode = #tpu.pipeline_mode<synchronous>, transform_indices = @transform_3, window_bounds = array<i64: 3, 3, 32, 32>}, {pipeline_mode = #tpu.pipeline_mode<synchronous>, transform_indices = @transform_4, window_bounds = array<i64: 1, 32>}, {pipeline_mode = #tpu.pipeline_mode<synchronous>, transform_indices = @transform_5, window_bounds = array<i64: 32, 128>}, {pipeline_mode = #tpu.pipeline_mode<synchronous>, transform_indices = @transform_6, window_bounds = array<i64: 1, 128>}, {pipeline_mode = #tpu.pipeline_mode<synchronous>, transform_indices = @transform_7, window_bounds = array<i64: 64, 128>}, {pipeline_mode = #tpu.pipeline_mode<synchronous>, transform_indices = @transform_8, window_bounds = array<i64: 1, 128>}, {transform_indices = @transform_9, window_bounds = array<i64: 1, 16, 16, 128>}]} {
    %c0 = arith.constant 0 : index
    %c0_0 = arith.constant 0 : index
    %c0_1 = arith.constant 0 : index
    %c0_2 = arith.constant 0 : index
    %0 = vector.load %arg1[%c0, %c0_0, %c0_1, %c0_2] : memref<1x16x16x64xf32, #tpu.memory_space<vmem>>, vector<1x16x16x64xf32>
    %1 = vector.shape_cast %0 : vector<1x16x16x64xf32> to vector<16x16x64xf32>
    %2 = vector.shape_cast %1 : vector<16x16x64xf32> to vector<256x64xf32>
    %c0_3 = arith.constant 0 : index
    %c0_4 = arith.constant 0 : index
    %3 = vector.load %arg2[%c0_3, %c0_4] : memref<64x32xf32, #tpu.memory_space<vmem>>, vector<64x32xf32>
    %cst = arith.constant dense<0.000000e+00> : vector<256x32xf32>
    %4 = tpu.matmul %2, %3, %cst {dimension_numbers = #tpu.dot_dimension_numbers<[1], [0], [0], [1], [0, 0, 1, 1], [], []>} : vector<256x64xf32>, vector<64x32xf32>, vector<256x32xf32> -> vector<256x32xf32>
    %c0_5 = arith.constant 0 : index
    %c0_6 = arith.constant 0 : index
    %5 = vector.load %arg3[%c0_5, %c0_6] : memref<1x32xf32, #tpu.memory_space<vmem>>, vector<1x32xf32>
    %6 = vector.broadcast %5 : vector<1x32xf32> to vector<256x32xf32>
    %7 = arith.addf %4, %6 : vector<256x32xf32>
    %cst_7 = arith.constant 0.000000e+00 : f32
    %8 = vector.broadcast %cst_7 : f32 to vector<256x32xf32>
    %9 = arith.maximumf %7, %8 : vector<256x32xf32>
    %cst_8 = arith.constant 0.000000e+00 : f32
    %10 = vector.broadcast %cst_8 : f32 to vector<18x8x32xf32>
    %c0_9 = arith.constant 0 : index
    %c0_10 = arith.constant 0 : index
    %c0_11 = arith.constant 0 : index
    %11 = vector.load %arg11[%c0_9, %c0_10, %c0_11] : memref<18x32x32xf32, #tpu.memory_space<vmem>>, vector<18x8x32xf32>
    tpu.vector_store %arg11[%c0_9, %c0_10, %c0_11], %10 {strides = array<i32>} : memref<18x32x32xf32, #tpu.memory_space<vmem>>, vector<18x8x32xf32>,
    %cst_12 = arith.constant 0.000000e+00 : f32
    %12 = vector.broadcast %cst_12 : f32 to vector<18x8x32xf32>
    %c0_13 = arith.constant 0 : index
    %c24 = arith.constant 24 : index
    %c0_14 = arith.constant 0 : index
    %13 = vector.load %arg11[%c0_13, %c24, %c0_14] : memref<18x32x32xf32, #tpu.memory_space<vmem>>, vector<18x8x32xf32>
    tpu.vector_store %arg11[%c0_13, %c24, %c0_14], %12 {strides = array<i32>} : memref<18x32x32xf32, #tpu.memory_space<vmem>>, vector<18x8x32xf32>,
    %cst_15 = arith.constant 0.000000e+00 : f32
    %14 = vector.broadcast %cst_15 : f32 to vector<1x16x32xf32>
    %c0_16 = arith.constant 0 : index
    %c8 = arith.constant 8 : index
    %c0_17 = arith.constant 0 : index
    %15 = vector.load %arg11[%c0_16, %c8, %c0_17] : memref<18x32x32xf32, #tpu.memory_space<vmem>>, vector<1x16x32xf32>
    tpu.vector_store %arg11[%c0_16, %c8, %c0_17], %14 {strides = array<i32>} : memref<18x32x32xf32, #tpu.memory_space<vmem>>, vector<1x16x32xf32>,
    %cst_18 = arith.constant 0.000000e+00 : f32
    %16 = vector.broadcast %cst_18 : f32 to vector<1x16x32xf32>
    %c17 = arith.constant 17 : index
    %c8_19 = arith.constant 8 : index
    %c0_20 = arith.constant 0 : index
    %17 = vector.load %arg11[%c17, %c8_19, %c0_20] : memref<18x32x32xf32, #tpu.memory_space<vmem>>, vector<1x16x32xf32>
    tpu.vector_store %arg11[%c17, %c8_19, %c0_20], %16 {strides = array<i32>} : memref<18x32x32xf32, #tpu.memory_space<vmem>>, vector<1x16x32xf32>,
    %18 = vector.shape_cast %9 : vector<256x32xf32> to vector<16x16x32xf32>
    %c1 = arith.constant 1 : index
    %c8_21 = arith.constant 8 : index
    %c0_22 = arith.constant 0 : index
    %19 = vector.load %arg11[%c1, %c8_21, %c0_22] : memref<18x32x32xf32, #tpu.memory_space<vmem>>, vector<16x16x32xf32>
    tpu.vector_store %arg11[%c1, %c8_21, %c0_22], %18 {strides = array<i32>} : memref<18x32x32xf32, #tpu.memory_space<vmem>>, vector<16x16x32xf32>,
    %c0_23 = arith.constant 0 : index
    %c7 = arith.constant 7 : index
    %c0_24 = arith.constant 0 : index
    %20 = vector.load %arg11[%c0_23, %c7, %c0_24] : memref<18x32x32xf32, #tpu.memory_space<vmem>>, vector<16x16x32xf32>
    %21 = vector.shape_cast %20 : vector<16x16x32xf32> to vector<256x32xf32>
    %c0_25 = arith.constant 0 : index
    %c0_26 = arith.constant 0 : index
    %c0_27 = arith.constant 0 : index
    %c0_28 = arith.constant 0 : index
    %22 = vector.load %arg4[%c0_25, %c0_26, %c0_27, %c0_28] : memref<3x3x32x32xf32, #tpu.memory_space<vmem>>, vector<1x1x32x32xf32>
    %23 = vector.shape_cast %22 : vector<1x1x32x32xf32> to vector<32x32xf32>
    %cst_29 = arith.constant dense<0.000000e+00> : vector<256x32xf32>
    %24 = tpu.matmul %21, %23, %cst_29 {dimension_numbers = #tpu.dot_dimension_numbers<[1], [0], [0], [1], [0, 0, 1, 1], [], []>} : vector<256x32xf32>, vector<32x32xf32>, vector<256x32xf32> -> vector<256x32xf32>
    %c0_30 = arith.constant 0 : index
    %c8_31 = arith.constant 8 : index
    %c0_32 = arith.constant 0 : index
    %25 = vector.load %arg11[%c0_30, %c8_31, %c0_32] : memref<18x32x32xf32, #tpu.memory_space<vmem>>, vector<16x16x32xf32>
    %26 = vector.shape_cast %25 : vector<16x16x32xf32> to vector<256x32xf32>
    %c0_33 = arith.constant 0 : index
    %c1_34 = arith.constant 1 : index
    %c0_35 = arith.constant 0 : index
    %c0_36 = arith.constant 0 : index
    %27 = vector.load %arg4[%c0_33, %c1_34, %c0_35, %c0_36] : memref<3x3x32x32xf32, #tpu.memory_space<vmem>>, vector<1x1x32x32xf32>
    %28 = vector.shape_cast %27 : vector<1x1x32x32xf32> to vector<32x32xf32>
    %cst_37 = arith.constant dense<0.000000e+00> : vector<256x32xf32>
    %29 = tpu.matmul %26, %28, %cst_37 {dimension_numbers = #tpu.dot_dimension_numbers<[1], [0], [0], [1], [0, 0, 1, 1], [], []>} : vector<256x32xf32>, vector<32x32xf32>, vector<256x32xf32> -> vector<256x32xf32>
    %30 = arith.addf %24, %29 : vector<256x32xf32>
    %c0_38 = arith.constant 0 : index
    %c9 = arith.constant 9 : index
    %c0_39 = arith.constant 0 : index
    %31 = vector.load %arg11[%c0_38, %c9, %c0_39] : memref<18x32x32xf32, #tpu.memory_space<vmem>>, vector<16x16x32xf32>
    %32 = vector.shape_cast %31 : vector<16x16x32xf32> to vector<256x32xf32>
    %c0_40 = arith.constant 0 : index
    %c2 = arith.constant 2 : index
    %c0_41 = arith.constant 0 : index
    %c0_42 = arith.constant 0 : index
    %33 = vector.load %arg4[%c0_40, %c2, %c0_41, %c0_42] : memref<3x3x32x32xf32, #tpu.memory_space<vmem>>, vector<1x1x32x32xf32>
    %34 = vector.shape_cast %33 : vector<1x1x32x32xf32> to vector<32x32xf32>
    %cst_43 = arith.constant dense<0.000000e+00> : vector<256x32xf32>
    %35 = tpu.matmul %32, %34, %cst_43 {dimension_numbers = #tpu.dot_dimension_numbers<[1], [0], [0], [1], [0, 0, 1, 1], [], []>} : vector<256x32xf32>, vector<32x32xf32>, vector<256x32xf32> -> vector<256x32xf32>
    %36 = arith.addf %30, %35 : vector<256x32xf32>
    %c1_44 = arith.constant 1 : index
    %c7_45 = arith.constant 7 : index
    %c0_46 = arith.constant 0 : index
    %37 = vector.load %arg11[%c1_44, %c7_45, %c0_46] : memref<18x32x32xf32, #tpu.memory_space<vmem>>, vector<16x16x32xf32>
    %38 = vector.shape_cast %37 : vector<16x16x32xf32> to vector<256x32xf32>
    %c1_47 = arith.constant 1 : index
    %c0_48 = arith.constant 0 : index
    %c0_49 = arith.constant 0 : index
    %c0_50 = arith.constant 0 : index
    %39 = vector.load %arg4[%c1_47, %c0_48, %c0_49, %c0_50] : memref<3x3x32x32xf32, #tpu.memory_space<vmem>>, vector<1x1x32x32xf32>
    %40 = vector.shape_cast %39 : vector<1x1x32x32xf32> to vector<32x32xf32>
    %cst_51 = arith.constant dense<0.000000e+00> : vector<256x32xf32>
    %41 = tpu.matmul %38, %40, %cst_51 {dimension_numbers = #tpu.dot_dimension_numbers<[1], [0], [0], [1], [0, 0, 1, 1], [], []>} : vector<256x32xf32>, vector<32x32xf32>, vector<256x32xf32> -> vector<256x32xf32>
    %42 = arith.addf %36, %41 : vector<256x32xf32>
    %c1_52 = arith.constant 1 : index
    %c8_53 = arith.constant 8 : index
    %c0_54 = arith.constant 0 : index
    %43 = vector.load %arg11[%c1_52, %c8_53, %c0_54] : memref<18x32x32xf32, #tpu.memory_space<vmem>>, vector<16x16x32xf32>
    %44 = vector.shape_cast %43 : vector<16x16x32xf32> to vector<256x32xf32>
    %c1_55 = arith.constant 1 : index
    %c1_56 = arith.constant 1 : index
    %c0_57 = arith.constant 0 : index
    %c0_58 = arith.constant 0 : index
    %45 = vector.load %arg4[%c1_55, %c1_56, %c0_57, %c0_58] : memref<3x3x32x32xf32, #tpu.memory_space<vmem>>, vector<1x1x32x32xf32>
    %46 = vector.shape_cast %45 : vector<1x1x32x32xf32> to vector<32x32xf32>
    %cst_59 = arith.constant dense<0.000000e+00> : vector<256x32xf32>
    %47 = tpu.matmul %44, %46, %cst_59 {dimension_numbers = #tpu.dot_dimension_numbers<[1], [0], [0], [1], [0, 0, 1, 1], [], []>} : vector<256x32xf32>, vector<32x32xf32>, vector<256x32xf32> -> vector<256x32xf32>
    %48 = arith.addf %42, %47 : vector<256x32xf32>
    %c1_60 = arith.constant 1 : index
    %c9_61 = arith.constant 9 : index
    %c0_62 = arith.constant 0 : index
    %49 = vector.load %arg11[%c1_60, %c9_61, %c0_62] : memref<18x32x32xf32, #tpu.memory_space<vmem>>, vector<16x16x32xf32>
    %50 = vector.shape_cast %49 : vector<16x16x32xf32> to vector<256x32xf32>
    %c1_63 = arith.constant 1 : index
    %c2_64 = arith.constant 2 : index
    %c0_65 = arith.constant 0 : index
    %c0_66 = arith.constant 0 : index
    %51 = vector.load %arg4[%c1_63, %c2_64, %c0_65, %c0_66] : memref<3x3x32x32xf32, #tpu.memory_space<vmem>>, vector<1x1x32x32xf32>
    %52 = vector.shape_cast %51 : vector<1x1x32x32xf32> to vector<32x32xf32>
    %cst_67 = arith.constant dense<0.000000e+00> : vector<256x32xf32>
    %53 = tpu.matmul %50, %52, %cst_67 {dimension_numbers = #tpu.dot_dimension_numbers<[1], [0], [0], [1], [0, 0, 1, 1], [], []>} : vector<256x32xf32>, vector<32x32xf32>, vector<256x32xf32> -> vector<256x32xf32>
    %54 = arith.addf %48, %53 : vector<256x32xf32>
    %c2_68 = arith.constant 2 : index
    %c7_69 = arith.constant 7 : index
    %c0_70 = arith.constant 0 : index
    %55 = vector.load %arg11[%c2_68, %c7_69, %c0_70] : memref<18x32x32xf32, #tpu.memory_space<vmem>>, vector<16x16x32xf32>
    %56 = vector.shape_cast %55 : vector<16x16x32xf32> to vector<256x32xf32>
    %c2_71 = arith.constant 2 : index
    %c0_72 = arith.constant 0 : index
    %c0_73 = arith.constant 0 : index
    %c0_74 = arith.constant 0 : index
    %57 = vector.load %arg4[%c2_71, %c0_72, %c0_73, %c0_74] : memref<3x3x32x32xf32, #tpu.memory_space<vmem>>, vector<1x1x32x32xf32>
    %58 = vector.shape_cast %57 : vector<1x1x32x32xf32> to vector<32x32xf32>
    %cst_75 = arith.constant dense<0.000000e+00> : vector<256x32xf32>
    %59 = tpu.matmul %56, %58, %cst_75 {dimension_numbers = #tpu.dot_dimension_numbers<[1], [0], [0], [1], [0, 0, 1, 1], [], []>} : vector<256x32xf32>, vector<32x32xf32>, vector<256x32xf32> -> vector<256x32xf32>
    %60 = arith.addf %54, %59 : vector<256x32xf32>
    %c2_76 = arith.constant 2 : index
    %c8_77 = arith.constant 8 : index
    %c0_78 = arith.constant 0 : index
    %61 = vector.load %arg11[%c2_76, %c8_77, %c0_78] : memref<18x32x32xf32, #tpu.memory_space<vmem>>, vector<16x16x32xf32>
    %62 = vector.shape_cast %61 : vector<16x16x32xf32> to vector<256x32xf32>
    %c2_79 = arith.constant 2 : index
    %c1_80 = arith.constant 1 : index
    %c0_81 = arith.constant 0 : index
    %c0_82 = arith.constant 0 : index
    %63 = vector.load %arg4[%c2_79, %c1_80, %c0_81, %c0_82] : memref<3x3x32x32xf32, #tpu.memory_space<vmem>>, vector<1x1x32x32xf32>
    %64 = vector.shape_cast %63 : vector<1x1x32x32xf32> to vector<32x32xf32>
    %cst_83 = arith.constant dense<0.000000e+00> : vector<256x32xf32>
    %65 = tpu.matmul %62, %64, %cst_83 {dimension_numbers = #tpu.dot_dimension_numbers<[1], [0], [0], [1], [0, 0, 1, 1], [], []>} : vector<256x32xf32>, vector<32x32xf32>, vector<256x32xf32> -> vector<256x32xf32>
    %66 = arith.addf %60, %65 : vector<256x32xf32>
    %c2_84 = arith.constant 2 : index
    %c9_85 = arith.constant 9 : index
    %c0_86 = arith.constant 0 : index
    %67 = vector.load %arg11[%c2_84, %c9_85, %c0_86] : memref<18x32x32xf32, #tpu.memory_space<vmem>>, vector<16x16x32xf32>
    %68 = vector.shape_cast %67 : vector<16x16x32xf32> to vector<256x32xf32>
    %c2_87 = arith.constant 2 : index
    %c2_88 = arith.constant 2 : index
    %c0_89 = arith.constant 0 : index
    %c0_90 = arith.constant 0 : index
    %69 = vector.load %arg4[%c2_87, %c2_88, %c0_89, %c0_90] : memref<3x3x32x32xf32, #tpu.memory_space<vmem>>, vector<1x1x32x32xf32>
    %70 = vector.shape_cast %69 : vector<1x1x32x32xf32> to vector<32x32xf32>
    %cst_91 = arith.constant dense<0.000000e+00> : vector<256x32xf32>
    %71 = tpu.matmul %68, %70, %cst_91 {dimension_numbers = #tpu.dot_dimension_numbers<[1], [0], [0], [1], [0, 0, 1, 1], [], []>} : vector<256x32xf32>, vector<32x32xf32>, vector<256x32xf32> -> vector<256x32xf32>
    %72 = arith.addf %66, %71 : vector<256x32xf32>
    %c0_92 = arith.constant 0 : index
    %c0_93 = arith.constant 0 : index
    %73 = vector.load %arg5[%c0_92, %c0_93] : memref<1x32xf32, #tpu.memory_space<vmem>>, vector<1x32xf32>
    %74 = vector.broadcast %73 : vector<1x32xf32> to vector<256x32xf32>
    %75 = arith.addf %72, %74 : vector<256x32xf32>
    %cst_94 = arith.constant 0.000000e+00 : f32
    %76 = vector.broadcast %cst_94 : f32 to vector<256x32xf32>
    %77 = arith.maximumf %75, %76 : vector<256x32xf32>
    %c0_95 = arith.constant 0 : index
    %c0_96 = arith.constant 0 : index
    %78 = vector.load %arg6[%c0_95, %c0_96] : memref<32x128xf32, #tpu.memory_space<vmem>>, vector<32x128xf32>
    %cst_97 = arith.constant dense<0.000000e+00> : vector<256x128xf32>
    %79 = tpu.matmul %77, %78, %cst_97 {dimension_numbers = #tpu.dot_dimension_numbers<[1], [0], [0], [1], [0, 0, 1, 1], [], []>} : vector<256x32xf32>, vector<32x128xf32>, vector<256x128xf32> -> vector<256x128xf32>
    %c0_98 = arith.constant 0 : index
    %c0_99 = arith.constant 0 : index
    %80 = vector.load %arg7[%c0_98, %c0_99] : memref<1x128xf32, #tpu.memory_space<vmem>>, vector<1x128xf32>
    %81 = vector.broadcast %80 : vector<1x128xf32> to vector<256x128xf32>
    %82 = arith.addf %79, %81 : vector<256x128xf32>
    %c0_100 = arith.constant 0 : index
    %c0_101 = arith.constant 0 : index
    %83 = vector.load %arg8[%c0_100, %c0_101] : memref<64x128xf32, #tpu.memory_space<vmem>>, vector<64x128xf32>
    %cst_102 = arith.constant dense<0.000000e+00> : vector<256x128xf32>
    %84 = tpu.matmul %2, %83, %cst_102 {dimension_numbers = #tpu.dot_dimension_numbers<[1], [0], [0], [1], [0, 0, 1, 1], [], []>} : vector<256x64xf32>, vector<64x128xf32>, vector<256x128xf32> -> vector<256x128xf32>
    %c0_103 = arith.constant 0 : index
    %c0_104 = arith.constant 0 : index
    %85 = vector.load %arg9[%c0_103, %c0_104] : memref<1x128xf32, #tpu.memory_space<vmem>>, vector<1x128xf32>
    %86 = vector.broadcast %85 : vector<1x128xf32> to vector<256x128xf32>
    %87 = arith.addf %84, %86 : vector<256x128xf32>
    %88 = arith.addf %82, %87 : vector<256x128xf32>
    %cst_105 = arith.constant 0.000000e+00 : f32
    %89 = vector.broadcast %cst_105 : f32 to vector<256x128xf32>
    %90 = arith.maximumf %88, %89 : vector<256x128xf32>
    %91 = vector.shape_cast %90 : vector<256x128xf32> to vector<16x16x128xf32>
    %c0_106 = arith.constant 0 : index
    %c0_107 = arith.constant 0 : index
    %c0_108 = arith.constant 0 : index
    %c0_109 = arith.constant 0 : index
    %92 = vector.load %arg10[%c0_106, %c0_107, %c0_108, %c0_109] : memref<1x16x16x128xf32, #tpu.memory_space<vmem>>, vector<1x16x16x128xf32>
    %93 = vector.shape_cast %92 : vector<1x16x16x128xf32> to vector<16x16x128xf32>
    %94 = vector.shape_cast %91 : vector<16x16x128xf32> to vector<1x16x16x128xf32>
    tpu.vector_store %arg10[%c0_106, %c0_107, %c0_108, %c0_109], %94 {strides = array<i32>} : memref<1x16x16x128xf32, #tpu.memory_space<vmem>>, vector<1x16x16x128xf32>,
    return
  }
  func.func @transform_0(%arg0: i32) -> (i32, i32, i32, i32) {
    %c0_i32 = arith.constant 0 : i32
    %c0_i32_0 = arith.constant 0 : i32
    %c0_i32_1 = arith.constant 0 : i32
    %c0_i32_2 = arith.constant 0 : i32
    return %arg0, %c0_i32, %c0_i32_0, %c0_i32_1 : i32, i32, i32, i32
  }
  func.func @transform_1(%arg0: i32) -> (i32, i32) {
    %c0_i32 = arith.constant 0 : i32
    %c0_i32_0 = arith.constant 0 : i32
    %c0_i32_1 = arith.constant 0 : i32
    return %c0_i32, %c0_i32_0 : i32, i32
  }
  func.func @transform_2(%arg0: i32) -> (i32, i32) {
    %c0_i32 = arith.constant 0 : i32
    %c0_i32_0 = arith.constant 0 : i32
    %c0_i32_1 = arith.constant 0 : i32
    return %c0_i32, %c0_i32_0 : i32, i32
  }
  func.func @transform_3(%arg0: i32) -> (i32, i32, i32, i32) {
    %c0_i32 = arith.constant 0 : i32
    %c0_i32_0 = arith.constant 0 : i32
    %c0_i32_1 = arith.constant 0 : i32
    %c0_i32_2 = arith.constant 0 : i32
    %c0_i32_3 = arith.constant 0 : i32
    return %c0_i32, %c0_i32_0, %c0_i32_1, %c0_i32_2 : i32, i32, i32, i32
  }
  func.func @transform_4(%arg0: i32) -> (i32, i32) {
    %c0_i32 = arith.constant 0 : i32
    %c0_i32_0 = arith.constant 0 : i32
    %c0_i32_1 = arith.constant 0 : i32
    return %c0_i32, %c0_i32_0 : i32, i32
  }
  func.func @transform_5(%arg0: i32) -> (i32, i32) {
    %c0_i32 = arith.constant 0 : i32
    %c0_i32_0 = arith.constant 0 : i32
    %c0_i32_1 = arith.constant 0 : i32
    return %c0_i32, %c0_i32_0 : i32, i32
  }
  func.func @transform_6(%arg0: i32) -> (i32, i32) {
    %c0_i32 = arith.constant 0 : i32
    %c0_i32_0 = arith.constant 0 : i32
    %c0_i32_1 = arith.constant 0 : i32
    return %c0_i32, %c0_i32_0 : i32, i32
  }
  func.func @transform_7(%arg0: i32) -> (i32, i32) {
    %c0_i32 = arith.constant 0 : i32
    %c0_i32_0 = arith.constant 0 : i32
    %c0_i32_1 = arith.constant 0 : i32
    return %c0_i32, %c0_i32_0 : i32, i32
  }
  func.func @transform_8(%arg0: i32) -> (i32, i32) {
    %c0_i32 = arith.constant 0 : i32
    %c0_i32_0 = arith.constant 0 : i32
    %c0_i32_1 = arith.constant 0 : i32
    return %c0_i32, %c0_i32_0 : i32, i32
  }
  func.func @transform_9(%arg0: i32) -> (i32, i32, i32, i32) {
    %c0_i32 = arith.constant 0 : i32
    %c0_i32_0 = arith.constant 0 : i32
    %c0_i32_1 = arith.constant 0 : i32
    %c0_i32_2 = arith.constant 0 : i32
    return %arg0, %c0_i32, %c0_i32_0, %c0_i32_1 : i32, i32, i32, i32
  }
}

</mosaic_0001>

<llo_original>
// kernel: fwd.2
$region0: #{fwd.2}
  #allocation0 [shape = 'u32[]', space=smem, size = 0x4, offset = 0x4, fixed_abs, tag = 'smem constant byte address 0x4 - core index']
  #allocation1 [shape = 'u32[72,128]{1,0:T(1,128)}', space=vmem, size = 0x9000, scoped, tag = 'internal scratch']
  #allocation2 [shape = 'f32[18,32,32]{2,1,0:T(8,128)}', space=vmem, size = 0x48000, scoped, tag = 'scratch operand']
  %s0 = inlined_call_operand.hbm [shape: f32[2,16,16,64], index: 0, kind: input, shape index: {}]
  %s1 = inlined_call_operand.hbm [shape: f32[64,32], index: 1, kind: input, shape index: {}]
  %s2 = inlined_call_operand.vmem [shape: f32[1,32], index: 2, kind: input, shape index: {}]
  %s3 = inlined_call_operand.hbm [shape: f32[3,3,32,32], index: 3, kind: input, shape index: {}]
  %s4 = inlined_call_operand.vmem [shape: f32[1,32], index: 4, kind: input, shape index: {}]
  %s5 = inlined_call_operand.hbm [shape: f32[32,128], index: 5, kind: input, shape index: {}]
  %s6 = inlined_call_operand.vmem [shape: f32[1,128], index: 6, kind: input, shape index: {}]
  %s7 = inlined_call_operand.hbm [shape: f32[64,128], index: 7, kind: input, shape index: {}]
  %s8 = inlined_call_operand.vmem [shape: f32[1,128], index: 8, kind: input, shape index: {}]
  %s9 = inlined_call_operand.vmem [shape: f32[2,16,16,128], index: 9, kind: output, shape index: {}]
  %s10 = sld [smem:[#allocation0]]
  $region89: #{fwd.2} parent=0
    _
  %s12 = ssub.s32 1, %s10
  %s13 = scalar_select 0, %s12, %s10
  $region1: #{fwd.2} parent=0
    #allocation3 [shape = 'u8[262144]{0}', space=vmem, size = 0x40000, scoped, tag = 'input window, operand 0']
    #allocation4 [shape = 's32[2]{0}', space=sflag, size = 0x8, scoped, tag = 'scoped memory for fwd.2']
    #allocation5 [shape = 'u8[32768]{0}', space=vmem, size = 0x8000, scoped, tag = 'input window, operand 1, single buffered']
    #allocation6 [shape = 's32[1]{0}', space=sflag, size = 0x4, scoped, tag = 'scoped memory for fwd.2']
    #allocation7 [shape = 'u8[147456]{0}', space=vmem, size = 0x24000, scoped, tag = 'input window, operand 3, single buffered']
    #allocation8 [shape = 'u8[16384]{0}', space=vmem, size = 0x4000, scoped, tag = 'input window, operand 5, single buffered']
    #allocation9 [shape = 's32[1]{0}', space=sflag, size = 0x4, scoped, tag = 'scoped memory for fwd.2']
    #allocation10 [shape = 'u8[32768]{0}', space=vmem, size = 0x8000, scoped, tag = 'input window, operand 7, single buffered']
    %14 = vsyncpa [#allocation4], 0
    %s15 = scalar_lea.sflag [#allocation4], 1
    %16 = vsyncpa %s15, 0
    %17 = vsyncpa [#allocation6], 0
    %18 = vsyncpa [#allocation9], 0
    loop: start=0, step=1, limit=4
    $region2: #{fwd.2} parent=1 // loop_pre_header
      _
    $region3: #{fwd.2} parent=1 // loop_header
      %s20 = sphi 0, %s24
      %p21 = scmp.ge.s32.totalorder %s20, 4
      %s30 = sphi 0, %s32
      %s33 = sphi 0, %s30
      %s34 = sphi 0, %s33
      %s50 = sphi 0, %s34
      %s54 = sphi 0, %s54
      %s56 = sphi 0, %s54
      %s57 = sphi 0, %s56
      %s71 = sphi 0, %s57
      %s75 = sphi 0, %s75
      %s77 = sphi 0, %s75
      %s78 = sphi 0, %s77
      %s92 = sphi 0, %s78
      %s96 = sphi 0, %s96
      %s98 = sphi 0, %s96
      %s99 = sphi 0, %s98
      %s113 = sphi 0, %s99
      %s117 = sphi 0, %s117
      %s119 = sphi 0, %s117
      %s120 = sphi 0, %s119
      %s134 = sphi 0, %s120
      %s138 = sphi 0, %s138
      %s140 = sphi 0, %s138
      %s141 = sphi 0, %s140
      %s155 = sphi 0, %s141
      %s159 = sphi 0, %s159
      %s161 = sphi 0, %s159
      %s162 = sphi 0, %s161
      %s176 = sphi 0, %s162
      %s180 = sphi 0, %s180
      %s182 = sphi 0, %s180
      %s183 = sphi 0, %s182
      %s197 = sphi 0, %s183
      %s201 = sphi 0, %s201
      %s203 = sphi 0, %s201
      %s204 = sphi 0, %s203
      %s218 = sphi 0, %s204
      %s224 = sphi 0, %s226
      %s227 = sphi 0, %s224
      %s228 = sphi 0, %s227
      %s244 = sphi 0, %s228
    $region4: #{fwd.2} parent=1 // loop_header_branch
      %23 = sbr.rel (%p21) target = $region8
    $region5: #{fwd.2} parent=1 // loop_body
      %s25 = ssub.s32 %s20, 1
      %s26 = ssub.s32 %s20, 2
      %s27 = sadd.s32 %s20, 1
      %s28 = ssub.s32 %s20, %s27
      %p29 = scmp.eq.s32.totalorder %s28, 0
      %s31 = sadd.s32 %s30, 1
      %s32 = scalar_select %p29, %s30, %s31
      %p35 = pneg %p29
      %p36 = scmp.eq.s32.totalorder %s20, 1
      %p37 = por %p35, %p36
      %p38 = scmp.ne.s32.totalorder %s30, %s33
      %p39 = scmp.eq.s32.totalorder %s20, 0
      %p40 = por %p38, %p39
      %p41 = scmp.ne.s32.totalorder %s30, %s33
      %p42 = scmp.eq.s32.totalorder %s25, 1
      %p43 = por %p41, %p42
      %p44 = scmp.ne.s32.totalorder %s33, %s34
      %p45 = scmp.eq.s32.totalorder %s25, 0
      %p46 = por %p44, %p45
      %p47 = scmp.ne.s32.totalorder %s33, %s34
      %p48 = scmp.eq.s32.totalorder %s26, 1
      %p49 = por %p47, %p48
      %p51 = scmp.ne.s32.totalorder %s34, %s50
      %p52 = scmp.eq.s32.totalorder %s26, 0
      %p53 = por %p51, %p52
      %s55 = sadd.s32 %s54, 1
      %p58 = scmp.eq.s32.totalorder %s20, 1
      %p59 = scmp.ne.s32.totalorder %s54, %s56
      %p60 = scmp.eq.s32.totalorder %s20, 0
      %p61 = por %p59, %p60
      %p62 = scmp.ne.s32.totalorder %s54, %s56
      %p63 = scmp.eq.s32.totalorder %s25, 1
      %p64 = por %p62, %p63
      %p65 = scmp.ne.s32.totalorder %s56, %s57
      %p66 = scmp.eq.s32.totalorder %s25, 0
      %p67 = por %p65, %p66
      %p68 = scmp.ne.s32.totalorder %s56, %s57
      %p69 = scmp.eq.s32.totalorder %s26, 1
      %p70 = por %p68, %p69
      %p72 = scmp.ne.s32.totalorder %s57, %s71
      %p73 = scmp.eq.s32.totalorder %s26, 0
      %p74 = por %p72, %p73
      %s76 = sadd.s32 %s75, 1
      %p79 = scmp.eq.s32.totalorder %s20, 1
      %p80 = scmp.ne.s32.totalorder %s75, %s77
      %p81 = scmp.eq.s32.totalorder %s20, 0
      %p82 = por %p80, %p81
      %p83 = scmp.ne.s32.totalorder %s75, %s77
      %p84 = scmp.eq.s32.totalorder %s25, 1
      %p85 = por %p83, %p84
      %p86 = scmp.ne.s32.totalorder %s77, %s78
      %p87 = scmp.eq.s32.totalorder %s25, 0
      %p88 = por %p86, %p87
      %p89 = scmp.ne.s32.totalorder %s77, %s78
      %p90 = scmp.eq.s32.totalorder %s26, 1
      %p91 = por %p89, %p90
      %p93 = scmp.ne.s32.totalorder %s78, %s92
      %p94 = scmp.eq.s32.totalorder %s26, 0
      %p95 = por %p93, %p94
      %s97 = sadd.s32 %s96, 1
      %p100 = scmp.eq.s32.totalorder %s20, 1
      %p101 = scmp.ne.s32.totalorder %s96, %s98
      %p102 = scmp.eq.s32.totalorder %s20, 0
      %p103 = por %p101, %p102
      %p104 = scmp.ne.s32.totalorder %s96, %s98
      %p105 = scmp.eq.s32.totalorder %s25, 1
      %p106 = por %p104, %p105
      %p107 = scmp.ne.s32.totalorder %s98, %s99
      %p108 = scmp.eq.s32.totalorder %s25, 0
      %p109 = por %p107, %p108
      %p110 = scmp.ne.s32.totalorder %s98, %s99
      %p111 = scmp.eq.s32.totalorder %s26, 1
      %p112 = por %p110, %p111
      %p114 = scmp.ne.s32.totalorder %s99, %s113
      %p115 = scmp.eq.s32.totalorder %s26, 0
      %p116 = por %p114, %p115
      %s118 = sadd.s32 %s117, 1
      %p121 = scmp.eq.s32.totalorder %s20, 1
      %p122 = scmp.ne.s32.totalorder %s117, %s119
      %p123 = scmp.eq.s32.totalorder %s20, 0
      %p124 = por %p122, %p123
      %p125 = scmp.ne.s32.totalorder %s117, %s119
      %p126 = scmp.eq.s32.totalorder %s25, 1
      %p127 = por %p125, %p126
      %p128 = scmp.ne.s32.totalorder %s119, %s120
      %p129 = scmp.eq.s32.totalorder %s25, 0
      %p130 = por %p128, %p129
      %p131 = scmp.ne.s32.totalorder %s119, %s120
      %p132 = scmp.eq.s32.totalorder %s26, 1
      %p133 = por %p131, %p132
      %p135 = scmp.ne.s32.totalorder %s120, %s134
      %p136 = scmp.eq.s32.totalorder %s26, 0
      %p137 = por %p135, %p136
      %s139 = sadd.s32 %s138, 1
      %p142 = scmp.eq.s32.totalorder %s20, 1
      %p143 = scmp.ne.s32.totalorder %s138, %s140
      %p144 = scmp.eq.s32.totalorder %s20, 0
      %p145 = por %p143, %p144
      %p146 = scmp.ne.s32.totalorder %s138, %s140
      %p147 = scmp.eq.s32.totalorder %s25, 1
      %p148 = por %p146, %p147
      %p149 = scmp.ne.s32.totalorder %s140, %s141
      %p150 = scmp.eq.s32.totalorder %s25, 0
      %p151 = por %p149, %p150
      %p152 = scmp.ne.s32.totalorder %s140, %s141
      %p153 = scmp.eq.s32.totalorder %s26, 1
      %p154 = por %p152, %p153
      %p156 = scmp.ne.s32.totalorder %s141, %s155
      %p157 = scmp.eq.s32.totalorder %s26, 0
      %p158 = por %p156, %p157
      %s160 = sadd.s32 %s159, 1
      %p163 = scmp.eq.s32.totalorder %s20, 1
      %p164 = scmp.ne.s32.totalorder %s159, %s161
      %p165 = scmp.eq.s32.totalorder %s20, 0
      %p166 = por %p164, %p165
      %p167 = scmp.ne.s32.totalorder %s159, %s161
      %p168 = scmp.eq.s32.totalorder %s25, 1
      %p169 = por %p167, %p168
      %p170 = scmp.ne.s32.totalorder %s161, %s162
      %p171 = scmp.eq.s32.totalorder %s25, 0
      %p172 = por %p170, %p171
      %p173 = scmp.ne.s32.totalorder %s161, %s162
      %p174 = scmp.eq.s32.totalorder %s26, 1
      %p175 = por %p173, %p174
      %p177 = scmp.ne.s32.totalorder %s162, %s176
      %p178 = scmp.eq.s32.totalorder %s26, 0
      %p179 = por %p177, %p178
      %s181 = sadd.s32 %s180, 1
      %p184 = scmp.eq.s32.totalorder %s20, 1
      %p185 = scmp.ne.s32.totalorder %s180, %s182
      %p186 = scmp.eq.s32.totalorder %s20, 0
      %p187 = por %p185, %p186
      %p188 = scmp.ne.s32.totalorder %s180, %s182
      %p189 = scmp.eq.s32.totalorder %s25, 1
      %p190 = por %p188, %p189
      %p191 = scmp.ne.s32.totalorder %s182, %s183
      %p192 = scmp.eq.s32.totalorder %s25, 0
      %p193 = por %p191, %p192
      %p194 = scmp.ne.s32.totalorder %s182, %s183
      %p195 = scmp.eq.s32.totalorder %s26, 1
      %p196 = por %p194, %p195
      %p198 = scmp.ne.s32.totalorder %s183, %s197
      %p199 = scmp.eq.s32.totalorder %s26, 0
      %p200 = por %p198, %p199
      %s202 = sadd.s32 %s201, 1
      %p205 = scmp.eq.s32.totalorder %s20, 1
      %p206 = scmp.ne.s32.totalorder %s201, %s203
      %p207 = scmp.eq.s32.totalorder %s20, 0
      %p208 = por %p206, %p207
      %p209 = scmp.ne.s32.totalorder %s201, %s203
      %p210 = scmp.eq.s32.totalorder %s25, 1
      %p211 = por %p209, %p210
      %p212 = scmp.ne.s32.totalorder %s203, %s204
      %p213 = scmp.eq.s32.totalorder %s25, 0
      %p214 = por %p212, %p213
      %p215 = scmp.ne.s32.totalorder %s203, %s204
      %p216 = scmp.eq.s32.totalorder %s26, 1
      %p217 = por %p215, %p216
      %p219 = scmp.ne.s32.totalorder %s204, %s218
      %p220 = scmp.eq.s32.totalorder %s26, 0
      %p221 = por %p219, %p220
      %s222 = ssub.s32 %s20, %s27
      %p223 = scmp.eq.s32.totalorder %s222, 0
      %s225 = sadd.s32 %s224, 1
      %s226 = scalar_select %p223, %s224, %s225
      %p229 = pneg %p223
      %p230 = scmp.eq.s32.totalorder %s20, 1
      %p231 = por %p229, %p230
      %p232 = scmp.ne.s32.totalorder %s224, %s227
      %p233 = scmp.eq.s32.totalorder %s20, 0
      %p234 = por %p232, %p233
      %p235 = scmp.ne.s32.totalorder %s224, %s227
      %p236 = scmp.eq.s32.totalorder %s25, 1
      %p237 = por %p235, %p236
      %p238 = scmp.ne.s32.totalorder %s227, %s228
      %p239 = scmp.eq.s32.totalorder %s25, 0
      %p240 = por %p238, %p239
      %p241 = scmp.ne.s32.totalorder %s227, %s228
      %p242 = scmp.eq.s32.totalorder %s26, 1
      %p243 = por %p241, %p242
      %p245 = scmp.ne.s32.totalorder %s228, %s244
      %p246 = scmp.eq.s32.totalorder %s26, 0
      %p247 = por %p245, %p246
      %p248 = scmp.le.s32.totalorder 1, %s20
      %p249 = scmp.lt.s32.totalorder %s20, 3
      %p250 = pnand %p248, %p249
      %p251 = pneg %p250
      // Predicated region
      $region9: #{fwd.2} parent=5 // pred_check
        _
      $region10: #{fwd.2} parent=5 // pred_check_branch
        %253 = sbr.rel (%p250) target = $region12
      $region11: #{fwd.2} parent=5 // pred_region
        %s254 = ssub.s32 %s20, 1
        // Predicated region
        $region13: #{fwd.2} parent=11 // pred_check
          %p255 = pneg %p67
        $region14: #{fwd.2} parent=11 // pred_check_branch
          %257 = sbr.rel (%p255) target = $region16
        $region15: #{fwd.2} parent=11 // pred_region
          %259 = vsyncadd [#allocation6], 0
          %s260 = sshll.u32 %s1, 4
          %s261 = int_to_ptr.hbm [resolvable:$true] %s260
          %s262 = sshll.u32 [#allocation5], 4
          %s263 = int_to_ptr.vmem [resolvable:$true] %s262
          %268 = dma.hbm_to_vmem [thread:$0]  %s261, 1024, %s263, [#allocation6], 128, 128, 8
        $region16: #{fwd.2} parent=11 // pred_fallthru
          _
        // Predicated region
        $region17: #{fwd.2} parent=11 // pred_check
          %p269 = pneg %p88
        $region18: #{fwd.2} parent=11 // pred_check_branch
          %271 = sbr.rel (%p269) target = $region20
        $region19: #{fwd.2} parent=11 // pred_region
          _
        $region20: #{fwd.2} parent=11 // pred_fallthru
          _
        // Predicated region
        $region21: #{fwd.2} parent=11 // pred_check
          %p272 = pneg %p109
        $region22: #{fwd.2} parent=11 // pred_check_branch
          %274 = sbr.rel (%p272) target = $region24
        $region23: #{fwd.2} parent=11 // pred_region
          %276 = vsyncadd [#allocation6], 0
          %s277 = sshll.u32 %s3, 4
          %s278 = int_to_ptr.hbm [resolvable:$true] %s277
          %s279 = sshll.u32 [#allocation7], 4
          %s280 = int_to_ptr.vmem [resolvable:$true] %s279
          %285 = dma.hbm_to_vmem [thread:$0]  %s278, 4608, %s280, [#allocation6], 128, 128, 8
        $region24: #{fwd.2} parent=11 // pred_fallthru
          _
        // Predicated region
        $region25: #{fwd.2} parent=11 // pred_check
          %p286 = pneg %p130
        $region26: #{fwd.2} parent=11 // pred_check_branch
          %288 = sbr.rel (%p286) target = $region28
        $region27: #{fwd.2} parent=11 // pred_region
          _
        $region28: #{fwd.2} parent=11 // pred_fallthru
          _
        // Predicated region
        $region29: #{fwd.2} parent=11 // pred_check
          %p289 = pneg %p151
        $region30: #{fwd.2} parent=11 // pred_check_branch
          %291 = sbr.rel (%p289) target = $region32
        $region31: #{fwd.2} parent=11 // pred_region
          %293 = vsyncadd [#allocation9], 0
          %s294 = sshll.u32 %s5, 4
          %s295 = int_to_ptr.hbm [resolvable:$true] %s294
          %s296 = sshll.u32 [#allocation8], 4
          %s297 = int_to_ptr.vmem [resolvable:$true] %s296
          %302 = dma.hbm_to_vmem [thread:$0]  %s295, 512, %s297, [#allocation9], 128, 128, 8
        $region32: #{fwd.2} parent=11 // pred_fallthru
          _
        // Predicated region
        $region33: #{fwd.2} parent=11 // pred_check
          %p303 = pneg %p172
        $region34: #{fwd.2} parent=11 // pred_check_branch
          %305 = sbr.rel (%p303) target = $region36
        $region35: #{fwd.2} parent=11 // pred_region
          _
        $region36: #{fwd.2} parent=11 // pred_fallthru
          _
        // Predicated region
        $region37: #{fwd.2} parent=11 // pred_check
          %p306 = pneg %p193
        $region38: #{fwd.2} parent=11 // pred_check_branch
          %308 = sbr.rel (%p306) target = $region40
        $region39: #{fwd.2} parent=11 // pred_region
          %310 = vsyncadd [#allocation9], 0
          %s311 = sshll.u32 %s7, 4
          %s312 = int_to_ptr.hbm [resolvable:$true] %s311
          %s313 = sshll.u32 [#allocation10], 4
          %s314 = int_to_ptr.vmem [resolvable:$true] %s313
          %319 = dma.hbm_to_vmem [thread:$0]  %s312, 1024, %s314, [#allocation9], 128, 128, 8
        $region40: #{fwd.2} parent=11 // pred_fallthru
          _
        // Predicated region
        $region41: #{fwd.2} parent=11 // pred_check
          %p320 = pneg %p214
        $region42: #{fwd.2} parent=11 // pred_check_branch
          %322 = sbr.rel (%p320) target = $region44
        $region43: #{fwd.2} parent=11 // pred_region
          _
        $region44: #{fwd.2} parent=11 // pred_fallthru
          _
      $region12: #{fwd.2} parent=5 // pred_fallthru
        _
      %p323 = scmp.lt.s32.totalorder %s20, 2
      // Predicated region
      $region45: #{fwd.2} parent=5 // pred_check
        %p324 = pneg %p323
      $region46: #{fwd.2} parent=5 // pred_check_branch
        %326 = sbr.rel (%p324) target = $region48
      $region47: #{fwd.2} parent=5 // pred_region
        // Predicated region
        $region49: #{fwd.2} parent=47 // pred_check
          %p327 = pneg %p40
        $region50: #{fwd.2} parent=47 // pred_check_branch
          %329 = sbr.rel (%p327) target = $region52
        $region51: #{fwd.2} parent=47 // pred_region
          %s330 = sand.u32 %s30, 1
          %s331 = scalar_lea.sflag [#allocation4], %s330
          %s332 = sand.u32 %s30, 1
          %s333 = smul.addr %s332, 256
          %s334 = scalar_lea.vmem [#allocation3], %s333
          %336 = vsyncadd %s331, 0
          %s337 = smul.addr %s20, 32
          %s338 = smul.addr %s337, 8
          %s339 = scalar_lea.hbm %s0, %s338
          %s340 = sshll.u32 %s339, 4
          %s341 = int_to_ptr.hbm [resolvable:$true] %s340
          %s342 = sshll.u32 %s334, 4
          %s343 = int_to_ptr.vmem [resolvable:$true] %s342
          %348 = dma.hbm_to_vmem [thread:$0]  %s341, 4096, %s343, %s331, 128, 128, 8
        $region52: #{fwd.2} parent=47 // pred_fallthru
          _
      $region48: #{fwd.2} parent=5 // pred_fallthru
        _
      %p349 = scmp.le.s32.totalorder 1, %s20
      %p350 = scmp.lt.s32.totalorder %s20, 3
      %p351 = pnand %p349, %p350
      %p352 = pneg %p351
      // Predicated region
      $region53: #{fwd.2} parent=5 // pred_check
        _
      $region54: #{fwd.2} parent=5 // pred_check_branch
        %354 = sbr.rel (%p351) target = $region56
      $region55: #{fwd.2} parent=5 // pred_region
        %s355 = ssub.s32 %s20, 1
        %s356 = sand.u32 %s33, 1
        %s357 = scalar_lea.sflag [#allocation4], %s356
        %s358 = sand.u32 %s33, 1
        %s359 = smul.addr %s358, 256
        %s360 = scalar_lea.vmem [#allocation3], %s359
        // Predicated region
        $region57: #{fwd.2} parent=55 // pred_check
          %p361 = pneg %p46
        $region58: #{fwd.2} parent=55 // pred_check_branch
          %363 = sbr.rel (%p361) target = $region60
        $region59: #{fwd.2} parent=55 // pred_region
          %365 = dma.done %s357, 4096
        $region60: #{fwd.2} parent=55 // pred_fallthru
          _
        // Predicated region
        $region61: #{fwd.2} parent=55 // pred_check
          %p366 = pneg %p67
        $region62: #{fwd.2} parent=55 // pred_check_branch
          %368 = sbr.rel (%p366) target = $region64
        $region63: #{fwd.2} parent=55 // pred_region
          %370 = dma.done [#allocation6], 1024
        $region64: #{fwd.2} parent=55 // pred_fallthru
          _
        // Predicated region
        $region65: #{fwd.2} parent=55 // pred_check
          %p371 = pneg %p109
        $region66: #{fwd.2} parent=55 // pred_check_branch
          %373 = sbr.rel (%p371) target = $region68
        $region67: #{fwd.2} parent=55 // pred_region
          %375 = dma.done [#allocation6], 4608
        $region68: #{fwd.2} parent=55 // pred_fallthru
          _
        // Predicated region
        $region69: #{fwd.2} parent=55 // pred_check
          %p376 = pneg %p151
        $region70: #{fwd.2} parent=55 // pred_check_branch
          %378 = sbr.rel (%p376) target = $region72
        $region71: #{fwd.2} parent=55 // pred_region
          %380 = dma.done [#allocation9], 512
        $region72: #{fwd.2} parent=55 // pred_fallthru
          _
        // Predicated region
        $region73: #{fwd.2} parent=55 // pred_check
          %p381 = pneg %p193
        $region74: #{fwd.2} parent=55 // pred_check_branch
          %383 = sbr.rel (%p381) target = $region76
        $region75: #{fwd.2} parent=55 // pred_region
          %385 = dma.done [#allocation9], 1024
        $region76: #{fwd.2} parent=55 // pred_fallthru
          _
        %s386 = sand.u32 %s33, 1
        %s387 = scalar_lea.sflag [#allocation4], %s386
        %s388 = sand.u32 %s33, 1
        %s389 = smul.addr %s388, 256
        %s390 = scalar_lea.vmem [#allocation3], %s389
        %p391 = pneg %p46
        %p392 = pneg %p43
        %p393 = pneg %p67
        %p394 = pneg %p64
        %p395 = pneg %p88
        %p396 = pneg %p85
        %p397 = pneg %p109
        %p398 = pneg %p106
        %p399 = pneg %p130
        %p400 = pneg %p127
        %p401 = pneg %p151
        %p402 = pneg %p148
        %p403 = pneg %p172
        %p404 = pneg %p169
        %p405 = pneg %p193
        %p406 = pneg %p190
        %p407 = pneg %p214
        %p408 = pneg %p211
        %p409 = pneg %p240
        %p410 = pneg %p237
        %p411 = scmp.lt.s32.totalorder %s25, 1
        %s412 = scalar_select %p411, %s25, 1
        %s413 = smul.addr %s412, 32
        %s414 = smul.addr %s413, 8
        %s415 = scalar_lea.vmem %s9, %s414
        %p416 = scmp.lt.s32.totalorder %s25, 1
        %s417 = scalar_select %p416, %s25, 1
        %s418 = smul.addr %s417, 32
        %s419 = smul.addr %s418, 8
        %s420 = scalar_lea.vmem %s9, %s419
        %v421 = vld [vmem:[%s360] sm:$0xff]
        %v422 = vld [vmem:[%s360 + $0x8] sm:$0xff]
        %v423 = vld [vmem:[%s360 + $0x10] sm:$0xff]
        %v424 = vld [vmem:[%s360 + $0x18] sm:$0xff]
        %v425 = vld [vmem:[%s360 + $0x20] sm:$0xff]
        %v426 = vld [vmem:[%s360 + $0x28] sm:$0xff]
        %v427 = vld [vmem:[%s360 + $0x30] sm:$0xff]
        %v428 = vld [vmem:[%s360 + $0x38] sm:$0xff]
        %v429 = vld [vmem:[%s360 + $0x40] sm:$0xff]
        %v430 = vld [vmem:[%s360 + $0x48] sm:$0xff]
        %v431 = vld [vmem:[%s360 + $0x50] sm:$0xff]
        %v432 = vld [vmem:[%s360 + $0x58] sm:$0xff]
        %v433 = vld [vmem:[%s360 + $0x60] sm:$0xff]
        %v434 = vld [vmem:[%s360 + $0x68] sm:$0xff]
        %v435 = vld [vmem:[%s360 + $0x70] sm:$0xff]
        %v436 = vld [vmem:[%s360 + $0x78] sm:$0xff]
        %v437 = vld [vmem:[%s360 + $0x80] sm:$0xff]
        %v438 = vld [vmem:[%s360 + $0x88] sm:$0xff]
        %v439 = vld [vmem:[%s360 + $0x90] sm:$0xff]
        %v440 = vld [vmem:[%s360 + $0x98] sm:$0xff]
        %v441 = vld [vmem:[%s360 + $0xa0] sm:$0xff]
        %v442 = vld [vmem:[%s360 + $0xa8] sm:$0xff]
        %v443 = vld [vmem:[%s360 + $0xb0] sm:$0xff]
        %v444 = vld [vmem:[%s360 + $0xb8] sm:$0xff]
        %v445 = vld [vmem:[%s360 + $0xc0] sm:$0xff]
        %v446 = vld [vmem:[%s360 + $0xc8] sm:$0xff]
        %v447 = vld [vmem:[%s360 + $0xd0] sm:$0xff]
        %v448 = vld [vmem:[%s360 + $0xd8] sm:$0xff]
        %v449 = vld [vmem:[%s360 + $0xe0] sm:$0xff]
        %v450 = vld [vmem:[%s360 + $0xe8] sm:$0xff]
        %v451 = vld [vmem:[%s360 + $0xf0] sm:$0xff]
        %v452 = vld [vmem:[%s360 + $0xf8] sm:$0xff]
        %v453 = vld [vmem:[#allocation5] sm:$0xff]
        %v454 = vld [vmem:[#allocation5 + $0x8] sm:$0xff]
        %v455 = vld [vmem:[#allocation5 + $0x10] sm:$0xff]
        %v456 = vld [vmem:[#allocation5 + $0x18] sm:$0xff]
        %v457 = vld [vmem:[#allocation5 + $0x20] sm:$0xff]
        %v458 = vld [vmem:[#allocation5 + $0x28] sm:$0xff]
        %v459 = vld [vmem:[#allocation5 + $0x30] sm:$0xff]
        %v460 = vld [vmem:[#allocation5 + $0x38] sm:$0xff]
        %v461 = vld [vmem:[%s2] sm:$0x1]
        %v463 = vperm.slane %v461, 0
        %vm465 = vcmask 523264
        %v467 = vsel %vm465, %v421, 0
        %v470 = vsel %vm465, %v422, 0
        %v473 = vsel %vm465, %v423, 0
        %v476 = vsel %vm465, %v424, 0
        %v479 = vsel %vm465, %v425, 0
        %v482 = vsel %vm465, %v426, 0
        %v485 = vsel %vm465, %v427, 0
        %v488 = vsel %vm465, %v428, 0
        %v491 = vsel %vm465, %v429, 0
        %v494 = vsel %vm465, %v430, 0
        %v497 = vsel %vm465, %v431, 0
        %v500 = vsel %vm465, %v432, 0
        %v503 = vsel %vm465, %v433, 0
        %v506 = vsel %vm465, %v434, 0
        %v509 = vsel %vm465, %v435, 0
        %v512 = vsel %vm465, %v436, 0
        %v515 = vsel %vm465, %v437, 0
        %v518 = vsel %vm465, %v438, 0
        %v521 = vsel %vm465, %v439, 0
        %v524 = vsel %vm465, %v440, 0
        %v527 = vsel %vm465, %v441, 0
        %v530 = vsel %vm465, %v442, 0
        %v533 = vsel %vm465, %v443, 0
        %v536 = vsel %vm465, %v444, 0
        %v539 = vsel %vm465, %v445, 0
        %v542 = vsel %vm465, %v446, 0
        %v545 = vsel %vm465, %v447, 0
        %v548 = vsel %vm465, %v448, 0
        %v551 = vsel %vm465, %v449, 0
        %v554 = vsel %vm465, %v450, 0
        %v557 = vsel %vm465, %v451, 0
        %v560 = vsel %vm465, %v452, 0
        %562 = vmatpush.msra.mxu0 0.0
        %563 = vmatpush.msra.mxu0 0.0
        %564 = vmatpush.msra.mxu0 0.0
        %565 = vmatpush.msra.mxu0 0.0
        %566 = vmatpush.msra.mxu0 0.0
        %567 = vmatpush.msra.mxu0 0.0
        %568 = vmatpush.msra.mxu0 0.0
        %569 = vmatpush.msra.mxu0 0.0
        %570 = vmatpush.msra.mxu0 %v460
        %571 = vmatpush.msra.mxu0 %v459
        %572 = vmatpush.msra.mxu0 %v458
        %573 = vmatpush.msra.mxu0 %v457
        %574 = vmatpush.msra.mxu0 %v456
        %575 = vmatpush.msra.mxu0 %v455
        %576 = vmatpush.msra.mxu0 %v454
        %577 = vmatpush.msra.mxu0 %v453
        %578 = vmatmul.f32.gmra.mxu0 %v467
        %v579 = vpop.f32.mrf.mxu0
        %v580 = vadd.f32 %v463, %v579
        %581 = vmatmul.f32.gmra.mxu0 %v470
        %v582 = vpop.f32.mrf.mxu0
        %v583 = vadd.f32 %v463, %v582
        %584 = vmatmul.f32.gmra.mxu0 %v473
        %v585 = vpop.f32.mrf.mxu0
        %v586 = vadd.f32 %v463, %v585
        %587 = vmatmul.f32.gmra.mxu0 %v476
        %v588 = vpop.f32.mrf.mxu0
        %v589 = vadd.f32 %v463, %v588
        %590 = vmatmul.f32.gmra.mxu0 %v479
        %v591 = vpop.f32.mrf.mxu0
        %v592 = vadd.f32 %v463, %v591
        %593 = vmatmul.f32.gmra.mxu0 %v482
        %v594 = vpop.f32.mrf.mxu0
        %v595 = vadd.f32 %v463, %v594
        %596 = vmatmul.f32.gmra.mxu0 %v485
        %v597 = vpop.f32.mrf.mxu0
        %v598 = vadd.f32 %v463, %v597
        %599 = vmatmul.f32.gmra.mxu0 %v488
        %v600 = vpop.f32.mrf.mxu0
        %v601 = vadd.f32 %v463, %v600
        %602 = vmatmul.f32.gmra.mxu0 %v491
        %v603 = vpop.f32.mrf.mxu0
        %v604 = vadd.f32 %v463, %v603
        %605 = vmatmul.f32.gmra.mxu0 %v494
        %v606 = vpop.f32.mrf.mxu0
        %v607 = vadd.f32 %v463, %v606
        %608 = vmatmul.f32.gmra.mxu0 %v497
        %v609 = vpop.f32.mrf.mxu0
        %v610 = vadd.f32 %v463, %v609
        %611 = vmatmul.f32.gmra.mxu0 %v500
        %v612 = vpop.f32.mrf.mxu0
        %v613 = vadd.f32 %v463, %v612
        %614 = vmatmul.f32.gmra.mxu0 %v503
        %v615 = vpop.f32.mrf.mxu0
        %v616 = vadd.f32 %v463, %v615
        %617 = vmatmul.f32.gmra.mxu0 %v506
        %v618 = vpop.f32.mrf.mxu0
        %v619 = vadd.f32 %v463, %v618
        %620 = vmatmul.f32.gmra.mxu0 %v509
        %v621 = vpop.f32.mrf.mxu0
        %v622 = vadd.f32 %v463, %v621
        %623 = vmatmul.f32.gmra.mxu0 %v512
        %v624 = vpop.f32.mrf.mxu0
        %v625 = vadd.f32 %v463, %v624
        %626 = vmatmul.f32.gmra.mxu0 %v515
        %v627 = vpop.f32.mrf.mxu0
        %v628 = vadd.f32 %v463, %v627
        %629 = vmatmul.f32.gmra.mxu0 %v518
        %v630 = vpop.f32.mrf.mxu0
        %v631 = vadd.f32 %v463, %v630
        %632 = vmatmul.f32.gmra.mxu0 %v521
        %v633 = vpop.f32.mrf.mxu0
        %v634 = vadd.f32 %v463, %v633
        %635 = vmatmul.f32.gmra.mxu0 %v524
        %v636 = vpop.f32.mrf.mxu0
        %v637 = vadd.f32 %v463, %v636
        %638 = vmatmul.f32.gmra.mxu0 %v527
        %v639 = vpop.f32.mrf.mxu0
        %v640 = vadd.f32 %v463, %v639
        %641 = vmatmul.f32.gmra.mxu0 %v530
        %v642 = vpop.f32.mrf.mxu0
        %v643 = vadd.f32 %v463, %v642
        %644 = vmatmul.f32.gmra.mxu0 %v533
        %v645 = vpop.f32.mrf.mxu0
        %v646 = vadd.f32 %v463, %v645
        %647 = vmatmul.f32.gmra.mxu0 %v536
        %v648 = vpop.f32.mrf.mxu0
        %v649 = vadd.f32 %v463, %v648
        %650 = vmatmul.f32.gmra.mxu0 %v539
        %v651 = vpop.f32.mrf.mxu0
        %v652 = vadd.f32 %v463, %v651
        %653 = vmatmul.f32.gmra.mxu0 %v542
        %v654 = vpop.f32.mrf.mxu0
        %v655 = vadd.f32 %v463, %v654
        %656 = vmatmul.f32.gmra.mxu0 %v545
        %v657 = vpop.f32.mrf.mxu0
        %v658 = vadd.f32 %v463, %v657
        %659 = vmatmul.f32.gmra.mxu0 %v548
        %v660 = vpop.f32.mrf.mxu0
        %v661 = vadd.f32 %v463, %v660
        %662 = vmatmul.f32.gmra.mxu0 %v551
        %v663 = vpop.f32.mrf.mxu0
        %v664 = vadd.f32 %v463, %v663
        %665 = vmatmul.f32.gmra.mxu0 %v554
        %v666 = vpop.f32.mrf.mxu0
        %v667 = vadd.f32 %v463, %v666
        %668 = vmatmul.f32.gmra.mxu0 %v557
        %v669 = vpop.f32.mrf.mxu0
        %v670 = vadd.f32 %v463, %v669
        %671 = vmatmul.f32.gmra.mxu0 %v560
        %v672 = vpop.f32.mrf.mxu0
        %v673 = vadd.f32 %v463, %v672
        %674 = vdwg.mxu0
        %v675 = vmax.f32 %v580, 0.0
        %v676 = vmax.f32 %v583, 0.0
        %v677 = vmax.f32 %v586, 0.0
        %v678 = vmax.f32 %v589, 0.0
        %v679 = vmax.f32 %v592, 0.0
        %v680 = vmax.f32 %v595, 0.0
        %v681 = vmax.f32 %v598, 0.0
        %v682 = vmax.f32 %v601, 0.0
        %v683 = vmax.f32 %v604, 0.0
        %v684 = vmax.f32 %v607, 0.0
        %v685 = vmax.f32 %v610, 0.0
        %v686 = vmax.f32 %v613, 0.0
        %v687 = vmax.f32 %v616, 0.0
        %v688 = vmax.f32 %v619, 0.0
        %v689 = vmax.f32 %v622, 0.0
        %v690 = vmax.f32 %v625, 0.0
        %v691 = vmax.f32 %v628, 0.0
        %v692 = vmax.f32 %v631, 0.0
        %v693 = vmax.f32 %v634, 0.0
        %v694 = vmax.f32 %v637, 0.0
        %v695 = vmax.f32 %v640, 0.0
        %v696 = vmax.f32 %v643, 0.0
        %v697 = vmax.f32 %v646, 0.0
        %v698 = vmax.f32 %v649, 0.0
        %v699 = vmax.f32 %v652, 0.0
        %v700 = vmax.f32 %v655, 0.0
        %v701 = vmax.f32 %v658, 0.0
        %v702 = vmax.f32 %v661, 0.0
        %v703 = vmax.f32 %v664, 0.0
        %v704 = vmax.f32 %v667, 0.0
        %v705 = vmax.f32 %v670, 0.0
        %v706 = vmax.f32 %v673, 0.0
        %vm707 = vcmask 261120
        %708 = vst.msk [vmem:[#allocation2] sm:$0xff] %vm707, 0.0
        %709 = vst.msk [vmem:[#allocation2 + $0x20] sm:$0xff] %vm707, 0.0
        %710 = vst.msk [vmem:[#allocation2 + $0x40] sm:$0xff] %vm707, 0.0
        %711 = vst.msk [vmem:[#allocation2 + $0x60] sm:$0xff] %vm707, 0.0
        %712 = vst.msk [vmem:[#allocation2 + $0x80] sm:$0xff] %vm707, 0.0
        %713 = vst.msk [vmem:[#allocation2 + $0xa0] sm:$0xff] %vm707, 0.0
        %714 = vst.msk [vmem:[#allocation2 + $0xc0] sm:$0xff] %vm707, 0.0
        %715 = vst.msk [vmem:[#allocation2 + $0xe0] sm:$0xff] %vm707, 0.0
        %716 = vst.msk [vmem:[#allocation2 + $0x100] sm:$0xff] %vm707, 0.0
        %717 = vst.msk [vmem:[#allocation2 + $0x120] sm:$0xff] %vm707, 0.0
        %718 = vst.msk [vmem:[#allocation2 + $0x140] sm:$0xff] %vm707, 0.0
        %719 = vst.msk [vmem:[#allocation2 + $0x160] sm:$0xff] %vm707, 0.0
        %720 = vst.msk [vmem:[#allocation2 + $0x180] sm:$0xff] %vm707, 0.0
        %721 = vst.msk [vmem:[#allocation2 + $0x1a0] sm:$0xff] %vm707, 0.0
        %722 = vst.msk [vmem:[#allocation2 + $0x1c0] sm:$0xff] %vm707, 0.0
        %723 = vst.msk [vmem:[#allocation2 + $0x1e0] sm:$0xff] %vm707, 0.0
        %724 = vst.msk [vmem:[#allocation2 + $0x200] sm:$0xff] %vm707, 0.0
        %725 = vst.msk [vmem:[#allocation2 + $0x220] sm:$0xff] %vm707, 0.0
        %726 = vst.msk [vmem:[#allocation2 + $0x18] sm:$0xff] %vm707, 0.0
        %727 = vst.msk [vmem:[#allocation2 + $0x38] sm:$0xff] %vm707, 0.0
        %728 = vst.msk [vmem:[#allocation2 + $0x58] sm:$0xff] %vm707, 0.0
        %729 = vst.msk [vmem:[#allocation2 + $0x78] sm:$0xff] %vm707, 0.0
        %730 = vst.msk [vmem:[#allocation2 + $0x98] sm:$0xff] %vm707, 0.0
        %731 = vst.msk [vmem:[#allocation2 + $0xb8] sm:$0xff] %vm707, 0.0
        %732 = vst.msk [vmem:[#allocation2 + $0xd8] sm:$0xff] %vm707, 0.0
        %733 = vst.msk [vmem:[#allocation2 + $0xf8] sm:$0xff] %vm707, 0.0
        %734 = vst.msk [vmem:[#allocation2 + $0x118] sm:$0xff] %vm707, 0.0
        %735 = vst.msk [vmem:[#allocation2 + $0x138] sm:$0xff] %vm707, 0.0
        %736 = vst.msk [vmem:[#allocation2 + $0x158] sm:$0xff] %vm707, 0.0
        %737 = vst.msk [vmem:[#allocation2 + $0x178] sm:$0xff] %vm707, 0.0
        %738 = vst.msk [vmem:[#allocation2 + $0x198] sm:$0xff] %vm707, 0.0
        %739 = vst.msk [vmem:[#allocation2 + $0x1b8] sm:$0xff] %vm707, 0.0
        %740 = vst.msk [vmem:[#allocation2 + $0x1d8] sm:$0xff] %vm707, 0.0
        %741 = vst.msk [vmem:[#allocation2 + $0x1f8] sm:$0xff] %vm707, 0.0
        %742 = vst.msk [vmem:[#allocation2 + $0x218] sm:$0xff] %vm707, 0.0
        %743 = vst.msk [vmem:[#allocation2 + $0x238] sm:$0xff] %vm707, 0.0
        %744 = vst.msk [vmem:[#allocation2 + $0x8] sm:$0xff] %vm707, 0.0
        %745 = vst.msk [vmem:[#allocation2 + $0x10] sm:$0xff] %vm707, 0.0
        %s746 = scalar_lea.vmem [#allocation2], 544
        %747 = vst.msk [vmem:[%s746 + $0x8] sm:$0xff] %vm707, 0.0
        %748 = vst.msk [vmem:[%s746 + $0x10] sm:$0xff] %vm707, 0.0
        %s749 = scalar_lea.vmem [#allocation2], 32
        %750 = vst.msk [vmem:[%s749 + $0x8] sm:$0xff] %vm707, %v675
        %751 = vst.msk [vmem:[%s749 + $0x10] sm:$0xff] %vm707, %v676
        %752 = vst.msk [vmem:[%s749 + $0x28] sm:$0xff] %vm707, %v677
        %753 = vst.msk [vmem:[%s749 + $0x30] sm:$0xff] %vm707, %v678
        %754 = vst.msk [vmem:[%s749 + $0x48] sm:$0xff] %vm707, %v679
        %755 = vst.msk [vmem:[%s749 + $0x50] sm:$0xff] %vm707, %v680
        %756 = vst.msk [vmem:[%s749 + $0x68] sm:$0xff] %vm707, %v681
        %757 = vst.msk [vmem:[%s749 + $0x70] sm:$0xff] %vm707, %v682
        %758 = vst.msk [vmem:[%s749 + $0x88] sm:$0xff] %vm707, %v683
        %759 = vst.msk [vmem:[%s749 + $0x90] sm:$0xff] %vm707, %v684
        %760 = vst.msk [vmem:[%s749 + $0xa8] sm:$0xff] %vm707, %v685
        %761 = vst.msk [vmem:[%s749 + $0xb0] sm:$0xff] %vm707, %v686
        %762 = vst.msk [vmem:[%s749 + $0xc8] sm:$0xff] %vm707, %v687
        %763 = vst.msk [vmem:[%s749 + $0xd0] sm:$0xff] %vm707, %v688
        %764 = vst.msk [vmem:[%s749 + $0xe8] sm:$0xff] %vm707, %v689
        %765 = vst.msk [vmem:[%s749 + $0xf0] sm:$0xff] %vm707, %v690
        %766 = vst.msk [vmem:[%s749 + $0x108] sm:$0xff] %vm707, %v691
        %767 = vst.msk [vmem:[%s749 + $0x110] sm:$0xff] %vm707, %v692
        %768 = vst.msk [vmem:[%s749 + $0x128] sm:$0xff] %vm707, %v693
        %769 = vst.msk [vmem:[%s749 + $0x130] sm:$0xff] %vm707, %v694
        %770 = vst.msk [vmem:[%s749 + $0x148] sm:$0xff] %vm707, %v695
        %771 = vst.msk [vmem:[%s749 + $0x150] sm:$0xff] %vm707, %v696
        %772 = vst.msk [vmem:[%s749 + $0x168] sm:$0xff] %vm707, %v697
        %773 = vst.msk [vmem:[%s749 + $0x170] sm:$0xff] %vm707, %v698
        %774 = vst.msk [vmem:[%s749 + $0x188] sm:$0xff] %vm707, %v699
        %775 = vst.msk [vmem:[%s749 + $0x190] sm:$0xff] %vm707, %v700
        %776 = vst.msk [vmem:[%s749 + $0x1a8] sm:$0xff] %vm707, %v701
        %777 = vst.msk [vmem:[%s749 + $0x1b0] sm:$0xff] %vm707, %v702
        %778 = vst.msk [vmem:[%s749 + $0x1c8] sm:$0xff] %vm707, %v703
        %779 = vst.msk [vmem:[%s749 + $0x1d0] sm:$0xff] %vm707, %v704
        %780 = vst.msk [vmem:[%s749 + $0x1e8] sm:$0xff] %vm707, %v705
        %781 = vst.msk [vmem:[%s749 + $0x1f0] sm:$0xff] %vm707, %v706
        %v782 = vld [vmem:[#allocation2 + $0x7] sm:$0xff]
        %v783 = vld [vmem:[#allocation2 + $0xf] sm:$0xff]
        %v784 = vld [vmem:[#allocation2 + $0x27] sm:$0xff]
        %v785 = vld [vmem:[#allocation2 + $0x2f] sm:$0xff]
        %v786 = vld [vmem:[#allocation2 + $0x47] sm:$0xff]
        %v787 = vld [vmem:[#allocation2 + $0x4f] sm:$0xff]
        %v788 = vld [vmem:[#allocation2 + $0x67] sm:$0xff]
        %v789 = vld [vmem:[#allocation2 + $0x6f] sm:$0xff]
        %v790 = vld [vmem:[#allocation2 + $0x87] sm:$0xff]
        %v791 = vld [vmem:[#allocation2 + $0x8f] sm:$0xff]
        %v792 = vld [vmem:[#allocation2 + $0xa7] sm:$0xff]
        %v793 = vld [vmem:[#allocation2 + $0xaf] sm:$0xff]
        %v794 = vld [vmem:[#allocation2 + $0xc7] sm:$0xff]
        %v795 = vld [vmem:[#allocation2 + $0xcf] sm:$0xff]
        %v796 = vld [vmem:[#allocation2 + $0xe7] sm:$0xff]
        %v797 = vld [vmem:[#allocation2 + $0xef] sm:$0xff]
        %v798 = vld [vmem:[#allocation2 + $0x107] sm:$0xff]
        %v799 = vld [vmem:[#allocation2 + $0x10f] sm:$0xff]
        %v800 = vld [vmem:[#allocation2 + $0x127] sm:$0xff]
        %v801 = vld [vmem:[#allocation2 + $0x12f] sm:$0xff]
        %v802 = vld [vmem:[#allocation2 + $0x147] sm:$0xff]
        %v803 = vld [vmem:[#allocation2 + $0x14f] sm:$0xff]
        %v804 = vld [vmem:[#allocation2 + $0x167] sm:$0xff]
        %v805 = vld [vmem:[#allocation2 + $0x16f] sm:$0xff]
        %v806 = vld [vmem:[#allocation2 + $0x187] sm:$0xff]
        %v807 = vld [vmem:[#allocation2 + $0x18f] sm:$0xff]
        %v808 = vld [vmem:[#allocation2 + $0x1a7] sm:$0xff]
        %v809 = vld [vmem:[#allocation2 + $0x1af] sm:$0xff]
        %v810 = vld [vmem:[#allocation2 + $0x1c7] sm:$0xff]
        %v811 = vld [vmem:[#allocation2 + $0x1cf] sm:$0xff]
        %v812 = vld [vmem:[#allocation2 + $0x1e7] sm:$0xff]
        %v813 = vld [vmem:[#allocation2 + $0x1ef] sm:$0xff]
        %v814 = vld [vmem:[#allocation7] sm:$0xff]
        %v815 = vld [vmem:[#allocation7 + $0x8] sm:$0xff]
        %v816 = vld [vmem:[#allocation7 + $0x10] sm:$0xff]
        %v817 = vld [vmem:[#allocation7 + $0x18] sm:$0xff]
        %v818 = vld [vmem:[#allocation2 + $0x8] sm:$0xff]
        %v819 = vld [vmem:[#allocation2 + $0x10] sm:$0xff]
        %v820 = vld [vmem:[#allocation2 + $0x28] sm:$0xff]
        %v821 = vld [vmem:[#allocation2 + $0x30] sm:$0xff]
        %v822 = vld [vmem:[#allocation2 + $0x48] sm:$0xff]
        %v823 = vld [vmem:[#allocation2 + $0x50] sm:$0xff]
        %v824 = vld [vmem:[#allocation2 + $0x68] sm:$0xff]
        %v825 = vld [vmem:[#allocation2 + $0x70] sm:$0xff]
        %v826 = vld [vmem:[#allocation2 + $0x88] sm:$0xff]
        %v827 = vld [vmem:[#allocation2 + $0x90] sm:$0xff]
        %v828 = vld [vmem:[#allocation2 + $0xa8] sm:$0xff]
        %v829 = vld [vmem:[#allocation2 + $0xb0] sm:$0xff]
        %v830 = vld [vmem:[#allocation2 + $0xc8] sm:$0xff]
        %v831 = vld [vmem:[#allocation2 + $0xd0] sm:$0xff]
        %v832 = vld [vmem:[#allocation2 + $0xe8] sm:$0xff]
        %v833 = vld [vmem:[#allocation2 + $0xf0] sm:$0xff]
        %v834 = vld [vmem:[#allocation2 + $0x108] sm:$0xff]
        %v835 = vld [vmem:[#allocation2 + $0x110] sm:$0xff]
        %v836 = vld [vmem:[#allocation2 + $0x128] sm:$0xff]
        %v837 = vld [vmem:[#allocation2 + $0x130] sm:$0xff]
        %v838 = vld [vmem:[#allocation2 + $0x148] sm:$0xff]
        %v839 = vld [vmem:[#allocation2 + $0x150] sm:$0xff]
        %v840 = vld [vmem:[#allocation2 + $0x168] sm:$0xff]
        %v841 = vld [vmem:[#allocation2 + $0x170] sm:$0xff]
        %v842 = vld [vmem:[#allocation2 + $0x188] sm:$0xff]
        %v843 = vld [vmem:[#allocation2 + $0x190] sm:$0xff]
        %v844 = vld [vmem:[#allocation2 + $0x1a8] sm:$0xff]
        %v845 = vld [vmem:[#allocation2 + $0x1b0] sm:$0xff]
        %v846 = vld [vmem:[#allocation2 + $0x1c8] sm:$0xff]
        %v847 = vld [vmem:[#allocation2 + $0x1d0] sm:$0xff]
        %v848 = vld [vmem:[#allocation2 + $0x1e8] sm:$0xff]
        %v849 = vld [vmem:[#allocation2 + $0x1f0] sm:$0xff]
        %s850 = scalar_lea.vmem [#allocation7], 32
        %v851 = vld [vmem:[%s850] sm:$0xff]
        %v852 = vld [vmem:[%s850 + $0x8] sm:$0xff]
        %v853 = vld [vmem:[%s850 + $0x10] sm:$0xff]
        %v854 = vld [vmem:[%s850 + $0x18] sm:$0xff]
        %v856 = vsel %vm707, %v818, 0
        %v859 = vsel %vm707, %v819, 0
        %v862 = vsel %vm707, %v820, 0
        %v865 = vsel %vm707, %v821, 0
        %v868 = vsel %vm707, %v822, 0
        %v871 = vsel %vm707, %v823, 0
        %v874 = vsel %vm707, %v824, 0
        %v877 = vsel %vm707, %v825, 0
        %v880 = vsel %vm707, %v826, 0
        %v883 = vsel %vm707, %v827, 0
        %v886 = vsel %vm707, %v828, 0
        %v889 = vsel %vm707, %v829, 0
        %v892 = vsel %vm707, %v830, 0
        %v895 = vsel %vm707, %v831, 0
        %v898 = vsel %vm707, %v832, 0
        %v901 = vsel %vm707, %v833, 0
        %v904 = vsel %vm707, %v834, 0
        %v907 = vsel %vm707, %v835, 0
        %v910 = vsel %vm707, %v836, 0
        %v913 = vsel %vm707, %v837, 0
        %v916 = vsel %vm707, %v838, 0
        %v919 = vsel %vm707, %v839, 0
        %v922 = vsel %vm707, %v840, 0
        %v925 = vsel %vm707, %v841, 0
        %v928 = vsel %vm707, %v842, 0
        %v931 = vsel %vm707, %v843, 0
        %v934 = vsel %vm707, %v844, 0
        %v937 = vsel %vm707, %v845, 0
        %v940 = vsel %vm707, %v846, 0
        %v943 = vsel %vm707, %v847, 0
        %v946 = vsel %vm707, %v848, 0
        %v949 = vsel %vm707, %v849, 0
        %951 = vmatpush.msra.mxu0 0.0
        %952 = vmatpush.msra.mxu0 0.0
        %953 = vmatpush.msra.mxu0 0.0
        %954 = vmatpush.msra.mxu0 0.0
        %955 = vmatpush.msra.mxu0 0.0
        %956 = vmatpush.msra.mxu0 0.0
        %957 = vmatpush.msra.mxu0 0.0
        %958 = vmatpush.msra.mxu0 0.0
        %959 = vmatpush.msra.mxu0 0.0
        %960 = vmatpush.msra.mxu0 0.0
        %961 = vmatpush.msra.mxu0 0.0
        %962 = vmatpush.msra.mxu0 0.0
        %963 = vmatpush.msra.mxu0 %v854
        %964 = vmatpush.msra.mxu0 %v853
        %965 = vmatpush.msra.mxu0 %v852
        %966 = vmatpush.msra.mxu0 %v851
        %967 = vmatmul.f32.gmra.mxu0 %v856
        %v968 = vpop.f32.mrf.mxu0
        %v969 = vadd.f32 0.0, %v968
        %970 = vmatmul.f32.gmra.mxu0 %v859
        %v971 = vpop.f32.mrf.mxu0
        %v972 = vadd.f32 0.0, %v971
        %973 = vmatmul.f32.gmra.mxu0 %v862
        %v974 = vpop.f32.mrf.mxu0
        %v975 = vadd.f32 0.0, %v974
        %976 = vmatmul.f32.gmra.mxu0 %v865
        %v977 = vpop.f32.mrf.mxu0
        %v978 = vadd.f32 0.0, %v977
        %979 = vmatmul.f32.gmra.mxu0 %v868
        %v980 = vpop.f32.mrf.mxu0
        %v981 = vadd.f32 0.0, %v980
        %982 = vmatmul.f32.gmra.mxu0 %v871
        %v983 = vpop.f32.mrf.mxu0
        %v984 = vadd.f32 0.0, %v983
        %985 = vmatmul.f32.gmra.mxu0 %v874
        %v986 = vpop.f32.mrf.mxu0
        %v987 = vadd.f32 0.0, %v986
        %988 = vmatmul.f32.gmra.mxu0 %v877
        %v989 = vpop.f32.mrf.mxu0
        %v990 = vadd.f32 0.0, %v989
        %991 = vmatmul.f32.gmra.mxu0 %v880
        %v992 = vpop.f32.mrf.mxu0
        %v993 = vadd.f32 0.0, %v992
        %994 = vmatmul.f32.gmra.mxu0 %v883
        %v995 = vpop.f32.mrf.mxu0
        %v996 = vadd.f32 0.0, %v995
        %997 = vmatmul.f32.gmra.mxu0 %v886
        %v998 = vpop.f32.mrf.mxu0
        %v999 = vadd.f32 0.0, %v998
        %1000 = vmatmul.f32.gmra.mxu0 %v889
        %v1001 = vpop.f32.mrf.mxu0
        %v1002 = vadd.f32 0.0, %v1001
        %1003 = vmatmul.f32.gmra.mxu0 %v892
        %v1004 = vpop.f32.mrf.mxu0
        %v1005 = vadd.f32 0.0, %v1004
        %1006 = vmatmul.f32.gmra.mxu0 %v895
        %v1007 = vpop.f32.mrf.mxu0
        %v1008 = vadd.f32 0.0, %v1007
        %1009 = vmatmul.f32.gmra.mxu0 %v898
        %v1010 = vpop.f32.mrf.mxu0
        %v1011 = vadd.f32 0.0, %v1010
        %1012 = vmatmul.f32.gmra.mxu0 %v901
        %v1013 = vpop.f32.mrf.mxu0
        %v1014 = vadd.f32 0.0, %v1013
        %1015 = vmatmul.f32.gmra.mxu0 %v904
        %v1016 = vpop.f32.mrf.mxu0
        %v1017 = vadd.f32 0.0, %v1016
        %1018 = vmatmul.f32.gmra.mxu0 %v907
        %v1019 = vpop.f32.mrf.mxu0
        %v1020 = vadd.f32 0.0, %v1019
        %1021 = vmatmul.f32.gmra.mxu0 %v910
        %v1022 = vpop.f32.mrf.mxu0
        %v1023 = vadd.f32 0.0, %v1022
        %1024 = vmatmul.f32.gmra.mxu0 %v913
        %v1025 = vpop.f32.mrf.mxu0
        %v1026 = vadd.f32 0.0, %v1025
        %1027 = vmatmul.f32.gmra.mxu0 %v916
        %v1028 = vpop.f32.mrf.mxu0
        %v1029 = vadd.f32 0.0, %v1028
        %1030 = vmatmul.f32.gmra.mxu0 %v919
        %v1031 = vpop.f32.mrf.mxu0
        %v1032 = vadd.f32 0.0, %v1031
        %1033 = vmatmul.f32.gmra.mxu0 %v922
        %v1034 = vpop.f32.mrf.mxu0
        %v1035 = vadd.f32 0.0, %v1034
        %1036 = vmatmul.f32.gmra.mxu0 %v925
        %v1037 = vpop.f32.mrf.mxu0
        %v1038 = vadd.f32 0.0, %v1037
        %1039 = vmatmul.f32.gmra.mxu0 %v928
        %v1040 = vpop.f32.mrf.mxu0
        %v1041 = vadd.f32 0.0, %v1040
        %1042 = vmatmul.f32.gmra.mxu0 %v931
        %v1043 = vpop.f32.mrf.mxu0
        %v1044 = vadd.f32 0.0, %v1043
        %1045 = vmatmul.f32.gmra.mxu0 %v934
        %v1046 = vpop.f32.mrf.mxu0
        %v1047 = vadd.f32 0.0, %v1046
        %1048 = vmatmul.f32.gmra.mxu0 %v937
        %v1049 = vpop.f32.mrf.mxu0
        %v1050 = vadd.f32 0.0, %v1049
        %1051 = vmatmul.f32.gmra.mxu0 %v940
        %v1052 = vpop.f32.mrf.mxu0
        %v1053 = vadd.f32 0.0, %v1052
        %1054 = vmatmul.f32.gmra.mxu0 %v943
        %v1055 = vpop.f32.mrf.mxu0
        %v1056 = vadd.f32 0.0, %v1055
        %1057 = vmatmul.f32.gmra.mxu0 %v946
        %v1058 = vpop.f32.mrf.mxu0
        %v1059 = vadd.f32 0.0, %v1058
        %1060 = vmatmul.f32.gmra.mxu0 %v949
        %v1061 = vpop.f32.mrf.mxu0
        %v1062 = vadd.f32 0.0, %v1061
        %1063 = vdwg.mxu0
        %v1065 = vsel %vm707, %v782, 0
        %v1068 = vsel %vm707, %v783, 0
        %v1071 = vsel %vm707, %v784, 0
        %v1074 = vsel %vm707, %v785, 0
        %v1077 = vsel %vm707, %v786, 0
        %v1080 = vsel %vm707, %v787, 0
        %v1083 = vsel %vm707, %v788, 0
        %v1086 = vsel %vm707, %v789, 0
        %v1089 = vsel %vm707, %v790, 0
        %v1092 = vsel %vm707, %v791, 0
        %v1095 = vsel %vm707, %v792, 0
        %v1098 = vsel %vm707, %v793, 0
        %v1101 = vsel %vm707, %v794, 0
        %v1104 = vsel %vm707, %v795, 0
        %v1107 = vsel %vm707, %v796, 0
        %v1110 = vsel %vm707, %v797, 0
        %v1113 = vsel %vm707, %v798, 0
        %v1116 = vsel %vm707, %v799, 0
        %v1119 = vsel %vm707, %v800, 0
        %v1122 = vsel %vm707, %v801, 0
        %v1125 = vsel %vm707, %v802, 0
        %v1128 = vsel %vm707, %v803, 0
        %v1131 = vsel %vm707, %v804, 0
        %v1134 = vsel %vm707, %v805, 0
        %v1137 = vsel %vm707, %v806, 0
        %v1140 = vsel %vm707, %v807, 0
        %v1143 = vsel %vm707, %v808, 0
        %v1146 = vsel %vm707, %v809, 0
        %v1149 = vsel %vm707, %v810, 0
        %v1152 = vsel %vm707, %v811, 0
        %v1155 = vsel %vm707, %v812, 0
        %v1158 = vsel %vm707, %v813, 0
        %1160 = vmatpush.msra.mxu0 0.0
        %1161 = vmatpush.msra.mxu0 0.0
        %1162 = vmatpush.msra.mxu0 0.0
        %1163 = vmatpush.msra.mxu0 0.0
        %1164 = vmatpush.msra.mxu0 0.0
        %1165 = vmatpush.msra.mxu0 0.0
        %1166 = vmatpush.msra.mxu0 0.0
        %1167 = vmatpush.msra.mxu0 0.0
        %1168 = vmatpush.msra.mxu0 0.0
        %1169 = vmatpush.msra.mxu0 0.0
        %1170 = vmatpush.msra.mxu0 0.0
        %1171 = vmatpush.msra.mxu0 0.0
        %1172 = vmatpush.msra.mxu0 %v817
        %1173 = vmatpush.msra.mxu0 %v816
        %1174 = vmatpush.msra.mxu0 %v815
        %1175 = vmatpush.msra.mxu0 %v814
        %1176 = vmatmul.f32.gmra.mxu0 %v1065
        %v1177 = vpop.f32.mrf.mxu0
        %v1178 = vadd.f32 %v969, %v1177
        %1179 = vmatmul.f32.gmra.mxu0 %v1068
        %v1180 = vpop.f32.mrf.mxu0
        %v1181 = vadd.f32 %v972, %v1180
        %1182 = vmatmul.f32.gmra.mxu0 %v1071
        %v1183 = vpop.f32.mrf.mxu0
        %v1184 = vadd.f32 %v975, %v1183
        %1185 = vmatmul.f32.gmra.mxu0 %v1074
        %v1186 = vpop.f32.mrf.mxu0
        %v1187 = vadd.f32 %v978, %v1186
        %1188 = vmatmul.f32.gmra.mxu0 %v1077
        %v1189 = vpop.f32.mrf.mxu0
        %v1190 = vadd.f32 %v981, %v1189
        %1191 = vmatmul.f32.gmra.mxu0 %v1080
        %v1192 = vpop.f32.mrf.mxu0
        %v1193 = vadd.f32 %v984, %v1192
        %1194 = vmatmul.f32.gmra.mxu0 %v1083
        %v1195 = vpop.f32.mrf.mxu0
        %v1196 = vadd.f32 %v987, %v1195
        %1197 = vmatmul.f32.gmra.mxu0 %v1086
        %v1198 = vpop.f32.mrf.mxu0
        %v1199 = vadd.f32 %v990, %v1198
        %1200 = vmatmul.f32.gmra.mxu0 %v1089
        %v1201 = vpop.f32.mrf.mxu0
        %v1202 = vadd.f32 %v993, %v1201
        %1203 = vmatmul.f32.gmra.mxu0 %v1092
        %v1204 = vpop.f32.mrf.mxu0
        %v1205 = vadd.f32 %v996, %v1204
        %1206 = vmatmul.f32.gmra.mxu0 %v1095
        %v1207 = vpop.f32.mrf.mxu0
        %v1208 = vadd.f32 %v999, %v1207
        %1209 = vmatmul.f32.gmra.mxu0 %v1098
        %v1210 = vpop.f32.mrf.mxu0
        %v1211 = vadd.f32 %v1002, %v1210
        %1212 = vmatmul.f32.gmra.mxu0 %v1101
        %v1213 = vpop.f32.mrf.mxu0
        %v1214 = vadd.f32 %v1005, %v1213
        %1215 = vmatmul.f32.gmra.mxu0 %v1104
        %v1216 = vpop.f32.mrf.mxu0
        %v1217 = vadd.f32 %v1008, %v1216
        %1218 = vmatmul.f32.gmra.mxu0 %v1107
        %v1219 = vpop.f32.mrf.mxu0
        %v1220 = vadd.f32 %v1011, %v1219
        %1221 = vmatmul.f32.gmra.mxu0 %v1110
        %v1222 = vpop.f32.mrf.mxu0
        %v1223 = vadd.f32 %v1014, %v1222
        %1224 = vmatmul.f32.gmra.mxu0 %v1113
        %v1225 = vpop.f32.mrf.mxu0
        %v1226 = vadd.f32 %v1017, %v1225
        %1227 = vmatmul.f32.gmra.mxu0 %v1116
        %v1228 = vpop.f32.mrf.mxu0
        %v1229 = vadd.f32 %v1020, %v1228
        %1230 = vmatmul.f32.gmra.mxu0 %v1119
        %v1231 = vpop.f32.mrf.mxu0
        %v1232 = vadd.f32 %v1023, %v1231
        %1233 = vmatmul.f32.gmra.mxu0 %v1122
        %v1234 = vpop.f32.mrf.mxu0
        %v1235 = vadd.f32 %v1026, %v1234
        %1236 = vmatmul.f32.gmra.mxu0 %v1125
        %v1237 = vpop.f32.mrf.mxu0
        %v1238 = vadd.f32 %v1029, %v1237
        %1239 = vmatmul.f32.gmra.mxu0 %v1128
        %v1240 = vpop.f32.mrf.mxu0
        %v1241 = vadd.f32 %v1032, %v1240
        %1242 = vmatmul.f32.gmra.mxu0 %v1131
        %v1243 = vpop.f32.mrf.mxu0
        %v1244 = vadd.f32 %v1035, %v1243
        %1245 = vmatmul.f32.gmra.mxu0 %v1134
        %v1246 = vpop.f32.mrf.mxu0
        %v1247 = vadd.f32 %v1038, %v1246
        %1248 = vmatmul.f32.gmra.mxu0 %v1137
        %v1249 = vpop.f32.mrf.mxu0
        %v1250 = vadd.f32 %v1041, %v1249
        %1251 = vmatmul.f32.gmra.mxu0 %v1140
        %v1252 = vpop.f32.mrf.mxu0
        %v1253 = vadd.f32 %v1044, %v1252
        %1254 = vmatmul.f32.gmra.mxu0 %v1143
        %v1255 = vpop.f32.mrf.mxu0
        %v1256 = vadd.f32 %v1047, %v1255
        %1257 = vmatmul.f32.gmra.mxu0 %v1146
        %v1258 = vpop.f32.mrf.mxu0
        %v1259 = vadd.f32 %v1050, %v1258
        %1260 = vmatmul.f32.gmra.mxu0 %v1149
        %v1261 = vpop.f32.mrf.mxu0
        %v1262 = vadd.f32 %v1053, %v1261
        %1263 = vmatmul.f32.gmra.mxu0 %v1152
        %v1264 = vpop.f32.mrf.mxu0
        %v1265 = vadd.f32 %v1056, %v1264
        %1266 = vmatmul.f32.gmra.mxu0 %v1155
        %v1267 = vpop.f32.mrf.mxu0
        %v1268 = vadd.f32 %v1059, %v1267
        %1269 = vmatmul.f32.gmra.mxu0 %v1158
        %v1270 = vpop.f32.mrf.mxu0
        %v1271 = vadd.f32 %v1062, %v1270
        %1272 = vdwg.mxu0
        %v1273 = vld [vmem:[#allocation2 + $0x9] sm:$0xff]
        %v1274 = vld [vmem:[#allocation2 + $0x11] sm:$0xff]
        %v1275 = vld [vmem:[#allocation2 + $0x29] sm:$0xff]
        %v1276 = vld [vmem:[#allocation2 + $0x31] sm:$0xff]
        %v1277 = vld [vmem:[#allocation2 + $0x49] sm:$0xff]
        %v1278 = vld [vmem:[#allocation2 + $0x51] sm:$0xff]
        %v1279 = vld [vmem:[#allocation2 + $0x69] sm:$0xff]
        %v1280 = vld [vmem:[#allocation2 + $0x71] sm:$0xff]
        %v1281 = vld [vmem:[#allocation2 + $0x89] sm:$0xff]
        %v1282 = vld [vmem:[#allocation2 + $0x91] sm:$0xff]
        %v1283 = vld [vmem:[#allocation2 + $0xa9] sm:$0xff]
        %v1284 = vld [vmem:[#allocation2 + $0xb1] sm:$0xff]
        %v1285 = vld [vmem:[#allocation2 + $0xc9] sm:$0xff]
        %v1286 = vld [vmem:[#allocation2 + $0xd1] sm:$0xff]
        %v1287 = vld [vmem:[#allocation2 + $0xe9] sm:$0xff]
        %v1288 = vld [vmem:[#allocation2 + $0xf1] sm:$0xff]
        %v1289 = vld [vmem:[#allocation2 + $0x109] sm:$0xff]
        %v1290 = vld [vmem:[#allocation2 + $0x111] sm:$0xff]
        %v1291 = vld [vmem:[#allocation2 + $0x129] sm:$0xff]
        %v1292 = vld [vmem:[#allocation2 + $0x131] sm:$0xff]
        %v1293 = vld [vmem:[#allocation2 + $0x149] sm:$0xff]
        %v1294 = vld [vmem:[#allocation2 + $0x151] sm:$0xff]
        %v1295 = vld [vmem:[#allocation2 + $0x169] sm:$0xff]
        %v1296 = vld [vmem:[#allocation2 + $0x171] sm:$0xff]
        %v1297 = vld [vmem:[#allocation2 + $0x189] sm:$0xff]
        %v1298 = vld [vmem:[#allocation2 + $0x191] sm:$0xff]
        %v1299 = vld [vmem:[#allocation2 + $0x1a9] sm:$0xff]
        %v1300 = vld [vmem:[#allocation2 + $0x1b1] sm:$0xff]
        %v1301 = vld [vmem:[#allocation2 + $0x1c9] sm:$0xff]
        %v1302 = vld [vmem:[#allocation2 + $0x1d1] sm:$0xff]
        %v1303 = vld [vmem:[#allocation2 + $0x1e9] sm:$0xff]
        %v1304 = vld [vmem:[#allocation2 + $0x1f1] sm:$0xff]
        %s1305 = scalar_lea.vmem [#allocation7], 64
        %v1306 = vld [vmem:[%s1305] sm:$0xff]
        %v1307 = vld [vmem:[%s1305 + $0x8] sm:$0xff]
        %v1308 = vld [vmem:[%s1305 + $0x10] sm:$0xff]
        %v1309 = vld [vmem:[%s1305 + $0x18] sm:$0xff]
        %v1311 = vsel %vm707, %v1273, 0
        %v1314 = vsel %vm707, %v1274, 0
        %v1317 = vsel %vm707, %v1275, 0
        %v1320 = vsel %vm707, %v1276, 0
        %v1323 = vsel %vm707, %v1277, 0
        %v1326 = vsel %vm707, %v1278, 0
        %v1329 = vsel %vm707, %v1279, 0
        %v1332 = vsel %vm707, %v1280, 0
        %v1335 = vsel %vm707, %v1281, 0
        %v1338 = vsel %vm707, %v1282, 0
        %v1341 = vsel %vm707, %v1283, 0
        %v1344 = vsel %vm707, %v1284, 0
        %v1347 = vsel %vm707, %v1285, 0
        %v1350 = vsel %vm707, %v1286, 0
        %v1353 = vsel %vm707, %v1287, 0
        %v1356 = vsel %vm707, %v1288, 0
        %v1359 = vsel %vm707, %v1289, 0
        %v1362 = vsel %vm707, %v1290, 0
        %v1365 = vsel %vm707, %v1291, 0
        %v1368 = vsel %vm707, %v1292, 0
        %v1371 = vsel %vm707, %v1293, 0
        %v1374 = vsel %vm707, %v1294, 0
        %v1377 = vsel %vm707, %v1295, 0
        %v1380 = vsel %vm707, %v1296, 0
        %v1383 = vsel %vm707, %v1297, 0
        %v1386 = vsel %vm707, %v1298, 0
        %v1389 = vsel %vm707, %v1299, 0
        %v1392 = vsel %vm707, %v1300, 0
        %v1395 = vsel %vm707, %v1301, 0
        %v1398 = vsel %vm707, %v1302, 0
        %v1401 = vsel %vm707, %v1303, 0
        %v1404 = vsel %vm707, %v1304, 0
        %1406 = vmatpush.msra.mxu0 0.0
        %1407 = vmatpush.msra.mxu0 0.0
        %1408 = vmatpush.msra.mxu0 0.0
        %1409 = vmatpush.msra.mxu0 0.0
        %1410 = vmatpush.msra.mxu0 0.0
        %1411 = vmatpush.msra.mxu0 0.0
        %1412 = vmatpush.msra.mxu0 0.0
        %1413 = vmatpush.msra.mxu0 0.0
        %1414 = vmatpush.msra.mxu0 0.0
        %1415 = vmatpush.msra.mxu0 0.0
        %1416 = vmatpush.msra.mxu0 0.0
        %1417 = vmatpush.msra.mxu0 0.0
        %1418 = vmatpush.msra.mxu0 %v1309
        %1419 = vmatpush.msra.mxu0 %v1308
        %1420 = vmatpush.msra.mxu0 %v1307
        %1421 = vmatpush.msra.mxu0 %v1306
        %1422 = vmatmul.f32.gmra.mxu0 %v1311
        %v1423 = vpop.f32.mrf.mxu0
        %v1424 = vadd.f32 0.0, %v1423
        %1425 = vmatmul.f32.gmra.mxu0 %v1314
        %v1426 = vpop.f32.mrf.mxu0
        %v1427 = vadd.f32 0.0, %v1426
        %1428 = vmatmul.f32.gmra.mxu0 %v1317
        %v1429 = vpop.f32.mrf.mxu0
        %v1430 = vadd.f32 0.0, %v1429
        %1431 = vmatmul.f32.gmra.mxu0 %v1320
        %v1432 = vpop.f32.mrf.mxu0
        %v1433 = vadd.f32 0.0, %v1432
        %1434 = vmatmul.f32.gmra.mxu0 %v1323
        %v1435 = vpop.f32.mrf.mxu0
        %v1436 = vadd.f32 0.0, %v1435
        %1437 = vmatmul.f32.gmra.mxu0 %v1326
        %v1438 = vpop.f32.mrf.mxu0
        %v1439 = vadd.f32 0.0, %v1438
        %1440 = vmatmul.f32.gmra.mxu0 %v1329
        %v1441 = vpop.f32.mrf.mxu0
        %v1442 = vadd.f32 0.0, %v1441
        %1443 = vmatmul.f32.gmra.mxu0 %v1332
        %v1444 = vpop.f32.mrf.mxu0
        %v1445 = vadd.f32 0.0, %v1444
        %1446 = vmatmul.f32.gmra.mxu0 %v1335
        %v1447 = vpop.f32.mrf.mxu0
        %v1448 = vadd.f32 0.0, %v1447
        %1449 = vmatmul.f32.gmra.mxu0 %v1338
        %v1450 = vpop.f32.mrf.mxu0
        %v1451 = vadd.f32 0.0, %v1450
        %1452 = vmatmul.f32.gmra.mxu0 %v1341
        %v1453 = vpop.f32.mrf.mxu0
        %v1454 = vadd.f32 0.0, %v1453
        %1455 = vmatmul.f32.gmra.mxu0 %v1344
        %v1456 = vpop.f32.mrf.mxu0
        %v1457 = vadd.f32 0.0, %v1456
        %1458 = vmatmul.f32.gmra.mxu0 %v1347
        %v1459 = vpop.f32.mrf.mxu0
        %v1460 = vadd.f32 0.0, %v1459
        %1461 = vmatmul.f32.gmra.mxu0 %v1350
        %v1462 = vpop.f32.mrf.mxu0
        %v1463 = vadd.f32 0.0, %v1462
        %1464 = vmatmul.f32.gmra.mxu0 %v1353
        %v1465 = vpop.f32.mrf.mxu0
        %v1466 = vadd.f32 0.0, %v1465
        %1467 = vmatmul.f32.gmra.mxu0 %v1356
        %v1468 = vpop.f32.mrf.mxu0
        %v1469 = vadd.f32 0.0, %v1468
        %1470 = vmatmul.f32.gmra.mxu0 %v1359
        %v1471 = vpop.f32.mrf.mxu0
        %v1472 = vadd.f32 0.0, %v1471
        %1473 = vmatmul.f32.gmra.mxu0 %v1362
        %v1474 = vpop.f32.mrf.mxu0
        %v1475 = vadd.f32 0.0, %v1474
        %1476 = vmatmul.f32.gmra.mxu0 %v1365
        %v1477 = vpop.f32.mrf.mxu0
        %v1478 = vadd.f32 0.0, %v1477
        %1479 = vmatmul.f32.gmra.mxu0 %v1368
        %v1480 = vpop.f32.mrf.mxu0
        %v1481 = vadd.f32 0.0, %v1480
        %1482 = vmatmul.f32.gmra.mxu0 %v1371
        %v1483 = vpop.f32.mrf.mxu0
        %v1484 = vadd.f32 0.0, %v1483
        %1485 = vmatmul.f32.gmra.mxu0 %v1374
        %v1486 = vpop.f32.mrf.mxu0
        %v1487 = vadd.f32 0.0, %v1486
        %1488 = vmatmul.f32.gmra.mxu0 %v1377
        %v1489 = vpop.f32.mrf.mxu0
        %v1490 = vadd.f32 0.0, %v1489
        %1491 = vmatmul.f32.gmra.mxu0 %v1380
        %v1492 = vpop.f32.mrf.mxu0
        %v1493 = vadd.f32 0.0, %v1492
        %1494 = vmatmul.f32.gmra.mxu0 %v1383
        %v1495 = vpop.f32.mrf.mxu0
        %v1496 = vadd.f32 0.0, %v1495
        %1497 = vmatmul.f32.gmra.mxu0 %v1386
        %v1498 = vpop.f32.mrf.mxu0
        %v1499 = vadd.f32 0.0, %v1498
        %1500 = vmatmul.f32.gmra.mxu0 %v1389
        %v1501 = vpop.f32.mrf.mxu0
        %v1502 = vadd.f32 0.0, %v1501
        %1503 = vmatmul.f32.gmra.mxu0 %v1392
        %v1504 = vpop.f32.mrf.mxu0
        %v1505 = vadd.f32 0.0, %v1504
        %1506 = vmatmul.f32.gmra.mxu0 %v1395
        %v1507 = vpop.f32.mrf.mxu0
        %v1508 = vadd.f32 0.0, %v1507
        %1509 = vmatmul.f32.gmra.mxu0 %v1398
        %v1510 = vpop.f32.mrf.mxu0
        %v1511 = vadd.f32 0.0, %v1510
        %1512 = vmatmul.f32.gmra.mxu0 %v1401
        %v1513 = vpop.f32.mrf.mxu0
        %v1514 = vadd.f32 0.0, %v1513
        %1515 = vmatmul.f32.gmra.mxu0 %v1404
        %v1516 = vpop.f32.mrf.mxu0
        %v1517 = vadd.f32 0.0, %v1516
        %1518 = vdwg.mxu0
        %v1519 = vadd.f32 %v1178, %v1424
        %v1520 = vadd.f32 %v1181, %v1427
        %v1521 = vadd.f32 %v1184, %v1430
        %v1522 = vadd.f32 %v1187, %v1433
        %v1523 = vadd.f32 %v1190, %v1436
        %v1524 = vadd.f32 %v1193, %v1439
        %v1525 = vadd.f32 %v1196, %v1442
        %v1526 = vadd.f32 %v1199, %v1445
        %v1527 = vadd.f32 %v1202, %v1448
        %v1528 = vadd.f32 %v1205, %v1451
        %v1529 = vadd.f32 %v1208, %v1454
        %v1530 = vadd.f32 %v1211, %v1457
        %v1531 = vadd.f32 %v1214, %v1460
        %v1532 = vadd.f32 %v1217, %v1463
        %v1533 = vadd.f32 %v1220, %v1466
        %v1534 = vadd.f32 %v1223, %v1469
        %v1535 = vadd.f32 %v1226, %v1472
        %v1536 = vadd.f32 %v1229, %v1475
        %v1537 = vadd.f32 %v1232, %v1478
        %v1538 = vadd.f32 %v1235, %v1481
        %v1539 = vadd.f32 %v1238, %v1484
        %v1540 = vadd.f32 %v1241, %v1487
        %v1541 = vadd.f32 %v1244, %v1490
        %v1542 = vadd.f32 %v1247, %v1493
        %v1543 = vadd.f32 %v1250, %v1496
        %v1544 = vadd.f32 %v1253, %v1499
        %v1545 = vadd.f32 %v1256, %v1502
        %v1546 = vadd.f32 %v1259, %v1505
        %v1547 = vadd.f32 %v1262, %v1508
        %v1548 = vadd.f32 %v1265, %v1511
        %v1549 = vadd.f32 %v1268, %v1514
        %v1550 = vadd.f32 %v1271, %v1517
        %v1551 = vld [vmem:[%s749 + $0x7] sm:$0xff]
        %v1552 = vld [vmem:[%s749 + $0xf] sm:$0xff]
        %v1553 = vld [vmem:[%s749 + $0x27] sm:$0xff]
        %v1554 = vld [vmem:[%s749 + $0x2f] sm:$0xff]
        %v1555 = vld [vmem:[%s749 + $0x47] sm:$0xff]
        %v1556 = vld [vmem:[%s749 + $0x4f] sm:$0xff]
        %v1557 = vld [vmem:[%s749 + $0x67] sm:$0xff]
        %v1558 = vld [vmem:[%s749 + $0x6f] sm:$0xff]
        %v1559 = vld [vmem:[%s749 + $0x87] sm:$0xff]
        %v1560 = vld [vmem:[%s749 + $0x8f] sm:$0xff]
        %v1561 = vld [vmem:[%s749 + $0xa7] sm:$0xff]
        %v1562 = vld [vmem:[%s749 + $0xaf] sm:$0xff]
        %v1563 = vld [vmem:[%s749 + $0xc7] sm:$0xff]
        %v1564 = vld [vmem:[%s749 + $0xcf] sm:$0xff]
        %v1565 = vld [vmem:[%s749 + $0xe7] sm:$0xff]
        %v1566 = vld [vmem:[%s749 + $0xef] sm:$0xff]
        %v1567 = vld [vmem:[%s749 + $0x107] sm:$0xff]
        %v1568 = vld [vmem:[%s749 + $0x10f] sm:$0xff]
        %v1569 = vld [vmem:[%s749 + $0x127] sm:$0xff]
        %v1570 = vld [vmem:[%s749 + $0x12f] sm:$0xff]
        %v1571 = vld [vmem:[%s749 + $0x147] sm:$0xff]
        %v1572 = vld [vmem:[%s749 + $0x14f] sm:$0xff]
        %v1573 = vld [vmem:[%s749 + $0x167] sm:$0xff]
        %v1574 = vld [vmem:[%s749 + $0x16f] sm:$0xff]
        %v1575 = vld [vmem:[%s749 + $0x187] sm:$0xff]
        %v1576 = vld [vmem:[%s749 + $0x18f] sm:$0xff]
        %v1577 = vld [vmem:[%s749 + $0x1a7] sm:$0xff]
        %v1578 = vld [vmem:[%s749 + $0x1af] sm:$0xff]
        %v1579 = vld [vmem:[%s749 + $0x1c7] sm:$0xff]
        %v1580 = vld [vmem:[%s749 + $0x1cf] sm:$0xff]
        %v1581 = vld [vmem:[%s749 + $0x1e7] sm:$0xff]
        %v1582 = vld [vmem:[%s749 + $0x1ef] sm:$0xff]
        %s1583 = scalar_lea.vmem [#allocation7], 96
        %v1584 = vld [vmem:[%s1583] sm:$0xff]
        %v1585 = vld [vmem:[%s1583 + $0x8] sm:$0xff]
        %v1586 = vld [vmem:[%s1583 + $0x10] sm:$0xff]
        %v1587 = vld [vmem:[%s1583 + $0x18] sm:$0xff]
        %v1589 = vsel %vm707, %v1551, 0
        %v1592 = vsel %vm707, %v1552, 0
        %v1595 = vsel %vm707, %v1553, 0
        %v1598 = vsel %vm707, %v1554, 0
        %v1601 = vsel %vm707, %v1555, 0
        %v1604 = vsel %vm707, %v1556, 0
        %v1607 = vsel %vm707, %v1557, 0
        %v1610 = vsel %vm707, %v1558, 0
        %v1613 = vsel %vm707, %v1559, 0
        %v1616 = vsel %vm707, %v1560, 0
        %v1619 = vsel %vm707, %v1561, 0
        %v1622 = vsel %vm707, %v1562, 0
        %v1625 = vsel %vm707, %v1563, 0
        %v1628 = vsel %vm707, %v1564, 0
        %v1631 = vsel %vm707, %v1565, 0
        %v1634 = vsel %vm707, %v1566, 0
        %v1637 = vsel %vm707, %v1567, 0
        %v1640 = vsel %vm707, %v1568, 0
        %v1643 = vsel %vm707, %v1569, 0
        %v1646 = vsel %vm707, %v1570, 0
        %v1649 = vsel %vm707, %v1571, 0
        %v1652 = vsel %vm707, %v1572, 0
        %v1655 = vsel %vm707, %v1573, 0
        %v1658 = vsel %vm707, %v1574, 0
        %v1661 = vsel %vm707, %v1575, 0
        %v1664 = vsel %vm707, %v1576, 0
        %v1667 = vsel %vm707, %v1577, 0
        %v1670 = vsel %vm707, %v1578, 0
        %v1673 = vsel %vm707, %v1579, 0
        %v1676 = vsel %vm707, %v1580, 0
        %v1679 = vsel %vm707, %v1581, 0
        %v1682 = vsel %vm707, %v1582, 0
        %1684 = vmatpush.msra.mxu0 0.0
        %1685 = vmatpush.msra.mxu0 0.0
        %1686 = vmatpush.msra.mxu0 0.0
        %1687 = vmatpush.msra.mxu0 0.0
        %1688 = vmatpush.msra.mxu0 0.0
        %1689 = vmatpush.msra.mxu0 0.0
        %1690 = vmatpush.msra.mxu0 0.0
        %1691 = vmatpush.msra.mxu0 0.0
        %1692 = vmatpush.msra.mxu0 0.0
        %1693 = vmatpush.msra.mxu0 0.0
        %1694 = vmatpush.msra.mxu0 0.0
        %1695 = vmatpush.msra.mxu0 0.0
        %1696 = vmatpush.msra.mxu0 %v1587
        %1697 = vmatpush.msra.mxu0 %v1586
        %1698 = vmatpush.msra.mxu0 %v1585
        %1699 = vmatpush.msra.mxu0 %v1584
        %1700 = vmatmul.f32.gmra.mxu0 %v1589
        %v1701 = vpop.f32.mrf.mxu0
        %v1702 = vadd.f32 0.0, %v1701
        %1703 = vmatmul.f32.gmra.mxu0 %v1592
        %v1704 = vpop.f32.mrf.mxu0
        %v1705 = vadd.f32 0.0, %v1704
        %1706 = vmatmul.f32.gmra.mxu0 %v1595
        %v1707 = vpop.f32.mrf.mxu0
        %v1708 = vadd.f32 0.0, %v1707
        %1709 = vmatmul.f32.gmra.mxu0 %v1598
        %v1710 = vpop.f32.mrf.mxu0
        %v1711 = vadd.f32 0.0, %v1710
        %1712 = vmatmul.f32.gmra.mxu0 %v1601
        %v1713 = vpop.f32.mrf.mxu0
        %v1714 = vadd.f32 0.0, %v1713
        %1715 = vmatmul.f32.gmra.mxu0 %v1604
        %v1716 = vpop.f32.mrf.mxu0
        %v1717 = vadd.f32 0.0, %v1716
        %1718 = vmatmul.f32.gmra.mxu0 %v1607
        %v1719 = vpop.f32.mrf.mxu0
        %v1720 = vadd.f32 0.0, %v1719
        %1721 = vmatmul.f32.gmra.mxu0 %v1610
        %v1722 = vpop.f32.mrf.mxu0
        %v1723 = vadd.f32 0.0, %v1722
        %1724 = vmatmul.f32.gmra.mxu0 %v1613
        %v1725 = vpop.f32.mrf.mxu0
        %v1726 = vadd.f32 0.0, %v1725
        %1727 = vmatmul.f32.gmra.mxu0 %v1616
        %v1728 = vpop.f32.mrf.mxu0
        %v1729 = vadd.f32 0.0, %v1728
        %1730 = vmatmul.f32.gmra.mxu0 %v1619
        %v1731 = vpop.f32.mrf.mxu0
        %v1732 = vadd.f32 0.0, %v1731
        %1733 = vmatmul.f32.gmra.mxu0 %v1622
        %v1734 = vpop.f32.mrf.mxu0
        %v1735 = vadd.f32 0.0, %v1734
        %1736 = vmatmul.f32.gmra.mxu0 %v1625
        %v1737 = vpop.f32.mrf.mxu0
        %v1738 = vadd.f32 0.0, %v1737
        %1739 = vmatmul.f32.gmra.mxu0 %v1628
        %v1740 = vpop.f32.mrf.mxu0
        %v1741 = vadd.f32 0.0, %v1740
        %1742 = vmatmul.f32.gmra.mxu0 %v1631
        %v1743 = vpop.f32.mrf.mxu0
        %v1744 = vadd.f32 0.0, %v1743
        %1745 = vmatmul.f32.gmra.mxu0 %v1634
        %v1746 = vpop.f32.mrf.mxu0
        %v1747 = vadd.f32 0.0, %v1746
        %1748 = vmatmul.f32.gmra.mxu0 %v1637
        %v1749 = vpop.f32.mrf.mxu0
        %v1750 = vadd.f32 0.0, %v1749
        %1751 = vmatmul.f32.gmra.mxu0 %v1640
        %v1752 = vpop.f32.mrf.mxu0
        %v1753 = vadd.f32 0.0, %v1752
        %1754 = vmatmul.f32.gmra.mxu0 %v1643
        %v1755 = vpop.f32.mrf.mxu0
        %v1756 = vadd.f32 0.0, %v1755
        %1757 = vmatmul.f32.gmra.mxu0 %v1646
        %v1758 = vpop.f32.mrf.mxu0
        %v1759 = vadd.f32 0.0, %v1758
        %1760 = vmatmul.f32.gmra.mxu0 %v1649
        %v1761 = vpop.f32.mrf.mxu0
        %v1762 = vadd.f32 0.0, %v1761
        %1763 = vmatmul.f32.gmra.mxu0 %v1652
        %v1764 = vpop.f32.mrf.mxu0
        %v1765 = vadd.f32 0.0, %v1764
        %1766 = vmatmul.f32.gmra.mxu0 %v1655
        %v1767 = vpop.f32.mrf.mxu0
        %v1768 = vadd.f32 0.0, %v1767
        %1769 = vmatmul.f32.gmra.mxu0 %v1658
        %v1770 = vpop.f32.mrf.mxu0
        %v1771 = vadd.f32 0.0, %v1770
        %1772 = vmatmul.f32.gmra.mxu0 %v1661
        %v1773 = vpop.f32.mrf.mxu0
        %v1774 = vadd.f32 0.0, %v1773
        %1775 = vmatmul.f32.gmra.mxu0 %v1664
        %v1776 = vpop.f32.mrf.mxu0
        %v1777 = vadd.f32 0.0, %v1776
        %1778 = vmatmul.f32.gmra.mxu0 %v1667
        %v1779 = vpop.f32.mrf.mxu0
        %v1780 = vadd.f32 0.0, %v1779
        %1781 = vmatmul.f32.gmra.mxu0 %v1670
        %v1782 = vpop.f32.mrf.mxu0
        %v1783 = vadd.f32 0.0, %v1782
        %1784 = vmatmul.f32.gmra.mxu0 %v1673
        %v1785 = vpop.f32.mrf.mxu0
        %v1786 = vadd.f32 0.0, %v1785
        %1787 = vmatmul.f32.gmra.mxu0 %v1676
        %v1788 = vpop.f32.mrf.mxu0
        %v1789 = vadd.f32 0.0, %v1788
        %1790 = vmatmul.f32.gmra.mxu0 %v1679
        %v1791 = vpop.f32.mrf.mxu0
        %v1792 = vadd.f32 0.0, %v1791
        %1793 = vmatmul.f32.gmra.mxu0 %v1682
        %v1794 = vpop.f32.mrf.mxu0
        %v1795 = vadd.f32 0.0, %v1794
        %1796 = vdwg.mxu0
        %v1797 = vadd.f32 %v1519, %v1702
        %v1798 = vadd.f32 %v1520, %v1705
        %v1799 = vadd.f32 %v1521, %v1708
        %v1800 = vadd.f32 %v1522, %v1711
        %v1801 = vadd.f32 %v1523, %v1714
        %v1802 = vadd.f32 %v1524, %v1717
        %v1803 = vadd.f32 %v1525, %v1720
        %v1804 = vadd.f32 %v1526, %v1723
        %v1805 = vadd.f32 %v1527, %v1726
        %v1806 = vadd.f32 %v1528, %v1729
        %v1807 = vadd.f32 %v1529, %v1732
        %v1808 = vadd.f32 %v1530, %v1735
        %v1809 = vadd.f32 %v1531, %v1738
        %v1810 = vadd.f32 %v1532, %v1741
        %v1811 = vadd.f32 %v1533, %v1744
        %v1812 = vadd.f32 %v1534, %v1747
        %v1813 = vadd.f32 %v1535, %v1750
        %v1814 = vadd.f32 %v1536, %v1753
        %v1815 = vadd.f32 %v1537, %v1756
        %v1816 = vadd.f32 %v1538, %v1759
        %v1817 = vadd.f32 %v1539, %v1762
        %v1818 = vadd.f32 %v1540, %v1765
        %v1819 = vadd.f32 %v1541, %v1768
        %v1820 = vadd.f32 %v1542, %v1771
        %v1821 = vadd.f32 %v1543, %v1774
        %v1822 = vadd.f32 %v1544, %v1777
        %v1823 = vadd.f32 %v1545, %v1780
        %v1824 = vadd.f32 %v1546, %v1783
        %v1825 = vadd.f32 %v1547, %v1786
        %v1826 = vadd.f32 %v1548, %v1789
        %v1827 = vadd.f32 %v1549, %v1792
        %v1828 = vadd.f32 %v1550, %v1795
        %v1829 = vld [vmem:[%s749 + $0x8] sm:$0xff]
        %v1830 = vld [vmem:[%s749 + $0x10] sm:$0xff]
        %v1831 = vld [vmem:[%s749 + $0x28] sm:$0xff]
        %v1832 = vld [vmem:[%s749 + $0x30] sm:$0xff]
        %v1833 = vld [vmem:[%s749 + $0x48] sm:$0xff]
        %v1834 = vld [vmem:[%s749 + $0x50] sm:$0xff]
        %v1835 = vld [vmem:[%s749 + $0x68] sm:$0xff]
        %v1836 = vld [vmem:[%s749 + $0x70] sm:$0xff]
        %v1837 = vld [vmem:[%s749 + $0x88] sm:$0xff]
        %v1838 = vld [vmem:[%s749 + $0x90] sm:$0xff]
        %v1839 = vld [vmem:[%s749 + $0xa8] sm:$0xff]
        %v1840 = vld [vmem:[%s749 + $0xb0] sm:$0xff]
        %v1841 = vld [vmem:[%s749 + $0xc8] sm:$0xff]
        %v1842 = vld [vmem:[%s749 + $0xd0] sm:$0xff]
        %v1843 = vld [vmem:[%s749 + $0xe8] sm:$0xff]
        %v1844 = vld [vmem:[%s749 + $0xf0] sm:$0xff]
        %v1845 = vld [vmem:[%s749 + $0x108] sm:$0xff]
        %v1846 = vld [vmem:[%s749 + $0x110] sm:$0xff]
        %v1847 = vld [vmem:[%s749 + $0x128] sm:$0xff]
        %v1848 = vld [vmem:[%s749 + $0x130] sm:$0xff]
        %v1849 = vld [vmem:[%s749 + $0x148] sm:$0xff]
        %v1850 = vld [vmem:[%s749 + $0x150] sm:$0xff]
        %v1851 = vld [vmem:[%s749 + $0x168] sm:$0xff]
        %v1852 = vld [vmem:[%s749 + $0x170] sm:$0xff]
        %v1853 = vld [vmem:[%s749 + $0x188] sm:$0xff]
        %v1854 = vld [vmem:[%s749 + $0x190] sm:$0xff]
        %v1855 = vld [vmem:[%s749 + $0x1a8] sm:$0xff]
        %v1856 = vld [vmem:[%s749 + $0x1b0] sm:$0xff]
        %v1857 = vld [vmem:[%s749 + $0x1c8] sm:$0xff]
        %v1858 = vld [vmem:[%s749 + $0x1d0] sm:$0xff]
        %v1859 = vld [vmem:[%s749 + $0x1e8] sm:$0xff]
        %v1860 = vld [vmem:[%s749 + $0x1f0] sm:$0xff]
        %s1861 = scalar_lea.vmem [#allocation7], 128
        %v1862 = vld [vmem:[%s1861] sm:$0xff]
        %v1863 = vld [vmem:[%s1861 + $0x8] sm:$0xff]
        %v1864 = vld [vmem:[%s1861 + $0x10] sm:$0xff]
        %v1865 = vld [vmem:[%s1861 + $0x18] sm:$0xff]
        %v1867 = vsel %vm707, %v1829, 0
        %v1870 = vsel %vm707, %v1830, 0
        %v1873 = vsel %vm707, %v1831, 0
        %v1876 = vsel %vm707, %v1832, 0
        %v1879 = vsel %vm707, %v1833, 0
        %v1882 = vsel %vm707, %v1834, 0
        %v1885 = vsel %vm707, %v1835, 0
        %v1888 = vsel %vm707, %v1836, 0
        %v1891 = vsel %vm707, %v1837, 0
        %v1894 = vsel %vm707, %v1838, 0
        %v1897 = vsel %vm707, %v1839, 0
        %v1900 = vsel %vm707, %v1840, 0
        %v1903 = vsel %vm707, %v1841, 0
        %v1906 = vsel %vm707, %v1842, 0
        %v1909 = vsel %vm707, %v1843, 0
        %v1912 = vsel %vm707, %v1844, 0
        %v1915 = vsel %vm707, %v1845, 0
        %v1918 = vsel %vm707, %v1846, 0
        %v1921 = vsel %vm707, %v1847, 0
        %v1924 = vsel %vm707, %v1848, 0
        %v1927 = vsel %vm707, %v1849, 0
        %v1930 = vsel %vm707, %v1850, 0
        %v1933 = vsel %vm707, %v1851, 0
        %v1936 = vsel %vm707, %v1852, 0
        %v1939 = vsel %vm707, %v1853, 0
        %v1942 = vsel %vm707, %v1854, 0
        %v1945 = vsel %vm707, %v1855, 0
        %v1948 = vsel %vm707, %v1856, 0
        %v1951 = vsel %vm707, %v1857, 0
        %v1954 = vsel %vm707, %v1858, 0
        %v1957 = vsel %vm707, %v1859, 0
        %v1960 = vsel %vm707, %v1860, 0
        %1962 = vmatpush.msra.mxu0 0.0
        %1963 = vmatpush.msra.mxu0 0.0
        %1964 = vmatpush.msra.mxu0 0.0
        %1965 = vmatpush.msra.mxu0 0.0
        %1966 = vmatpush.msra.mxu0 0.0
        %1967 = vmatpush.msra.mxu0 0.0
        %1968 = vmatpush.msra.mxu0 0.0
        %1969 = vmatpush.msra.mxu0 0.0
        %1970 = vmatpush.msra.mxu0 0.0
        %1971 = vmatpush.msra.mxu0 0.0
        %1972 = vmatpush.msra.mxu0 0.0
        %1973 = vmatpush.msra.mxu0 0.0
        %1974 = vmatpush.msra.mxu0 %v1865
        %1975 = vmatpush.msra.mxu0 %v1864
        %1976 = vmatpush.msra.mxu0 %v1863
        %1977 = vmatpush.msra.mxu0 %v1862
        %1978 = vmatmul.f32.gmra.mxu0 %v1867
        %v1979 = vpop.f32.mrf.mxu0
        %v1980 = vadd.f32 0.0, %v1979
        %1981 = vmatmul.f32.gmra.mxu0 %v1870
        %v1982 = vpop.f32.mrf.mxu0
        %v1983 = vadd.f32 0.0, %v1982
        %1984 = vmatmul.f32.gmra.mxu0 %v1873
        %v1985 = vpop.f32.mrf.mxu0
        %v1986 = vadd.f32 0.0, %v1985
        %1987 = vmatmul.f32.gmra.mxu0 %v1876
        %v1988 = vpop.f32.mrf.mxu0
        %v1989 = vadd.f32 0.0, %v1988
        %1990 = vmatmul.f32.gmra.mxu0 %v1879
        %v1991 = vpop.f32.mrf.mxu0
        %v1992 = vadd.f32 0.0, %v1991
        %1993 = vmatmul.f32.gmra.mxu0 %v1882
        %v1994 = vpop.f32.mrf.mxu0
        %v1995 = vadd.f32 0.0, %v1994
        %1996 = vmatmul.f32.gmra.mxu0 %v1885
        %v1997 = vpop.f32.mrf.mxu0
        %v1998 = vadd.f32 0.0, %v1997
        %1999 = vmatmul.f32.gmra.mxu0 %v1888
        %v2000 = vpop.f32.mrf.mxu0
        %v2001 = vadd.f32 0.0, %v2000
        %2002 = vmatmul.f32.gmra.mxu0 %v1891
        %v2003 = vpop.f32.mrf.mxu0
        %v2004 = vadd.f32 0.0, %v2003
        %2005 = vmatmul.f32.gmra.mxu0 %v1894
        %v2006 = vpop.f32.mrf.mxu0
        %v2007 = vadd.f32 0.0, %v2006
        %2008 = vmatmul.f32.gmra.mxu0 %v1897
        %v2009 = vpop.f32.mrf.mxu0
        %v2010 = vadd.f32 0.0, %v2009
        %2011 = vmatmul.f32.gmra.mxu0 %v1900
        %v2012 = vpop.f32.mrf.mxu0
        %v2013 = vadd.f32 0.0, %v2012
        %2014 = vmatmul.f32.gmra.mxu0 %v1903
        %v2015 = vpop.f32.mrf.mxu0
        %v2016 = vadd.f32 0.0, %v2015
        %2017 = vmatmul.f32.gmra.mxu0 %v1906
        %v2018 = vpop.f32.mrf.mxu0
        %v2019 = vadd.f32 0.0, %v2018
        %2020 = vmatmul.f32.gmra.mxu0 %v1909
        %v2021 = vpop.f32.mrf.mxu0
        %v2022 = vadd.f32 0.0, %v2021
        %2023 = vmatmul.f32.gmra.mxu0 %v1912
        %v2024 = vpop.f32.mrf.mxu0
        %v2025 = vadd.f32 0.0, %v2024
        %2026 = vmatmul.f32.gmra.mxu0 %v1915
        %v2027 = vpop.f32.mrf.mxu0
        %v2028 = vadd.f32 0.0, %v2027
        %2029 = vmatmul.f32.gmra.mxu0 %v1918
        %v2030 = vpop.f32.mrf.mxu0
        %v2031 = vadd.f32 0.0, %v2030
        %2032 = vmatmul.f32.gmra.mxu0 %v1921
        %v2033 = vpop.f32.mrf.mxu0
        %v2034 = vadd.f32 0.0, %v2033
        %2035 = vmatmul.f32.gmra.mxu0 %v1924
        %v2036 = vpop.f32.mrf.mxu0
        %v2037 = vadd.f32 0.0, %v2036
        %2038 = vmatmul.f32.gmra.mxu0 %v1927
        %v2039 = vpop.f32.mrf.mxu0
        %v2040 = vadd.f32 0.0, %v2039
        %2041 = vmatmul.f32.gmra.mxu0 %v1930
        %v2042 = vpop.f32.mrf.mxu0
        %v2043 = vadd.f32 0.0, %v2042
        %2044 = vmatmul.f32.gmra.mxu0 %v1933
        %v2045 = vpop.f32.mrf.mxu0
        %v2046 = vadd.f32 0.0, %v2045
        %2047 = vmatmul.f32.gmra.mxu0 %v1936
        %v2048 = vpop.f32.mrf.mxu0
        %v2049 = vadd.f32 0.0, %v2048
        %2050 = vmatmul.f32.gmra.mxu0 %v1939
        %v2051 = vpop.f32.mrf.mxu0
        %v2052 = vadd.f32 0.0, %v2051
        %2053 = vmatmul.f32.gmra.mxu0 %v1942
        %v2054 = vpop.f32.mrf.mxu0
        %v2055 = vadd.f32 0.0, %v2054
        %2056 = vmatmul.f32.gmra.mxu0 %v1945
        %v2057 = vpop.f32.mrf.mxu0
        %v2058 = vadd.f32 0.0, %v2057
        %2059 = vmatmul.f32.gmra.mxu0 %v1948
        %v2060 = vpop.f32.mrf.mxu0
        %v2061 = vadd.f32 0.0, %v2060
        %2062 = vmatmul.f32.gmra.mxu0 %v1951
        %v2063 = vpop.f32.mrf.mxu0
        %v2064 = vadd.f32 0.0, %v2063
        %2065 = vmatmul.f32.gmra.mxu0 %v1954
        %v2066 = vpop.f32.mrf.mxu0
        %v2067 = vadd.f32 0.0, %v2066
        %2068 = vmatmul.f32.gmra.mxu0 %v1957
        %v2069 = vpop.f32.mrf.mxu0
        %v2070 = vadd.f32 0.0, %v2069
        %2071 = vmatmul.f32.gmra.mxu0 %v1960
        %v2072 = vpop.f32.mrf.mxu0
        %v2073 = vadd.f32 0.0, %v2072
        %2074 = vdwg.mxu0
        %v2075 = vadd.f32 %v1797, %v1980
        %v2076 = vadd.f32 %v1798, %v1983
        %v2077 = vadd.f32 %v1799, %v1986
        %v2078 = vadd.f32 %v1800, %v1989
        %v2079 = vadd.f32 %v1801, %v1992
        %v2080 = vadd.f32 %v1802, %v1995
        %v2081 = vadd.f32 %v1803, %v1998
        %v2082 = vadd.f32 %v1804, %v2001
        %v2083 = vadd.f32 %v1805, %v2004
        %v2084 = vadd.f32 %v1806, %v2007
        %v2085 = vadd.f32 %v1807, %v2010
        %v2086 = vadd.f32 %v1808, %v2013
        %v2087 = vadd.f32 %v1809, %v2016
        %v2088 = vadd.f32 %v1810, %v2019
        %v2089 = vadd.f32 %v1811, %v2022
        %v2090 = vadd.f32 %v1812, %v2025
        %v2091 = vadd.f32 %v1813, %v2028
        %v2092 = vadd.f32 %v1814, %v2031
        %v2093 = vadd.f32 %v1815, %v2034
        %v2094 = vadd.f32 %v1816, %v2037
        %v2095 = vadd.f32 %v1817, %v2040
        %v2096 = vadd.f32 %v1818, %v2043
        %v2097 = vadd.f32 %v1819, %v2046
        %v2098 = vadd.f32 %v1820, %v2049
        %v2099 = vadd.f32 %v1821, %v2052
        %v2100 = vadd.f32 %v1822, %v2055
        %v2101 = vadd.f32 %v1823, %v2058
        %v2102 = vadd.f32 %v1824, %v2061
        %v2103 = vadd.f32 %v1825, %v2064
        %v2104 = vadd.f32 %v1826, %v2067
        %v2105 = vadd.f32 %v1827, %v2070
        %v2106 = vadd.f32 %v1828, %v2073
        %v2107 = vld [vmem:[%s749 + $0x9] sm:$0xff]
        %v2108 = vld [vmem:[%s749 + $0x11] sm:$0xff]
        %v2109 = vld [vmem:[%s749 + $0x29] sm:$0xff]
        %v2110 = vld [vmem:[%s749 + $0x31] sm:$0xff]
        %v2111 = vld [vmem:[%s749 + $0x49] sm:$0xff]
        %v2112 = vld [vmem:[%s749 + $0x51] sm:$0xff]
        %v2113 = vld [vmem:[%s749 + $0x69] sm:$0xff]
        %v2114 = vld [vmem:[%s749 + $0x71] sm:$0xff]
        %v2115 = vld [vmem:[%s749 + $0x89] sm:$0xff]
        %v2116 = vld [vmem:[%s749 + $0x91] sm:$0xff]
        %v2117 = vld [vmem:[%s749 + $0xa9] sm:$0xff]
        %v2118 = vld [vmem:[%s749 + $0xb1] sm:$0xff]
        %v2119 = vld [vmem:[%s749 + $0xc9] sm:$0xff]
        %v2120 = vld [vmem:[%s749 + $0xd1] sm:$0xff]
        %v2121 = vld [vmem:[%s749 + $0xe9] sm:$0xff]
        %v2122 = vld [vmem:[%s749 + $0xf1] sm:$0xff]
        %v2123 = vld [vmem:[%s749 + $0x109] sm:$0xff]
        %v2124 = vld [vmem:[%s749 + $0x111] sm:$0xff]
        %v2125 = vld [vmem:[%s749 + $0x129] sm:$0xff]
        %v2126 = vld [vmem:[%s749 + $0x131] sm:$0xff]
        %v2127 = vld [vmem:[%s749 + $0x149] sm:$0xff]
        %v2128 = vld [vmem:[%s749 + $0x151] sm:$0xff]
        %v2129 = vld [vmem:[%s749 + $0x169] sm:$0xff]
        %v2130 = vld [vmem:[%s749 + $0x171] sm:$0xff]
        %v2131 = vld [vmem:[%s749 + $0x189] sm:$0xff]
        %v2132 = vld [vmem:[%s749 + $0x191] sm:$0xff]
        %v2133 = vld [vmem:[%s749 + $0x1a9] sm:$0xff]
        %v2134 = vld [vmem:[%s749 + $0x1b1] sm:$0xff]
        %v2135 = vld [vmem:[%s749 + $0x1c9] sm:$0xff]
        %v2136 = vld [vmem:[%s749 + $0x1d1] sm:$0xff]
        %v2137 = vld [vmem:[%s749 + $0x1e9] sm:$0xff]
        %v2138 = vld [vmem:[%s749 + $0x1f1] sm:$0xff]
        %s2139 = scalar_lea.vmem [#allocation7], 160
        %v2140 = vld [vmem:[%s2139] sm:$0xff]
        %v2141 = vld [vmem:[%s2139 + $0x8] sm:$0xff]
        %v2142 = vld [vmem:[%s2139 + $0x10] sm:$0xff]
        %v2143 = vld [vmem:[%s2139 + $0x18] sm:$0xff]
        %v2145 = vsel %vm707, %v2107, 0
        %v2148 = vsel %vm707, %v2108, 0
        %v2151 = vsel %vm707, %v2109, 0
        %v2154 = vsel %vm707, %v2110, 0
        %v2157 = vsel %vm707, %v2111, 0
        %v2160 = vsel %vm707, %v2112, 0
        %v2163 = vsel %vm707, %v2113, 0
        %v2166 = vsel %vm707, %v2114, 0
        %v2169 = vsel %vm707, %v2115, 0
        %v2172 = vsel %vm707, %v2116, 0
        %v2175 = vsel %vm707, %v2117, 0
        %v2178 = vsel %vm707, %v2118, 0
        %v2181 = vsel %vm707, %v2119, 0
        %v2184 = vsel %vm707, %v2120, 0
        %v2187 = vsel %vm707, %v2121, 0
        %v2190 = vsel %vm707, %v2122, 0
        %v2193 = vsel %vm707, %v2123, 0
        %v2196 = vsel %vm707, %v2124, 0
        %v2199 = vsel %vm707, %v2125, 0
        %v2202 = vsel %vm707, %v2126, 0
        %v2205 = vsel %vm707, %v2127, 0
        %v2208 = vsel %vm707, %v2128, 0
        %v2211 = vsel %vm707, %v2129, 0
        %v2214 = vsel %vm707, %v2130, 0
        %v2217 = vsel %vm707, %v2131, 0
        %v2220 = vsel %vm707, %v2132, 0
        %v2223 = vsel %vm707, %v2133, 0
        %v2226 = vsel %vm707, %v2134, 0
        %v2229 = vsel %vm707, %v2135, 0
        %v2232 = vsel %vm707, %v2136, 0
        %v2235 = vsel %vm707, %v2137, 0
        %v2238 = vsel %vm707, %v2138, 0
        %2240 = vmatpush.msra.mxu0 0.0
        %2241 = vmatpush.msra.mxu0 0.0
        %2242 = vmatpush.msra.mxu0 0.0
        %2243 = vmatpush.msra.mxu0 0.0
        %2244 = vmatpush.msra.mxu0 0.0
        %2245 = vmatpush.msra.mxu0 0.0
        %2246 = vmatpush.msra.mxu0 0.0
        %2247 = vmatpush.msra.mxu0 0.0
        %2248 = vmatpush.msra.mxu0 0.0
        %2249 = vmatpush.msra.mxu0 0.0
        %2250 = vmatpush.msra.mxu0 0.0
        %2251 = vmatpush.msra.mxu0 0.0
        %2252 = vmatpush.msra.mxu0 %v2143
        %2253 = vmatpush.msra.mxu0 %v2142
        %2254 = vmatpush.msra.mxu0 %v2141
        %2255 = vmatpush.msra.mxu0 %v2140
        %2256 = vmatmul.f32.gmra.mxu0 %v2145
        %v2257 = vpop.f32.mrf.mxu0
        %v2258 = vadd.f32 0.0, %v2257
        %2259 = vmatmul.f32.gmra.mxu0 %v2148
        %v2260 = vpop.f32.mrf.mxu0
        %v2261 = vadd.f32 0.0, %v2260
        %2262 = vmatmul.f32.gmra.mxu0 %v2151
        %v2263 = vpop.f32.mrf.mxu0
        %v2264 = vadd.f32 0.0, %v2263
        %2265 = vmatmul.f32.gmra.mxu0 %v2154
        %v2266 = vpop.f32.mrf.mxu0
        %v2267 = vadd.f32 0.0, %v2266
        %2268 = vmatmul.f32.gmra.mxu0 %v2157
        %v2269 = vpop.f32.mrf.mxu0
        %v2270 = vadd.f32 0.0, %v2269
        %2271 = vmatmul.f32.gmra.mxu0 %v2160
        %v2272 = vpop.f32.mrf.mxu0
        %v2273 = vadd.f32 0.0, %v2272
        %2274 = vmatmul.f32.gmra.mxu0 %v2163
        %v2275 = vpop.f32.mrf.mxu0
        %v2276 = vadd.f32 0.0, %v2275
        %2277 = vmatmul.f32.gmra.mxu0 %v2166
        %v2278 = vpop.f32.mrf.mxu0
        %v2279 = vadd.f32 0.0, %v2278
        %2280 = vmatmul.f32.gmra.mxu0 %v2169
        %v2281 = vpop.f32.mrf.mxu0
        %v2282 = vadd.f32 0.0, %v2281
        %2283 = vmatmul.f32.gmra.mxu0 %v2172
        %v2284 = vpop.f32.mrf.mxu0
        %v2285 = vadd.f32 0.0, %v2284
        %2286 = vmatmul.f32.gmra.mxu0 %v2175
        %v2287 = vpop.f32.mrf.mxu0
        %v2288 = vadd.f32 0.0, %v2287
        %2289 = vmatmul.f32.gmra.mxu0 %v2178
        %v2290 = vpop.f32.mrf.mxu0
        %v2291 = vadd.f32 0.0, %v2290
        %2292 = vmatmul.f32.gmra.mxu0 %v2181
        %v2293 = vpop.f32.mrf.mxu0
        %v2294 = vadd.f32 0.0, %v2293
        %2295 = vmatmul.f32.gmra.mxu0 %v2184
        %v2296 = vpop.f32.mrf.mxu0
        %v2297 = vadd.f32 0.0, %v2296
        %2298 = vmatmul.f32.gmra.mxu0 %v2187
        %v2299 = vpop.f32.mrf.mxu0
        %v2300 = vadd.f32 0.0, %v2299
        %2301 = vmatmul.f32.gmra.mxu0 %v2190
        %v2302 = vpop.f32.mrf.mxu0
        %v2303 = vadd.f32 0.0, %v2302
        %2304 = vmatmul.f32.gmra.mxu0 %v2193
        %v2305 = vpop.f32.mrf.mxu0
        %v2306 = vadd.f32 0.0, %v2305
        %2307 = vmatmul.f32.gmra.mxu0 %v2196
        %v2308 = vpop.f32.mrf.mxu0
        %v2309 = vadd.f32 0.0, %v2308
        %2310 = vmatmul.f32.gmra.mxu0 %v2199
        %v2311 = vpop.f32.mrf.mxu0
        %v2312 = vadd.f32 0.0, %v2311
        %2313 = vmatmul.f32.gmra.mxu0 %v2202
        %v2314 = vpop.f32.mrf.mxu0
        %v2315 = vadd.f32 0.0, %v2314
        %2316 = vmatmul.f32.gmra.mxu0 %v2205
        %v2317 = vpop.f32.mrf.mxu0
        %v2318 = vadd.f32 0.0, %v2317
        %2319 = vmatmul.f32.gmra.mxu0 %v2208
        %v2320 = vpop.f32.mrf.mxu0
        %v2321 = vadd.f32 0.0, %v2320
        %2322 = vmatmul.f32.gmra.mxu0 %v2211
        %v2323 = vpop.f32.mrf.mxu0
        %v2324 = vadd.f32 0.0, %v2323
        %2325 = vmatmul.f32.gmra.mxu0 %v2214
        %v2326 = vpop.f32.mrf.mxu0
        %v2327 = vadd.f32 0.0, %v2326
        %2328 = vmatmul.f32.gmra.mxu0 %v2217
        %v2329 = vpop.f32.mrf.mxu0
        %v2330 = vadd.f32 0.0, %v2329
        %2331 = vmatmul.f32.gmra.mxu0 %v2220
        %v2332 = vpop.f32.mrf.mxu0
        %v2333 = vadd.f32 0.0, %v2332
        %2334 = vmatmul.f32.gmra.mxu0 %v2223
        %v2335 = vpop.f32.mrf.mxu0
        %v2336 = vadd.f32 0.0, %v2335
        %2337 = vmatmul.f32.gmra.mxu0 %v2226
        %v2338 = vpop.f32.mrf.mxu0
        %v2339 = vadd.f32 0.0, %v2338
        %2340 = vmatmul.f32.gmra.mxu0 %v2229
        %v2341 = vpop.f32.mrf.mxu0
        %v2342 = vadd.f32 0.0, %v2341
        %2343 = vmatmul.f32.gmra.mxu0 %v2232
        %v2344 = vpop.f32.mrf.mxu0
        %v2345 = vadd.f32 0.0, %v2344
        %2346 = vmatmul.f32.gmra.mxu0 %v2235
        %v2347 = vpop.f32.mrf.mxu0
        %v2348 = vadd.f32 0.0, %v2347
        %2349 = vmatmul.f32.gmra.mxu0 %v2238
        %v2350 = vpop.f32.mrf.mxu0
        %v2351 = vadd.f32 0.0, %v2350
        %2352 = vdwg.mxu0
        %v2353 = vadd.f32 %v2075, %v2258
        %v2354 = vadd.f32 %v2076, %v2261
        %v2355 = vadd.f32 %v2077, %v2264
        %v2356 = vadd.f32 %v2078, %v2267
        %v2357 = vadd.f32 %v2079, %v2270
        %v2358 = vadd.f32 %v2080, %v2273
        %v2359 = vadd.f32 %v2081, %v2276
        %v2360 = vadd.f32 %v2082, %v2279
        %v2361 = vadd.f32 %v2083, %v2282
        %v2362 = vadd.f32 %v2084, %v2285
        %v2363 = vadd.f32 %v2085, %v2288
        %v2364 = vadd.f32 %v2086, %v2291
        %v2365 = vadd.f32 %v2087, %v2294
        %v2366 = vadd.f32 %v2088, %v2297
        %v2367 = vadd.f32 %v2089, %v2300
        %v2368 = vadd.f32 %v2090, %v2303
        %v2369 = vadd.f32 %v2091, %v2306
        %v2370 = vadd.f32 %v2092, %v2309
        %v2371 = vadd.f32 %v2093, %v2312
        %v2372 = vadd.f32 %v2094, %v2315
        %v2373 = vadd.f32 %v2095, %v2318
        %v2374 = vadd.f32 %v2096, %v2321
        %v2375 = vadd.f32 %v2097, %v2324
        %v2376 = vadd.f32 %v2098, %v2327
        %v2377 = vadd.f32 %v2099, %v2330
        %v2378 = vadd.f32 %v2100, %v2333
        %v2379 = vadd.f32 %v2101, %v2336
        %v2380 = vadd.f32 %v2102, %v2339
        %v2381 = vadd.f32 %v2103, %v2342
        %v2382 = vadd.f32 %v2104, %v2345
        %v2383 = vadd.f32 %v2105, %v2348
        %v2384 = vadd.f32 %v2106, %v2351
        %s2385 = scalar_lea.vmem [#allocation2], 64
        %v2386 = vld [vmem:[%s2385 + $0x7] sm:$0xff]
        %v2387 = vld [vmem:[%s2385 + $0xf] sm:$0xff]
        %v2388 = vld [vmem:[%s2385 + $0x27] sm:$0xff]
        %v2389 = vld [vmem:[%s2385 + $0x2f] sm:$0xff]
        %v2390 = vld [vmem:[%s2385 + $0x47] sm:$0xff]
        %v2391 = vld [vmem:[%s2385 + $0x4f] sm:$0xff]
        %v2392 = vld [vmem:[%s2385 + $0x67] sm:$0xff]
        %v2393 = vld [vmem:[%s2385 + $0x6f] sm:$0xff]
        %v2394 = vld [vmem:[%s2385 + $0x87] sm:$0xff]
        %v2395 = vld [vmem:[%s2385 + $0x8f] sm:$0xff]
        %v2396 = vld [vmem:[%s2385 + $0xa7] sm:$0xff]
        %v2397 = vld [vmem:[%s2385 + $0xaf] sm:$0xff]
        %v2398 = vld [vmem:[%s2385 + $0xc7] sm:$0xff]
        %v2399 = vld [vmem:[%s2385 + $0xcf] sm:$0xff]
        %v2400 = vld [vmem:[%s2385 + $0xe7] sm:$0xff]
        %v2401 = vld [vmem:[%s2385 + $0xef] sm:$0xff]
        %v2402 = vld [vmem:[%s2385 + $0x107] sm:$0xff]
        %v2403 = vld [vmem:[%s2385 + $0x10f] sm:$0xff]
        %v2404 = vld [vmem:[%s2385 + $0x127] sm:$0xff]
        %v2405 = vld [vmem:[%s2385 + $0x12f] sm:$0xff]
        %v2406 = vld [vmem:[%s2385 + $0x147] sm:$0xff]
        %v2407 = vld [vmem:[%s2385 + $0x14f] sm:$0xff]
        %v2408 = vld [vmem:[%s2385 + $0x167] sm:$0xff]
        %v2409 = vld [vmem:[%s2385 + $0x16f] sm:$0xff]
        %v2410 = vld [vmem:[%s2385 + $0x187] sm:$0xff]
        %v2411 = vld [vmem:[%s2385 + $0x18f] sm:$0xff]
        %v2412 = vld [vmem:[%s2385 + $0x1a7] sm:$0xff]
        %v2413 = vld [vmem:[%s2385 + $0x1af] sm:$0xff]
        %v2414 = vld [vmem:[%s2385 + $0x1c7] sm:$0xff]
        %v2415 = vld [vmem:[%s2385 + $0x1cf] sm:$0xff]
        %v2416 = vld [vmem:[%s2385 + $0x1e7] sm:$0xff]
        %v2417 = vld [vmem:[%s2385 + $0x1ef] sm:$0xff]
        %s2418 = scalar_lea.vmem [#allocation7], 192
        %v2419 = vld [vmem:[%s2418] sm:$0xff]
        %v2420 = vld [vmem:[%s2418 + $0x8] sm:$0xff]
        %v2421 = vld [vmem:[%s2418 + $0x10] sm:$0xff]
        %v2422 = vld [vmem:[%s2418 + $0x18] sm:$0xff]
        %v2424 = vsel %vm707, %v2386, 0
        %v2427 = vsel %vm707, %v2387, 0
        %v2430 = vsel %vm707, %v2388, 0
        %v2433 = vsel %vm707, %v2389, 0
        %v2436 = vsel %vm707, %v2390, 0
        %v2439 = vsel %vm707, %v2391, 0
        %v2442 = vsel %vm707, %v2392, 0
        %v2445 = vsel %vm707, %v2393, 0
        %v2448 = vsel %vm707, %v2394, 0
        %v2451 = vsel %vm707, %v2395, 0
        %v2454 = vsel %vm707, %v2396, 0
        %v2457 = vsel %vm707, %v2397, 0
        %v2460 = vsel %vm707, %v2398, 0
        %v2463 = vsel %vm707, %v2399, 0
        %v2466 = vsel %vm707, %v2400, 0
        %v2469 = vsel %vm707, %v2401, 0
        %v2472 = vsel %vm707, %v2402, 0
        %v2475 = vsel %vm707, %v2403, 0
        %v2478 = vsel %vm707, %v2404, 0
        %v2481 = vsel %vm707, %v2405, 0
        %v2484 = vsel %vm707, %v2406, 0
        %v2487 = vsel %vm707, %v2407, 0
        %v2490 = vsel %vm707, %v2408, 0
        %v2493 = vsel %vm707, %v2409, 0
        %v2496 = vsel %vm707, %v2410, 0
        %v2499 = vsel %vm707, %v2411, 0
        %v2502 = vsel %vm707, %v2412, 0
        %v2505 = vsel %vm707, %v2413, 0
        %v2508 = vsel %vm707, %v2414, 0
        %v2511 = vsel %vm707, %v2415, 0
        %v2514 = vsel %vm707, %v2416, 0
        %v2517 = vsel %vm707, %v2417, 0
        %2519 = vmatpush.msra.mxu0 0.0
        %2520 = vmatpush.msra.mxu0 0.0
        %2521 = vmatpush.msra.mxu0 0.0
        %2522 = vmatpush.msra.mxu0 0.0
        %2523 = vmatpush.msra.mxu0 0.0
        %2524 = vmatpush.msra.mxu0 0.0
        %2525 = vmatpush.msra.mxu0 0.0
        %2526 = vmatpush.msra.mxu0 0.0
        %2527 = vmatpush.msra.mxu0 0.0
        %2528 = vmatpush.msra.mxu0 0.0
        %2529 = vmatpush.msra.mxu0 0.0
        %2530 = vmatpush.msra.mxu0 0.0
        %2531 = vmatpush.msra.mxu0 %v2422
        %2532 = vmatpush.msra.mxu0 %v2421
        %2533 = vmatpush.msra.mxu0 %v2420
        %2534 = vmatpush.msra.mxu0 %v2419
        %2535 = vmatmul.f32.gmra.mxu0 %v2424
        %v2536 = vpop.f32.mrf.mxu0
        %v2537 = vadd.f32 0.0, %v2536
        %2538 = vmatmul.f32.gmra.mxu0 %v2427
        %v2539 = vpop.f32.mrf.mxu0
        %v2540 = vadd.f32 0.0, %v2539
        %2541 = vmatmul.f32.gmra.mxu0 %v2430
        %v2542 = vpop.f32.mrf.mxu0
        %v2543 = vadd.f32 0.0, %v2542
        %2544 = vmatmul.f32.gmra.mxu0 %v2433
        %v2545 = vpop.f32.mrf.mxu0
        %v2546 = vadd.f32 0.0, %v2545
        %2547 = vmatmul.f32.gmra.mxu0 %v2436
        %v2548 = vpop.f32.mrf.mxu0
        %v2549 = vadd.f32 0.0, %v2548
        %2550 = vmatmul.f32.gmra.mxu0 %v2439
        %v2551 = vpop.f32.mrf.mxu0
        %v2552 = vadd.f32 0.0, %v2551
        %2553 = vmatmul.f32.gmra.mxu0 %v2442
        %v2554 = vpop.f32.mrf.mxu0
        %v2555 = vadd.f32 0.0, %v2554
        %2556 = vmatmul.f32.gmra.mxu0 %v2445
        %v2557 = vpop.f32.mrf.mxu0
        %v2558 = vadd.f32 0.0, %v2557
        %2559 = vmatmul.f32.gmra.mxu0 %v2448
        %v2560 = vpop.f32.mrf.mxu0
        %v2561 = vadd.f32 0.0, %v2560
        %2562 = vmatmul.f32.gmra.mxu0 %v2451
        %v2563 = vpop.f32.mrf.mxu0
        %v2564 = vadd.f32 0.0, %v2563
        %2565 = vmatmul.f32.gmra.mxu0 %v2454
        %v2566 = vpop.f32.mrf.mxu0
        %v2567 = vadd.f32 0.0, %v2566
        %2568 = vmatmul.f32.gmra.mxu0 %v2457
        %v2569 = vpop.f32.mrf.mxu0
        %v2570 = vadd.f32 0.0, %v2569
        %2571 = vmatmul.f32.gmra.mxu0 %v2460
        %v2572 = vpop.f32.mrf.mxu0
        %v2573 = vadd.f32 0.0, %v2572
        %2574 = vmatmul.f32.gmra.mxu0 %v2463
        %v2575 = vpop.f32.mrf.mxu0
        %v2576 = vadd.f32 0.0, %v2575
        %2577 = vmatmul.f32.gmra.mxu0 %v2466
        %v2578 = vpop.f32.mrf.mxu0
        %v2579 = vadd.f32 0.0, %v2578
        %2580 = vmatmul.f32.gmra.mxu0 %v2469
        %v2581 = vpop.f32.mrf.mxu0
        %v2582 = vadd.f32 0.0, %v2581
        %2583 = vmatmul.f32.gmra.mxu0 %v2472
        %v2584 = vpop.f32.mrf.mxu0
        %v2585 = vadd.f32 0.0, %v2584
        %2586 = vmatmul.f32.gmra.mxu0 %v2475
        %v2587 = vpop.f32.mrf.mxu0
        %v2588 = vadd.f32 0.0, %v2587
        %2589 = vmatmul.f32.gmra.mxu0 %v2478
        %v2590 = vpop.f32.mrf.mxu0
        %v2591 = vadd.f32 0.0, %v2590
        %2592 = vmatmul.f32.gmra.mxu0 %v2481
        %v2593 = vpop.f32.mrf.mxu0
        %v2594 = vadd.f32 0.0, %v2593
        %2595 = vmatmul.f32.gmra.mxu0 %v2484
        %v2596 = vpop.f32.mrf.mxu0
        %v2597 = vadd.f32 0.0, %v2596
        %2598 = vmatmul.f32.gmra.mxu0 %v2487
        %v2599 = vpop.f32.mrf.mxu0
        %v2600 = vadd.f32 0.0, %v2599
        %2601 = vmatmul.f32.gmra.mxu0 %v2490
        %v2602 = vpop.f32.mrf.mxu0
        %v2603 = vadd.f32 0.0, %v2602
        %2604 = vmatmul.f32.gmra.mxu0 %v2493
        %v2605 = vpop.f32.mrf.mxu0
        %v2606 = vadd.f32 0.0, %v2605
        %2607 = vmatmul.f32.gmra.mxu0 %v2496
        %v2608 = vpop.f32.mrf.mxu0
        %v2609 = vadd.f32 0.0, %v2608
        %2610 = vmatmul.f32.gmra.mxu0 %v2499
        %v2611 = vpop.f32.mrf.mxu0
        %v2612 = vadd.f32 0.0, %v2611
        %2613 = vmatmul.f32.gmra.mxu0 %v2502
        %v2614 = vpop.f32.mrf.mxu0
        %v2615 = vadd.f32 0.0, %v2614
        %2616 = vmatmul.f32.gmra.mxu0 %v2505
        %v2617 = vpop.f32.mrf.mxu0
        %v2618 = vadd.f32 0.0, %v2617
        %2619 = vmatmul.f32.gmra.mxu0 %v2508
        %v2620 = vpop.f32.mrf.mxu0
        %v2621 = vadd.f32 0.0, %v2620
        %2622 = vmatmul.f32.gmra.mxu0 %v2511
        %v2623 = vpop.f32.mrf.mxu0
        %v2624 = vadd.f32 0.0, %v2623
        %2625 = vmatmul.f32.gmra.mxu0 %v2514
        %v2626 = vpop.f32.mrf.mxu0
        %v2627 = vadd.f32 0.0, %v2626
        %2628 = vmatmul.f32.gmra.mxu0 %v2517
        %v2629 = vpop.f32.mrf.mxu0
        %v2630 = vadd.f32 0.0, %v2629
        %2631 = vdwg.mxu0
        %v2632 = vadd.f32 %v2353, %v2537
        %v2633 = vadd.f32 %v2354, %v2540
        %v2634 = vadd.f32 %v2355, %v2543
        %v2635 = vadd.f32 %v2356, %v2546
        %v2636 = vadd.f32 %v2357, %v2549
        %v2637 = vadd.f32 %v2358, %v2552
        %v2638 = vadd.f32 %v2359, %v2555
        %v2639 = vadd.f32 %v2360, %v2558
        %v2640 = vadd.f32 %v2361, %v2561
        %v2641 = vadd.f32 %v2362, %v2564
        %v2642 = vadd.f32 %v2363, %v2567
        %v2643 = vadd.f32 %v2364, %v2570
        %v2644 = vadd.f32 %v2365, %v2573
        %v2645 = vadd.f32 %v2366, %v2576
        %v2646 = vadd.f32 %v2367, %v2579
        %v2647 = vadd.f32 %v2368, %v2582
        %v2648 = vadd.f32 %v2369, %v2585
        %v2649 = vadd.f32 %v2370, %v2588
        %v2650 = vadd.f32 %v2371, %v2591
        %v2651 = vadd.f32 %v2372, %v2594
        %v2652 = vadd.f32 %v2373, %v2597
        %v2653 = vadd.f32 %v2374, %v2600
        %v2654 = vadd.f32 %v2375, %v2603
        %v2655 = vadd.f32 %v2376, %v2606
        %v2656 = vadd.f32 %v2377, %v2609
        %v2657 = vadd.f32 %v2378, %v2612
        %v2658 = vadd.f32 %v2379, %v2615
        %v2659 = vadd.f32 %v2380, %v2618
        %v2660 = vadd.f32 %v2381, %v2621
        %v2661 = vadd.f32 %v2382, %v2624
        %v2662 = vadd.f32 %v2383, %v2627
        %v2663 = vadd.f32 %v2384, %v2630
        %v2664 = vld [vmem:[%s2385 + $0x8] sm:$0xff]
        %v2665 = vld [vmem:[%s2385 + $0x10] sm:$0xff]
        %v2666 = vld [vmem:[%s2385 + $0x28] sm:$0xff]
        %v2667 = vld [vmem:[%s2385 + $0x30] sm:$0xff]
        %v2668 = vld [vmem:[%s2385 + $0x48] sm:$0xff]
        %v2669 = vld [vmem:[%s2385 + $0x50] sm:$0xff]
        %v2670 = vld [vmem:[%s2385 + $0x68] sm:$0xff]
        %v2671 = vld [vmem:[%s2385 + $0x70] sm:$0xff]
        %v2672 = vld [vmem:[%s2385 + $0x88] sm:$0xff]
        %v2673 = vld [vmem:[%s2385 + $0x90] sm:$0xff]
        %v2674 = vld [vmem:[%s2385 + $0xa8] sm:$0xff]
        %v2675 = vld [vmem:[%s2385 + $0xb0] sm:$0xff]
        %v2676 = vld [vmem:[%s2385 + $0xc8] sm:$0xff]
        %v2677 = vld [vmem:[%s2385 + $0xd0] sm:$0xff]
        %v2678 = vld [vmem:[%s2385 + $0xe8] sm:$0xff]
        %v2679 = vld [vmem:[%s2385 + $0xf0] sm:$0xff]
        %v2680 = vld [vmem:[%s2385 + $0x108] sm:$0xff]
        %v2681 = vld [vmem:[%s2385 + $0x110] sm:$0xff]
        %v2682 = vld [vmem:[%s2385 + $0x128] sm:$0xff]
        %v2683 = vld [vmem:[%s2385 + $0x130] sm:$0xff]
        %v2684 = vld [vmem:[%s2385 + $0x148] sm:$0xff]
        %v2685 = vld [vmem:[%s2385 + $0x150] sm:$0xff]
        %v2686 = vld [vmem:[%s2385 + $0x168] sm:$0xff]
        %v2687 = vld [vmem:[%s2385 + $0x170] sm:$0xff]
        %v2688 = vld [vmem:[%s2385 + $0x188] sm:$0xff]
        %v2689 = vld [vmem:[%s2385 + $0x190] sm:$0xff]
        %v2690 = vld [vmem:[%s2385 + $0x1a8] sm:$0xff]
        %v2691 = vld [vmem:[%s2385 + $0x1b0] sm:$0xff]
        %v2692 = vld [vmem:[%s2385 + $0x1c8] sm:$0xff]
        %v2693 = vld [vmem:[%s2385 + $0x1d0] sm:$0xff]
        %v2694 = vld [vmem:[%s2385 + $0x1e8] sm:$0xff]
        %v2695 = vld [vmem:[%s2385 + $0x1f0] sm:$0xff]
        %s2696 = scalar_lea.vmem [#allocation7], 224
        %v2697 = vld [vmem:[%s2696] sm:$0xff]
        %v2698 = vld [vmem:[%s2696 + $0x8] sm:$0xff]
        %v2699 = vld [vmem:[%s2696 + $0x10] sm:$0xff]
        %v2700 = vld [vmem:[%s2696 + $0x18] sm:$0xff]
        %v2702 = vsel %vm707, %v2664, 0
        %v2705 = vsel %vm707, %v2665, 0
        %v2708 = vsel %vm707, %v2666, 0
        %v2711 = vsel %vm707, %v2667, 0
        %v2714 = vsel %vm707, %v2668, 0
        %v2717 = vsel %vm707, %v2669, 0
        %v2720 = vsel %vm707, %v2670, 0
        %v2723 = vsel %vm707, %v2671, 0
        %v2726 = vsel %vm707, %v2672, 0
        %v2729 = vsel %vm707, %v2673, 0
        %v2732 = vsel %vm707, %v2674, 0
        %v2735 = vsel %vm707, %v2675, 0
        %v2738 = vsel %vm707, %v2676, 0
        %v2741 = vsel %vm707, %v2677, 0
        %v2744 = vsel %vm707, %v2678, 0
        %v2747 = vsel %vm707, %v2679, 0
        %v2750 = vsel %vm707, %v2680, 0
        %v2753 = vsel %vm707, %v2681, 0
        %v2756 = vsel %vm707, %v2682, 0
        %v2759 = vsel %vm707, %v2683, 0
        %v2762 = vsel %vm707, %v2684, 0
        %v2765 = vsel %vm707, %v2685, 0
        %v2768 = vsel %vm707, %v2686, 0
        %v2771 = vsel %vm707, %v2687, 0
        %v2774 = vsel %vm707, %v2688, 0
        %v2777 = vsel %vm707, %v2689, 0
        %v2780 = vsel %vm707, %v2690, 0
        %v2783 = vsel %vm707, %v2691, 0
        %v2786 = vsel %vm707, %v2692, 0
        %v2789 = vsel %vm707, %v2693, 0
        %v2792 = vsel %vm707, %v2694, 0
        %v2795 = vsel %vm707, %v2695, 0
        %2797 = vmatpush.msra.mxu0 0.0
        %2798 = vmatpush.msra.mxu0 0.0
        %2799 = vmatpush.msra.mxu0 0.0
        %2800 = vmatpush.msra.mxu0 0.0
        %2801 = vmatpush.msra.mxu0 0.0
        %2802 = vmatpush.msra.mxu0 0.0
        %2803 = vmatpush.msra.mxu0 0.0
        %2804 = vmatpush.msra.mxu0 0.0
        %2805 = vmatpush.msra.mxu0 0.0
        %2806 = vmatpush.msra.mxu0 0.0
        %2807 = vmatpush.msra.mxu0 0.0
        %2808 = vmatpush.msra.mxu0 0.0
        %2809 = vmatpush.msra.mxu0 %v2700
        %2810 = vmatpush.msra.mxu0 %v2699
        %2811 = vmatpush.msra.mxu0 %v2698
        %2812 = vmatpush.msra.mxu0 %v2697
        %2813 = vmatmul.f32.gmra.mxu0 %v2702
        %v2814 = vpop.f32.mrf.mxu0
        %v2815 = vadd.f32 0.0, %v2814
        %2816 = vmatmul.f32.gmra.mxu0 %v2705
        %v2817 = vpop.f32.mrf.mxu0
        %v2818 = vadd.f32 0.0, %v2817
        %2819 = vmatmul.f32.gmra.mxu0 %v2708
        %v2820 = vpop.f32.mrf.mxu0
        %v2821 = vadd.f32 0.0, %v2820
        %2822 = vmatmul.f32.gmra.mxu0 %v2711
        %v2823 = vpop.f32.mrf.mxu0
        %v2824 = vadd.f32 0.0, %v2823
        %2825 = vmatmul.f32.gmra.mxu0 %v2714
        %v2826 = vpop.f32.mrf.mxu0
        %v2827 = vadd.f32 0.0, %v2826
        %2828 = vmatmul.f32.gmra.mxu0 %v2717
        %v2829 = vpop.f32.mrf.mxu0
        %v2830 = vadd.f32 0.0, %v2829
        %2831 = vmatmul.f32.gmra.mxu0 %v2720
        %v2832 = vpop.f32.mrf.mxu0
        %v2833 = vadd.f32 0.0, %v2832
        %2834 = vmatmul.f32.gmra.mxu0 %v2723
        %v2835 = vpop.f32.mrf.mxu0
        %v2836 = vadd.f32 0.0, %v2835
        %2837 = vmatmul.f32.gmra.mxu0 %v2726
        %v2838 = vpop.f32.mrf.mxu0
        %v2839 = vadd.f32 0.0, %v2838
        %2840 = vmatmul.f32.gmra.mxu0 %v2729
        %v2841 = vpop.f32.mrf.mxu0
        %v2842 = vadd.f32 0.0, %v2841
        %2843 = vmatmul.f32.gmra.mxu0 %v2732
        %v2844 = vpop.f32.mrf.mxu0
        %v2845 = vadd.f32 0.0, %v2844
        %2846 = vmatmul.f32.gmra.mxu0 %v2735
        %v2847 = vpop.f32.mrf.mxu0
        %v2848 = vadd.f32 0.0, %v2847
        %2849 = vmatmul.f32.gmra.mxu0 %v2738
        %v2850 = vpop.f32.mrf.mxu0
        %v2851 = vadd.f32 0.0, %v2850
        %2852 = vmatmul.f32.gmra.mxu0 %v2741
        %v2853 = vpop.f32.mrf.mxu0
        %v2854 = vadd.f32 0.0, %v2853
        %2855 = vmatmul.f32.gmra.mxu0 %v2744
        %v2856 = vpop.f32.mrf.mxu0
        %v2857 = vadd.f32 0.0, %v2856
        %2858 = vmatmul.f32.gmra.mxu0 %v2747
        %v2859 = vpop.f32.mrf.mxu0
        %v2860 = vadd.f32 0.0, %v2859
        %2861 = vmatmul.f32.gmra.mxu0 %v2750
        %v2862 = vpop.f32.mrf.mxu0
        %v2863 = vadd.f32 0.0, %v2862
        %2864 = vmatmul.f32.gmra.mxu0 %v2753
        %v2865 = vpop.f32.mrf.mxu0
        %v2866 = vadd.f32 0.0, %v2865
        %2867 = vmatmul.f32.gmra.mxu0 %v2756
        %v2868 = vpop.f32.mrf.mxu0
        %v2869 = vadd.f32 0.0, %v2868
        %2870 = vmatmul.f32.gmra.mxu0 %v2759
        %v2871 = vpop.f32.mrf.mxu0
        %v2872 = vadd.f32 0.0, %v2871
        %2873 = vmatmul.f32.gmra.mxu0 %v2762
        %v2874 = vpop.f32.mrf.mxu0
        %v2875 = vadd.f32 0.0, %v2874
        %2876 = vmatmul.f32.gmra.mxu0 %v2765
        %v2877 = vpop.f32.mrf.mxu0
        %v2878 = vadd.f32 0.0, %v2877
        %2879 = vmatmul.f32.gmra.mxu0 %v2768
        %v2880 = vpop.f32.mrf.mxu0
        %v2881 = vadd.f32 0.0, %v2880
        %2882 = vmatmul.f32.gmra.mxu0 %v2771
        %v2883 = vpop.f32.mrf.mxu0
        %v2884 = vadd.f32 0.0, %v2883
        %2885 = vmatmul.f32.gmra.mxu0 %v2774
        %v2886 = vpop.f32.mrf.mxu0
        %v2887 = vadd.f32 0.0, %v2886
        %2888 = vmatmul.f32.gmra.mxu0 %v2777
        %v2889 = vpop.f32.mrf.mxu0
        %v2890 = vadd.f32 0.0, %v2889
        %2891 = vmatmul.f32.gmra.mxu0 %v2780
        %v2892 = vpop.f32.mrf.mxu0
        %v2893 = vadd.f32 0.0, %v2892
        %2894 = vmatmul.f32.gmra.mxu0 %v2783
        %v2895 = vpop.f32.mrf.mxu0
        %v2896 = vadd.f32 0.0, %v2895
        %2897 = vmatmul.f32.gmra.mxu0 %v2786
        %v2898 = vpop.f32.mrf.mxu0
        %v2899 = vadd.f32 0.0, %v2898
        %2900 = vmatmul.f32.gmra.mxu0 %v2789
        %v2901 = vpop.f32.mrf.mxu0
        %v2902 = vadd.f32 0.0, %v2901
        %2903 = vmatmul.f32.gmra.mxu0 %v2792
        %v2904 = vpop.f32.mrf.mxu0
        %v2905 = vadd.f32 0.0, %v2904
        %2906 = vmatmul.f32.gmra.mxu0 %v2795
        %v2907 = vpop.f32.mrf.mxu0
        %v2908 = vadd.f32 0.0, %v2907
        %2909 = vdwg.mxu0
        %v2910 = vadd.f32 %v2632, %v2815
        %v2911 = vadd.f32 %v2633, %v2818
        %v2912 = vadd.f32 %v2634, %v2821
        %v2913 = vadd.f32 %v2635, %v2824
        %v2914 = vadd.f32 %v2636, %v2827
        %v2915 = vadd.f32 %v2637, %v2830
        %v2916 = vadd.f32 %v2638, %v2833
        %v2917 = vadd.f32 %v2639, %v2836
        %v2918 = vadd.f32 %v2640, %v2839
        %v2919 = vadd.f32 %v2641, %v2842
        %v2920 = vadd.f32 %v2642, %v2845
        %v2921 = vadd.f32 %v2643, %v2848
        %v2922 = vadd.f32 %v2644, %v2851
        %v2923 = vadd.f32 %v2645, %v2854
        %v2924 = vadd.f32 %v2646, %v2857
        %v2925 = vadd.f32 %v2647, %v2860
        %v2926 = vadd.f32 %v2648, %v2863
        %v2927 = vadd.f32 %v2649, %v2866
        %v2928 = vadd.f32 %v2650, %v2869
        %v2929 = vadd.f32 %v2651, %v2872
        %v2930 = vadd.f32 %v2652, %v2875
        %v2931 = vadd.f32 %v2653, %v2878
        %v2932 = vadd.f32 %v2654, %v2881
        %v2933 = vadd.f32 %v2655, %v2884
        %v2934 = vadd.f32 %v2656, %v2887
        %v2935 = vadd.f32 %v2657, %v2890
        %v2936 = vadd.f32 %v2658, %v2893
        %v2937 = vadd.f32 %v2659, %v2896
        %v2938 = vadd.f32 %v2660, %v2899
        %v2939 = vadd.f32 %v2661, %v2902
        %v2940 = vadd.f32 %v2662, %v2905
        %v2941 = vadd.f32 %v2663, %v2908
        %v2942 = vld [vmem:[%s2385 + $0x9] sm:$0xff]
        %v2943 = vld [vmem:[%s2385 + $0x11] sm:$0xff]
        %v2944 = vld [vmem:[%s2385 + $0x29] sm:$0xff]
        %v2945 = vld [vmem:[%s2385 + $0x31] sm:$0xff]
        %v2946 = vld [vmem:[%s2385 + $0x49] sm:$0xff]
        %v2947 = vld [vmem:[%s2385 + $0x51] sm:$0xff]
        %v2948 = vld [vmem:[%s2385 + $0x69] sm:$0xff]
        %v2949 = vld [vmem:[%s2385 + $0x71] sm:$0xff]
        %v2950 = vld [vmem:[%s2385 + $0x89] sm:$0xff]
        %v2951 = vld [vmem:[%s2385 + $0x91] sm:$0xff]
        %v2952 = vld [vmem:[%s2385 + $0xa9] sm:$0xff]
        %v2953 = vld [vmem:[%s2385 + $0xb1] sm:$0xff]
        %v2954 = vld [vmem:[%s2385 + $0xc9] sm:$0xff]
        %v2955 = vld [vmem:[%s2385 + $0xd1] sm:$0xff]
        %v2956 = vld [vmem:[%s2385 + $0xe9] sm:$0xff]
        %v2957 = vld [vmem:[%s2385 + $0xf1] sm:$0xff]
        %v2958 = vld [vmem:[%s2385 + $0x109] sm:$0xff]
        %v2959 = vld [vmem:[%s2385 + $0x111] sm:$0xff]
        %v2960 = vld [vmem:[%s2385 + $0x129] sm:$0xff]
        %v2961 = vld [vmem:[%s2385 + $0x131] sm:$0xff]
        %v2962 = vld [vmem:[%s2385 + $0x149] sm:$0xff]
        %v2963 = vld [vmem:[%s2385 + $0x151] sm:$0xff]
        %v2964 = vld [vmem:[%s2385 + $0x169] sm:$0xff]
        %v2965 = vld [vmem:[%s2385 + $0x171] sm:$0xff]
        %v2966 = vld [vmem:[%s2385 + $0x189] sm:$0xff]
        %v2967 = vld [vmem:[%s2385 + $0x191] sm:$0xff]
        %v2968 = vld [vmem:[%s2385 + $0x1a9] sm:$0xff]
        %v2969 = vld [vmem:[%s2385 + $0x1b1] sm:$0xff]
        %v2970 = vld [vmem:[%s2385 + $0x1c9] sm:$0xff]
        %v2971 = vld [vmem:[%s2385 + $0x1d1] sm:$0xff]
        %v2972 = vld [vmem:[%s2385 + $0x1e9] sm:$0xff]
        %v2973 = vld [vmem:[%s2385 + $0x1f1] sm:$0xff]
        %s2974 = scalar_lea.vmem [#allocation7], 256
        %v2975 = vld [vmem:[%s2974] sm:$0xff]
        %v2976 = vld [vmem:[%s2974 + $0x8] sm:$0xff]
        %v2977 = vld [vmem:[%s2974 + $0x10] sm:$0xff]
        %v2978 = vld [vmem:[%s2974 + $0x18] sm:$0xff]
        %v2980 = vsel %vm707, %v2942, 0
        %v2983 = vsel %vm707, %v2943, 0
        %v2986 = vsel %vm707, %v2944, 0
        %v2989 = vsel %vm707, %v2945, 0
        %v2992 = vsel %vm707, %v2946, 0
        %v2995 = vsel %vm707, %v2947, 0
        %v2998 = vsel %vm707, %v2948, 0
        %v3001 = vsel %vm707, %v2949, 0
        %v3004 = vsel %vm707, %v2950, 0
        %v3007 = vsel %vm707, %v2951, 0
        %v3010 = vsel %vm707, %v2952, 0
        %v3013 = vsel %vm707, %v2953, 0
        %v3016 = vsel %vm707, %v2954, 0
        %v3019 = vsel %vm707, %v2955, 0
        %v3022 = vsel %vm707, %v2956, 0
        %v3025 = vsel %vm707, %v2957, 0
        %v3028 = vsel %vm707, %v2958, 0
        %v3031 = vsel %vm707, %v2959, 0
        %v3034 = vsel %vm707, %v2960, 0
        %v3037 = vsel %vm707, %v2961, 0
        %v3040 = vsel %vm707, %v2962, 0
        %v3043 = vsel %vm707, %v2963, 0
        %v3046 = vsel %vm707, %v2964, 0
        %v3049 = vsel %vm707, %v2965, 0
        %v3052 = vsel %vm707, %v2966, 0
        %v3055 = vsel %vm707, %v2967, 0
        %v3058 = vsel %vm707, %v2968, 0
        %v3061 = vsel %vm707, %v2969, 0
        %v3064 = vsel %vm707, %v2970, 0
        %v3067 = vsel %vm707, %v2971, 0
        %v3070 = vsel %vm707, %v2972, 0
        %v3073 = vsel %vm707, %v2973, 0
        %3075 = vmatpush.msra.mxu0 0.0
        %3076 = vmatpush.msra.mxu0 0.0
        %3077 = vmatpush.msra.mxu0 0.0
        %3078 = vmatpush.msra.mxu0 0.0
        %3079 = vmatpush.msra.mxu0 0.0
        %3080 = vmatpush.msra.mxu0 0.0
        %3081 = vmatpush.msra.mxu0 0.0
        %3082 = vmatpush.msra.mxu0 0.0
        %3083 = vmatpush.msra.mxu0 0.0
        %3084 = vmatpush.msra.mxu0 0.0
        %3085 = vmatpush.msra.mxu0 0.0
        %3086 = vmatpush.msra.mxu0 0.0
        %3087 = vmatpush.msra.mxu0 %v2978
        %3088 = vmatpush.msra.mxu0 %v2977
        %3089 = vmatpush.msra.mxu0 %v2976
        %3090 = vmatpush.msra.mxu0 %v2975
        %3091 = vmatmul.f32.gmra.mxu0 %v2980
        %v3092 = vpop.f32.mrf.mxu0
        %v3093 = vadd.f32 0.0, %v3092
        %3094 = vmatmul.f32.gmra.mxu0 %v2983
        %v3095 = vpop.f32.mrf.mxu0
        %v3096 = vadd.f32 0.0, %v3095
        %3097 = vmatmul.f32.gmra.mxu0 %v2986
        %v3098 = vpop.f32.mrf.mxu0
        %v3099 = vadd.f32 0.0, %v3098
        %3100 = vmatmul.f32.gmra.mxu0 %v2989
        %v3101 = vpop.f32.mrf.mxu0
        %v3102 = vadd.f32 0.0, %v3101
        %3103 = vmatmul.f32.gmra.mxu0 %v2992
        %v3104 = vpop.f32.mrf.mxu0
        %v3105 = vadd.f32 0.0, %v3104
        %3106 = vmatmul.f32.gmra.mxu0 %v2995
        %v3107 = vpop.f32.mrf.mxu0
        %v3108 = vadd.f32 0.0, %v3107
        %3109 = vmatmul.f32.gmra.mxu0 %v2998
        %v3110 = vpop.f32.mrf.mxu0
        %v3111 = vadd.f32 0.0, %v3110
        %3112 = vmatmul.f32.gmra.mxu0 %v3001
        %v3113 = vpop.f32.mrf.mxu0
        %v3114 = vadd.f32 0.0, %v3113
        %3115 = vmatmul.f32.gmra.mxu0 %v3004
        %v3116 = vpop.f32.mrf.mxu0
        %v3117 = vadd.f32 0.0, %v3116
        %3118 = vmatmul.f32.gmra.mxu0 %v3007
        %v3119 = vpop.f32.mrf.mxu0
        %v3120 = vadd.f32 0.0, %v3119
        %3121 = vmatmul.f32.gmra.mxu0 %v3010
        %v3122 = vpop.f32.mrf.mxu0
        %v3123 = vadd.f32 0.0, %v3122
        %3124 = vmatmul.f32.gmra.mxu0 %v3013
        %v3125 = vpop.f32.mrf.mxu0
        %v3126 = vadd.f32 0.0, %v3125
        %3127 = vmatmul.f32.gmra.mxu0 %v3016
        %v3128 = vpop.f32.mrf.mxu0
        %v3129 = vadd.f32 0.0, %v3128
        %3130 = vmatmul.f32.gmra.mxu0 %v3019
        %v3131 = vpop.f32.mrf.mxu0
        %v3132 = vadd.f32 0.0, %v3131
        %3133 = vmatmul.f32.gmra.mxu0 %v3022
        %v3134 = vpop.f32.mrf.mxu0
        %v3135 = vadd.f32 0.0, %v3134
        %3136 = vmatmul.f32.gmra.mxu0 %v3025
        %v3137 = vpop.f32.mrf.mxu0
        %v3138 = vadd.f32 0.0, %v3137
        %3139 = vmatmul.f32.gmra.mxu0 %v3028
        %v3140 = vpop.f32.mrf.mxu0
        %v3141 = vadd.f32 0.0, %v3140
        %3142 = vmatmul.f32.gmra.mxu0 %v3031
        %v3143 = vpop.f32.mrf.mxu0
        %v3144 = vadd.f32 0.0, %v3143
        %3145 = vmatmul.f32.gmra.mxu0 %v3034
        %v3146 = vpop.f32.mrf.mxu0
        %v3147 = vadd.f32 0.0, %v3146
        %3148 = vmatmul.f32.gmra.mxu0 %v3037
        %v3149 = vpop.f32.mrf.mxu0
        %v3150 = vadd.f32 0.0, %v3149
        %3151 = vmatmul.f32.gmra.mxu0 %v3040
        %v3152 = vpop.f32.mrf.mxu0
        %v3153 = vadd.f32 0.0, %v3152
        %3154 = vmatmul.f32.gmra.mxu0 %v3043
        %v3155 = vpop.f32.mrf.mxu0
        %v3156 = vadd.f32 0.0, %v3155
        %3157 = vmatmul.f32.gmra.mxu0 %v3046
        %v3158 = vpop.f32.mrf.mxu0
        %v3159 = vadd.f32 0.0, %v3158
        %3160 = vmatmul.f32.gmra.mxu0 %v3049
        %v3161 = vpop.f32.mrf.mxu0
        %v3162 = vadd.f32 0.0, %v3161
        %3163 = vmatmul.f32.gmra.mxu0 %v3052
        %v3164 = vpop.f32.mrf.mxu0
        %v3165 = vadd.f32 0.0, %v3164
        %3166 = vmatmul.f32.gmra.mxu0 %v3055
        %v3167 = vpop.f32.mrf.mxu0
        %v3168 = vadd.f32 0.0, %v3167
        %3169 = vmatmul.f32.gmra.mxu0 %v3058
        %v3170 = vpop.f32.mrf.mxu0
        %v3171 = vadd.f32 0.0, %v3170
        %3172 = vmatmul.f32.gmra.mxu0 %v3061
        %v3173 = vpop.f32.mrf.mxu0
        %v3174 = vadd.f32 0.0, %v3173
        %3175 = vmatmul.f32.gmra.mxu0 %v3064
        %v3176 = vpop.f32.mrf.mxu0
        %v3177 = vadd.f32 0.0, %v3176
        %3178 = vmatmul.f32.gmra.mxu0 %v3067
        %v3179 = vpop.f32.mrf.mxu0
        %v3180 = vadd.f32 0.0, %v3179
        %3181 = vmatmul.f32.gmra.mxu0 %v3070
        %v3182 = vpop.f32.mrf.mxu0
        %v3183 = vadd.f32 0.0, %v3182
        %3184 = vmatmul.f32.gmra.mxu0 %v3073
        %v3185 = vpop.f32.mrf.mxu0
        %v3186 = vadd.f32 0.0, %v3185
        %3187 = vdwg.mxu0
        %v3188 = vadd.f32 %v2910, %v3093
        %v3189 = vadd.f32 %v2911, %v3096
        %v3190 = vadd.f32 %v2912, %v3099
        %v3191 = vadd.f32 %v2913, %v3102
        %v3192 = vadd.f32 %v2914, %v3105
        %v3193 = vadd.f32 %v2915, %v3108
        %v3194 = vadd.f32 %v2916, %v3111
        %v3195 = vadd.f32 %v2917, %v3114
        %v3196 = vadd.f32 %v2918, %v3117
        %v3197 = vadd.f32 %v2919, %v3120
        %v3198 = vadd.f32 %v2920, %v3123
        %v3199 = vadd.f32 %v2921, %v3126
        %v3200 = vadd.f32 %v2922, %v3129
        %v3201 = vadd.f32 %v2923, %v3132
        %v3202 = vadd.f32 %v2924, %v3135
        %v3203 = vadd.f32 %v2925, %v3138
        %v3204 = vadd.f32 %v2926, %v3141
        %v3205 = vadd.f32 %v2927, %v3144
        %v3206 = vadd.f32 %v2928, %v3147
        %v3207 = vadd.f32 %v2929, %v3150
        %v3208 = vadd.f32 %v2930, %v3153
        %v3209 = vadd.f32 %v2931, %v3156
        %v3210 = vadd.f32 %v2932, %v3159
        %v3211 = vadd.f32 %v2933, %v3162
        %v3212 = vadd.f32 %v2934, %v3165
        %v3213 = vadd.f32 %v2935, %v3168
        %v3214 = vadd.f32 %v2936, %v3171
        %v3215 = vadd.f32 %v2937, %v3174
        %v3216 = vadd.f32 %v2938, %v3177
        %v3217 = vadd.f32 %v2939, %v3180
        %v3218 = vadd.f32 %v2940, %v3183
        %v3219 = vadd.f32 %v2941, %v3186
        %v3220 = vld [vmem:[%s4] sm:$0x1]
        %v3222 = vperm.slane %v3220, 0
        %v3224 = vadd.f32 %v3188, %v3222
        %v3225 = vadd.f32 %v3189, %v3222
        %v3226 = vadd.f32 %v3190, %v3222
        %v3227 = vadd.f32 %v3191, %v3222
        %v3228 = vadd.f32 %v3192, %v3222
        %v3229 = vadd.f32 %v3193, %v3222
        %v3230 = vadd.f32 %v3194, %v3222
        %v3231 = vadd.f32 %v3195, %v3222
        %v3232 = vadd.f32 %v3196, %v3222
        %v3233 = vadd.f32 %v3197, %v3222
        %v3234 = vadd.f32 %v3198, %v3222
        %v3235 = vadd.f32 %v3199, %v3222
        %v3236 = vadd.f32 %v3200, %v3222
        %v3237 = vadd.f32 %v3201, %v3222
        %v3238 = vadd.f32 %v3202, %v3222
        %v3239 = vadd.f32 %v3203, %v3222
        %v3240 = vadd.f32 %v3204, %v3222
        %v3241 = vadd.f32 %v3205, %v3222
        %v3242 = vadd.f32 %v3206, %v3222
        %v3243 = vadd.f32 %v3207, %v3222
        %v3244 = vadd.f32 %v3208, %v3222
        %v3245 = vadd.f32 %v3209, %v3222
        %v3246 = vadd.f32 %v3210, %v3222
        %v3247 = vadd.f32 %v3211, %v3222
        %v3248 = vadd.f32 %v3212, %v3222
        %v3249 = vadd.f32 %v3213, %v3222
        %v3250 = vadd.f32 %v3214, %v3222
        %v3251 = vadd.f32 %v3215, %v3222
        %v3252 = vadd.f32 %v3216, %v3222
        %v3253 = vadd.f32 %v3217, %v3222
        %v3254 = vadd.f32 %v3218, %v3222
        %v3255 = vadd.f32 %v3219, %v3222
        %v3256 = vmax.f32 %v3224, 0.0
        %v3257 = vmax.f32 %v3225, 0.0
        %v3258 = vmax.f32 %v3226, 0.0
        %v3259 = vmax.f32 %v3227, 0.0
        %v3260 = vmax.f32 %v3228, 0.0
        %v3261 = vmax.f32 %v3229, 0.0
        %v3262 = vmax.f32 %v3230, 0.0
        %v3263 = vmax.f32 %v3231, 0.0
        %v3264 = vmax.f32 %v3232, 0.0
        %v3265 = vmax.f32 %v3233, 0.0
        %v3266 = vmax.f32 %v3234, 0.0
        %v3267 = vmax.f32 %v3235, 0.0
        %v3268 = vmax.f32 %v3236, 0.0
        %v3269 = vmax.f32 %v3237, 0.0
        %v3270 = vmax.f32 %v3238, 0.0
        %v3271 = vmax.f32 %v3239, 0.0
        %v3272 = vmax.f32 %v3240, 0.0
        %v3273 = vmax.f32 %v3241, 0.0
        %v3274 = vmax.f32 %v3242, 0.0
        %v3275 = vmax.f32 %v3243, 0.0
        %v3276 = vmax.f32 %v3244, 0.0
        %v3277 = vmax.f32 %v3245, 0.0
        %v3278 = vmax.f32 %v3246, 0.0
        %v3279 = vmax.f32 %v3247, 0.0
        %v3280 = vmax.f32 %v3248, 0.0
        %v3281 = vmax.f32 %v3249, 0.0
        %v3282 = vmax.f32 %v3250, 0.0
        %v3283 = vmax.f32 %v3251, 0.0
        %v3284 = vmax.f32 %v3252, 0.0
        %v3285 = vmax.f32 %v3253, 0.0
        %v3286 = vmax.f32 %v3254, 0.0
        %v3287 = vmax.f32 %v3255, 0.0
        %v3288 = vld [vmem:[#allocation8] sm:$0xff]
        %v3289 = vld [vmem:[#allocation8 + $0x8] sm:$0xff]
        %v3290 = vld [vmem:[#allocation8 + $0x10] sm:$0xff]
        %v3291 = vld [vmem:[#allocation8 + $0x18] sm:$0xff]
        %v3292 = vld [vmem:[%s6] sm:$0x1]
        %v3294 = vperm.slane %v3292, 0
        %v3297 = vsel %vm707, %v3256, 0
        %v3300 = vsel %vm707, %v3257, 0
        %v3303 = vsel %vm707, %v3258, 0
        %v3306 = vsel %vm707, %v3259, 0
        %v3309 = vsel %vm707, %v3260, 0
        %v3312 = vsel %vm707, %v3261, 0
        %v3315 = vsel %vm707, %v3262, 0
        %v3318 = vsel %vm707, %v3263, 0
        %v3321 = vsel %vm707, %v3264, 0
        %v3324 = vsel %vm707, %v3265, 0
        %v3327 = vsel %vm707, %v3266, 0
        %v3330 = vsel %vm707, %v3267, 0
        %v3333 = vsel %vm707, %v3268, 0
        %v3336 = vsel %vm707, %v3269, 0
        %v3339 = vsel %vm707, %v3270, 0
        %v3342 = vsel %vm707, %v3271, 0
        %v3345 = vsel %vm707, %v3272, 0
        %v3348 = vsel %vm707, %v3273, 0
        %v3351 = vsel %vm707, %v3274, 0
        %v3354 = vsel %vm707, %v3275, 0
        %v3357 = vsel %vm707, %v3276, 0
        %v3360 = vsel %vm707, %v3277, 0
        %v3363 = vsel %vm707, %v3278, 0
        %v3366 = vsel %vm707, %v3279, 0
        %v3369 = vsel %vm707, %v3280, 0
        %v3372 = vsel %vm707, %v3281, 0
        %v3375 = vsel %vm707, %v3282, 0
        %v3378 = vsel %vm707, %v3283, 0
        %v3381 = vsel %vm707, %v3284, 0
        %v3384 = vsel %vm707, %v3285, 0
        %v3387 = vsel %vm707, %v3286, 0
        %v3390 = vsel %vm707, %v3287, 0
        %3392 = vmatpush.msra.mxu0 0.0
        %3393 = vmatpush.msra.mxu0 0.0
        %3394 = vmatpush.msra.mxu0 0.0
        %3395 = vmatpush.msra.mxu0 0.0
        %3396 = vmatpush.msra.mxu0 0.0
        %3397 = vmatpush.msra.mxu0 0.0
        %3398 = vmatpush.msra.mxu0 0.0
        %3399 = vmatpush.msra.mxu0 0.0
        %3400 = vmatpush.msra.mxu0 0.0
        %3401 = vmatpush.msra.mxu0 0.0
        %3402 = vmatpush.msra.mxu0 0.0
        %3403 = vmatpush.msra.mxu0 0.0
        %3404 = vmatpush.msra.mxu0 %v3291
        %3405 = vmatpush.msra.mxu0 %v3290
        %3406 = vmatpush.msra.mxu0 %v3289
        %3407 = vmatpush.msra.mxu0 %v3288
        %3408 = vmatmul.f32.gmra.mxu0 %v3297
        %v3409 = vpop.f32.mrf.mxu0
        %v3410 = vadd.f32 %v3294, %v3409
        %3411 = vmatmul.f32.gmra.mxu0 %v3300
        %v3412 = vpop.f32.mrf.mxu0
        %v3413 = vadd.f32 %v3294, %v3412
        %3414 = vmatmul.f32.gmra.mxu0 %v3303
        %v3415 = vpop.f32.mrf.mxu0
        %v3416 = vadd.f32 %v3294, %v3415
        %3417 = vmatmul.f32.gmra.mxu0 %v3306
        %v3418 = vpop.f32.mrf.mxu0
        %v3419 = vadd.f32 %v3294, %v3418
        %3420 = vmatmul.f32.gmra.mxu0 %v3309
        %v3421 = vpop.f32.mrf.mxu0
        %v3422 = vadd.f32 %v3294, %v3421
        %3423 = vmatmul.f32.gmra.mxu0 %v3312
        %v3424 = vpop.f32.mrf.mxu0
        %v3425 = vadd.f32 %v3294, %v3424
        %3426 = vmatmul.f32.gmra.mxu0 %v3315
        %v3427 = vpop.f32.mrf.mxu0
        %v3428 = vadd.f32 %v3294, %v3427
        %3429 = vmatmul.f32.gmra.mxu0 %v3318
        %v3430 = vpop.f32.mrf.mxu0
        %v3431 = vadd.f32 %v3294, %v3430
        %3432 = vmatmul.f32.gmra.mxu0 %v3321
        %v3433 = vpop.f32.mrf.mxu0
        %v3434 = vadd.f32 %v3294, %v3433
        %3435 = vmatmul.f32.gmra.mxu0 %v3324
        %v3436 = vpop.f32.mrf.mxu0
        %v3437 = vadd.f32 %v3294, %v3436
        %3438 = vmatmul.f32.gmra.mxu0 %v3327
        %v3439 = vpop.f32.mrf.mxu0
        %v3440 = vadd.f32 %v3294, %v3439
        %3441 = vmatmul.f32.gmra.mxu0 %v3330
        %v3442 = vpop.f32.mrf.mxu0
        %v3443 = vadd.f32 %v3294, %v3442
        %3444 = vmatmul.f32.gmra.mxu0 %v3333
        %v3445 = vpop.f32.mrf.mxu0
        %v3446 = vadd.f32 %v3294, %v3445
        %3447 = vmatmul.f32.gmra.mxu0 %v3336
        %v3448 = vpop.f32.mrf.mxu0
        %v3449 = vadd.f32 %v3294, %v3448
        %3450 = vmatmul.f32.gmra.mxu0 %v3339
        %v3451 = vpop.f32.mrf.mxu0
        %v3452 = vadd.f32 %v3294, %v3451
        %3453 = vmatmul.f32.gmra.mxu0 %v3342
        %v3454 = vpop.f32.mrf.mxu0
        %v3455 = vadd.f32 %v3294, %v3454
        %3456 = vmatmul.f32.gmra.mxu0 %v3345
        %v3457 = vpop.f32.mrf.mxu0
        %v3458 = vadd.f32 %v3294, %v3457
        %3459 = vmatmul.f32.gmra.mxu0 %v3348
        %v3460 = vpop.f32.mrf.mxu0
        %v3461 = vadd.f32 %v3294, %v3460
        %3462 = vmatmul.f32.gmra.mxu0 %v3351
        %v3463 = vpop.f32.mrf.mxu0
        %v3464 = vadd.f32 %v3294, %v3463
        %3465 = vmatmul.f32.gmra.mxu0 %v3354
        %v3466 = vpop.f32.mrf.mxu0
        %v3467 = vadd.f32 %v3294, %v3466
        %3468 = vmatmul.f32.gmra.mxu0 %v3357
        %v3469 = vpop.f32.mrf.mxu0
        %v3470 = vadd.f32 %v3294, %v3469
        %3471 = vmatmul.f32.gmra.mxu0 %v3360
        %v3472 = vpop.f32.mrf.mxu0
        %v3473 = vadd.f32 %v3294, %v3472
        %3474 = vmatmul.f32.gmra.mxu0 %v3363
        %v3475 = vpop.f32.mrf.mxu0
        %v3476 = vadd.f32 %v3294, %v3475
        %3477 = vmatmul.f32.gmra.mxu0 %v3366
        %v3478 = vpop.f32.mrf.mxu0
        %v3479 = vadd.f32 %v3294, %v3478
        %3480 = vmatmul.f32.gmra.mxu0 %v3369
        %v3481 = vpop.f32.mrf.mxu0
        %v3482 = vadd.f32 %v3294, %v3481
        %3483 = vmatmul.f32.gmra.mxu0 %v3372
        %v3484 = vpop.f32.mrf.mxu0
        %v3485 = vadd.f32 %v3294, %v3484
        %3486 = vmatmul.f32.gmra.mxu0 %v3375
        %v3487 = vpop.f32.mrf.mxu0
        %v3488 = vadd.f32 %v3294, %v3487
        %3489 = vmatmul.f32.gmra.mxu0 %v3378
        %v3490 = vpop.f32.mrf.mxu0
        %v3491 = vadd.f32 %v3294, %v3490
        %3492 = vmatmul.f32.gmra.mxu0 %v3381
        %v3493 = vpop.f32.mrf.mxu0
        %v3494 = vadd.f32 %v3294, %v3493
        %3495 = vmatmul.f32.gmra.mxu0 %v3384
        %v3496 = vpop.f32.mrf.mxu0
        %v3497 = vadd.f32 %v3294, %v3496
        %3498 = vmatmul.f32.gmra.mxu0 %v3387
        %v3499 = vpop.f32.mrf.mxu0
        %v3500 = vadd.f32 %v3294, %v3499
        %3501 = vmatmul.f32.gmra.mxu0 %v3390
        %v3502 = vpop.f32.mrf.mxu0
        %v3503 = vadd.f32 %v3294, %v3502
        %3504 = vdwg.mxu0
        %v3505 = vld [vmem:[#allocation10] sm:$0xff]
        %v3506 = vld [vmem:[#allocation10 + $0x8] sm:$0xff]
        %v3507 = vld [vmem:[#allocation10 + $0x10] sm:$0xff]
        %v3508 = vld [vmem:[#allocation10 + $0x18] sm:$0xff]
        %v3509 = vld [vmem:[#allocation10 + $0x20] sm:$0xff]
        %v3510 = vld [vmem:[#allocation10 + $0x28] sm:$0xff]
        %v3511 = vld [vmem:[#allocation10 + $0x30] sm:$0xff]
        %v3512 = vld [vmem:[#allocation10 + $0x38] sm:$0xff]
        %v3513 = vld [vmem:[%s8] sm:$0x1]
        %v3515 = vperm.slane %v3513, 0
        %3517 = vmatpush.msra.mxu0 0.0
        %3518 = vmatpush.msra.mxu0 0.0
        %3519 = vmatpush.msra.mxu0 0.0
        %3520 = vmatpush.msra.mxu0 0.0
        %3521 = vmatpush.msra.mxu0 0.0
        %3522 = vmatpush.msra.mxu0 0.0
        %3523 = vmatpush.msra.mxu0 0.0
        %3524 = vmatpush.msra.mxu0 0.0
        %3525 = vmatpush.msra.mxu0 %v3512
        %3526 = vmatpush.msra.mxu0 %v3511
        %3527 = vmatpush.msra.mxu0 %v3510
        %3528 = vmatpush.msra.mxu0 %v3509
        %3529 = vmatpush.msra.mxu0 %v3508
        %3530 = vmatpush.msra.mxu0 %v3507
        %3531 = vmatpush.msra.mxu0 %v3506
        %3532 = vmatpush.msra.mxu0 %v3505
        %3533 = vmatmul.f32.gmra.mxu0 %v467
        %v3534 = vpop.f32.mrf.mxu0
        %v3535 = vadd.f32 %v3515, %v3534
        %3536 = vmatmul.f32.gmra.mxu0 %v470
        %v3537 = vpop.f32.mrf.mxu0
        %v3538 = vadd.f32 %v3515, %v3537
        %3539 = vmatmul.f32.gmra.mxu0 %v473
        %v3540 = vpop.f32.mrf.mxu0
        %v3541 = vadd.f32 %v3515, %v3540
        %3542 = vmatmul.f32.gmra.mxu0 %v476
        %v3543 = vpop.f32.mrf.mxu0
        %v3544 = vadd.f32 %v3515, %v3543
        %3545 = vmatmul.f32.gmra.mxu0 %v479
        %v3546 = vpop.f32.mrf.mxu0
        %v3547 = vadd.f32 %v3515, %v3546
        %3548 = vmatmul.f32.gmra.mxu0 %v482
        %v3549 = vpop.f32.mrf.mxu0
        %v3550 = vadd.f32 %v3515, %v3549
        %3551 = vmatmul.f32.gmra.mxu0 %v485
        %v3552 = vpop.f32.mrf.mxu0
        %v3553 = vadd.f32 %v3515, %v3552
        %3554 = vmatmul.f32.gmra.mxu0 %v488
        %v3555 = vpop.f32.mrf.mxu0
        %v3556 = vadd.f32 %v3515, %v3555
        %3557 = vmatmul.f32.gmra.mxu0 %v491
        %v3558 = vpop.f32.mrf.mxu0
        %v3559 = vadd.f32 %v3515, %v3558
        %3560 = vmatmul.f32.gmra.mxu0 %v494
        %v3561 = vpop.f32.mrf.mxu0
        %v3562 = vadd.f32 %v3515, %v3561
        %3563 = vmatmul.f32.gmra.mxu0 %v497
        %v3564 = vpop.f32.mrf.mxu0
        %v3565 = vadd.f32 %v3515, %v3564
        %3566 = vmatmul.f32.gmra.mxu0 %v500
        %v3567 = vpop.f32.mrf.mxu0
        %v3568 = vadd.f32 %v3515, %v3567
        %3569 = vmatmul.f32.gmra.mxu0 %v503
        %v3570 = vpop.f32.mrf.mxu0
        %v3571 = vadd.f32 %v3515, %v3570
        %3572 = vmatmul.f32.gmra.mxu0 %v506
        %v3573 = vpop.f32.mrf.mxu0
        %v3574 = vadd.f32 %v3515, %v3573
        %3575 = vmatmul.f32.gmra.mxu0 %v509
        %v3576 = vpop.f32.mrf.mxu0
        %v3577 = vadd.f32 %v3515, %v3576
        %3578 = vmatmul.f32.gmra.mxu0 %v512
        %v3579 = vpop.f32.mrf.mxu0
        %v3580 = vadd.f32 %v3515, %v3579
        %3581 = vmatmul.f32.gmra.mxu0 %v515
        %v3582 = vpop.f32.mrf.mxu0
        %v3583 = vadd.f32 %v3515, %v3582
        %3584 = vmatmul.f32.gmra.mxu0 %v518
        %v3585 = vpop.f32.mrf.mxu0
        %v3586 = vadd.f32 %v3515, %v3585
        %3587 = vmatmul.f32.gmra.mxu0 %v521
        %v3588 = vpop.f32.mrf.mxu0
        %v3589 = vadd.f32 %v3515, %v3588
        %3590 = vmatmul.f32.gmra.mxu0 %v524
        %v3591 = vpop.f32.mrf.mxu0
        %v3592 = vadd.f32 %v3515, %v3591
        %3593 = vmatmul.f32.gmra.mxu0 %v527
        %v3594 = vpop.f32.mrf.mxu0
        %v3595 = vadd.f32 %v3515, %v3594
        %3596 = vmatmul.f32.gmra.mxu0 %v530
        %v3597 = vpop.f32.mrf.mxu0
        %v3598 = vadd.f32 %v3515, %v3597
        %3599 = vmatmul.f32.gmra.mxu0 %v533
        %v3600 = vpop.f32.mrf.mxu0
        %v3601 = vadd.f32 %v3515, %v3600
        %3602 = vmatmul.f32.gmra.mxu0 %v536
        %v3603 = vpop.f32.mrf.mxu0
        %v3604 = vadd.f32 %v3515, %v3603
        %3605 = vmatmul.f32.gmra.mxu0 %v539
        %v3606 = vpop.f32.mrf.mxu0
        %v3607 = vadd.f32 %v3515, %v3606
        %3608 = vmatmul.f32.gmra.mxu0 %v542
        %v3609 = vpop.f32.mrf.mxu0
        %v3610 = vadd.f32 %v3515, %v3609
        %3611 = vmatmul.f32.gmra.mxu0 %v545
        %v3612 = vpop.f32.mrf.mxu0
        %v3613 = vadd.f32 %v3515, %v3612
        %3614 = vmatmul.f32.gmra.mxu0 %v548
        %v3615 = vpop.f32.mrf.mxu0
        %v3616 = vadd.f32 %v3515, %v3615
        %3617 = vmatmul.f32.gmra.mxu0 %v551
        %v3618 = vpop.f32.mrf.mxu0
        %v3619 = vadd.f32 %v3515, %v3618
        %3620 = vmatmul.f32.gmra.mxu0 %v554
        %v3621 = vpop.f32.mrf.mxu0
        %v3622 = vadd.f32 %v3515, %v3621
        %3623 = vmatmul.f32.gmra.mxu0 %v557
        %v3624 = vpop.f32.mrf.mxu0
        %v3625 = vadd.f32 %v3515, %v3624
        %3626 = vmatmul.f32.gmra.mxu0 %v560
        %v3627 = vpop.f32.mrf.mxu0
        %v3628 = vadd.f32 %v3515, %v3627
        %3629 = vdwg.mxu0
        %v3630 = vadd.f32 %v3410, %v3535
        %v3631 = vadd.f32 %v3413, %v3538
        %v3632 = vadd.f32 %v3416, %v3541
        %v3633 = vadd.f32 %v3419, %v3544
        %v3634 = vadd.f32 %v3422, %v3547
        %v3635 = vadd.f32 %v3425, %v3550
        %v3636 = vadd.f32 %v3428, %v3553
        %v3637 = vadd.f32 %v3431, %v3556
        %v3638 = vadd.f32 %v3434, %v3559
        %v3639 = vadd.f32 %v3437, %v3562
        %v3640 = vadd.f32 %v3440, %v3565
        %v3641 = vadd.f32 %v3443, %v3568
        %v3642 = vadd.f32 %v3446, %v3571
        %v3643 = vadd.f32 %v3449, %v3574
        %v3644 = vadd.f32 %v3452, %v3577
        %v3645 = vadd.f32 %v3455, %v3580
        %v3646 = vadd.f32 %v3458, %v3583
        %v3647 = vadd.f32 %v3461, %v3586
        %v3648 = vadd.f32 %v3464, %v3589
        %v3649 = vadd.f32 %v3467, %v3592
        %v3650 = vadd.f32 %v3470, %v3595
        %v3651 = vadd.f32 %v3473, %v3598
        %v3652 = vadd.f32 %v3476, %v3601
        %v3653 = vadd.f32 %v3479, %v3604
        %v3654 = vadd.f32 %v3482, %v3607
        %v3655 = vadd.f32 %v3485, %v3610
        %v3656 = vadd.f32 %v3488, %v3613
        %v3657 = vadd.f32 %v3491, %v3616
        %v3658 = vadd.f32 %v3494, %v3619
        %v3659 = vadd.f32 %v3497, %v3622
        %v3660 = vadd.f32 %v3500, %v3625
        %v3661 = vadd.f32 %v3503, %v3628
        %v3662 = vmax.f32 %v3630, 0.0
        %v3663 = vmax.f32 %v3631, 0.0
        %v3664 = vmax.f32 %v3632, 0.0
        %v3665 = vmax.f32 %v3633, 0.0
        %v3666 = vmax.f32 %v3634, 0.0
        %v3667 = vmax.f32 %v3635, 0.0
        %v3668 = vmax.f32 %v3636, 0.0
        %v3669 = vmax.f32 %v3637, 0.0
        %v3670 = vmax.f32 %v3638, 0.0
        %v3671 = vmax.f32 %v3639, 0.0
        %v3672 = vmax.f32 %v3640, 0.0
        %v3673 = vmax.f32 %v3641, 0.0
        %v3674 = vmax.f32 %v3642, 0.0
        %v3675 = vmax.f32 %v3643, 0.0
        %v3676 = vmax.f32 %v3644, 0.0
        %v3677 = vmax.f32 %v3645, 0.0
        %v3678 = vmax.f32 %v3646, 0.0
        %v3679 = vmax.f32 %v3647, 0.0
        %v3680 = vmax.f32 %v3648, 0.0
        %v3681 = vmax.f32 %v3649, 0.0
        %v3682 = vmax.f32 %v3650, 0.0
        %v3683 = vmax.f32 %v3651, 0.0
        %v3684 = vmax.f32 %v3652, 0.0
        %v3685 = vmax.f32 %v3653, 0.0
        %v3686 = vmax.f32 %v3654, 0.0
        %v3687 = vmax.f32 %v3655, 0.0
        %v3688 = vmax.f32 %v3656, 0.0
        %v3689 = vmax.f32 %v3657, 0.0
        %v3690 = vmax.f32 %v3658, 0.0
        %v3691 = vmax.f32 %v3659, 0.0
        %v3692 = vmax.f32 %v3660, 0.0
        %v3693 = vmax.f32 %v3661, 0.0
        %3694 = vst [vmem:[%s420] sm:$0xff] %v3662
        %3695 = vst [vmem:[%s420 + $0x8] sm:$0xff] %v3663
        %3696 = vst [vmem:[%s420 + $0x10] sm:$0xff] %v3664
        %3697 = vst [vmem:[%s420 + $0x18] sm:$0xff] %v3665
        %3698 = vst [vmem:[%s420 + $0x20] sm:$0xff] %v3666
        %3699 = vst [vmem:[%s420 + $0x28] sm:$0xff] %v3667
        %3700 = vst [vmem:[%s420 + $0x30] sm:$0xff] %v3668
        %3701 = vst [vmem:[%s420 + $0x38] sm:$0xff] %v3669
        %3702 = vst [vmem:[%s420 + $0x40] sm:$0xff] %v3670
        %3703 = vst [vmem:[%s420 + $0x48] sm:$0xff] %v3671
        %3704 = vst [vmem:[%s420 + $0x50] sm:$0xff] %v3672
        %3705 = vst [vmem:[%s420 + $0x58] sm:$0xff] %v3673
        %3706 = vst [vmem:[%s420 + $0x60] sm:$0xff] %v3674
        %3707 = vst [vmem:[%s420 + $0x68] sm:$0xff] %v3675
        %3708 = vst [vmem:[%s420 + $0x70] sm:$0xff] %v3676
        %3709 = vst [vmem:[%s420 + $0x78] sm:$0xff] %v3677
        %3710 = vst [vmem:[%s420 + $0x80] sm:$0xff] %v3678
        %3711 = vst [vmem:[%s420 + $0x88] sm:$0xff] %v3679
        %3712 = vst [vmem:[%s420 + $0x90] sm:$0xff] %v3680
        %3713 = vst [vmem:[%s420 + $0x98] sm:$0xff] %v3681
        %3714 = vst [vmem:[%s420 + $0xa0] sm:$0xff] %v3682
        %3715 = vst [vmem:[%s420 + $0xa8] sm:$0xff] %v3683
        %3716 = vst [vmem:[%s420 + $0xb0] sm:$0xff] %v3684
        %3717 = vst [vmem:[%s420 + $0xb8] sm:$0xff] %v3685
        %3718 = vst [vmem:[%s420 + $0xc0] sm:$0xff] %v3686
        %3719 = vst [vmem:[%s420 + $0xc8] sm:$0xff] %v3687
        %3720 = vst [vmem:[%s420 + $0xd0] sm:$0xff] %v3688
        %3721 = vst [vmem:[%s420 + $0xd8] sm:$0xff] %v3689
        %3722 = vst [vmem:[%s420 + $0xe0] sm:$0xff] %v3690
        %3723 = vst [vmem:[%s420 + $0xe8] sm:$0xff] %v3691
        %3724 = vst [vmem:[%s420 + $0xf0] sm:$0xff] %v3692
        %3725 = vst [vmem:[%s420 + $0xf8] sm:$0xff] %v3693
        %p3726 = scmp.lt.s32.totalorder %s25, 1
        %s3727 = scalar_select %p3726, %s25, 1
        %s3728 = smul.addr %s3727, 32
        %s3729 = smul.addr %s3728, 8
        %s3730 = scalar_lea.vmem %s9, %s3729
        // Predicated region
        $region77: #{fwd.2} parent=55 // pred_check
          %p3731 = pneg %p237
        $region78: #{fwd.2} parent=55 // pred_check_branch
          %3733 = sbr.rel (%p3731) target = $region80
        $region79: #{fwd.2} parent=55 // pred_region
          _
        $region80: #{fwd.2} parent=55 // pred_fallthru
          _
      $region56: #{fwd.2} parent=5 // pred_fallthru
        _
      %p3734 = scmp.le.s32.totalorder 2, %s20
      // Predicated region
      $region81: #{fwd.2} parent=5 // pred_check
        %p3735 = pneg %p3734
      $region82: #{fwd.2} parent=5 // pred_check_branch
        %3737 = sbr.rel (%p3735) target = $region84
      $region83: #{fwd.2} parent=5 // pred_region
        %s3738 = ssub.s32 %s20, 2
        // Predicated region
        $region85: #{fwd.2} parent=83 // pred_check
          %p3739 = pneg %p243
        $region86: #{fwd.2} parent=83 // pred_check_branch
          %3741 = sbr.rel (%p3739) target = $region88
        $region87: #{fwd.2} parent=83 // pred_region
          %p3742 = scmp.lt.s32.totalorder %s26, 1
          %s3743 = scalar_select %p3742, %s26, 1
          %s3744 = smul.addr %s3743, 32
          %s3745 = smul.addr %s3744, 8
          %s3746 = scalar_lea.vmem %s9, %s3745
        $region88: #{fwd.2} parent=83 // pred_fallthru
          _
      $region84: #{fwd.2} parent=5 // pred_fallthru
        _
    $region6: #{fwd.2} parent=1 // loop_footer
      %s24 = sadd.s32 1, %s20
    $region7: #{fwd.2} parent=1 // loop_footer_branch
      %19 = sbr.rel target = $region3
    $region8: #{fwd.2} parent=1 // loop_exit
      _
    %3747 = vsyncpa [#allocation4], 1
    %s3748 = scalar_lea.sflag [#allocation4], 1
    %3749 = vsyncpa %s3748, 1
    %3750 = vsyncpa [#allocation6], 1
    %3751 = vsyncpa [#allocation9], 1

// kernel: fwd.3
$region0: #{fwd.3}
  #allocation0 [shape = 'u32[]', space=smem, size = 0x4, offset = 0x4, fixed_abs, tag = 'smem constant byte address 0x4 - core index']
  #allocation1 [shape = 'u32[72,128]{1,0:T(1,128)}', space=vmem, size = 0x9000, scoped, tag = 'internal scratch']
  #allocation2 [shape = 'f32[18,32,32]{2,1,0:T(8,128)}', space=vmem, size = 0x48000, scoped, tag = 'scratch operand']
  %s0 = inlined_call_operand.vmem [shape: f32[2,16,16,128], index: 0, kind: input, shape index: {}]
  %s1 = inlined_call_operand.hbm [shape: f32[128,32], index: 1, kind: input, shape index: {}]
  %s2 = inlined_call_operand.hbm [shape: f32[1,32], index: 2, kind: input, shape index: {}]
  %s3 = inlined_call_operand.hbm [shape: f32[3,3,32,32], index: 3, kind: input, shape index: {}]
  %s4 = inlined_call_operand.vmem [shape: f32[1,32], index: 4, kind: input, shape index: {}]
  %s5 = inlined_call_operand.hbm [shape: f32[32,128], index: 5, kind: input, shape index: {}]
  %s6 = inlined_call_operand.vmem [shape: f32[1,128], index: 6, kind: input, shape index: {}]
  %s7 = inlined_call_operand.hbm [shape: f32[2,16,16,128], index: 7, kind: output, shape index: {}]
  %s8 = sld [smem:[#allocation0]]
  $region77: #{fwd.3} parent=0
    _
  %s10 = ssub.s32 1, %s8
  %s11 = scalar_select 0, %s10, %s8
  $region1: #{fwd.3} parent=0
    #allocation3 [shape = 'u8[65536]{0}', space=vmem, size = 0x10000, scoped, tag = 'input window, operand 1, single buffered']
    #allocation4 [shape = 's32[2]{0}', space=sflag, size = 0x8, scoped, tag = 'scoped memory for fwd.3']
    #allocation5 [shape = 's32[2]{0}', space=sflag, size = 0x8, scoped, tag = 'scoped memory for fwd.3']
    #allocation6 [shape = 'u8[512]{0}', space=vmem, size = 0x400, scoped, tag = 'input window, operand 2, single buffered']
    #allocation7 [shape = 's32[1]{0}', space=sflag, size = 0x4, scoped, tag = 'scoped memory for fwd.3']
    #allocation8 [shape = 'u8[147456]{0}', space=vmem, size = 0x24000, scoped, tag = 'input window, operand 3, single buffered']
    #allocation9 [shape = 'u8[16384]{0}', space=vmem, size = 0x4000, scoped, tag = 'input window, operand 5, single buffered']
    #allocation10 [shape = 's32[1]{0}', space=sflag, size = 0x4, scoped, tag = 'scoped memory for fwd.3']
    #allocation11 [shape = 'u8[262144]{0}', space=vmem, size = 0x40000, scoped, tag = 'output window, operand 0']
    %12 = vsyncpa [#allocation4], 0
    %13 = vsyncpa [#allocation7], 0
    %14 = vsyncpa [#allocation10], 0
    %15 = vsyncpa [#allocation5], 0
    %s16 = scalar_lea.sflag [#allocation5], 1
    %17 = vsyncpa %s16, 0
    loop: start=0, step=1, limit=4
    $region2: #{fwd.3} parent=1 // loop_pre_header
      _
    $region3: #{fwd.3} parent=1 // loop_header
      %s19 = sphi 0, %s23
      %p20 = scmp.ge.s32.totalorder %s19, 4
      %s29 = sphi 0, %s31
      %s32 = sphi 0, %s29
      %s33 = sphi 0, %s32
      %s49 = sphi 0, %s33
      %s53 = sphi 0, %s53
      %s55 = sphi 0, %s53
      %s56 = sphi 0, %s55
      %s70 = sphi 0, %s56
      %s74 = sphi 0, %s74
      %s76 = sphi 0, %s74
      %s77 = sphi 0, %s76
      %s91 = sphi 0, %s77
      %s95 = sphi 0, %s95
      %s97 = sphi 0, %s95
      %s98 = sphi 0, %s97
      %s112 = sphi 0, %s98
      %s116 = sphi 0, %s116
      %s118 = sphi 0, %s116
      %s119 = sphi 0, %s118
      %s133 = sphi 0, %s119
      %s137 = sphi 0, %s137
      %s139 = sphi 0, %s137
      %s140 = sphi 0, %s139
      %s154 = sphi 0, %s140
      %s158 = sphi 0, %s158
      %s160 = sphi 0, %s158
      %s161 = sphi 0, %s160
      %s175 = sphi 0, %s161
      %s181 = sphi 0, %s183
      %s184 = sphi 0, %s181
      %s185 = sphi 0, %s184
      %s201 = sphi 0, %s185
    $region4: #{fwd.3} parent=1 // loop_header_branch
      %22 = sbr.rel (%p20) target = $region8
    $region5: #{fwd.3} parent=1 // loop_body
      %s24 = ssub.s32 %s19, 1
      %s25 = ssub.s32 %s19, 2
      %s26 = sadd.s32 %s19, 1
      %s27 = ssub.s32 %s19, %s26
      %p28 = scmp.eq.s32.totalorder %s27, 0
      %s30 = sadd.s32 %s29, 1
      %s31 = scalar_select %p28, %s29, %s30
      %p34 = pneg %p28
      %p35 = scmp.eq.s32.totalorder %s19, 1
      %p36 = por %p34, %p35
      %p37 = scmp.ne.s32.totalorder %s29, %s32
      %p38 = scmp.eq.s32.totalorder %s19, 0
      %p39 = por %p37, %p38
      %p40 = scmp.ne.s32.totalorder %s29, %s32
      %p41 = scmp.eq.s32.totalorder %s24, 1
      %p42 = por %p40, %p41
      %p43 = scmp.ne.s32.totalorder %s32, %s33
      %p44 = scmp.eq.s32.totalorder %s24, 0
      %p45 = por %p43, %p44
      %p46 = scmp.ne.s32.totalorder %s32, %s33
      %p47 = scmp.eq.s32.totalorder %s25, 1
      %p48 = por %p46, %p47
      %p50 = scmp.ne.s32.totalorder %s33, %s49
      %p51 = scmp.eq.s32.totalorder %s25, 0
      %p52 = por %p50, %p51
      %s54 = sadd.s32 %s53, 1
      %p57 = scmp.eq.s32.totalorder %s19, 1
      %p58 = scmp.ne.s32.totalorder %s53, %s55
      %p59 = scmp.eq.s32.totalorder %s19, 0
      %p60 = por %p58, %p59
      %p61 = scmp.ne.s32.totalorder %s53, %s55
      %p62 = scmp.eq.s32.totalorder %s24, 1
      %p63 = por %p61, %p62
      %p64 = scmp.ne.s32.totalorder %s55, %s56
      %p65 = scmp.eq.s32.totalorder %s24, 0
      %p66 = por %p64, %p65
      %p67 = scmp.ne.s32.totalorder %s55, %s56
      %p68 = scmp.eq.s32.totalorder %s25, 1
      %p69 = por %p67, %p68
      %p71 = scmp.ne.s32.totalorder %s56, %s70
      %p72 = scmp.eq.s32.totalorder %s25, 0
      %p73 = por %p71, %p72
      %s75 = sadd.s32 %s74, 1
      %p78 = scmp.eq.s32.totalorder %s19, 1
      %p79 = scmp.ne.s32.totalorder %s74, %s76
      %p80 = scmp.eq.s32.totalorder %s19, 0
      %p81 = por %p79, %p80
      %p82 = scmp.ne.s32.totalorder %s74, %s76
      %p83 = scmp.eq.s32.totalorder %s24, 1
      %p84 = por %p82, %p83
      %p85 = scmp.ne.s32.totalorder %s76, %s77
      %p86 = scmp.eq.s32.totalorder %s24, 0
      %p87 = por %p85, %p86
      %p88 = scmp.ne.s32.totalorder %s76, %s77
      %p89 = scmp.eq.s32.totalorder %s25, 1
      %p90 = por %p88, %p89
      %p92 = scmp.ne.s32.totalorder %s77, %s91
      %p93 = scmp.eq.s32.totalorder %s25, 0
      %p94 = por %p92, %p93
      %s96 = sadd.s32 %s95, 1
      %p99 = scmp.eq.s32.totalorder %s19, 1
      %p100 = scmp.ne.s32.totalorder %s95, %s97
      %p101 = scmp.eq.s32.totalorder %s19, 0
      %p102 = por %p100, %p101
      %p103 = scmp.ne.s32.totalorder %s95, %s97
      %p104 = scmp.eq.s32.totalorder %s24, 1
      %p105 = por %p103, %p104
      %p106 = scmp.ne.s32.totalorder %s97, %s98
      %p107 = scmp.eq.s32.totalorder %s24, 0
      %p108 = por %p106, %p107
      %p109 = scmp.ne.s32.totalorder %s97, %s98
      %p110 = scmp.eq.s32.totalorder %s25, 1
      %p111 = por %p109, %p110
      %p113 = scmp.ne.s32.totalorder %s98, %s112
      %p114 = scmp.eq.s32.totalorder %s25, 0
      %p115 = por %p113, %p114
      %s117 = sadd.s32 %s116, 1
      %p120 = scmp.eq.s32.totalorder %s19, 1
      %p121 = scmp.ne.s32.totalorder %s116, %s118
      %p122 = scmp.eq.s32.totalorder %s19, 0
      %p123 = por %p121, %p122
      %p124 = scmp.ne.s32.totalorder %s116, %s118
      %p125 = scmp.eq.s32.totalorder %s24, 1
      %p126 = por %p124, %p125
      %p127 = scmp.ne.s32.totalorder %s118, %s119
      %p128 = scmp.eq.s32.totalorder %s24, 0
      %p129 = por %p127, %p128
      %p130 = scmp.ne.s32.totalorder %s118, %s119
      %p131 = scmp.eq.s32.totalorder %s25, 1
      %p132 = por %p130, %p131
      %p134 = scmp.ne.s32.totalorder %s119, %s133
      %p135 = scmp.eq.s32.totalorder %s25, 0
      %p136 = por %p134, %p135
      %s138 = sadd.s32 %s137, 1
      %p141 = scmp.eq.s32.totalorder %s19, 1
      %p142 = scmp.ne.s32.totalorder %s137, %s139
      %p143 = scmp.eq.s32.totalorder %s19, 0
      %p144 = por %p142, %p143
      %p145 = scmp.ne.s32.totalorder %s137, %s139
      %p146 = scmp.eq.s32.totalorder %s24, 1
      %p147 = por %p145, %p146
      %p148 = scmp.ne.s32.totalorder %s139, %s140
      %p149 = scmp.eq.s32.totalorder %s24, 0
      %p150 = por %p148, %p149
      %p151 = scmp.ne.s32.totalorder %s139, %s140
      %p152 = scmp.eq.s32.totalorder %s25, 1
      %p153 = por %p151, %p152
      %p155 = scmp.ne.s32.totalorder %s140, %s154
      %p156 = scmp.eq.s32.totalorder %s25, 0
      %p157 = por %p155, %p156
      %s159 = sadd.s32 %s158, 1
      %p162 = scmp.eq.s32.totalorder %s19, 1
      %p163 = scmp.ne.s32.totalorder %s158, %s160
      %p164 = scmp.eq.s32.totalorder %s19, 0
      %p165 = por %p163, %p164
      %p166 = scmp.ne.s32.totalorder %s158, %s160
      %p167 = scmp.eq.s32.totalorder %s24, 1
      %p168 = por %p166, %p167
      %p169 = scmp.ne.s32.totalorder %s160, %s161
      %p170 = scmp.eq.s32.totalorder %s24, 0
      %p171 = por %p169, %p170
      %p172 = scmp.ne.s32.totalorder %s160, %s161
      %p173 = scmp.eq.s32.totalorder %s25, 1
      %p174 = por %p172, %p173
      %p176 = scmp.ne.s32.totalorder %s161, %s175
      %p177 = scmp.eq.s32.totalorder %s25, 0
      %p178 = por %p176, %p177
      %s179 = ssub.s32 %s19, %s26
      %p180 = scmp.eq.s32.totalorder %s179, 0
      %s182 = sadd.s32 %s181, 1
      %s183 = scalar_select %p180, %s181, %s182
      %p186 = pneg %p180
      %p187 = scmp.eq.s32.totalorder %s19, 1
      %p188 = por %p186, %p187
      %p189 = scmp.ne.s32.totalorder %s181, %s184
      %p190 = scmp.eq.s32.totalorder %s19, 0
      %p191 = por %p189, %p190
      %p192 = scmp.ne.s32.totalorder %s181, %s184
      %p193 = scmp.eq.s32.totalorder %s24, 1
      %p194 = por %p192, %p193
      %p195 = scmp.ne.s32.totalorder %s184, %s185
      %p196 = scmp.eq.s32.totalorder %s24, 0
      %p197 = por %p195, %p196
      %p198 = scmp.ne.s32.totalorder %s184, %s185
      %p199 = scmp.eq.s32.totalorder %s25, 1
      %p200 = por %p198, %p199
      %p202 = scmp.ne.s32.totalorder %s185, %s201
      %p203 = scmp.eq.s32.totalorder %s25, 0
      %p204 = por %p202, %p203
      %p205 = scmp.le.s32.totalorder 1, %s19
      %p206 = scmp.lt.s32.totalorder %s19, 3
      %p207 = pnand %p205, %p206
      %p208 = pneg %p207
      // Predicated region
      $region9: #{fwd.3} parent=5 // pred_check
        _
      $region10: #{fwd.3} parent=5 // pred_check_branch
        %210 = sbr.rel (%p207) target = $region12
      $region11: #{fwd.3} parent=5 // pred_region
        %s211 = ssub.s32 %s19, 1
        // Predicated region
        $region13: #{fwd.3} parent=11 // pred_check
          %p212 = pneg %p66
        $region14: #{fwd.3} parent=11 // pred_check_branch
          %214 = sbr.rel (%p212) target = $region16
        $region15: #{fwd.3} parent=11 // pred_region
          %216 = vsyncadd [#allocation4], 0
          %s217 = sshll.u32 %s1, 4
          %s218 = int_to_ptr.hbm [resolvable:$true] %s217
          %s219 = sshll.u32 [#allocation3], 4
          %s220 = int_to_ptr.vmem [resolvable:$true] %s219
          %225 = dma.hbm_to_vmem [thread:$0]  %s218, 2048, %s220, [#allocation4], 128, 128, 8
        $region16: #{fwd.3} parent=11 // pred_fallthru
          _
        // Predicated region
        $region17: #{fwd.3} parent=11 // pred_check
          %p226 = pneg %p87
        $region18: #{fwd.3} parent=11 // pred_check_branch
          %228 = sbr.rel (%p226) target = $region20
        $region19: #{fwd.3} parent=11 // pred_region
          %230 = vsyncadd [#allocation7], 0
          %s232 = sshll.u32 %s2, 4
          %s233 = int_to_ptr.hbm [resolvable:$true] %s232
          %s234 = sshll.u32 [#allocation6], 4
          %s235 = int_to_ptr.vmem [resolvable:$true] %s234
          %237 = dma.hbm_to_vmem [thread:$0]  %s233, 16, %s235, [#allocation7]
        $region20: #{fwd.3} parent=11 // pred_fallthru
          _
        // Predicated region
        $region21: #{fwd.3} parent=11 // pred_check
          %p238 = pneg %p108
        $region22: #{fwd.3} parent=11 // pred_check_branch
          %240 = sbr.rel (%p238) target = $region24
        $region23: #{fwd.3} parent=11 // pred_region
          %242 = vsyncadd [#allocation7], 0
          %s243 = sshll.u32 %s3, 4
          %s244 = int_to_ptr.hbm [resolvable:$true] %s243
          %s245 = sshll.u32 [#allocation8], 4
          %s246 = int_to_ptr.vmem [resolvable:$true] %s245
          %251 = dma.hbm_to_vmem [thread:$0]  %s244, 4608, %s246, [#allocation7], 128, 128, 8
        $region24: #{fwd.3} parent=11 // pred_fallthru
          _
        // Predicated region
        $region25: #{fwd.3} parent=11 // pred_check
          %p252 = pneg %p129
        $region26: #{fwd.3} parent=11 // pred_check_branch
          %254 = sbr.rel (%p252) target = $region28
        $region27: #{fwd.3} parent=11 // pred_region
          _
        $region28: #{fwd.3} parent=11 // pred_fallthru
          _
        // Predicated region
        $region29: #{fwd.3} parent=11 // pred_check
          %p255 = pneg %p150
        $region30: #{fwd.3} parent=11 // pred_check_branch
          %257 = sbr.rel (%p255) target = $region32
        $region31: #{fwd.3} parent=11 // pred_region
          %259 = vsyncadd [#allocation10], 0
          %s260 = sshll.u32 %s5, 4
          %s261 = int_to_ptr.hbm [resolvable:$true] %s260
          %s262 = sshll.u32 [#allocation9], 4
          %s263 = int_to_ptr.vmem [resolvable:$true] %s262
          %268 = dma.hbm_to_vmem [thread:$0]  %s261, 512, %s263, [#allocation10], 128, 128, 8
        $region32: #{fwd.3} parent=11 // pred_fallthru
          _
        // Predicated region
        $region33: #{fwd.3} parent=11 // pred_check
          %p269 = pneg %p171
        $region34: #{fwd.3} parent=11 // pred_check_branch
          %271 = sbr.rel (%p269) target = $region36
        $region35: #{fwd.3} parent=11 // pred_region
          _
        $region36: #{fwd.3} parent=11 // pred_fallthru
          _
      $region12: #{fwd.3} parent=5 // pred_fallthru
        _
      %p272 = scmp.lt.s32.totalorder %s19, 2
      // Predicated region
      $region37: #{fwd.3} parent=5 // pred_check
        %p273 = pneg %p272
      $region38: #{fwd.3} parent=5 // pred_check_branch
        %275 = sbr.rel (%p273) target = $region40
      $region39: #{fwd.3} parent=5 // pred_region
        // Predicated region
        $region41: #{fwd.3} parent=39 // pred_check
          %p276 = pneg %p39
        $region42: #{fwd.3} parent=39 // pred_check_branch
          %278 = sbr.rel (%p276) target = $region44
        $region43: #{fwd.3} parent=39 // pred_region
          %p279 = scmp.lt.s32.totalorder %s19, 1
          %s280 = scalar_select %p279, %s19, 1
          %s281 = smul.addr %s280, 32
          %s282 = smul.addr %s281, 8
          %s283 = scalar_lea.vmem %s0, %s282
        $region44: #{fwd.3} parent=39 // pred_fallthru
          _
      $region40: #{fwd.3} parent=5 // pred_fallthru
        _
      %p284 = scmp.le.s32.totalorder 1, %s19
      %p285 = scmp.lt.s32.totalorder %s19, 3
      %p286 = pnand %p284, %p285
      %p287 = pneg %p286
      // Predicated region
      $region45: #{fwd.3} parent=5 // pred_check
        _
      $region46: #{fwd.3} parent=5 // pred_check_branch
        %289 = sbr.rel (%p286) target = $region48
      $region47: #{fwd.3} parent=5 // pred_region
        %s290 = ssub.s32 %s19, 1
        // Predicated region
        $region49: #{fwd.3} parent=47 // pred_check
          %p291 = pneg %p66
        $region50: #{fwd.3} parent=47 // pred_check_branch
          %293 = sbr.rel (%p291) target = $region52
        $region51: #{fwd.3} parent=47 // pred_region
          %295 = dma.done [#allocation4], 2048
        $region52: #{fwd.3} parent=47 // pred_fallthru
          _
        // Predicated region
        $region53: #{fwd.3} parent=47 // pred_check
          %p296 = pneg %p87
        $region54: #{fwd.3} parent=47 // pred_check_branch
          %298 = sbr.rel (%p296) target = $region56
        $region55: #{fwd.3} parent=47 // pred_region
          %300 = dma.done [#allocation7], 16
        $region56: #{fwd.3} parent=47 // pred_fallthru
          _
        // Predicated region
        $region57: #{fwd.3} parent=47 // pred_check
          %p301 = pneg %p108
        $region58: #{fwd.3} parent=47 // pred_check_branch
          %303 = sbr.rel (%p301) target = $region60
        $region59: #{fwd.3} parent=47 // pred_region
          %305 = dma.done [#allocation7], 4608
        $region60: #{fwd.3} parent=47 // pred_fallthru
          _
        // Predicated region
        $region61: #{fwd.3} parent=47 // pred_check
          %p306 = pneg %p150
        $region62: #{fwd.3} parent=47 // pred_check_branch
          %308 = sbr.rel (%p306) target = $region64
        $region63: #{fwd.3} parent=47 // pred_region
          %310 = dma.done [#allocation10], 512
        $region64: #{fwd.3} parent=47 // pred_fallthru
          _
        %p311 = scmp.lt.s32.totalorder %s24, 1
        %s312 = scalar_select %p311, %s24, 1
        %s313 = smul.addr %s312, 32
        %s314 = smul.addr %s313, 8
        %s315 = scalar_lea.vmem %s0, %s314
        %p316 = pneg %p45
        %p317 = pneg %p42
        %p318 = pneg %p66
        %p319 = pneg %p63
        %p320 = pneg %p87
        %p321 = pneg %p84
        %p322 = pneg %p108
        %p323 = pneg %p105
        %p324 = pneg %p129
        %p325 = pneg %p126
        %p326 = pneg %p150
        %p327 = pneg %p147
        %p328 = pneg %p171
        %p329 = pneg %p168
        %p330 = pneg %p197
        %p331 = pneg %p194
        %s332 = sand.u32 %s184, 1
        %s333 = scalar_lea.sflag [#allocation5], %s332
        %s334 = sand.u32 %s184, 1
        %s335 = smul.addr %s334, 256
        %s336 = scalar_lea.vmem [#allocation11], %s335
        %p337 = scmp.lt.s32.totalorder %s24, 1
        %s338 = scalar_select %p337, %s24, 1
        %s339 = smul.addr %s338, 32
        %s340 = smul.addr %s339, 8
        %s341 = scalar_lea.vmem %s0, %s340
        %v342 = vld [vmem:[%s341] sm:$0xff]
        %v343 = vld [vmem:[%s341 + $0x8] sm:$0xff]
        %v344 = vld [vmem:[%s341 + $0x10] sm:$0xff]
        %v345 = vld [vmem:[%s341 + $0x18] sm:$0xff]
        %v346 = vld [vmem:[%s341 + $0x20] sm:$0xff]
        %v347 = vld [vmem:[%s341 + $0x28] sm:$0xff]
        %v348 = vld [vmem:[%s341 + $0x30] sm:$0xff]
        %v349 = vld [vmem:[%s341 + $0x38] sm:$0xff]
        %v350 = vld [vmem:[%s341 + $0x40] sm:$0xff]
        %v351 = vld [vmem:[%s341 + $0x48] sm:$0xff]
        %v352 = vld [vmem:[%s341 + $0x50] sm:$0xff]
        %v353 = vld [vmem:[%s341 + $0x58] sm:$0xff]
        %v354 = vld [vmem:[%s341 + $0x60] sm:$0xff]
        %v355 = vld [vmem:[%s341 + $0x68] sm:$0xff]
        %v356 = vld [vmem:[%s341 + $0x70] sm:$0xff]
        %v357 = vld [vmem:[%s341 + $0x78] sm:$0xff]
        %v358 = vld [vmem:[%s341 + $0x80] sm:$0xff]
        %v359 = vld [vmem:[%s341 + $0x88] sm:$0xff]
        %v360 = vld [vmem:[%s341 + $0x90] sm:$0xff]
        %v361 = vld [vmem:[%s341 + $0x98] sm:$0xff]
        %v362 = vld [vmem:[%s341 + $0xa0] sm:$0xff]
        %v363 = vld [vmem:[%s341 + $0xa8] sm:$0xff]
        %v364 = vld [vmem:[%s341 + $0xb0] sm:$0xff]
        %v365 = vld [vmem:[%s341 + $0xb8] sm:$0xff]
        %v366 = vld [vmem:[%s341 + $0xc0] sm:$0xff]
        %v367 = vld [vmem:[%s341 + $0xc8] sm:$0xff]
        %v368 = vld [vmem:[%s341 + $0xd0] sm:$0xff]
        %v369 = vld [vmem:[%s341 + $0xd8] sm:$0xff]
        %v370 = vld [vmem:[%s341 + $0xe0] sm:$0xff]
        %v371 = vld [vmem:[%s341 + $0xe8] sm:$0xff]
        %v372 = vld [vmem:[%s341 + $0xf0] sm:$0xff]
        %v373 = vld [vmem:[%s341 + $0xf8] sm:$0xff]
        %v374 = vld [vmem:[#allocation3] sm:$0xff]
        %v375 = vld [vmem:[#allocation3 + $0x8] sm:$0xff]
        %v376 = vld [vmem:[#allocation3 + $0x10] sm:$0xff]
        %v377 = vld [vmem:[#allocation3 + $0x18] sm:$0xff]
        %v378 = vld [vmem:[#allocation3 + $0x20] sm:$0xff]
        %v379 = vld [vmem:[#allocation3 + $0x28] sm:$0xff]
        %v380 = vld [vmem:[#allocation3 + $0x30] sm:$0xff]
        %v381 = vld [vmem:[#allocation3 + $0x38] sm:$0xff]
        %v382 = vld [vmem:[#allocation3 + $0x40] sm:$0xff]
        %v383 = vld [vmem:[#allocation3 + $0x48] sm:$0xff]
        %v384 = vld [vmem:[#allocation3 + $0x50] sm:$0xff]
        %v385 = vld [vmem:[#allocation3 + $0x58] sm:$0xff]
        %v386 = vld [vmem:[#allocation3 + $0x60] sm:$0xff]
        %v387 = vld [vmem:[#allocation3 + $0x68] sm:$0xff]
        %v388 = vld [vmem:[#allocation3 + $0x70] sm:$0xff]
        %v389 = vld [vmem:[#allocation3 + $0x78] sm:$0xff]
        %v390 = vld [vmem:[#allocation6] sm:$0x1]
        %v392 = vperm.slane %v390, 0
        %394 = vmatpush.msra.mxu0 %v389
        %395 = vmatpush.msra.mxu0 %v388
        %396 = vmatpush.msra.mxu0 %v387
        %397 = vmatpush.msra.mxu0 %v386
        %398 = vmatpush.msra.mxu0 %v385
        %399 = vmatpush.msra.mxu0 %v384
        %400 = vmatpush.msra.mxu0 %v383
        %401 = vmatpush.msra.mxu0 %v382
        %402 = vmatpush.msra.mxu0 %v381
        %403 = vmatpush.msra.mxu0 %v380
        %404 = vmatpush.msra.mxu0 %v379
        %405 = vmatpush.msra.mxu0 %v378
        %406 = vmatpush.msra.mxu0 %v377
        %407 = vmatpush.msra.mxu0 %v376
        %408 = vmatpush.msra.mxu0 %v375
        %409 = vmatpush.msra.mxu0 %v374
        %410 = vmatmul.f32.gmra.mxu0 %v342
        %v411 = vpop.f32.mrf.mxu0
        %v412 = vadd.f32 %v392, %v411
        %413 = vmatmul.f32.gmra.mxu0 %v343
        %v414 = vpop.f32.mrf.mxu0
        %v415 = vadd.f32 %v392, %v414
        %416 = vmatmul.f32.gmra.mxu0 %v344
        %v417 = vpop.f32.mrf.mxu0
        %v418 = vadd.f32 %v392, %v417
        %419 = vmatmul.f32.gmra.mxu0 %v345
        %v420 = vpop.f32.mrf.mxu0
        %v421 = vadd.f32 %v392, %v420
        %422 = vmatmul.f32.gmra.mxu0 %v346
        %v423 = vpop.f32.mrf.mxu0
        %v424 = vadd.f32 %v392, %v423
        %425 = vmatmul.f32.gmra.mxu0 %v347
        %v426 = vpop.f32.mrf.mxu0
        %v427 = vadd.f32 %v392, %v426
        %428 = vmatmul.f32.gmra.mxu0 %v348
        %v429 = vpop.f32.mrf.mxu0
        %v430 = vadd.f32 %v392, %v429
        %431 = vmatmul.f32.gmra.mxu0 %v349
        %v432 = vpop.f32.mrf.mxu0
        %v433 = vadd.f32 %v392, %v432
        %434 = vmatmul.f32.gmra.mxu0 %v350
        %v435 = vpop.f32.mrf.mxu0
        %v436 = vadd.f32 %v392, %v435
        %437 = vmatmul.f32.gmra.mxu0 %v351
        %v438 = vpop.f32.mrf.mxu0
        %v439 = vadd.f32 %v392, %v438
        %440 = vmatmul.f32.gmra.mxu0 %v352
        %v441 = vpop.f32.mrf.mxu0
        %v442 = vadd.f32 %v392, %v441
        %443 = vmatmul.f32.gmra.mxu0 %v353
        %v444 = vpop.f32.mrf.mxu0
        %v445 = vadd.f32 %v392, %v444
        %446 = vmatmul.f32.gmra.mxu0 %v354
        %v447 = vpop.f32.mrf.mxu0
        %v448 = vadd.f32 %v392, %v447
        %449 = vmatmul.f32.gmra.mxu0 %v355
        %v450 = vpop.f32.mrf.mxu0
        %v451 = vadd.f32 %v392, %v450
        %452 = vmatmul.f32.gmra.mxu0 %v356
        %v453 = vpop.f32.mrf.mxu0
        %v454 = vadd.f32 %v392, %v453
        %455 = vmatmul.f32.gmra.mxu0 %v357
        %v456 = vpop.f32.mrf.mxu0
        %v457 = vadd.f32 %v392, %v456
        %458 = vmatmul.f32.gmra.mxu0 %v358
        %v459 = vpop.f32.mrf.mxu0
        %v460 = vadd.f32 %v392, %v459
        %461 = vmatmul.f32.gmra.mxu0 %v359
        %v462 = vpop.f32.mrf.mxu0
        %v463 = vadd.f32 %v392, %v462
        %464 = vmatmul.f32.gmra.mxu0 %v360
        %v465 = vpop.f32.mrf.mxu0
        %v466 = vadd.f32 %v392, %v465
        %467 = vmatmul.f32.gmra.mxu0 %v361
        %v468 = vpop.f32.mrf.mxu0
        %v469 = vadd.f32 %v392, %v468
        %470 = vmatmul.f32.gmra.mxu0 %v362
        %v471 = vpop.f32.mrf.mxu0
        %v472 = vadd.f32 %v392, %v471
        %473 = vmatmul.f32.gmra.mxu0 %v363
        %v474 = vpop.f32.mrf.mxu0
        %v475 = vadd.f32 %v392, %v474
        %476 = vmatmul.f32.gmra.mxu0 %v364
        %v477 = vpop.f32.mrf.mxu0
        %v478 = vadd.f32 %v392, %v477
        %479 = vmatmul.f32.gmra.mxu0 %v365
        %v480 = vpop.f32.mrf.mxu0
        %v481 = vadd.f32 %v392, %v480
        %482 = vmatmul.f32.gmra.mxu0 %v366
        %v483 = vpop.f32.mrf.mxu0
        %v484 = vadd.f32 %v392, %v483
        %485 = vmatmul.f32.gmra.mxu0 %v367
        %v486 = vpop.f32.mrf.mxu0
        %v487 = vadd.f32 %v392, %v486
        %488 = vmatmul.f32.gmra.mxu0 %v368
        %v489 = vpop.f32.mrf.mxu0
        %v490 = vadd.f32 %v392, %v489
        %491 = vmatmul.f32.gmra.mxu0 %v369
        %v492 = vpop.f32.mrf.mxu0
        %v493 = vadd.f32 %v392, %v492
        %494 = vmatmul.f32.gmra.mxu0 %v370
        %v495 = vpop.f32.mrf.mxu0
        %v496 = vadd.f32 %v392, %v495
        %497 = vmatmul.f32.gmra.mxu0 %v371
        %v498 = vpop.f32.mrf.mxu0
        %v499 = vadd.f32 %v392, %v498
        %500 = vmatmul.f32.gmra.mxu0 %v372
        %v501 = vpop.f32.mrf.mxu0
        %v502 = vadd.f32 %v392, %v501
        %503 = vmatmul.f32.gmra.mxu0 %v373
        %v504 = vpop.f32.mrf.mxu0
        %v505 = vadd.f32 %v392, %v504
        %506 = vdwg.mxu0
        %v507 = vmax.f32 %v412, 0.0
        %v508 = vmax.f32 %v415, 0.0
        %v509 = vmax.f32 %v418, 0.0
        %v510 = vmax.f32 %v421, 0.0
        %v511 = vmax.f32 %v424, 0.0
        %v512 = vmax.f32 %v427, 0.0
        %v513 = vmax.f32 %v430, 0.0
        %v514 = vmax.f32 %v433, 0.0
        %v515 = vmax.f32 %v436, 0.0
        %v516 = vmax.f32 %v439, 0.0
        %v517 = vmax.f32 %v442, 0.0
        %v518 = vmax.f32 %v445, 0.0
        %v519 = vmax.f32 %v448, 0.0
        %v520 = vmax.f32 %v451, 0.0
        %v521 = vmax.f32 %v454, 0.0
        %v522 = vmax.f32 %v457, 0.0
        %v523 = vmax.f32 %v460, 0.0
        %v524 = vmax.f32 %v463, 0.0
        %v525 = vmax.f32 %v466, 0.0
        %v526 = vmax.f32 %v469, 0.0
        %v527 = vmax.f32 %v472, 0.0
        %v528 = vmax.f32 %v475, 0.0
        %v529 = vmax.f32 %v478, 0.0
        %v530 = vmax.f32 %v481, 0.0
        %v531 = vmax.f32 %v484, 0.0
        %v532 = vmax.f32 %v487, 0.0
        %v533 = vmax.f32 %v490, 0.0
        %v534 = vmax.f32 %v493, 0.0
        %v535 = vmax.f32 %v496, 0.0
        %v536 = vmax.f32 %v499, 0.0
        %v537 = vmax.f32 %v502, 0.0
        %v538 = vmax.f32 %v505, 0.0
        %vm539 = vcmask 261120
        %540 = vst.msk [vmem:[#allocation2] sm:$0xff] %vm539, 0.0
        %541 = vst.msk [vmem:[#allocation2 + $0x20] sm:$0xff] %vm539, 0.0
        %542 = vst.msk [vmem:[#allocation2 + $0x40] sm:$0xff] %vm539, 0.0
        %543 = vst.msk [vmem:[#allocation2 + $0x60] sm:$0xff] %vm539, 0.0
        %544 = vst.msk [vmem:[#allocation2 + $0x80] sm:$0xff] %vm539, 0.0
        %545 = vst.msk [vmem:[#allocation2 + $0xa0] sm:$0xff] %vm539, 0.0
        %546 = vst.msk [vmem:[#allocation2 + $0xc0] sm:$0xff] %vm539, 0.0
        %547 = vst.msk [vmem:[#allocation2 + $0xe0] sm:$0xff] %vm539, 0.0
        %548 = vst.msk [vmem:[#allocation2 + $0x100] sm:$0xff] %vm539, 0.0
        %549 = vst.msk [vmem:[#allocation2 + $0x120] sm:$0xff] %vm539, 0.0
        %550 = vst.msk [vmem:[#allocation2 + $0x140] sm:$0xff] %vm539, 0.0
        %551 = vst.msk [vmem:[#allocation2 + $0x160] sm:$0xff] %vm539, 0.0
        %552 = vst.msk [vmem:[#allocation2 + $0x180] sm:$0xff] %vm539, 0.0
        %553 = vst.msk [vmem:[#allocation2 + $0x1a0] sm:$0xff] %vm539, 0.0
        %554 = vst.msk [vmem:[#allocation2 + $0x1c0] sm:$0xff] %vm539, 0.0
        %555 = vst.msk [vmem:[#allocation2 + $0x1e0] sm:$0xff] %vm539, 0.0
        %556 = vst.msk [vmem:[#allocation2 + $0x200] sm:$0xff] %vm539, 0.0
        %557 = vst.msk [vmem:[#allocation2 + $0x220] sm:$0xff] %vm539, 0.0
        %558 = vst.msk [vmem:[#allocation2 + $0x18] sm:$0xff] %vm539, 0.0
        %559 = vst.msk [vmem:[#allocation2 + $0x38] sm:$0xff] %vm539, 0.0
        %560 = vst.msk [vmem:[#allocation2 + $0x58] sm:$0xff] %vm539, 0.0
        %561 = vst.msk [vmem:[#allocation2 + $0x78] sm:$0xff] %vm539, 0.0
        %562 = vst.msk [vmem:[#allocation2 + $0x98] sm:$0xff] %vm539, 0.0
        %563 = vst.msk [vmem:[#allocation2 + $0xb8] sm:$0xff] %vm539, 0.0
        %564 = vst.msk [vmem:[#allocation2 + $0xd8] sm:$0xff] %vm539, 0.0
        %565 = vst.msk [vmem:[#allocation2 + $0xf8] sm:$0xff] %vm539, 0.0
        %566 = vst.msk [vmem:[#allocation2 + $0x118] sm:$0xff] %vm539, 0.0
        %567 = vst.msk [vmem:[#allocation2 + $0x138] sm:$0xff] %vm539, 0.0
        %568 = vst.msk [vmem:[#allocation2 + $0x158] sm:$0xff] %vm539, 0.0
        %569 = vst.msk [vmem:[#allocation2 + $0x178] sm:$0xff] %vm539, 0.0
        %570 = vst.msk [vmem:[#allocation2 + $0x198] sm:$0xff] %vm539, 0.0
        %571 = vst.msk [vmem:[#allocation2 + $0x1b8] sm:$0xff] %vm539, 0.0
        %572 = vst.msk [vmem:[#allocation2 + $0x1d8] sm:$0xff] %vm539, 0.0
        %573 = vst.msk [vmem:[#allocation2 + $0x1f8] sm:$0xff] %vm539, 0.0
        %574 = vst.msk [vmem:[#allocation2 + $0x218] sm:$0xff] %vm539, 0.0
        %575 = vst.msk [vmem:[#allocation2 + $0x238] sm:$0xff] %vm539, 0.0
        %576 = vst.msk [vmem:[#allocation2 + $0x8] sm:$0xff] %vm539, 0.0
        %577 = vst.msk [vmem:[#allocation2 + $0x10] sm:$0xff] %vm539, 0.0
        %s578 = scalar_lea.vmem [#allocation2], 544
        %579 = vst.msk [vmem:[%s578 + $0x8] sm:$0xff] %vm539, 0.0
        %580 = vst.msk [vmem:[%s578 + $0x10] sm:$0xff] %vm539, 0.0
        %s581 = scalar_lea.vmem [#allocation2], 32
        %582 = vst.msk [vmem:[%s581 + $0x8] sm:$0xff] %vm539, %v507
        %583 = vst.msk [vmem:[%s581 + $0x10] sm:$0xff] %vm539, %v508
        %584 = vst.msk [vmem:[%s581 + $0x28] sm:$0xff] %vm539, %v509
        %585 = vst.msk [vmem:[%s581 + $0x30] sm:$0xff] %vm539, %v510
        %586 = vst.msk [vmem:[%s581 + $0x48] sm:$0xff] %vm539, %v511
        %587 = vst.msk [vmem:[%s581 + $0x50] sm:$0xff] %vm539, %v512
        %588 = vst.msk [vmem:[%s581 + $0x68] sm:$0xff] %vm539, %v513
        %589 = vst.msk [vmem:[%s581 + $0x70] sm:$0xff] %vm539, %v514
        %590 = vst.msk [vmem:[%s581 + $0x88] sm:$0xff] %vm539, %v515
        %591 = vst.msk [vmem:[%s581 + $0x90] sm:$0xff] %vm539, %v516
        %592 = vst.msk [vmem:[%s581 + $0xa8] sm:$0xff] %vm539, %v517
        %593 = vst.msk [vmem:[%s581 + $0xb0] sm:$0xff] %vm539, %v518
        %594 = vst.msk [vmem:[%s581 + $0xc8] sm:$0xff] %vm539, %v519
        %595 = vst.msk [vmem:[%s581 + $0xd0] sm:$0xff] %vm539, %v520
        %596 = vst.msk [vmem:[%s581 + $0xe8] sm:$0xff] %vm539, %v521
        %597 = vst.msk [vmem:[%s581 + $0xf0] sm:$0xff] %vm539, %v522
        %598 = vst.msk [vmem:[%s581 + $0x108] sm:$0xff] %vm539, %v523
        %599 = vst.msk [vmem:[%s581 + $0x110] sm:$0xff] %vm539, %v524
        %600 = vst.msk [vmem:[%s581 + $0x128] sm:$0xff] %vm539, %v525
        %601 = vst.msk [vmem:[%s581 + $0x130] sm:$0xff] %vm539, %v526
        %602 = vst.msk [vmem:[%s581 + $0x148] sm:$0xff] %vm539, %v527
        %603 = vst.msk [vmem:[%s581 + $0x150] sm:$0xff] %vm539, %v528
        %604 = vst.msk [vmem:[%s581 + $0x168] sm:$0xff] %vm539, %v529
        %605 = vst.msk [vmem:[%s581 + $0x170] sm:$0xff] %vm539, %v530
        %606 = vst.msk [vmem:[%s581 + $0x188] sm:$0xff] %vm539, %v531
        %607 = vst.msk [vmem:[%s581 + $0x190] sm:$0xff] %vm539, %v532
        %608 = vst.msk [vmem:[%s581 + $0x1a8] sm:$0xff] %vm539, %v533
        %609 = vst.msk [vmem:[%s581 + $0x1b0] sm:$0xff] %vm539, %v534
        %610 = vst.msk [vmem:[%s581 + $0x1c8] sm:$0xff] %vm539, %v535
        %611 = vst.msk [vmem:[%s581 + $0x1d0] sm:$0xff] %vm539, %v536
        %612 = vst.msk [vmem:[%s581 + $0x1e8] sm:$0xff] %vm539, %v537
        %613 = vst.msk [vmem:[%s581 + $0x1f0] sm:$0xff] %vm539, %v538
        %v614 = vld [vmem:[#allocation2 + $0x7] sm:$0xff]
        %v615 = vld [vmem:[#allocation2 + $0xf] sm:$0xff]
        %v616 = vld [vmem:[#allocation2 + $0x27] sm:$0xff]
        %v617 = vld [vmem:[#allocation2 + $0x2f] sm:$0xff]
        %v618 = vld [vmem:[#allocation2 + $0x47] sm:$0xff]
        %v619 = vld [vmem:[#allocation2 + $0x4f] sm:$0xff]
        %v620 = vld [vmem:[#allocation2 + $0x67] sm:$0xff]
        %v621 = vld [vmem:[#allocation2 + $0x6f] sm:$0xff]
        %v622 = vld [vmem:[#allocation2 + $0x87] sm:$0xff]
        %v623 = vld [vmem:[#allocation2 + $0x8f] sm:$0xff]
        %v624 = vld [vmem:[#allocation2 + $0xa7] sm:$0xff]
        %v625 = vld [vmem:[#allocation2 + $0xaf] sm:$0xff]
        %v626 = vld [vmem:[#allocation2 + $0xc7] sm:$0xff]
        %v627 = vld [vmem:[#allocation2 + $0xcf] sm:$0xff]
        %v628 = vld [vmem:[#allocation2 + $0xe7] sm:$0xff]
        %v629 = vld [vmem:[#allocation2 + $0xef] sm:$0xff]
        %v630 = vld [vmem:[#allocation2 + $0x107] sm:$0xff]
        %v631 = vld [vmem:[#allocation2 + $0x10f] sm:$0xff]
        %v632 = vld [vmem:[#allocation2 + $0x127] sm:$0xff]
        %v633 = vld [vmem:[#allocation2 + $0x12f] sm:$0xff]
        %v634 = vld [vmem:[#allocation2 + $0x147] sm:$0xff]
        %v635 = vld [vmem:[#allocation2 + $0x14f] sm:$0xff]
        %v636 = vld [vmem:[#allocation2 + $0x167] sm:$0xff]
        %v637 = vld [vmem:[#allocation2 + $0x16f] sm:$0xff]
        %v638 = vld [vmem:[#allocation2 + $0x187] sm:$0xff]
        %v639 = vld [vmem:[#allocation2 + $0x18f] sm:$0xff]
        %v640 = vld [vmem:[#allocation2 + $0x1a7] sm:$0xff]
        %v641 = vld [vmem:[#allocation2 + $0x1af] sm:$0xff]
        %v642 = vld [vmem:[#allocation2 + $0x1c7] sm:$0xff]
        %v643 = vld [vmem:[#allocation2 + $0x1cf] sm:$0xff]
        %v644 = vld [vmem:[#allocation2 + $0x1e7] sm:$0xff]
        %v645 = vld [vmem:[#allocation2 + $0x1ef] sm:$0xff]
        %v646 = vld [vmem:[#allocation8] sm:$0xff]
        %v647 = vld [vmem:[#allocation8 + $0x8] sm:$0xff]
        %v648 = vld [vmem:[#allocation8 + $0x10] sm:$0xff]
        %v649 = vld [vmem:[#allocation8 + $0x18] sm:$0xff]
        %v650 = vld [vmem:[#allocation2 + $0x8] sm:$0xff]
        %v651 = vld [vmem:[#allocation2 + $0x10] sm:$0xff]
        %v652 = vld [vmem:[#allocation2 + $0x28] sm:$0xff]
        %v653 = vld [vmem:[#allocation2 + $0x30] sm:$0xff]
        %v654 = vld [vmem:[#allocation2 + $0x48] sm:$0xff]
        %v655 = vld [vmem:[#allocation2 + $0x50] sm:$0xff]
        %v656 = vld [vmem:[#allocation2 + $0x68] sm:$0xff]
        %v657 = vld [vmem:[#allocation2 + $0x70] sm:$0xff]
        %v658 = vld [vmem:[#allocation2 + $0x88] sm:$0xff]
        %v659 = vld [vmem:[#allocation2 + $0x90] sm:$0xff]
        %v660 = vld [vmem:[#allocation2 + $0xa8] sm:$0xff]
        %v661 = vld [vmem:[#allocation2 + $0xb0] sm:$0xff]
        %v662 = vld [vmem:[#allocation2 + $0xc8] sm:$0xff]
        %v663 = vld [vmem:[#allocation2 + $0xd0] sm:$0xff]
        %v664 = vld [vmem:[#allocation2 + $0xe8] sm:$0xff]
        %v665 = vld [vmem:[#allocation2 + $0xf0] sm:$0xff]
        %v666 = vld [vmem:[#allocation2 + $0x108] sm:$0xff]
        %v667 = vld [vmem:[#allocation2 + $0x110] sm:$0xff]
        %v668 = vld [vmem:[#allocation2 + $0x128] sm:$0xff]
        %v669 = vld [vmem:[#allocation2 + $0x130] sm:$0xff]
        %v670 = vld [vmem:[#allocation2 + $0x148] sm:$0xff]
        %v671 = vld [vmem:[#allocation2 + $0x150] sm:$0xff]
        %v672 = vld [vmem:[#allocation2 + $0x168] sm:$0xff]
        %v673 = vld [vmem:[#allocation2 + $0x170] sm:$0xff]
        %v674 = vld [vmem:[#allocation2 + $0x188] sm:$0xff]
        %v675 = vld [vmem:[#allocation2 + $0x190] sm:$0xff]
        %v676 = vld [vmem:[#allocation2 + $0x1a8] sm:$0xff]
        %v677 = vld [vmem:[#allocation2 + $0x1b0] sm:$0xff]
        %v678 = vld [vmem:[#allocation2 + $0x1c8] sm:$0xff]
        %v679 = vld [vmem:[#allocation2 + $0x1d0] sm:$0xff]
        %v680 = vld [vmem:[#allocation2 + $0x1e8] sm:$0xff]
        %v681 = vld [vmem:[#allocation2 + $0x1f0] sm:$0xff]
        %s682 = scalar_lea.vmem [#allocation8], 32
        %v683 = vld [vmem:[%s682] sm:$0xff]
        %v684 = vld [vmem:[%s682 + $0x8] sm:$0xff]
        %v685 = vld [vmem:[%s682 + $0x10] sm:$0xff]
        %v686 = vld [vmem:[%s682 + $0x18] sm:$0xff]
        %v688 = vsel %vm539, %v650, 0
        %v691 = vsel %vm539, %v651, 0
        %v694 = vsel %vm539, %v652, 0
        %v697 = vsel %vm539, %v653, 0
        %v700 = vsel %vm539, %v654, 0
        %v703 = vsel %vm539, %v655, 0
        %v706 = vsel %vm539, %v656, 0
        %v709 = vsel %vm539, %v657, 0
        %v712 = vsel %vm539, %v658, 0
        %v715 = vsel %vm539, %v659, 0
        %v718 = vsel %vm539, %v660, 0
        %v721 = vsel %vm539, %v661, 0
        %v724 = vsel %vm539, %v662, 0
        %v727 = vsel %vm539, %v663, 0
        %v730 = vsel %vm539, %v664, 0
        %v733 = vsel %vm539, %v665, 0
        %v736 = vsel %vm539, %v666, 0
        %v739 = vsel %vm539, %v667, 0
        %v742 = vsel %vm539, %v668, 0
        %v745 = vsel %vm539, %v669, 0
        %v748 = vsel %vm539, %v670, 0
        %v751 = vsel %vm539, %v671, 0
        %v754 = vsel %vm539, %v672, 0
        %v757 = vsel %vm539, %v673, 0
        %v760 = vsel %vm539, %v674, 0
        %v763 = vsel %vm539, %v675, 0
        %v766 = vsel %vm539, %v676, 0
        %v769 = vsel %vm539, %v677, 0
        %v772 = vsel %vm539, %v678, 0
        %v775 = vsel %vm539, %v679, 0
        %v778 = vsel %vm539, %v680, 0
        %v781 = vsel %vm539, %v681, 0
        %783 = vmatpush.msra.mxu0 0.0
        %784 = vmatpush.msra.mxu0 0.0
        %785 = vmatpush.msra.mxu0 0.0
        %786 = vmatpush.msra.mxu0 0.0
        %787 = vmatpush.msra.mxu0 0.0
        %788 = vmatpush.msra.mxu0 0.0
        %789 = vmatpush.msra.mxu0 0.0
        %790 = vmatpush.msra.mxu0 0.0
        %791 = vmatpush.msra.mxu0 0.0
        %792 = vmatpush.msra.mxu0 0.0
        %793 = vmatpush.msra.mxu0 0.0
        %794 = vmatpush.msra.mxu0 0.0
        %795 = vmatpush.msra.mxu0 %v686
        %796 = vmatpush.msra.mxu0 %v685
        %797 = vmatpush.msra.mxu0 %v684
        %798 = vmatpush.msra.mxu0 %v683
        %799 = vmatmul.f32.gmra.mxu0 %v688
        %v800 = vpop.f32.mrf.mxu0
        %v801 = vadd.f32 0.0, %v800
        %802 = vmatmul.f32.gmra.mxu0 %v691
        %v803 = vpop.f32.mrf.mxu0
        %v804 = vadd.f32 0.0, %v803
        %805 = vmatmul.f32.gmra.mxu0 %v694
        %v806 = vpop.f32.mrf.mxu0
        %v807 = vadd.f32 0.0, %v806
        %808 = vmatmul.f32.gmra.mxu0 %v697
        %v809 = vpop.f32.mrf.mxu0
        %v810 = vadd.f32 0.0, %v809
        %811 = vmatmul.f32.gmra.mxu0 %v700
        %v812 = vpop.f32.mrf.mxu0
        %v813 = vadd.f32 0.0, %v812
        %814 = vmatmul.f32.gmra.mxu0 %v703
        %v815 = vpop.f32.mrf.mxu0
        %v816 = vadd.f32 0.0, %v815
        %817 = vmatmul.f32.gmra.mxu0 %v706
        %v818 = vpop.f32.mrf.mxu0
        %v819 = vadd.f32 0.0, %v818
        %820 = vmatmul.f32.gmra.mxu0 %v709
        %v821 = vpop.f32.mrf.mxu0
        %v822 = vadd.f32 0.0, %v821
        %823 = vmatmul.f32.gmra.mxu0 %v712
        %v824 = vpop.f32.mrf.mxu0
        %v825 = vadd.f32 0.0, %v824
        %826 = vmatmul.f32.gmra.mxu0 %v715
        %v827 = vpop.f32.mrf.mxu0
        %v828 = vadd.f32 0.0, %v827
        %829 = vmatmul.f32.gmra.mxu0 %v718
        %v830 = vpop.f32.mrf.mxu0
        %v831 = vadd.f32 0.0, %v830
        %832 = vmatmul.f32.gmra.mxu0 %v721
        %v833 = vpop.f32.mrf.mxu0
        %v834 = vadd.f32 0.0, %v833
        %835 = vmatmul.f32.gmra.mxu0 %v724
        %v836 = vpop.f32.mrf.mxu0
        %v837 = vadd.f32 0.0, %v836
        %838 = vmatmul.f32.gmra.mxu0 %v727
        %v839 = vpop.f32.mrf.mxu0
        %v840 = vadd.f32 0.0, %v839
        %841 = vmatmul.f32.gmra.mxu0 %v730
        %v842 = vpop.f32.mrf.mxu0
        %v843 = vadd.f32 0.0, %v842
        %844 = vmatmul.f32.gmra.mxu0 %v733
        %v845 = vpop.f32.mrf.mxu0
        %v846 = vadd.f32 0.0, %v845
        %847 = vmatmul.f32.gmra.mxu0 %v736
        %v848 = vpop.f32.mrf.mxu0
        %v849 = vadd.f32 0.0, %v848
        %850 = vmatmul.f32.gmra.mxu0 %v739
        %v851 = vpop.f32.mrf.mxu0
        %v852 = vadd.f32 0.0, %v851
        %853 = vmatmul.f32.gmra.mxu0 %v742
        %v854 = vpop.f32.mrf.mxu0
        %v855 = vadd.f32 0.0, %v854
        %856 = vmatmul.f32.gmra.mxu0 %v745
        %v857 = vpop.f32.mrf.mxu0
        %v858 = vadd.f32 0.0, %v857
        %859 = vmatmul.f32.gmra.mxu0 %v748
        %v860 = vpop.f32.mrf.mxu0
        %v861 = vadd.f32 0.0, %v860
        %862 = vmatmul.f32.gmra.mxu0 %v751
        %v863 = vpop.f32.mrf.mxu0
        %v864 = vadd.f32 0.0, %v863
        %865 = vmatmul.f32.gmra.mxu0 %v754
        %v866 = vpop.f32.mrf.mxu0
        %v867 = vadd.f32 0.0, %v866
        %868 = vmatmul.f32.gmra.mxu0 %v757
        %v869 = vpop.f32.mrf.mxu0
        %v870 = vadd.f32 0.0, %v869
        %871 = vmatmul.f32.gmra.mxu0 %v760
        %v872 = vpop.f32.mrf.mxu0
        %v873 = vadd.f32 0.0, %v872
        %874 = vmatmul.f32.gmra.mxu0 %v763
        %v875 = vpop.f32.mrf.mxu0
        %v876 = vadd.f32 0.0, %v875
        %877 = vmatmul.f32.gmra.mxu0 %v766
        %v878 = vpop.f32.mrf.mxu0
        %v879 = vadd.f32 0.0, %v878
        %880 = vmatmul.f32.gmra.mxu0 %v769
        %v881 = vpop.f32.mrf.mxu0
        %v882 = vadd.f32 0.0, %v881
        %883 = vmatmul.f32.gmra.mxu0 %v772
        %v884 = vpop.f32.mrf.mxu0
        %v885 = vadd.f32 0.0, %v884
        %886 = vmatmul.f32.gmra.mxu0 %v775
        %v887 = vpop.f32.mrf.mxu0
        %v888 = vadd.f32 0.0, %v887
        %889 = vmatmul.f32.gmra.mxu0 %v778
        %v890 = vpop.f32.mrf.mxu0
        %v891 = vadd.f32 0.0, %v890
        %892 = vmatmul.f32.gmra.mxu0 %v781
        %v893 = vpop.f32.mrf.mxu0
        %v894 = vadd.f32 0.0, %v893
        %895 = vdwg.mxu0
        %v897 = vsel %vm539, %v614, 0
        %v900 = vsel %vm539, %v615, 0
        %v903 = vsel %vm539, %v616, 0
        %v906 = vsel %vm539, %v617, 0
        %v909 = vsel %vm539, %v618, 0
        %v912 = vsel %vm539, %v619, 0
        %v915 = vsel %vm539, %v620, 0
        %v918 = vsel %vm539, %v621, 0
        %v921 = vsel %vm539, %v622, 0
        %v924 = vsel %vm539, %v623, 0
        %v927 = vsel %vm539, %v624, 0
        %v930 = vsel %vm539, %v625, 0
        %v933 = vsel %vm539, %v626, 0
        %v936 = vsel %vm539, %v627, 0
        %v939 = vsel %vm539, %v628, 0
        %v942 = vsel %vm539, %v629, 0
        %v945 = vsel %vm539, %v630, 0
        %v948 = vsel %vm539, %v631, 0
        %v951 = vsel %vm539, %v632, 0
        %v954 = vsel %vm539, %v633, 0
        %v957 = vsel %vm539, %v634, 0
        %v960 = vsel %vm539, %v635, 0
        %v963 = vsel %vm539, %v636, 0
        %v966 = vsel %vm539, %v637, 0
        %v969 = vsel %vm539, %v638, 0
        %v972 = vsel %vm539, %v639, 0
        %v975 = vsel %vm539, %v640, 0
        %v978 = vsel %vm539, %v641, 0
        %v981 = vsel %vm539, %v642, 0
        %v984 = vsel %vm539, %v643, 0
        %v987 = vsel %vm539, %v644, 0
        %v990 = vsel %vm539, %v645, 0
        %992 = vmatpush.msra.mxu0 0.0
        %993 = vmatpush.msra.mxu0 0.0
        %994 = vmatpush.msra.mxu0 0.0
        %995 = vmatpush.msra.mxu0 0.0
        %996 = vmatpush.msra.mxu0 0.0
        %997 = vmatpush.msra.mxu0 0.0
        %998 = vmatpush.msra.mxu0 0.0
        %999 = vmatpush.msra.mxu0 0.0
        %1000 = vmatpush.msra.mxu0 0.0
        %1001 = vmatpush.msra.mxu0 0.0
        %1002 = vmatpush.msra.mxu0 0.0
        %1003 = vmatpush.msra.mxu0 0.0
        %1004 = vmatpush.msra.mxu0 %v649
        %1005 = vmatpush.msra.mxu0 %v648
        %1006 = vmatpush.msra.mxu0 %v647
        %1007 = vmatpush.msra.mxu0 %v646
        %1008 = vmatmul.f32.gmra.mxu0 %v897
        %v1009 = vpop.f32.mrf.mxu0
        %v1010 = vadd.f32 %v801, %v1009
        %1011 = vmatmul.f32.gmra.mxu0 %v900
        %v1012 = vpop.f32.mrf.mxu0
        %v1013 = vadd.f32 %v804, %v1012
        %1014 = vmatmul.f32.gmra.mxu0 %v903
        %v1015 = vpop.f32.mrf.mxu0
        %v1016 = vadd.f32 %v807, %v1015
        %1017 = vmatmul.f32.gmra.mxu0 %v906
        %v1018 = vpop.f32.mrf.mxu0
        %v1019 = vadd.f32 %v810, %v1018
        %1020 = vmatmul.f32.gmra.mxu0 %v909
        %v1021 = vpop.f32.mrf.mxu0
        %v1022 = vadd.f32 %v813, %v1021
        %1023 = vmatmul.f32.gmra.mxu0 %v912
        %v1024 = vpop.f32.mrf.mxu0
        %v1025 = vadd.f32 %v816, %v1024
        %1026 = vmatmul.f32.gmra.mxu0 %v915
        %v1027 = vpop.f32.mrf.mxu0
        %v1028 = vadd.f32 %v819, %v1027
        %1029 = vmatmul.f32.gmra.mxu0 %v918
        %v1030 = vpop.f32.mrf.mxu0
        %v1031 = vadd.f32 %v822, %v1030
        %1032 = vmatmul.f32.gmra.mxu0 %v921
        %v1033 = vpop.f32.mrf.mxu0
        %v1034 = vadd.f32 %v825, %v1033
        %1035 = vmatmul.f32.gmra.mxu0 %v924
        %v1036 = vpop.f32.mrf.mxu0
        %v1037 = vadd.f32 %v828, %v1036
        %1038 = vmatmul.f32.gmra.mxu0 %v927
        %v1039 = vpop.f32.mrf.mxu0
        %v1040 = vadd.f32 %v831, %v1039
        %1041 = vmatmul.f32.gmra.mxu0 %v930
        %v1042 = vpop.f32.mrf.mxu0
        %v1043 = vadd.f32 %v834, %v1042
        %1044 = vmatmul.f32.gmra.mxu0 %v933
        %v1045 = vpop.f32.mrf.mxu0
        %v1046 = vadd.f32 %v837, %v1045
        %1047 = vmatmul.f32.gmra.mxu0 %v936
        %v1048 = vpop.f32.mrf.mxu0
        %v1049 = vadd.f32 %v840, %v1048
        %1050 = vmatmul.f32.gmra.mxu0 %v939
        %v1051 = vpop.f32.mrf.mxu0
        %v1052 = vadd.f32 %v843, %v1051
        %1053 = vmatmul.f32.gmra.mxu0 %v942
        %v1054 = vpop.f32.mrf.mxu0
        %v1055 = vadd.f32 %v846, %v1054
        %1056 = vmatmul.f32.gmra.mxu0 %v945
        %v1057 = vpop.f32.mrf.mxu0
        %v1058 = vadd.f32 %v849, %v1057
        %1059 = vmatmul.f32.gmra.mxu0 %v948
        %v1060 = vpop.f32.mrf.mxu0
        %v1061 = vadd.f32 %v852, %v1060
        %1062 = vmatmul.f32.gmra.mxu0 %v951
        %v1063 = vpop.f32.mrf.mxu0
        %v1064 = vadd.f32 %v855, %v1063
        %1065 = vmatmul.f32.gmra.mxu0 %v954
        %v1066 = vpop.f32.mrf.mxu0
        %v1067 = vadd.f32 %v858, %v1066
        %1068 = vmatmul.f32.gmra.mxu0 %v957
        %v1069 = vpop.f32.mrf.mxu0
        %v1070 = vadd.f32 %v861, %v1069
        %1071 = vmatmul.f32.gmra.mxu0 %v960
        %v1072 = vpop.f32.mrf.mxu0
        %v1073 = vadd.f32 %v864, %v1072
        %1074 = vmatmul.f32.gmra.mxu0 %v963
        %v1075 = vpop.f32.mrf.mxu0
        %v1076 = vadd.f32 %v867, %v1075
        %1077 = vmatmul.f32.gmra.mxu0 %v966
        %v1078 = vpop.f32.mrf.mxu0
        %v1079 = vadd.f32 %v870, %v1078
        %1080 = vmatmul.f32.gmra.mxu0 %v969
        %v1081 = vpop.f32.mrf.mxu0
        %v1082 = vadd.f32 %v873, %v1081
        %1083 = vmatmul.f32.gmra.mxu0 %v972
        %v1084 = vpop.f32.mrf.mxu0
        %v1085 = vadd.f32 %v876, %v1084
        %1086 = vmatmul.f32.gmra.mxu0 %v975
        %v1087 = vpop.f32.mrf.mxu0
        %v1088 = vadd.f32 %v879, %v1087
        %1089 = vmatmul.f32.gmra.mxu0 %v978
        %v1090 = vpop.f32.mrf.mxu0
        %v1091 = vadd.f32 %v882, %v1090
        %1092 = vmatmul.f32.gmra.mxu0 %v981
        %v1093 = vpop.f32.mrf.mxu0
        %v1094 = vadd.f32 %v885, %v1093
        %1095 = vmatmul.f32.gmra.mxu0 %v984
        %v1096 = vpop.f32.mrf.mxu0
        %v1097 = vadd.f32 %v888, %v1096
        %1098 = vmatmul.f32.gmra.mxu0 %v987
        %v1099 = vpop.f32.mrf.mxu0
        %v1100 = vadd.f32 %v891, %v1099
        %1101 = vmatmul.f32.gmra.mxu0 %v990
        %v1102 = vpop.f32.mrf.mxu0
        %v1103 = vadd.f32 %v894, %v1102
        %1104 = vdwg.mxu0
        %v1105 = vld [vmem:[#allocation2 + $0x9] sm:$0xff]
        %v1106 = vld [vmem:[#allocation2 + $0x11] sm:$0xff]
        %v1107 = vld [vmem:[#allocation2 + $0x29] sm:$0xff]
        %v1108 = vld [vmem:[#allocation2 + $0x31] sm:$0xff]
        %v1109 = vld [vmem:[#allocation2 + $0x49] sm:$0xff]
        %v1110 = vld [vmem:[#allocation2 + $0x51] sm:$0xff]
        %v1111 = vld [vmem:[#allocation2 + $0x69] sm:$0xff]
        %v1112 = vld [vmem:[#allocation2 + $0x71] sm:$0xff]
        %v1113 = vld [vmem:[#allocation2 + $0x89] sm:$0xff]
        %v1114 = vld [vmem:[#allocation2 + $0x91] sm:$0xff]
        %v1115 = vld [vmem:[#allocation2 + $0xa9] sm:$0xff]
        %v1116 = vld [vmem:[#allocation2 + $0xb1] sm:$0xff]
        %v1117 = vld [vmem:[#allocation2 + $0xc9] sm:$0xff]
        %v1118 = vld [vmem:[#allocation2 + $0xd1] sm:$0xff]
        %v1119 = vld [vmem:[#allocation2 + $0xe9] sm:$0xff]
        %v1120 = vld [vmem:[#allocation2 + $0xf1] sm:$0xff]
        %v1121 = vld [vmem:[#allocation2 + $0x109] sm:$0xff]
        %v1122 = vld [vmem:[#allocation2 + $0x111] sm:$0xff]
        %v1123 = vld [vmem:[#allocation2 + $0x129] sm:$0xff]
        %v1124 = vld [vmem:[#allocation2 + $0x131] sm:$0xff]
        %v1125 = vld [vmem:[#allocation2 + $0x149] sm:$0xff]
        %v1126 = vld [vmem:[#allocation2 + $0x151] sm:$0xff]
        %v1127 = vld [vmem:[#allocation2 + $0x169] sm:$0xff]
        %v1128 = vld [vmem:[#allocation2 + $0x171] sm:$0xff]
        %v1129 = vld [vmem:[#allocation2 + $0x189] sm:$0xff]
        %v1130 = vld [vmem:[#allocation2 + $0x191] sm:$0xff]
        %v1131 = vld [vmem:[#allocation2 + $0x1a9] sm:$0xff]
        %v1132 = vld [vmem:[#allocation2 + $0x1b1] sm:$0xff]
        %v1133 = vld [vmem:[#allocation2 + $0x1c9] sm:$0xff]
        %v1134 = vld [vmem:[#allocation2 + $0x1d1] sm:$0xff]
        %v1135 = vld [vmem:[#allocation2 + $0x1e9] sm:$0xff]
        %v1136 = vld [vmem:[#allocation2 + $0x1f1] sm:$0xff]
        %s1137 = scalar_lea.vmem [#allocation8], 64
        %v1138 = vld [vmem:[%s1137] sm:$0xff]
        %v1139 = vld [vmem:[%s1137 + $0x8] sm:$0xff]
        %v1140 = vld [vmem:[%s1137 + $0x10] sm:$0xff]
        %v1141 = vld [vmem:[%s1137 + $0x18] sm:$0xff]
        %v1143 = vsel %vm539, %v1105, 0
        %v1146 = vsel %vm539, %v1106, 0
        %v1149 = vsel %vm539, %v1107, 0
        %v1152 = vsel %vm539, %v1108, 0
        %v1155 = vsel %vm539, %v1109, 0
        %v1158 = vsel %vm539, %v1110, 0
        %v1161 = vsel %vm539, %v1111, 0
        %v1164 = vsel %vm539, %v1112, 0
        %v1167 = vsel %vm539, %v1113, 0
        %v1170 = vsel %vm539, %v1114, 0
        %v1173 = vsel %vm539, %v1115, 0
        %v1176 = vsel %vm539, %v1116, 0
        %v1179 = vsel %vm539, %v1117, 0
        %v1182 = vsel %vm539, %v1118, 0
        %v1185 = vsel %vm539, %v1119, 0
        %v1188 = vsel %vm539, %v1120, 0
        %v1191 = vsel %vm539, %v1121, 0
        %v1194 = vsel %vm539, %v1122, 0
        %v1197 = vsel %vm539, %v1123, 0
        %v1200 = vsel %vm539, %v1124, 0
        %v1203 = vsel %vm539, %v1125, 0
        %v1206 = vsel %vm539, %v1126, 0
        %v1209 = vsel %vm539, %v1127, 0
        %v1212 = vsel %vm539, %v1128, 0
        %v1215 = vsel %vm539, %v1129, 0
        %v1218 = vsel %vm539, %v1130, 0
        %v1221 = vsel %vm539, %v1131, 0
        %v1224 = vsel %vm539, %v1132, 0
        %v1227 = vsel %vm539, %v1133, 0
        %v1230 = vsel %vm539, %v1134, 0
        %v1233 = vsel %vm539, %v1135, 0
        %v1236 = vsel %vm539, %v1136, 0
        %1238 = vmatpush.msra.mxu0 0.0
        %1239 = vmatpush.msra.mxu0 0.0
        %1240 = vmatpush.msra.mxu0 0.0
        %1241 = vmatpush.msra.mxu0 0.0
        %1242 = vmatpush.msra.mxu0 0.0
        %1243 = vmatpush.msra.mxu0 0.0
        %1244 = vmatpush.msra.mxu0 0.0
        %1245 = vmatpush.msra.mxu0 0.0
        %1246 = vmatpush.msra.mxu0 0.0
        %1247 = vmatpush.msra.mxu0 0.0
        %1248 = vmatpush.msra.mxu0 0.0
        %1249 = vmatpush.msra.mxu0 0.0
        %1250 = vmatpush.msra.mxu0 %v1141
        %1251 = vmatpush.msra.mxu0 %v1140
        %1252 = vmatpush.msra.mxu0 %v1139
        %1253 = vmatpush.msra.mxu0 %v1138
        %1254 = vmatmul.f32.gmra.mxu0 %v1143
        %v1255 = vpop.f32.mrf.mxu0
        %v1256 = vadd.f32 0.0, %v1255
        %1257 = vmatmul.f32.gmra.mxu0 %v1146
        %v1258 = vpop.f32.mrf.mxu0
        %v1259 = vadd.f32 0.0, %v1258
        %1260 = vmatmul.f32.gmra.mxu0 %v1149
        %v1261 = vpop.f32.mrf.mxu0
        %v1262 = vadd.f32 0.0, %v1261
        %1263 = vmatmul.f32.gmra.mxu0 %v1152
        %v1264 = vpop.f32.mrf.mxu0
        %v1265 = vadd.f32 0.0, %v1264
        %1266 = vmatmul.f32.gmra.mxu0 %v1155
        %v1267 = vpop.f32.mrf.mxu0
        %v1268 = vadd.f32 0.0, %v1267
        %1269 = vmatmul.f32.gmra.mxu0 %v1158
        %v1270 = vpop.f32.mrf.mxu0
        %v1271 = vadd.f32 0.0, %v1270
        %1272 = vmatmul.f32.gmra.mxu0 %v1161
        %v1273 = vpop.f32.mrf.mxu0
        %v1274 = vadd.f32 0.0, %v1273
        %1275 = vmatmul.f32.gmra.mxu0 %v1164
        %v1276 = vpop.f32.mrf.mxu0
        %v1277 = vadd.f32 0.0, %v1276
        %1278 = vmatmul.f32.gmra.mxu0 %v1167
        %v1279 = vpop.f32.mrf.mxu0
        %v1280 = vadd.f32 0.0, %v1279
        %1281 = vmatmul.f32.gmra.mxu0 %v1170
        %v1282 = vpop.f32.mrf.mxu0
        %v1283 = vadd.f32 0.0, %v1282
        %1284 = vmatmul.f32.gmra.mxu0 %v1173
        %v1285 = vpop.f32.mrf.mxu0
        %v1286 = vadd.f32 0.0, %v1285
        %1287 = vmatmul.f32.gmra.mxu0 %v1176
        %v1288 = vpop.f32.mrf.mxu0
        %v1289 = vadd.f32 0.0, %v1288
        %1290 = vmatmul.f32.gmra.mxu0 %v1179
        %v1291 = vpop.f32.mrf.mxu0
        %v1292 = vadd.f32 0.0, %v1291
        %1293 = vmatmul.f32.gmra.mxu0 %v1182
        %v1294 = vpop.f32.mrf.mxu0
        %v1295 = vadd.f32 0.0, %v1294
        %1296 = vmatmul.f32.gmra.mxu0 %v1185
        %v1297 = vpop.f32.mrf.mxu0
        %v1298 = vadd.f32 0.0, %v1297
        %1299 = vmatmul.f32.gmra.mxu0 %v1188
        %v1300 = vpop.f32.mrf.mxu0
        %v1301 = vadd.f32 0.0, %v1300
        %1302 = vmatmul.f32.gmra.mxu0 %v1191
        %v1303 = vpop.f32.mrf.mxu0
        %v1304 = vadd.f32 0.0, %v1303
        %1305 = vmatmul.f32.gmra.mxu0 %v1194
        %v1306 = vpop.f32.mrf.mxu0
        %v1307 = vadd.f32 0.0, %v1306
        %1308 = vmatmul.f32.gmra.mxu0 %v1197
        %v1309 = vpop.f32.mrf.mxu0
        %v1310 = vadd.f32 0.0, %v1309
        %1311 = vmatmul.f32.gmra.mxu0 %v1200
        %v1312 = vpop.f32.mrf.mxu0
        %v1313 = vadd.f32 0.0, %v1312
        %1314 = vmatmul.f32.gmra.mxu0 %v1203
        %v1315 = vpop.f32.mrf.mxu0
        %v1316 = vadd.f32 0.0, %v1315
        %1317 = vmatmul.f32.gmra.mxu0 %v1206
        %v1318 = vpop.f32.mrf.mxu0
        %v1319 = vadd.f32 0.0, %v1318
        %1320 = vmatmul.f32.gmra.mxu0 %v1209
        %v1321 = vpop.f32.mrf.mxu0
        %v1322 = vadd.f32 0.0, %v1321
        %1323 = vmatmul.f32.gmra.mxu0 %v1212
        %v1324 = vpop.f32.mrf.mxu0
        %v1325 = vadd.f32 0.0, %v1324
        %1326 = vmatmul.f32.gmra.mxu0 %v1215
        %v1327 = vpop.f32.mrf.mxu0
        %v1328 = vadd.f32 0.0, %v1327
        %1329 = vmatmul.f32.gmra.mxu0 %v1218
        %v1330 = vpop.f32.mrf.mxu0
        %v1331 = vadd.f32 0.0, %v1330
        %1332 = vmatmul.f32.gmra.mxu0 %v1221
        %v1333 = vpop.f32.mrf.mxu0
        %v1334 = vadd.f32 0.0, %v1333
        %1335 = vmatmul.f32.gmra.mxu0 %v1224
        %v1336 = vpop.f32.mrf.mxu0
        %v1337 = vadd.f32 0.0, %v1336
        %1338 = vmatmul.f32.gmra.mxu0 %v1227
        %v1339 = vpop.f32.mrf.mxu0
        %v1340 = vadd.f32 0.0, %v1339
        %1341 = vmatmul.f32.gmra.mxu0 %v1230
        %v1342 = vpop.f32.mrf.mxu0
        %v1343 = vadd.f32 0.0, %v1342
        %1344 = vmatmul.f32.gmra.mxu0 %v1233
        %v1345 = vpop.f32.mrf.mxu0
        %v1346 = vadd.f32 0.0, %v1345
        %1347 = vmatmul.f32.gmra.mxu0 %v1236
        %v1348 = vpop.f32.mrf.mxu0
        %v1349 = vadd.f32 0.0, %v1348
        %1350 = vdwg.mxu0
        %v1351 = vadd.f32 %v1010, %v1256
        %v1352 = vadd.f32 %v1013, %v1259
        %v1353 = vadd.f32 %v1016, %v1262
        %v1354 = vadd.f32 %v1019, %v1265
        %v1355 = vadd.f32 %v1022, %v1268
        %v1356 = vadd.f32 %v1025, %v1271
        %v1357 = vadd.f32 %v1028, %v1274
        %v1358 = vadd.f32 %v1031, %v1277
        %v1359 = vadd.f32 %v1034, %v1280
        %v1360 = vadd.f32 %v1037, %v1283
        %v1361 = vadd.f32 %v1040, %v1286
        %v1362 = vadd.f32 %v1043, %v1289
        %v1363 = vadd.f32 %v1046, %v1292
        %v1364 = vadd.f32 %v1049, %v1295
        %v1365 = vadd.f32 %v1052, %v1298
        %v1366 = vadd.f32 %v1055, %v1301
        %v1367 = vadd.f32 %v1058, %v1304
        %v1368 = vadd.f32 %v1061, %v1307
        %v1369 = vadd.f32 %v1064, %v1310
        %v1370 = vadd.f32 %v1067, %v1313
        %v1371 = vadd.f32 %v1070, %v1316
        %v1372 = vadd.f32 %v1073, %v1319
        %v1373 = vadd.f32 %v1076, %v1322
        %v1374 = vadd.f32 %v1079, %v1325
        %v1375 = vadd.f32 %v1082, %v1328
        %v1376 = vadd.f32 %v1085, %v1331
        %v1377 = vadd.f32 %v1088, %v1334
        %v1378 = vadd.f32 %v1091, %v1337
        %v1379 = vadd.f32 %v1094, %v1340
        %v1380 = vadd.f32 %v1097, %v1343
        %v1381 = vadd.f32 %v1100, %v1346
        %v1382 = vadd.f32 %v1103, %v1349
        %v1383 = vld [vmem:[%s581 + $0x7] sm:$0xff]
        %v1384 = vld [vmem:[%s581 + $0xf] sm:$0xff]
        %v1385 = vld [vmem:[%s581 + $0x27] sm:$0xff]
        %v1386 = vld [vmem:[%s581 + $0x2f] sm:$0xff]
        %v1387 = vld [vmem:[%s581 + $0x47] sm:$0xff]
        %v1388 = vld [vmem:[%s581 + $0x4f] sm:$0xff]
        %v1389 = vld [vmem:[%s581 + $0x67] sm:$0xff]
        %v1390 = vld [vmem:[%s581 + $0x6f] sm:$0xff]
        %v1391 = vld [vmem:[%s581 + $0x87] sm:$0xff]
        %v1392 = vld [vmem:[%s581 + $0x8f] sm:$0xff]
        %v1393 = vld [vmem:[%s581 + $0xa7] sm:$0xff]
        %v1394 = vld [vmem:[%s581 + $0xaf] sm:$0xff]
        %v1395 = vld [vmem:[%s581 + $0xc7] sm:$0xff]
        %v1396 = vld [vmem:[%s581 + $0xcf] sm:$0xff]
        %v1397 = vld [vmem:[%s581 + $0xe7] sm:$0xff]
        %v1398 = vld [vmem:[%s581 + $0xef] sm:$0xff]
        %v1399 = vld [vmem:[%s581 + $0x107] sm:$0xff]
        %v1400 = vld [vmem:[%s581 + $0x10f] sm:$0xff]
        %v1401 = vld [vmem:[%s581 + $0x127] sm:$0xff]
        %v1402 = vld [vmem:[%s581 + $0x12f] sm:$0xff]
        %v1403 = vld [vmem:[%s581 + $0x147] sm:$0xff]
        %v1404 = vld [vmem:[%s581 + $0x14f] sm:$0xff]
        %v1405 = vld [vmem:[%s581 + $0x167] sm:$0xff]
        %v1406 = vld [vmem:[%s581 + $0x16f] sm:$0xff]
        %v1407 = vld [vmem:[%s581 + $0x187] sm:$0xff]
        %v1408 = vld [vmem:[%s581 + $0x18f] sm:$0xff]
        %v1409 = vld [vmem:[%s581 + $0x1a7] sm:$0xff]
        %v1410 = vld [vmem:[%s581 + $0x1af] sm:$0xff]
        %v1411 = vld [vmem:[%s581 + $0x1c7] sm:$0xff]
        %v1412 = vld [vmem:[%s581 + $0x1cf] sm:$0xff]
        %v1413 = vld [vmem:[%s581 + $0x1e7] sm:$0xff]
        %v1414 = vld [vmem:[%s581 + $0x1ef] sm:$0xff]
        %s1415 = scalar_lea.vmem [#allocation8], 96
        %v1416 = vld [vmem:[%s1415] sm:$0xff]
        %v1417 = vld [vmem:[%s1415 + $0x8] sm:$0xff]
        %v1418 = vld [vmem:[%s1415 + $0x10] sm:$0xff]
        %v1419 = vld [vmem:[%s1415 + $0x18] sm:$0xff]
        %v1421 = vsel %vm539, %v1383, 0
        %v1424 = vsel %vm539, %v1384, 0
        %v1427 = vsel %vm539, %v1385, 0
        %v1430 = vsel %vm539, %v1386, 0
        %v1433 = vsel %vm539, %v1387, 0
        %v1436 = vsel %vm539, %v1388, 0
        %v1439 = vsel %vm539, %v1389, 0
        %v1442 = vsel %vm539, %v1390, 0
        %v1445 = vsel %vm539, %v1391, 0
        %v1448 = vsel %vm539, %v1392, 0
        %v1451 = vsel %vm539, %v1393, 0
        %v1454 = vsel %vm539, %v1394, 0
        %v1457 = vsel %vm539, %v1395, 0
        %v1460 = vsel %vm539, %v1396, 0
        %v1463 = vsel %vm539, %v1397, 0
        %v1466 = vsel %vm539, %v1398, 0
        %v1469 = vsel %vm539, %v1399, 0
        %v1472 = vsel %vm539, %v1400, 0
        %v1475 = vsel %vm539, %v1401, 0
        %v1478 = vsel %vm539, %v1402, 0
        %v1481 = vsel %vm539, %v1403, 0
        %v1484 = vsel %vm539, %v1404, 0
        %v1487 = vsel %vm539, %v1405, 0
        %v1490 = vsel %vm539, %v1406, 0
        %v1493 = vsel %vm539, %v1407, 0
        %v1496 = vsel %vm539, %v1408, 0
        %v1499 = vsel %vm539, %v1409, 0
        %v1502 = vsel %vm539, %v1410, 0
        %v1505 = vsel %vm539, %v1411, 0
        %v1508 = vsel %vm539, %v1412, 0
        %v1511 = vsel %vm539, %v1413, 0
        %v1514 = vsel %vm539, %v1414, 0
        %1516 = vmatpush.msra.mxu0 0.0
        %1517 = vmatpush.msra.mxu0 0.0
        %1518 = vmatpush.msra.mxu0 0.0
        %1519 = vmatpush.msra.mxu0 0.0
        %1520 = vmatpush.msra.mxu0 0.0
        %1521 = vmatpush.msra.mxu0 0.0
        %1522 = vmatpush.msra.mxu0 0.0
        %1523 = vmatpush.msra.mxu0 0.0
        %1524 = vmatpush.msra.mxu0 0.0
        %1525 = vmatpush.msra.mxu0 0.0
        %1526 = vmatpush.msra.mxu0 0.0
        %1527 = vmatpush.msra.mxu0 0.0
        %1528 = vmatpush.msra.mxu0 %v1419
        %1529 = vmatpush.msra.mxu0 %v1418
        %1530 = vmatpush.msra.mxu0 %v1417
        %1531 = vmatpush.msra.mxu0 %v1416
        %1532 = vmatmul.f32.gmra.mxu0 %v1421
        %v1533 = vpop.f32.mrf.mxu0
        %v1534 = vadd.f32 0.0, %v1533
        %1535 = vmatmul.f32.gmra.mxu0 %v1424
        %v1536 = vpop.f32.mrf.mxu0
        %v1537 = vadd.f32 0.0, %v1536
        %1538 = vmatmul.f32.gmra.mxu0 %v1427
        %v1539 = vpop.f32.mrf.mxu0
        %v1540 = vadd.f32 0.0, %v1539
        %1541 = vmatmul.f32.gmra.mxu0 %v1430
        %v1542 = vpop.f32.mrf.mxu0
        %v1543 = vadd.f32 0.0, %v1542
        %1544 = vmatmul.f32.gmra.mxu0 %v1433
        %v1545 = vpop.f32.mrf.mxu0
        %v1546 = vadd.f32 0.0, %v1545
        %1547 = vmatmul.f32.gmra.mxu0 %v1436
        %v1548 = vpop.f32.mrf.mxu0
        %v1549 = vadd.f32 0.0, %v1548
        %1550 = vmatmul.f32.gmra.mxu0 %v1439
        %v1551 = vpop.f32.mrf.mxu0
        %v1552 = vadd.f32 0.0, %v1551
        %1553 = vmatmul.f32.gmra.mxu0 %v1442
        %v1554 = vpop.f32.mrf.mxu0
        %v1555 = vadd.f32 0.0, %v1554
        %1556 = vmatmul.f32.gmra.mxu0 %v1445
        %v1557 = vpop.f32.mrf.mxu0
        %v1558 = vadd.f32 0.0, %v1557
        %1559 = vmatmul.f32.gmra.mxu0 %v1448
        %v1560 = vpop.f32.mrf.mxu0
        %v1561 = vadd.f32 0.0, %v1560
        %1562 = vmatmul.f32.gmra.mxu0 %v1451
        %v1563 = vpop.f32.mrf.mxu0
        %v1564 = vadd.f32 0.0, %v1563
        %1565 = vmatmul.f32.gmra.mxu0 %v1454
        %v1566 = vpop.f32.mrf.mxu0
        %v1567 = vadd.f32 0.0, %v1566
        %1568 = vmatmul.f32.gmra.mxu0 %v1457
        %v1569 = vpop.f32.mrf.mxu0
        %v1570 = vadd.f32 0.0, %v1569
        %1571 = vmatmul.f32.gmra.mxu0 %v1460
        %v1572 = vpop.f32.mrf.mxu0
        %v1573 = vadd.f32 0.0, %v1572
        %1574 = vmatmul.f32.gmra.mxu0 %v1463
        %v1575 = vpop.f32.mrf.mxu0
        %v1576 = vadd.f32 0.0, %v1575
        %1577 = vmatmul.f32.gmra.mxu0 %v1466
        %v1578 = vpop.f32.mrf.mxu0
        %v1579 = vadd.f32 0.0, %v1578
        %1580 = vmatmul.f32.gmra.mxu0 %v1469
        %v1581 = vpop.f32.mrf.mxu0
        %v1582 = vadd.f32 0.0, %v1581
        %1583 = vmatmul.f32.gmra.mxu0 %v1472
        %v1584 = vpop.f32.mrf.mxu0
        %v1585 = vadd.f32 0.0, %v1584
        %1586 = vmatmul.f32.gmra.mxu0 %v1475
        %v1587 = vpop.f32.mrf.mxu0
        %v1588 = vadd.f32 0.0, %v1587
        %1589 = vmatmul.f32.gmra.mxu0 %v1478
        %v1590 = vpop.f32.mrf.mxu0
        %v1591 = vadd.f32 0.0, %v1590
        %1592 = vmatmul.f32.gmra.mxu0 %v1481
        %v1593 = vpop.f32.mrf.mxu0
        %v1594 = vadd.f32 0.0, %v1593
        %1595 = vmatmul.f32.gmra.mxu0 %v1484
        %v1596 = vpop.f32.mrf.mxu0
        %v1597 = vadd.f32 0.0, %v1596
        %1598 = vmatmul.f32.gmra.mxu0 %v1487
        %v1599 = vpop.f32.mrf.mxu0
        %v1600 = vadd.f32 0.0, %v1599
        %1601 = vmatmul.f32.gmra.mxu0 %v1490
        %v1602 = vpop.f32.mrf.mxu0
        %v1603 = vadd.f32 0.0, %v1602
        %1604 = vmatmul.f32.gmra.mxu0 %v1493
        %v1605 = vpop.f32.mrf.mxu0
        %v1606 = vadd.f32 0.0, %v1605
        %1607 = vmatmul.f32.gmra.mxu0 %v1496
        %v1608 = vpop.f32.mrf.mxu0
        %v1609 = vadd.f32 0.0, %v1608
        %1610 = vmatmul.f32.gmra.mxu0 %v1499
        %v1611 = vpop.f32.mrf.mxu0
        %v1612 = vadd.f32 0.0, %v1611
        %1613 = vmatmul.f32.gmra.mxu0 %v1502
        %v1614 = vpop.f32.mrf.mxu0
        %v1615 = vadd.f32 0.0, %v1614
        %1616 = vmatmul.f32.gmra.mxu0 %v1505
        %v1617 = vpop.f32.mrf.mxu0
        %v1618 = vadd.f32 0.0, %v1617
        %1619 = vmatmul.f32.gmra.mxu0 %v1508
        %v1620 = vpop.f32.mrf.mxu0
        %v1621 = vadd.f32 0.0, %v1620
        %1622 = vmatmul.f32.gmra.mxu0 %v1511
        %v1623 = vpop.f32.mrf.mxu0
        %v1624 = vadd.f32 0.0, %v1623
        %1625 = vmatmul.f32.gmra.mxu0 %v1514
        %v1626 = vpop.f32.mrf.mxu0
        %v1627 = vadd.f32 0.0, %v1626
        %1628 = vdwg.mxu0
        %v1629 = vadd.f32 %v1351, %v1534
        %v1630 = vadd.f32 %v1352, %v1537
        %v1631 = vadd.f32 %v1353, %v1540
        %v1632 = vadd.f32 %v1354, %v1543
        %v1633 = vadd.f32 %v1355, %v1546
        %v1634 = vadd.f32 %v1356, %v1549
        %v1635 = vadd.f32 %v1357, %v1552
        %v1636 = vadd.f32 %v1358, %v1555
        %v1637 = vadd.f32 %v1359, %v1558
        %v1638 = vadd.f32 %v1360, %v1561
        %v1639 = vadd.f32 %v1361, %v1564
        %v1640 = vadd.f32 %v1362, %v1567
        %v1641 = vadd.f32 %v1363, %v1570
        %v1642 = vadd.f32 %v1364, %v1573
        %v1643 = vadd.f32 %v1365, %v1576
        %v1644 = vadd.f32 %v1366, %v1579
        %v1645 = vadd.f32 %v1367, %v1582
        %v1646 = vadd.f32 %v1368, %v1585
        %v1647 = vadd.f32 %v1369, %v1588
        %v1648 = vadd.f32 %v1370, %v1591
        %v1649 = vadd.f32 %v1371, %v1594
        %v1650 = vadd.f32 %v1372, %v1597
        %v1651 = vadd.f32 %v1373, %v1600
        %v1652 = vadd.f32 %v1374, %v1603
        %v1653 = vadd.f32 %v1375, %v1606
        %v1654 = vadd.f32 %v1376, %v1609
        %v1655 = vadd.f32 %v1377, %v1612
        %v1656 = vadd.f32 %v1378, %v1615
        %v1657 = vadd.f32 %v1379, %v1618
        %v1658 = vadd.f32 %v1380, %v1621
        %v1659 = vadd.f32 %v1381, %v1624
        %v1660 = vadd.f32 %v1382, %v1627
        %v1661 = vld [vmem:[%s581 + $0x8] sm:$0xff]
        %v1662 = vld [vmem:[%s581 + $0x10] sm:$0xff]
        %v1663 = vld [vmem:[%s581 + $0x28] sm:$0xff]
        %v1664 = vld [vmem:[%s581 + $0x30] sm:$0xff]
        %v1665 = vld [vmem:[%s581 + $0x48] sm:$0xff]
        %v1666 = vld [vmem:[%s581 + $0x50] sm:$0xff]
        %v1667 = vld [vmem:[%s581 + $0x68] sm:$0xff]
        %v1668 = vld [vmem:[%s581 + $0x70] sm:$0xff]
        %v1669 = vld [vmem:[%s581 + $0x88] sm:$0xff]
        %v1670 = vld [vmem:[%s581 + $0x90] sm:$0xff]
        %v1671 = vld [vmem:[%s581 + $0xa8] sm:$0xff]
        %v1672 = vld [vmem:[%s581 + $0xb0] sm:$0xff]
        %v1673 = vld [vmem:[%s581 + $0xc8] sm:$0xff]
        %v1674 = vld [vmem:[%s581 + $0xd0] sm:$0xff]
        %v1675 = vld [vmem:[%s581 + $0xe8] sm:$0xff]
        %v1676 = vld [vmem:[%s581 + $0xf0] sm:$0xff]
        %v1677 = vld [vmem:[%s581 + $0x108] sm:$0xff]
        %v1678 = vld [vmem:[%s581 + $0x110] sm:$0xff]
        %v1679 = vld [vmem:[%s581 + $0x128] sm:$0xff]
        %v1680 = vld [vmem:[%s581 + $0x130] sm:$0xff]
        %v1681 = vld [vmem:[%s581 + $0x148] sm:$0xff]
        %v1682 = vld [vmem:[%s581 + $0x150] sm:$0xff]
        %v1683 = vld [vmem:[%s581 + $0x168] sm:$0xff]
        %v1684 = vld [vmem:[%s581 + $0x170] sm:$0xff]
        %v1685 = vld [vmem:[%s581 + $0x188] sm:$0xff]
        %v1686 = vld [vmem:[%s581 + $0x190] sm:$0xff]
        %v1687 = vld [vmem:[%s581 + $0x1a8] sm:$0xff]
        %v1688 = vld [vmem:[%s581 + $0x1b0] sm:$0xff]
        %v1689 = vld [vmem:[%s581 + $0x1c8] sm:$0xff]
        %v1690 = vld [vmem:[%s581 + $0x1d0] sm:$0xff]
        %v1691 = vld [vmem:[%s581 + $0x1e8] sm:$0xff]
        %v1692 = vld [vmem:[%s581 + $0x1f0] sm:$0xff]
        %s1693 = scalar_lea.vmem [#allocation8], 128
        %v1694 = vld [vmem:[%s1693] sm:$0xff]
        %v1695 = vld [vmem:[%s1693 + $0x8] sm:$0xff]
        %v1696 = vld [vmem:[%s1693 + $0x10] sm:$0xff]
        %v1697 = vld [vmem:[%s1693 + $0x18] sm:$0xff]
        %v1699 = vsel %vm539, %v1661, 0
        %v1702 = vsel %vm539, %v1662, 0
        %v1705 = vsel %vm539, %v1663, 0
        %v1708 = vsel %vm539, %v1664, 0
        %v1711 = vsel %vm539, %v1665, 0
        %v1714 = vsel %vm539, %v1666, 0
        %v1717 = vsel %vm539, %v1667, 0
        %v1720 = vsel %vm539, %v1668, 0
        %v1723 = vsel %vm539, %v1669, 0
        %v1726 = vsel %vm539, %v1670, 0
        %v1729 = vsel %vm539, %v1671, 0
        %v1732 = vsel %vm539, %v1672, 0
        %v1735 = vsel %vm539, %v1673, 0
        %v1738 = vsel %vm539, %v1674, 0
        %v1741 = vsel %vm539, %v1675, 0
        %v1744 = vsel %vm539, %v1676, 0
        %v1747 = vsel %vm539, %v1677, 0
        %v1750 = vsel %vm539, %v1678, 0
        %v1753 = vsel %vm539, %v1679, 0
        %v1756 = vsel %vm539, %v1680, 0
        %v1759 = vsel %vm539, %v1681, 0
        %v1762 = vsel %vm539, %v1682, 0
        %v1765 = vsel %vm539, %v1683, 0
        %v1768 = vsel %vm539, %v1684, 0
        %v1771 = vsel %vm539, %v1685, 0
        %v1774 = vsel %vm539, %v1686, 0
        %v1777 = vsel %vm539, %v1687, 0
        %v1780 = vsel %vm539, %v1688, 0
        %v1783 = vsel %vm539, %v1689, 0
        %v1786 = vsel %vm539, %v1690, 0
        %v1789 = vsel %vm539, %v1691, 0
        %v1792 = vsel %vm539, %v1692, 0
        %1794 = vmatpush.msra.mxu0 0.0
        %1795 = vmatpush.msra.mxu0 0.0
        %1796 = vmatpush.msra.mxu0 0.0
        %1797 = vmatpush.msra.mxu0 0.0
        %1798 = vmatpush.msra.mxu0 0.0
        %1799 = vmatpush.msra.mxu0 0.0
        %1800 = vmatpush.msra.mxu0 0.0
        %1801 = vmatpush.msra.mxu0 0.0
        %1802 = vmatpush.msra.mxu0 0.0
        %1803 = vmatpush.msra.mxu0 0.0
        %1804 = vmatpush.msra.mxu0 0.0
        %1805 = vmatpush.msra.mxu0 0.0
        %1806 = vmatpush.msra.mxu0 %v1697
        %1807 = vmatpush.msra.mxu0 %v1696
        %1808 = vmatpush.msra.mxu0 %v1695
        %1809 = vmatpush.msra.mxu0 %v1694
        %1810 = vmatmul.f32.gmra.mxu0 %v1699
        %v1811 = vpop.f32.mrf.mxu0
        %v1812 = vadd.f32 0.0, %v1811
        %1813 = vmatmul.f32.gmra.mxu0 %v1702
        %v1814 = vpop.f32.mrf.mxu0
        %v1815 = vadd.f32 0.0, %v1814
        %1816 = vmatmul.f32.gmra.mxu0 %v1705
        %v1817 = vpop.f32.mrf.mxu0
        %v1818 = vadd.f32 0.0, %v1817
        %1819 = vmatmul.f32.gmra.mxu0 %v1708
        %v1820 = vpop.f32.mrf.mxu0
        %v1821 = vadd.f32 0.0, %v1820
        %1822 = vmatmul.f32.gmra.mxu0 %v1711
        %v1823 = vpop.f32.mrf.mxu0
        %v1824 = vadd.f32 0.0, %v1823
        %1825 = vmatmul.f32.gmra.mxu0 %v1714
        %v1826 = vpop.f32.mrf.mxu0
        %v1827 = vadd.f32 0.0, %v1826
        %1828 = vmatmul.f32.gmra.mxu0 %v1717
        %v1829 = vpop.f32.mrf.mxu0
        %v1830 = vadd.f32 0.0, %v1829
        %1831 = vmatmul.f32.gmra.mxu0 %v1720
        %v1832 = vpop.f32.mrf.mxu0
        %v1833 = vadd.f32 0.0, %v1832
        %1834 = vmatmul.f32.gmra.mxu0 %v1723
        %v1835 = vpop.f32.mrf.mxu0
        %v1836 = vadd.f32 0.0, %v1835
        %1837 = vmatmul.f32.gmra.mxu0 %v1726
        %v1838 = vpop.f32.mrf.mxu0
        %v1839 = vadd.f32 0.0, %v1838
        %1840 = vmatmul.f32.gmra.mxu0 %v1729
        %v1841 = vpop.f32.mrf.mxu0
        %v1842 = vadd.f32 0.0, %v1841
        %1843 = vmatmul.f32.gmra.mxu0 %v1732
        %v1844 = vpop.f32.mrf.mxu0
        %v1845 = vadd.f32 0.0, %v1844
        %1846 = vmatmul.f32.gmra.mxu0 %v1735
        %v1847 = vpop.f32.mrf.mxu0
        %v1848 = vadd.f32 0.0, %v1847
        %1849 = vmatmul.f32.gmra.mxu0 %v1738
        %v1850 = vpop.f32.mrf.mxu0
        %v1851 = vadd.f32 0.0, %v1850
        %1852 = vmatmul.f32.gmra.mxu0 %v1741
        %v1853 = vpop.f32.mrf.mxu0
        %v1854 = vadd.f32 0.0, %v1853
        %1855 = vmatmul.f32.gmra.mxu0 %v1744
        %v1856 = vpop.f32.mrf.mxu0
        %v1857 = vadd.f32 0.0, %v1856
        %1858 = vmatmul.f32.gmra.mxu0 %v1747
        %v1859 = vpop.f32.mrf.mxu0
        %v1860 = vadd.f32 0.0, %v1859
        %1861 = vmatmul.f32.gmra.mxu0 %v1750
        %v1862 = vpop.f32.mrf.mxu0
        %v1863 = vadd.f32 0.0, %v1862
        %1864 = vmatmul.f32.gmra.mxu0 %v1753
        %v1865 = vpop.f32.mrf.mxu0
        %v1866 = vadd.f32 0.0, %v1865
        %1867 = vmatmul.f32.gmra.mxu0 %v1756
        %v1868 = vpop.f32.mrf.mxu0
        %v1869 = vadd.f32 0.0, %v1868
        %1870 = vmatmul.f32.gmra.mxu0 %v1759
        %v1871 = vpop.f32.mrf.mxu0
        %v1872 = vadd.f32 0.0, %v1871
        %1873 = vmatmul.f32.gmra.mxu0 %v1762
        %v1874 = vpop.f32.mrf.mxu0
        %v1875 = vadd.f32 0.0, %v1874
        %1876 = vmatmul.f32.gmra.mxu0 %v1765
        %v1877 = vpop.f32.mrf.mxu0
        %v1878 = vadd.f32 0.0, %v1877
        %1879 = vmatmul.f32.gmra.mxu0 %v1768
        %v1880 = vpop.f32.mrf.mxu0
        %v1881 = vadd.f32 0.0, %v1880
        %1882 = vmatmul.f32.gmra.mxu0 %v1771
        %v1883 = vpop.f32.mrf.mxu0
        %v1884 = vadd.f32 0.0, %v1883
        %1885 = vmatmul.f32.gmra.mxu0 %v1774
        %v1886 = vpop.f32.mrf.mxu0
        %v1887 = vadd.f32 0.0, %v1886
        %1888 = vmatmul.f32.gmra.mxu0 %v1777
        %v1889 = vpop.f32.mrf.mxu0
        %v1890 = vadd.f32 0.0, %v1889
        %1891 = vmatmul.f32.gmra.mxu0 %v1780
        %v1892 = vpop.f32.mrf.mxu0
        %v1893 = vadd.f32 0.0, %v1892
        %1894 = vmatmul.f32.gmra.mxu0 %v1783
        %v1895 = vpop.f32.mrf.mxu0
        %v1896 = vadd.f32 0.0, %v1895
        %1897 = vmatmul.f32.gmra.mxu0 %v1786
        %v1898 = vpop.f32.mrf.mxu0
        %v1899 = vadd.f32 0.0, %v1898
        %1900 = vmatmul.f32.gmra.mxu0 %v1789
        %v1901 = vpop.f32.mrf.mxu0
        %v1902 = vadd.f32 0.0, %v1901
        %1903 = vmatmul.f32.gmra.mxu0 %v1792
        %v1904 = vpop.f32.mrf.mxu0
        %v1905 = vadd.f32 0.0, %v1904
        %1906 = vdwg.mxu0
        %v1907 = vadd.f32 %v1629, %v1812
        %v1908 = vadd.f32 %v1630, %v1815
        %v1909 = vadd.f32 %v1631, %v1818
        %v1910 = vadd.f32 %v1632, %v1821
        %v1911 = vadd.f32 %v1633, %v1824
        %v1912 = vadd.f32 %v1634, %v1827
        %v1913 = vadd.f32 %v1635, %v1830
        %v1914 = vadd.f32 %v1636, %v1833
        %v1915 = vadd.f32 %v1637, %v1836
        %v1916 = vadd.f32 %v1638, %v1839
        %v1917 = vadd.f32 %v1639, %v1842
        %v1918 = vadd.f32 %v1640, %v1845
        %v1919 = vadd.f32 %v1641, %v1848
        %v1920 = vadd.f32 %v1642, %v1851
        %v1921 = vadd.f32 %v1643, %v1854
        %v1922 = vadd.f32 %v1644, %v1857
        %v1923 = vadd.f32 %v1645, %v1860
        %v1924 = vadd.f32 %v1646, %v1863
        %v1925 = vadd.f32 %v1647, %v1866
        %v1926 = vadd.f32 %v1648, %v1869
        %v1927 = vadd.f32 %v1649, %v1872
        %v1928 = vadd.f32 %v1650, %v1875
        %v1929 = vadd.f32 %v1651, %v1878
        %v1930 = vadd.f32 %v1652, %v1881
        %v1931 = vadd.f32 %v1653, %v1884
        %v1932 = vadd.f32 %v1654, %v1887
        %v1933 = vadd.f32 %v1655, %v1890
        %v1934 = vadd.f32 %v1656, %v1893
        %v1935 = vadd.f32 %v1657, %v1896
        %v1936 = vadd.f32 %v1658, %v1899
        %v1937 = vadd.f32 %v1659, %v1902
        %v1938 = vadd.f32 %v1660, %v1905
        %v1939 = vld [vmem:[%s581 + $0x9] sm:$0xff]
        %v1940 = vld [vmem:[%s581 + $0x11] sm:$0xff]
        %v1941 = vld [vmem:[%s581 + $0x29] sm:$0xff]
        %v1942 = vld [vmem:[%s581 + $0x31] sm:$0xff]
        %v1943 = vld [vmem:[%s581 + $0x49] sm:$0xff]
        %v1944 = vld [vmem:[%s581 + $0x51] sm:$0xff]
        %v1945 = vld [vmem:[%s581 + $0x69] sm:$0xff]
        %v1946 = vld [vmem:[%s581 + $0x71] sm:$0xff]
        %v1947 = vld [vmem:[%s581 + $0x89] sm:$0xff]
        %v1948 = vld [vmem:[%s581 + $0x91] sm:$0xff]
        %v1949 = vld [vmem:[%s581 + $0xa9] sm:$0xff]
        %v1950 = vld [vmem:[%s581 + $0xb1] sm:$0xff]
        %v1951 = vld [vmem:[%s581 + $0xc9] sm:$0xff]
        %v1952 = vld [vmem:[%s581 + $0xd1] sm:$0xff]
        %v1953 = vld [vmem:[%s581 + $0xe9] sm:$0xff]
        %v1954 = vld [vmem:[%s581 + $0xf1] sm:$0xff]
        %v1955 = vld [vmem:[%s581 + $0x109] sm:$0xff]
        %v1956 = vld [vmem:[%s581 + $0x111] sm:$0xff]
        %v1957 = vld [vmem:[%s581 + $0x129] sm:$0xff]
        %v1958 = vld [vmem:[%s581 + $0x131] sm:$0xff]
        %v1959 = vld [vmem:[%s581 + $0x149] sm:$0xff]
        %v1960 = vld [vmem:[%s581 + $0x151] sm:$0xff]
        %v1961 = vld [vmem:[%s581 + $0x169] sm:$0xff]
        %v1962 = vld [vmem:[%s581 + $0x171] sm:$0xff]
        %v1963 = vld [vmem:[%s581 + $0x189] sm:$0xff]
        %v1964 = vld [vmem:[%s581 + $0x191] sm:$0xff]
        %v1965 = vld [vmem:[%s581 + $0x1a9] sm:$0xff]
        %v1966 = vld [vmem:[%s581 + $0x1b1] sm:$0xff]
        %v1967 = vld [vmem:[%s581 + $0x1c9] sm:$0xff]
        %v1968 = vld [vmem:[%s581 + $0x1d1] sm:$0xff]
        %v1969 = vld [vmem:[%s581 + $0x1e9] sm:$0xff]
        %v1970 = vld [vmem:[%s581 + $0x1f1] sm:$0xff]
        %s1971 = scalar_lea.vmem [#allocation8], 160
        %v1972 = vld [vmem:[%s1971] sm:$0xff]
        %v1973 = vld [vmem:[%s1971 + $0x8] sm:$0xff]
        %v1974 = vld [vmem:[%s1971 + $0x10] sm:$0xff]
        %v1975 = vld [vmem:[%s1971 + $0x18] sm:$0xff]
        %v1977 = vsel %vm539, %v1939, 0
        %v1980 = vsel %vm539, %v1940, 0
        %v1983 = vsel %vm539, %v1941, 0
        %v1986 = vsel %vm539, %v1942, 0
        %v1989 = vsel %vm539, %v1943, 0
        %v1992 = vsel %vm539, %v1944, 0
        %v1995 = vsel %vm539, %v1945, 0
        %v1998 = vsel %vm539, %v1946, 0
        %v2001 = vsel %vm539, %v1947, 0
        %v2004 = vsel %vm539, %v1948, 0
        %v2007 = vsel %vm539, %v1949, 0
        %v2010 = vsel %vm539, %v1950, 0
        %v2013 = vsel %vm539, %v1951, 0
        %v2016 = vsel %vm539, %v1952, 0
        %v2019 = vsel %vm539, %v1953, 0
        %v2022 = vsel %vm539, %v1954, 0
        %v2025 = vsel %vm539, %v1955, 0
        %v2028 = vsel %vm539, %v1956, 0
        %v2031 = vsel %vm539, %v1957, 0
        %v2034 = vsel %vm539, %v1958, 0
        %v2037 = vsel %vm539, %v1959, 0
        %v2040 = vsel %vm539, %v1960, 0
        %v2043 = vsel %vm539, %v1961, 0
        %v2046 = vsel %vm539, %v1962, 0
        %v2049 = vsel %vm539, %v1963, 0
        %v2052 = vsel %vm539, %v1964, 0
        %v2055 = vsel %vm539, %v1965, 0
        %v2058 = vsel %vm539, %v1966, 0
        %v2061 = vsel %vm539, %v1967, 0
        %v2064 = vsel %vm539, %v1968, 0
        %v2067 = vsel %vm539, %v1969, 0
        %v2070 = vsel %vm539, %v1970, 0
        %2072 = vmatpush.msra.mxu0 0.0
        %2073 = vmatpush.msra.mxu0 0.0
        %2074 = vmatpush.msra.mxu0 0.0
        %2075 = vmatpush.msra.mxu0 0.0
        %2076 = vmatpush.msra.mxu0 0.0
        %2077 = vmatpush.msra.mxu0 0.0
        %2078 = vmatpush.msra.mxu0 0.0
        %2079 = vmatpush.msra.mxu0 0.0
        %2080 = vmatpush.msra.mxu0 0.0
        %2081 = vmatpush.msra.mxu0 0.0
        %2082 = vmatpush.msra.mxu0 0.0
        %2083 = vmatpush.msra.mxu0 0.0
        %2084 = vmatpush.msra.mxu0 %v1975
        %2085 = vmatpush.msra.mxu0 %v1974
        %2086 = vmatpush.msra.mxu0 %v1973
        %2087 = vmatpush.msra.mxu0 %v1972
        %2088 = vmatmul.f32.gmra.mxu0 %v1977
        %v2089 = vpop.f32.mrf.mxu0
        %v2090 = vadd.f32 0.0, %v2089
        %2091 = vmatmul.f32.gmra.mxu0 %v1980
        %v2092 = vpop.f32.mrf.mxu0
        %v2093 = vadd.f32 0.0, %v2092
        %2094 = vmatmul.f32.gmra.mxu0 %v1983
        %v2095 = vpop.f32.mrf.mxu0
        %v2096 = vadd.f32 0.0, %v2095
        %2097 = vmatmul.f32.gmra.mxu0 %v1986
        %v2098 = vpop.f32.mrf.mxu0
        %v2099 = vadd.f32 0.0, %v2098
        %2100 = vmatmul.f32.gmra.mxu0 %v1989
        %v2101 = vpop.f32.mrf.mxu0
        %v2102 = vadd.f32 0.0, %v2101
        %2103 = vmatmul.f32.gmra.mxu0 %v1992
        %v2104 = vpop.f32.mrf.mxu0
        %v2105 = vadd.f32 0.0, %v2104
        %2106 = vmatmul.f32.gmra.mxu0 %v1995
        %v2107 = vpop.f32.mrf.mxu0
        %v2108 = vadd.f32 0.0, %v2107
        %2109 = vmatmul.f32.gmra.mxu0 %v1998
        %v2110 = vpop.f32.mrf.mxu0
        %v2111 = vadd.f32 0.0, %v2110
        %2112 = vmatmul.f32.gmra.mxu0 %v2001
        %v2113 = vpop.f32.mrf.mxu0
        %v2114 = vadd.f32 0.0, %v2113
        %2115 = vmatmul.f32.gmra.mxu0 %v2004
        %v2116 = vpop.f32.mrf.mxu0
        %v2117 = vadd.f32 0.0, %v2116
        %2118 = vmatmul.f32.gmra.mxu0 %v2007
        %v2119 = vpop.f32.mrf.mxu0
        %v2120 = vadd.f32 0.0, %v2119
        %2121 = vmatmul.f32.gmra.mxu0 %v2010
        %v2122 = vpop.f32.mrf.mxu0
        %v2123 = vadd.f32 0.0, %v2122
        %2124 = vmatmul.f32.gmra.mxu0 %v2013
        %v2125 = vpop.f32.mrf.mxu0
        %v2126 = vadd.f32 0.0, %v2125
        %2127 = vmatmul.f32.gmra.mxu0 %v2016
        %v2128 = vpop.f32.mrf.mxu0
        %v2129 = vadd.f32 0.0, %v2128
        %2130 = vmatmul.f32.gmra.mxu0 %v2019
        %v2131 = vpop.f32.mrf.mxu0
        %v2132 = vadd.f32 0.0, %v2131
        %2133 = vmatmul.f32.gmra.mxu0 %v2022
        %v2134 = vpop.f32.mrf.mxu0
        %v2135 = vadd.f32 0.0, %v2134
        %2136 = vmatmul.f32.gmra.mxu0 %v2025
        %v2137 = vpop.f32.mrf.mxu0
        %v2138 = vadd.f32 0.0, %v2137
        %2139 = vmatmul.f32.gmra.mxu0 %v2028
        %v2140 = vpop.f32.mrf.mxu0
        %v2141 = vadd.f32 0.0, %v2140
        %2142 = vmatmul.f32.gmra.mxu0 %v2031
        %v2143 = vpop.f32.mrf.mxu0
        %v2144 = vadd.f32 0.0, %v2143
        %2145 = vmatmul.f32.gmra.mxu0 %v2034
        %v2146 = vpop.f32.mrf.mxu0
        %v2147 = vadd.f32 0.0, %v2146
        %2148 = vmatmul.f32.gmra.mxu0 %v2037
        %v2149 = vpop.f32.mrf.mxu0
        %v2150 = vadd.f32 0.0, %v2149
        %2151 = vmatmul.f32.gmra.mxu0 %v2040
        %v2152 = vpop.f32.mrf.mxu0
        %v2153 = vadd.f32 0.0, %v2152
        %2154 = vmatmul.f32.gmra.mxu0 %v2043
        %v2155 = vpop.f32.mrf.mxu0
        %v2156 = vadd.f32 0.0, %v2155
        %2157 = vmatmul.f32.gmra.mxu0 %v2046
        %v2158 = vpop.f32.mrf.mxu0
        %v2159 = vadd.f32 0.0, %v2158
        %2160 = vmatmul.f32.gmra.mxu0 %v2049
        %v2161 = vpop.f32.mrf.mxu0
        %v2162 = vadd.f32 0.0, %v2161
        %2163 = vmatmul.f32.gmra.mxu0 %v2052
        %v2164 = vpop.f32.mrf.mxu0
        %v2165 = vadd.f32 0.0, %v2164
        %2166 = vmatmul.f32.gmra.mxu0 %v2055
        %v2167 = vpop.f32.mrf.mxu0
        %v2168 = vadd.f32 0.0, %v2167
        %2169 = vmatmul.f32.gmra.mxu0 %v2058
        %v2170 = vpop.f32.mrf.mxu0
        %v2171 = vadd.f32 0.0, %v2170
        %2172 = vmatmul.f32.gmra.mxu0 %v2061
        %v2173 = vpop.f32.mrf.mxu0
        %v2174 = vadd.f32 0.0, %v2173
        %2175 = vmatmul.f32.gmra.mxu0 %v2064
        %v2176 = vpop.f32.mrf.mxu0
        %v2177 = vadd.f32 0.0, %v2176
        %2178 = vmatmul.f32.gmra.mxu0 %v2067
        %v2179 = vpop.f32.mrf.mxu0
        %v2180 = vadd.f32 0.0, %v2179
        %2181 = vmatmul.f32.gmra.mxu0 %v2070
        %v2182 = vpop.f32.mrf.mxu0
        %v2183 = vadd.f32 0.0, %v2182
        %2184 = vdwg.mxu0
        %v2185 = vadd.f32 %v1907, %v2090
        %v2186 = vadd.f32 %v1908, %v2093
        %v2187 = vadd.f32 %v1909, %v2096
        %v2188 = vadd.f32 %v1910, %v2099
        %v2189 = vadd.f32 %v1911, %v2102
        %v2190 = vadd.f32 %v1912, %v2105
        %v2191 = vadd.f32 %v1913, %v2108
        %v2192 = vadd.f32 %v1914, %v2111
        %v2193 = vadd.f32 %v1915, %v2114
        %v2194 = vadd.f32 %v1916, %v2117
        %v2195 = vadd.f32 %v1917, %v2120
        %v2196 = vadd.f32 %v1918, %v2123
        %v2197 = vadd.f32 %v1919, %v2126
        %v2198 = vadd.f32 %v1920, %v2129
        %v2199 = vadd.f32 %v1921, %v2132
        %v2200 = vadd.f32 %v1922, %v2135
        %v2201 = vadd.f32 %v1923, %v2138
        %v2202 = vadd.f32 %v1924, %v2141
        %v2203 = vadd.f32 %v1925, %v2144
        %v2204 = vadd.f32 %v1926, %v2147
        %v2205 = vadd.f32 %v1927, %v2150
        %v2206 = vadd.f32 %v1928, %v2153
        %v2207 = vadd.f32 %v1929, %v2156
        %v2208 = vadd.f32 %v1930, %v2159
        %v2209 = vadd.f32 %v1931, %v2162
        %v2210 = vadd.f32 %v1932, %v2165
        %v2211 = vadd.f32 %v1933, %v2168
        %v2212 = vadd.f32 %v1934, %v2171
        %v2213 = vadd.f32 %v1935, %v2174
        %v2214 = vadd.f32 %v1936, %v2177
        %v2215 = vadd.f32 %v1937, %v2180
        %v2216 = vadd.f32 %v1938, %v2183
        %s2217 = scalar_lea.vmem [#allocation2], 64
        %v2218 = vld [vmem:[%s2217 + $0x7] sm:$0xff]
        %v2219 = vld [vmem:[%s2217 + $0xf] sm:$0xff]
        %v2220 = vld [vmem:[%s2217 + $0x27] sm:$0xff]
        %v2221 = vld [vmem:[%s2217 + $0x2f] sm:$0xff]
        %v2222 = vld [vmem:[%s2217 + $0x47] sm:$0xff]
        %v2223 = vld [vmem:[%s2217 + $0x4f] sm:$0xff]
        %v2224 = vld [vmem:[%s2217 + $0x67] sm:$0xff]
        %v2225 = vld [vmem:[%s2217 + $0x6f] sm:$0xff]
        %v2226 = vld [vmem:[%s2217 + $0x87] sm:$0xff]
        %v2227 = vld [vmem:[%s2217 + $0x8f] sm:$0xff]
        %v2228 = vld [vmem:[%s2217 + $0xa7] sm:$0xff]
        %v2229 = vld [vmem:[%s2217 + $0xaf] sm:$0xff]
        %v2230 = vld [vmem:[%s2217 + $0xc7] sm:$0xff]
        %v2231 = vld [vmem:[%s2217 + $0xcf] sm:$0xff]
        %v2232 = vld [vmem:[%s2217 + $0xe7] sm:$0xff]
        %v2233 = vld [vmem:[%s2217 + $0xef] sm:$0xff]
        %v2234 = vld [vmem:[%s2217 + $0x107] sm:$0xff]
        %v2235 = vld [vmem:[%s2217 + $0x10f] sm:$0xff]
        %v2236 = vld [vmem:[%s2217 + $0x127] sm:$0xff]
        %v2237 = vld [vmem:[%s2217 + $0x12f] sm:$0xff]
        %v2238 = vld [vmem:[%s2217 + $0x147] sm:$0xff]
        %v2239 = vld [vmem:[%s2217 + $0x14f] sm:$0xff]
        %v2240 = vld [vmem:[%s2217 + $0x167] sm:$0xff]
        %v2241 = vld [vmem:[%s2217 + $0x16f] sm:$0xff]
        %v2242 = vld [vmem:[%s2217 + $0x187] sm:$0xff]
        %v2243 = vld [vmem:[%s2217 + $0x18f] sm:$0xff]
        %v2244 = vld [vmem:[%s2217 + $0x1a7] sm:$0xff]
        %v2245 = vld [vmem:[%s2217 + $0x1af] sm:$0xff]
        %v2246 = vld [vmem:[%s2217 + $0x1c7] sm:$0xff]
        %v2247 = vld [vmem:[%s2217 + $0x1cf] sm:$0xff]
        %v2248 = vld [vmem:[%s2217 + $0x1e7] sm:$0xff]
        %v2249 = vld [vmem:[%s2217 + $0x1ef] sm:$0xff]
        %s2250 = scalar_lea.vmem [#allocation8], 192
        %v2251 = vld [vmem:[%s2250] sm:$0xff]
        %v2252 = vld [vmem:[%s2250 + $0x8] sm:$0xff]
        %v2253 = vld [vmem:[%s2250 + $0x10] sm:$0xff]
        %v2254 = vld [vmem:[%s2250 + $0x18] sm:$0xff]
        %v2256 = vsel %vm539, %v2218, 0
        %v2259 = vsel %vm539, %v2219, 0
        %v2262 = vsel %vm539, %v2220, 0
        %v2265 = vsel %vm539, %v2221, 0
        %v2268 = vsel %vm539, %v2222, 0
        %v2271 = vsel %vm539, %v2223, 0
        %v2274 = vsel %vm539, %v2224, 0
        %v2277 = vsel %vm539, %v2225, 0
        %v2280 = vsel %vm539, %v2226, 0
        %v2283 = vsel %vm539, %v2227, 0
        %v2286 = vsel %vm539, %v2228, 0
        %v2289 = vsel %vm539, %v2229, 0
        %v2292 = vsel %vm539, %v2230, 0
        %v2295 = vsel %vm539, %v2231, 0
        %v2298 = vsel %vm539, %v2232, 0
        %v2301 = vsel %vm539, %v2233, 0
        %v2304 = vsel %vm539, %v2234, 0
        %v2307 = vsel %vm539, %v2235, 0
        %v2310 = vsel %vm539, %v2236, 0
        %v2313 = vsel %vm539, %v2237, 0
        %v2316 = vsel %vm539, %v2238, 0
        %v2319 = vsel %vm539, %v2239, 0
        %v2322 = vsel %vm539, %v2240, 0
        %v2325 = vsel %vm539, %v2241, 0
        %v2328 = vsel %vm539, %v2242, 0
        %v2331 = vsel %vm539, %v2243, 0
        %v2334 = vsel %vm539, %v2244, 0
        %v2337 = vsel %vm539, %v2245, 0
        %v2340 = vsel %vm539, %v2246, 0
        %v2343 = vsel %vm539, %v2247, 0
        %v2346 = vsel %vm539, %v2248, 0
        %v2349 = vsel %vm539, %v2249, 0
        %2351 = vmatpush.msra.mxu0 0.0
        %2352 = vmatpush.msra.mxu0 0.0
        %2353 = vmatpush.msra.mxu0 0.0
        %2354 = vmatpush.msra.mxu0 0.0
        %2355 = vmatpush.msra.mxu0 0.0
        %2356 = vmatpush.msra.mxu0 0.0
        %2357 = vmatpush.msra.mxu0 0.0
        %2358 = vmatpush.msra.mxu0 0.0
        %2359 = vmatpush.msra.mxu0 0.0
        %2360 = vmatpush.msra.mxu0 0.0
        %2361 = vmatpush.msra.mxu0 0.0
        %2362 = vmatpush.msra.mxu0 0.0
        %2363 = vmatpush.msra.mxu0 %v2254
        %2364 = vmatpush.msra.mxu0 %v2253
        %2365 = vmatpush.msra.mxu0 %v2252
        %2366 = vmatpush.msra.mxu0 %v2251
        %2367 = vmatmul.f32.gmra.mxu0 %v2256
        %v2368 = vpop.f32.mrf.mxu0
        %v2369 = vadd.f32 0.0, %v2368
        %2370 = vmatmul.f32.gmra.mxu0 %v2259
        %v2371 = vpop.f32.mrf.mxu0
        %v2372 = vadd.f32 0.0, %v2371
        %2373 = vmatmul.f32.gmra.mxu0 %v2262
        %v2374 = vpop.f32.mrf.mxu0
        %v2375 = vadd.f32 0.0, %v2374
        %2376 = vmatmul.f32.gmra.mxu0 %v2265
        %v2377 = vpop.f32.mrf.mxu0
        %v2378 = vadd.f32 0.0, %v2377
        %2379 = vmatmul.f32.gmra.mxu0 %v2268
        %v2380 = vpop.f32.mrf.mxu0
        %v2381 = vadd.f32 0.0, %v2380
        %2382 = vmatmul.f32.gmra.mxu0 %v2271
        %v2383 = vpop.f32.mrf.mxu0
        %v2384 = vadd.f32 0.0, %v2383
        %2385 = vmatmul.f32.gmra.mxu0 %v2274
        %v2386 = vpop.f32.mrf.mxu0
        %v2387 = vadd.f32 0.0, %v2386
        %2388 = vmatmul.f32.gmra.mxu0 %v2277
        %v2389 = vpop.f32.mrf.mxu0
        %v2390 = vadd.f32 0.0, %v2389
        %2391 = vmatmul.f32.gmra.mxu0 %v2280
        %v2392 = vpop.f32.mrf.mxu0
        %v2393 = vadd.f32 0.0, %v2392
        %2394 = vmatmul.f32.gmra.mxu0 %v2283
        %v2395 = vpop.f32.mrf.mxu0
        %v2396 = vadd.f32 0.0, %v2395
        %2397 = vmatmul.f32.gmra.mxu0 %v2286
        %v2398 = vpop.f32.mrf.mxu0
        %v2399 = vadd.f32 0.0, %v2398
        %2400 = vmatmul.f32.gmra.mxu0 %v2289
        %v2401 = vpop.f32.mrf.mxu0
        %v2402 = vadd.f32 0.0, %v2401
        %2403 = vmatmul.f32.gmra.mxu0 %v2292
        %v2404 = vpop.f32.mrf.mxu0
        %v2405 = vadd.f32 0.0, %v2404
        %2406 = vmatmul.f32.gmra.mxu0 %v2295
        %v2407 = vpop.f32.mrf.mxu0
        %v2408 = vadd.f32 0.0, %v2407
        %2409 = vmatmul.f32.gmra.mxu0 %v2298
        %v2410 = vpop.f32.mrf.mxu0
        %v2411 = vadd.f32 0.0, %v2410
        %2412 = vmatmul.f32.gmra.mxu0 %v2301
        %v2413 = vpop.f32.mrf.mxu0
        %v2414 = vadd.f32 0.0, %v2413
        %2415 = vmatmul.f32.gmra.mxu0 %v2304
        %v2416 = vpop.f32.mrf.mxu0
        %v2417 = vadd.f32 0.0, %v2416
        %2418 = vmatmul.f32.gmra.mxu0 %v2307
        %v2419 = vpop.f32.mrf.mxu0
        %v2420 = vadd.f32 0.0, %v2419
        %2421 = vmatmul.f32.gmra.mxu0 %v2310
        %v2422 = vpop.f32.mrf.mxu0
        %v2423 = vadd.f32 0.0, %v2422
        %2424 = vmatmul.f32.gmra.mxu0 %v2313
        %v2425 = vpop.f32.mrf.mxu0
        %v2426 = vadd.f32 0.0, %v2425
        %2427 = vmatmul.f32.gmra.mxu0 %v2316
        %v2428 = vpop.f32.mrf.mxu0
        %v2429 = vadd.f32 0.0, %v2428
        %2430 = vmatmul.f32.gmra.mxu0 %v2319
        %v2431 = vpop.f32.mrf.mxu0
        %v2432 = vadd.f32 0.0, %v2431
        %2433 = vmatmul.f32.gmra.mxu0 %v2322
        %v2434 = vpop.f32.mrf.mxu0
        %v2435 = vadd.f32 0.0, %v2434
        %2436 = vmatmul.f32.gmra.mxu0 %v2325
        %v2437 = vpop.f32.mrf.mxu0
        %v2438 = vadd.f32 0.0, %v2437
        %2439 = vmatmul.f32.gmra.mxu0 %v2328
        %v2440 = vpop.f32.mrf.mxu0
        %v2441 = vadd.f32 0.0, %v2440
        %2442 = vmatmul.f32.gmra.mxu0 %v2331
        %v2443 = vpop.f32.mrf.mxu0
        %v2444 = vadd.f32 0.0, %v2443
        %2445 = vmatmul.f32.gmra.mxu0 %v2334
        %v2446 = vpop.f32.mrf.mxu0
        %v2447 = vadd.f32 0.0, %v2446
        %2448 = vmatmul.f32.gmra.mxu0 %v2337
        %v2449 = vpop.f32.mrf.mxu0
        %v2450 = vadd.f32 0.0, %v2449
        %2451 = vmatmul.f32.gmra.mxu0 %v2340
        %v2452 = vpop.f32.mrf.mxu0
        %v2453 = vadd.f32 0.0, %v2452
        %2454 = vmatmul.f32.gmra.mxu0 %v2343
        %v2455 = vpop.f32.mrf.mxu0
        %v2456 = vadd.f32 0.0, %v2455
        %2457 = vmatmul.f32.gmra.mxu0 %v2346
        %v2458 = vpop.f32.mrf.mxu0
        %v2459 = vadd.f32 0.0, %v2458
        %2460 = vmatmul.f32.gmra.mxu0 %v2349
        %v2461 = vpop.f32.mrf.mxu0
        %v2462 = vadd.f32 0.0, %v2461
        %2463 = vdwg.mxu0
        %v2464 = vadd.f32 %v2185, %v2369
        %v2465 = vadd.f32 %v2186, %v2372
        %v2466 = vadd.f32 %v2187, %v2375
        %v2467 = vadd.f32 %v2188, %v2378
        %v2468 = vadd.f32 %v2189, %v2381
        %v2469 = vadd.f32 %v2190, %v2384
        %v2470 = vadd.f32 %v2191, %v2387
        %v2471 = vadd.f32 %v2192, %v2390
        %v2472 = vadd.f32 %v2193, %v2393
        %v2473 = vadd.f32 %v2194, %v2396
        %v2474 = vadd.f32 %v2195, %v2399
        %v2475 = vadd.f32 %v2196, %v2402
        %v2476 = vadd.f32 %v2197, %v2405
        %v2477 = vadd.f32 %v2198, %v2408
        %v2478 = vadd.f32 %v2199, %v2411
        %v2479 = vadd.f32 %v2200, %v2414
        %v2480 = vadd.f32 %v2201, %v2417
        %v2481 = vadd.f32 %v2202, %v2420
        %v2482 = vadd.f32 %v2203, %v2423
        %v2483 = vadd.f32 %v2204, %v2426
        %v2484 = vadd.f32 %v2205, %v2429
        %v2485 = vadd.f32 %v2206, %v2432
        %v2486 = vadd.f32 %v2207, %v2435
        %v2487 = vadd.f32 %v2208, %v2438
        %v2488 = vadd.f32 %v2209, %v2441
        %v2489 = vadd.f32 %v2210, %v2444
        %v2490 = vadd.f32 %v2211, %v2447
        %v2491 = vadd.f32 %v2212, %v2450
        %v2492 = vadd.f32 %v2213, %v2453
        %v2493 = vadd.f32 %v2214, %v2456
        %v2494 = vadd.f32 %v2215, %v2459
        %v2495 = vadd.f32 %v2216, %v2462
        %v2496 = vld [vmem:[%s2217 + $0x8] sm:$0xff]
        %v2497 = vld [vmem:[%s2217 + $0x10] sm:$0xff]
        %v2498 = vld [vmem:[%s2217 + $0x28] sm:$0xff]
        %v2499 = vld [vmem:[%s2217 + $0x30] sm:$0xff]
        %v2500 = vld [vmem:[%s2217 + $0x48] sm:$0xff]
        %v2501 = vld [vmem:[%s2217 + $0x50] sm:$0xff]
        %v2502 = vld [vmem:[%s2217 + $0x68] sm:$0xff]
        %v2503 = vld [vmem:[%s2217 + $0x70] sm:$0xff]
        %v2504 = vld [vmem:[%s2217 + $0x88] sm:$0xff]
        %v2505 = vld [vmem:[%s2217 + $0x90] sm:$0xff]
        %v2506 = vld [vmem:[%s2217 + $0xa8] sm:$0xff]
        %v2507 = vld [vmem:[%s2217 + $0xb0] sm:$0xff]
        %v2508 = vld [vmem:[%s2217 + $0xc8] sm:$0xff]
        %v2509 = vld [vmem:[%s2217 + $0xd0] sm:$0xff]
        %v2510 = vld [vmem:[%s2217 + $0xe8] sm:$0xff]
        %v2511 = vld [vmem:[%s2217 + $0xf0] sm:$0xff]
        %v2512 = vld [vmem:[%s2217 + $0x108] sm:$0xff]
        %v2513 = vld [vmem:[%s2217 + $0x110] sm:$0xff]
        %v2514 = vld [vmem:[%s2217 + $0x128] sm:$0xff]
        %v2515 = vld [vmem:[%s2217 + $0x130] sm:$0xff]
        %v2516 = vld [vmem:[%s2217 + $0x148] sm:$0xff]
        %v2517 = vld [vmem:[%s2217 + $0x150] sm:$0xff]
        %v2518 = vld [vmem:[%s2217 + $0x168] sm:$0xff]
        %v2519 = vld [vmem:[%s2217 + $0x170] sm:$0xff]
        %v2520 = vld [vmem:[%s2217 + $0x188] sm:$0xff]
        %v2521 = vld [vmem:[%s2217 + $0x190] sm:$0xff]
        %v2522 = vld [vmem:[%s2217 + $0x1a8] sm:$0xff]
        %v2523 = vld [vmem:[%s2217 + $0x1b0] sm:$0xff]
        %v2524 = vld [vmem:[%s2217 + $0x1c8] sm:$0xff]
        %v2525 = vld [vmem:[%s2217 + $0x1d0] sm:$0xff]
        %v2526 = vld [vmem:[%s2217 + $0x1e8] sm:$0xff]
        %v2527 = vld [vmem:[%s2217 + $0x1f0] sm:$0xff]
        %s2528 = scalar_lea.vmem [#allocation8], 224
        %v2529 = vld [vmem:[%s2528] sm:$0xff]
        %v2530 = vld [vmem:[%s2528 + $0x8] sm:$0xff]
        %v2531 = vld [vmem:[%s2528 + $0x10] sm:$0xff]
        %v2532 = vld [vmem:[%s2528 + $0x18] sm:$0xff]
        %v2534 = vsel %vm539, %v2496, 0
        %v2537 = vsel %vm539, %v2497, 0
        %v2540 = vsel %vm539, %v2498, 0
        %v2543 = vsel %vm539, %v2499, 0
        %v2546 = vsel %vm539, %v2500, 0
        %v2549 = vsel %vm539, %v2501, 0
        %v2552 = vsel %vm539, %v2502, 0
        %v2555 = vsel %vm539, %v2503, 0
        %v2558 = vsel %vm539, %v2504, 0
        %v2561 = vsel %vm539, %v2505, 0
        %v2564 = vsel %vm539, %v2506, 0
        %v2567 = vsel %vm539, %v2507, 0
        %v2570 = vsel %vm539, %v2508, 0
        %v2573 = vsel %vm539, %v2509, 0
        %v2576 = vsel %vm539, %v2510, 0
        %v2579 = vsel %vm539, %v2511, 0
        %v2582 = vsel %vm539, %v2512, 0
        %v2585 = vsel %vm539, %v2513, 0
        %v2588 = vsel %vm539, %v2514, 0
        %v2591 = vsel %vm539, %v2515, 0
        %v2594 = vsel %vm539, %v2516, 0
        %v2597 = vsel %vm539, %v2517, 0
        %v2600 = vsel %vm539, %v2518, 0
        %v2603 = vsel %vm539, %v2519, 0
        %v2606 = vsel %vm539, %v2520, 0
        %v2609 = vsel %vm539, %v2521, 0
        %v2612 = vsel %vm539, %v2522, 0
        %v2615 = vsel %vm539, %v2523, 0
        %v2618 = vsel %vm539, %v2524, 0
        %v2621 = vsel %vm539, %v2525, 0
        %v2624 = vsel %vm539, %v2526, 0
        %v2627 = vsel %vm539, %v2527, 0
        %2629 = vmatpush.msra.mxu0 0.0
        %2630 = vmatpush.msra.mxu0 0.0
        %2631 = vmatpush.msra.mxu0 0.0
        %2632 = vmatpush.msra.mxu0 0.0
        %2633 = vmatpush.msra.mxu0 0.0
        %2634 = vmatpush.msra.mxu0 0.0
        %2635 = vmatpush.msra.mxu0 0.0
        %2636 = vmatpush.msra.mxu0 0.0
        %2637 = vmatpush.msra.mxu0 0.0
        %2638 = vmatpush.msra.mxu0 0.0
        %2639 = vmatpush.msra.mxu0 0.0
        %2640 = vmatpush.msra.mxu0 0.0
        %2641 = vmatpush.msra.mxu0 %v2532
        %2642 = vmatpush.msra.mxu0 %v2531
        %2643 = vmatpush.msra.mxu0 %v2530
        %2644 = vmatpush.msra.mxu0 %v2529
        %2645 = vmatmul.f32.gmra.mxu0 %v2534
        %v2646 = vpop.f32.mrf.mxu0
        %v2647 = vadd.f32 0.0, %v2646
        %2648 = vmatmul.f32.gmra.mxu0 %v2537
        %v2649 = vpop.f32.mrf.mxu0
        %v2650 = vadd.f32 0.0, %v2649
        %2651 = vmatmul.f32.gmra.mxu0 %v2540
        %v2652 = vpop.f32.mrf.mxu0
        %v2653 = vadd.f32 0.0, %v2652
        %2654 = vmatmul.f32.gmra.mxu0 %v2543
        %v2655 = vpop.f32.mrf.mxu0
        %v2656 = vadd.f32 0.0, %v2655
        %2657 = vmatmul.f32.gmra.mxu0 %v2546
        %v2658 = vpop.f32.mrf.mxu0
        %v2659 = vadd.f32 0.0, %v2658
        %2660 = vmatmul.f32.gmra.mxu0 %v2549
        %v2661 = vpop.f32.mrf.mxu0
        %v2662 = vadd.f32 0.0, %v2661
        %2663 = vmatmul.f32.gmra.mxu0 %v2552
        %v2664 = vpop.f32.mrf.mxu0
        %v2665 = vadd.f32 0.0, %v2664
        %2666 = vmatmul.f32.gmra.mxu0 %v2555
        %v2667 = vpop.f32.mrf.mxu0
        %v2668 = vadd.f32 0.0, %v2667
        %2669 = vmatmul.f32.gmra.mxu0 %v2558
        %v2670 = vpop.f32.mrf.mxu0
        %v2671 = vadd.f32 0.0, %v2670
        %2672 = vmatmul.f32.gmra.mxu0 %v2561
        %v2673 = vpop.f32.mrf.mxu0
        %v2674 = vadd.f32 0.0, %v2673
        %2675 = vmatmul.f32.gmra.mxu0 %v2564
        %v2676 = vpop.f32.mrf.mxu0
        %v2677 = vadd.f32 0.0, %v2676
        %2678 = vmatmul.f32.gmra.mxu0 %v2567
        %v2679 = vpop.f32.mrf.mxu0
        %v2680 = vadd.f32 0.0, %v2679
        %2681 = vmatmul.f32.gmra.mxu0 %v2570
        %v2682 = vpop.f32.mrf.mxu0
        %v2683 = vadd.f32 0.0, %v2682
        %2684 = vmatmul.f32.gmra.mxu0 %v2573
        %v2685 = vpop.f32.mrf.mxu0
        %v2686 = vadd.f32 0.0, %v2685
        %2687 = vmatmul.f32.gmra.mxu0 %v2576
        %v2688 = vpop.f32.mrf.mxu0
        %v2689 = vadd.f32 0.0, %v2688
        %2690 = vmatmul.f32.gmra.mxu0 %v2579
        %v2691 = vpop.f32.mrf.mxu0
        %v2692 = vadd.f32 0.0, %v2691
        %2693 = vmatmul.f32.gmra.mxu0 %v2582
        %v2694 = vpop.f32.mrf.mxu0
        %v2695 = vadd.f32 0.0, %v2694
        %2696 = vmatmul.f32.gmra.mxu0 %v2585
        %v2697 = vpop.f32.mrf.mxu0
        %v2698 = vadd.f32 0.0, %v2697
        %2699 = vmatmul.f32.gmra.mxu0 %v2588
        %v2700 = vpop.f32.mrf.mxu0
        %v2701 = vadd.f32 0.0, %v2700
        %2702 = vmatmul.f32.gmra.mxu0 %v2591
        %v2703 = vpop.f32.mrf.mxu0
        %v2704 = vadd.f32 0.0, %v2703
        %2705 = vmatmul.f32.gmra.mxu0 %v2594
        %v2706 = vpop.f32.mrf.mxu0
        %v2707 = vadd.f32 0.0, %v2706
        %2708 = vmatmul.f32.gmra.mxu0 %v2597
        %v2709 = vpop.f32.mrf.mxu0
        %v2710 = vadd.f32 0.0, %v2709
        %2711 = vmatmul.f32.gmra.mxu0 %v2600
        %v2712 = vpop.f32.mrf.mxu0
        %v2713 = vadd.f32 0.0, %v2712
        %2714 = vmatmul.f32.gmra.mxu0 %v2603
        %v2715 = vpop.f32.mrf.mxu0
        %v2716 = vadd.f32 0.0, %v2715
        %2717 = vmatmul.f32.gmra.mxu0 %v2606
        %v2718 = vpop.f32.mrf.mxu0
        %v2719 = vadd.f32 0.0, %v2718
        %2720 = vmatmul.f32.gmra.mxu0 %v2609
        %v2721 = vpop.f32.mrf.mxu0
        %v2722 = vadd.f32 0.0, %v2721
        %2723 = vmatmul.f32.gmra.mxu0 %v2612
        %v2724 = vpop.f32.mrf.mxu0
        %v2725 = vadd.f32 0.0, %v2724
        %2726 = vmatmul.f32.gmra.mxu0 %v2615
        %v2727 = vpop.f32.mrf.mxu0
        %v2728 = vadd.f32 0.0, %v2727
        %2729 = vmatmul.f32.gmra.mxu0 %v2618
        %v2730 = vpop.f32.mrf.mxu0
        %v2731 = vadd.f32 0.0, %v2730
        %2732 = vmatmul.f32.gmra.mxu0 %v2621
        %v2733 = vpop.f32.mrf.mxu0
        %v2734 = vadd.f32 0.0, %v2733
        %2735 = vmatmul.f32.gmra.mxu0 %v2624
        %v2736 = vpop.f32.mrf.mxu0
        %v2737 = vadd.f32 0.0, %v2736
        %2738 = vmatmul.f32.gmra.mxu0 %v2627
        %v2739 = vpop.f32.mrf.mxu0
        %v2740 = vadd.f32 0.0, %v2739
        %2741 = vdwg.mxu0
        %v2742 = vadd.f32 %v2464, %v2647
        %v2743 = vadd.f32 %v2465, %v2650
        %v2744 = vadd.f32 %v2466, %v2653
        %v2745 = vadd.f32 %v2467, %v2656
        %v2746 = vadd.f32 %v2468, %v2659
        %v2747 = vadd.f32 %v2469, %v2662
        %v2748 = vadd.f32 %v2470, %v2665
        %v2749 = vadd.f32 %v2471, %v2668
        %v2750 = vadd.f32 %v2472, %v2671
        %v2751 = vadd.f32 %v2473, %v2674
        %v2752 = vadd.f32 %v2474, %v2677
        %v2753 = vadd.f32 %v2475, %v2680
        %v2754 = vadd.f32 %v2476, %v2683
        %v2755 = vadd.f32 %v2477, %v2686
        %v2756 = vadd.f32 %v2478, %v2689
        %v2757 = vadd.f32 %v2479, %v2692
        %v2758 = vadd.f32 %v2480, %v2695
        %v2759 = vadd.f32 %v2481, %v2698
        %v2760 = vadd.f32 %v2482, %v2701
        %v2761 = vadd.f32 %v2483, %v2704
        %v2762 = vadd.f32 %v2484, %v2707
        %v2763 = vadd.f32 %v2485, %v2710
        %v2764 = vadd.f32 %v2486, %v2713
        %v2765 = vadd.f32 %v2487, %v2716
        %v2766 = vadd.f32 %v2488, %v2719
        %v2767 = vadd.f32 %v2489, %v2722
        %v2768 = vadd.f32 %v2490, %v2725
        %v2769 = vadd.f32 %v2491, %v2728
        %v2770 = vadd.f32 %v2492, %v2731
        %v2771 = vadd.f32 %v2493, %v2734
        %v2772 = vadd.f32 %v2494, %v2737
        %v2773 = vadd.f32 %v2495, %v2740
        %v2774 = vld [vmem:[%s2217 + $0x9] sm:$0xff]
        %v2775 = vld [vmem:[%s2217 + $0x11] sm:$0xff]
        %v2776 = vld [vmem:[%s2217 + $0x29] sm:$0xff]
        %v2777 = vld [vmem:[%s2217 + $0x31] sm:$0xff]
        %v2778 = vld [vmem:[%s2217 + $0x49] sm:$0xff]
        %v2779 = vld [vmem:[%s2217 + $0x51] sm:$0xff]
        %v2780 = vld [vmem:[%s2217 + $0x69] sm:$0xff]
        %v2781 = vld [vmem:[%s2217 + $0x71] sm:$0xff]
        %v2782 = vld [vmem:[%s2217 + $0x89] sm:$0xff]
        %v2783 = vld [vmem:[%s2217 + $0x91] sm:$0xff]
        %v2784 = vld [vmem:[%s2217 + $0xa9] sm:$0xff]
        %v2785 = vld [vmem:[%s2217 + $0xb1] sm:$0xff]
        %v2786 = vld [vmem:[%s2217 + $0xc9] sm:$0xff]
        %v2787 = vld [vmem:[%s2217 + $0xd1] sm:$0xff]
        %v2788 = vld [vmem:[%s2217 + $0xe9] sm:$0xff]
        %v2789 = vld [vmem:[%s2217 + $0xf1] sm:$0xff]
        %v2790 = vld [vmem:[%s2217 + $0x109] sm:$0xff]
        %v2791 = vld [vmem:[%s2217 + $0x111] sm:$0xff]
        %v2792 = vld [vmem:[%s2217 + $0x129] sm:$0xff]
        %v2793 = vld [vmem:[%s2217 + $0x131] sm:$0xff]
        %v2794 = vld [vmem:[%s2217 + $0x149] sm:$0xff]
        %v2795 = vld [vmem:[%s2217 + $0x151] sm:$0xff]
        %v2796 = vld [vmem:[%s2217 + $0x169] sm:$0xff]
        %v2797 = vld [vmem:[%s2217 + $0x171] sm:$0xff]
        %v2798 = vld [vmem:[%s2217 + $0x189] sm:$0xff]
        %v2799 = vld [vmem:[%s2217 + $0x191] sm:$0xff]
        %v2800 = vld [vmem:[%s2217 + $0x1a9] sm:$0xff]
        %v2801 = vld [vmem:[%s2217 + $0x1b1] sm:$0xff]
        %v2802 = vld [vmem:[%s2217 + $0x1c9] sm:$0xff]
        %v2803 = vld [vmem:[%s2217 + $0x1d1] sm:$0xff]
        %v2804 = vld [vmem:[%s2217 + $0x1e9] sm:$0xff]
        %v2805 = vld [vmem:[%s2217 + $0x1f1] sm:$0xff]
        %s2806 = scalar_lea.vmem [#allocation8], 256
        %v2807 = vld [vmem:[%s2806] sm:$0xff]
        %v2808 = vld [vmem:[%s2806 + $0x8] sm:$0xff]
        %v2809 = vld [vmem:[%s2806 + $0x10] sm:$0xff]
        %v2810 = vld [vmem:[%s2806 + $0x18] sm:$0xff]
        %v2812 = vsel %vm539, %v2774, 0
        %v2815 = vsel %vm539, %v2775, 0
        %v2818 = vsel %vm539, %v2776, 0
        %v2821 = vsel %vm539, %v2777, 0
        %v2824 = vsel %vm539, %v2778, 0
        %v2827 = vsel %vm539, %v2779, 0
        %v2830 = vsel %vm539, %v2780, 0
        %v2833 = vsel %vm539, %v2781, 0
        %v2836 = vsel %vm539, %v2782, 0
        %v2839 = vsel %vm539, %v2783, 0
        %v2842 = vsel %vm539, %v2784, 0
        %v2845 = vsel %vm539, %v2785, 0
        %v2848 = vsel %vm539, %v2786, 0
        %v2851 = vsel %vm539, %v2787, 0
        %v2854 = vsel %vm539, %v2788, 0
        %v2857 = vsel %vm539, %v2789, 0
        %v2860 = vsel %vm539, %v2790, 0
        %v2863 = vsel %vm539, %v2791, 0
        %v2866 = vsel %vm539, %v2792, 0
        %v2869 = vsel %vm539, %v2793, 0
        %v2872 = vsel %vm539, %v2794, 0
        %v2875 = vsel %vm539, %v2795, 0
        %v2878 = vsel %vm539, %v2796, 0
        %v2881 = vsel %vm539, %v2797, 0
        %v2884 = vsel %vm539, %v2798, 0
        %v2887 = vsel %vm539, %v2799, 0
        %v2890 = vsel %vm539, %v2800, 0
        %v2893 = vsel %vm539, %v2801, 0
        %v2896 = vsel %vm539, %v2802, 0
        %v2899 = vsel %vm539, %v2803, 0
        %v2902 = vsel %vm539, %v2804, 0
        %v2905 = vsel %vm539, %v2805, 0
        %2907 = vmatpush.msra.mxu0 0.0
        %2908 = vmatpush.msra.mxu0 0.0
        %2909 = vmatpush.msra.mxu0 0.0
        %2910 = vmatpush.msra.mxu0 0.0
        %2911 = vmatpush.msra.mxu0 0.0
        %2912 = vmatpush.msra.mxu0 0.0
        %2913 = vmatpush.msra.mxu0 0.0
        %2914 = vmatpush.msra.mxu0 0.0
        %2915 = vmatpush.msra.mxu0 0.0
        %2916 = vmatpush.msra.mxu0 0.0
        %2917 = vmatpush.msra.mxu0 0.0
        %2918 = vmatpush.msra.mxu0 0.0
        %2919 = vmatpush.msra.mxu0 %v2810
        %2920 = vmatpush.msra.mxu0 %v2809
        %2921 = vmatpush.msra.mxu0 %v2808
        %2922 = vmatpush.msra.mxu0 %v2807
        %2923 = vmatmul.f32.gmra.mxu0 %v2812
        %v2924 = vpop.f32.mrf.mxu0
        %v2925 = vadd.f32 0.0, %v2924
        %2926 = vmatmul.f32.gmra.mxu0 %v2815
        %v2927 = vpop.f32.mrf.mxu0
        %v2928 = vadd.f32 0.0, %v2927
        %2929 = vmatmul.f32.gmra.mxu0 %v2818
        %v2930 = vpop.f32.mrf.mxu0
        %v2931 = vadd.f32 0.0, %v2930
        %2932 = vmatmul.f32.gmra.mxu0 %v2821
        %v2933 = vpop.f32.mrf.mxu0
        %v2934 = vadd.f32 0.0, %v2933
        %2935 = vmatmul.f32.gmra.mxu0 %v2824
        %v2936 = vpop.f32.mrf.mxu0
        %v2937 = vadd.f32 0.0, %v2936
        %2938 = vmatmul.f32.gmra.mxu0 %v2827
        %v2939 = vpop.f32.mrf.mxu0
        %v2940 = vadd.f32 0.0, %v2939
        %2941 = vmatmul.f32.gmra.mxu0 %v2830
        %v2942 = vpop.f32.mrf.mxu0
        %v2943 = vadd.f32 0.0, %v2942
        %2944 = vmatmul.f32.gmra.mxu0 %v2833
        %v2945 = vpop.f32.mrf.mxu0
        %v2946 = vadd.f32 0.0, %v2945
        %2947 = vmatmul.f32.gmra.mxu0 %v2836
        %v2948 = vpop.f32.mrf.mxu0
        %v2949 = vadd.f32 0.0, %v2948
        %2950 = vmatmul.f32.gmra.mxu0 %v2839
        %v2951 = vpop.f32.mrf.mxu0
        %v2952 = vadd.f32 0.0, %v2951
        %2953 = vmatmul.f32.gmra.mxu0 %v2842
        %v2954 = vpop.f32.mrf.mxu0
        %v2955 = vadd.f32 0.0, %v2954
        %2956 = vmatmul.f32.gmra.mxu0 %v2845
        %v2957 = vpop.f32.mrf.mxu0
        %v2958 = vadd.f32 0.0, %v2957
        %2959 = vmatmul.f32.gmra.mxu0 %v2848
        %v2960 = vpop.f32.mrf.mxu0
        %v2961 = vadd.f32 0.0, %v2960
        %2962 = vmatmul.f32.gmra.mxu0 %v2851
        %v2963 = vpop.f32.mrf.mxu0
        %v2964 = vadd.f32 0.0, %v2963
        %2965 = vmatmul.f32.gmra.mxu0 %v2854
        %v2966 = vpop.f32.mrf.mxu0
        %v2967 = vadd.f32 0.0, %v2966
        %2968 = vmatmul.f32.gmra.mxu0 %v2857
        %v2969 = vpop.f32.mrf.mxu0
        %v2970 = vadd.f32 0.0, %v2969
        %2971 = vmatmul.f32.gmra.mxu0 %v2860
        %v2972 = vpop.f32.mrf.mxu0
        %v2973 = vadd.f32 0.0, %v2972
        %2974 = vmatmul.f32.gmra.mxu0 %v2863
        %v2975 = vpop.f32.mrf.mxu0
        %v2976 = vadd.f32 0.0, %v2975
        %2977 = vmatmul.f32.gmra.mxu0 %v2866
        %v2978 = vpop.f32.mrf.mxu0
        %v2979 = vadd.f32 0.0, %v2978
        %2980 = vmatmul.f32.gmra.mxu0 %v2869
        %v2981 = vpop.f32.mrf.mxu0
        %v2982 = vadd.f32 0.0, %v2981
        %2983 = vmatmul.f32.gmra.mxu0 %v2872
        %v2984 = vpop.f32.mrf.mxu0
        %v2985 = vadd.f32 0.0, %v2984
        %2986 = vmatmul.f32.gmra.mxu0 %v2875
        %v2987 = vpop.f32.mrf.mxu0
        %v2988 = vadd.f32 0.0, %v2987
        %2989 = vmatmul.f32.gmra.mxu0 %v2878
        %v2990 = vpop.f32.mrf.mxu0
        %v2991 = vadd.f32 0.0, %v2990
        %2992 = vmatmul.f32.gmra.mxu0 %v2881
        %v2993 = vpop.f32.mrf.mxu0
        %v2994 = vadd.f32 0.0, %v2993
        %2995 = vmatmul.f32.gmra.mxu0 %v2884
        %v2996 = vpop.f32.mrf.mxu0
        %v2997 = vadd.f32 0.0, %v2996
        %2998 = vmatmul.f32.gmra.mxu0 %v2887
        %v2999 = vpop.f32.mrf.mxu0
        %v3000 = vadd.f32 0.0, %v2999
        %3001 = vmatmul.f32.gmra.mxu0 %v2890
        %v3002 = vpop.f32.mrf.mxu0
        %v3003 = vadd.f32 0.0, %v3002
        %3004 = vmatmul.f32.gmra.mxu0 %v2893
        %v3005 = vpop.f32.mrf.mxu0
        %v3006 = vadd.f32 0.0, %v3005
        %3007 = vmatmul.f32.gmra.mxu0 %v2896
        %v3008 = vpop.f32.mrf.mxu0
        %v3009 = vadd.f32 0.0, %v3008
        %3010 = vmatmul.f32.gmra.mxu0 %v2899
        %v3011 = vpop.f32.mrf.mxu0
        %v3012 = vadd.f32 0.0, %v3011
        %3013 = vmatmul.f32.gmra.mxu0 %v2902
        %v3014 = vpop.f32.mrf.mxu0
        %v3015 = vadd.f32 0.0, %v3014
        %3016 = vmatmul.f32.gmra.mxu0 %v2905
        %v3017 = vpop.f32.mrf.mxu0
        %v3018 = vadd.f32 0.0, %v3017
        %3019 = vdwg.mxu0
        %v3020 = vadd.f32 %v2742, %v2925
        %v3021 = vadd.f32 %v2743, %v2928
        %v3022 = vadd.f32 %v2744, %v2931
        %v3023 = vadd.f32 %v2745, %v2934
        %v3024 = vadd.f32 %v2746, %v2937
        %v3025 = vadd.f32 %v2747, %v2940
        %v3026 = vadd.f32 %v2748, %v2943
        %v3027 = vadd.f32 %v2749, %v2946
        %v3028 = vadd.f32 %v2750, %v2949
        %v3029 = vadd.f32 %v2751, %v2952
        %v3030 = vadd.f32 %v2752, %v2955
        %v3031 = vadd.f32 %v2753, %v2958
        %v3032 = vadd.f32 %v2754, %v2961
        %v3033 = vadd.f32 %v2755, %v2964
        %v3034 = vadd.f32 %v2756, %v2967
        %v3035 = vadd.f32 %v2757, %v2970
        %v3036 = vadd.f32 %v2758, %v2973
        %v3037 = vadd.f32 %v2759, %v2976
        %v3038 = vadd.f32 %v2760, %v2979
        %v3039 = vadd.f32 %v2761, %v2982
        %v3040 = vadd.f32 %v2762, %v2985
        %v3041 = vadd.f32 %v2763, %v2988
        %v3042 = vadd.f32 %v2764, %v2991
        %v3043 = vadd.f32 %v2765, %v2994
        %v3044 = vadd.f32 %v2766, %v2997
        %v3045 = vadd.f32 %v2767, %v3000
        %v3046 = vadd.f32 %v2768, %v3003
        %v3047 = vadd.f32 %v2769, %v3006
        %v3048 = vadd.f32 %v2770, %v3009
        %v3049 = vadd.f32 %v2771, %v3012
        %v3050 = vadd.f32 %v2772, %v3015
        %v3051 = vadd.f32 %v2773, %v3018
        %v3052 = vld [vmem:[%s4] sm:$0x1]
        %v3054 = vperm.slane %v3052, 0
        %v3056 = vadd.f32 %v3020, %v3054
        %v3057 = vadd.f32 %v3021, %v3054
        %v3058 = vadd.f32 %v3022, %v3054
        %v3059 = vadd.f32 %v3023, %v3054
        %v3060 = vadd.f32 %v3024, %v3054
        %v3061 = vadd.f32 %v3025, %v3054
        %v3062 = vadd.f32 %v3026, %v3054
        %v3063 = vadd.f32 %v3027, %v3054
        %v3064 = vadd.f32 %v3028, %v3054
        %v3065 = vadd.f32 %v3029, %v3054
        %v3066 = vadd.f32 %v3030, %v3054
        %v3067 = vadd.f32 %v3031, %v3054
        %v3068 = vadd.f32 %v3032, %v3054
        %v3069 = vadd.f32 %v3033, %v3054
        %v3070 = vadd.f32 %v3034, %v3054
        %v3071 = vadd.f32 %v3035, %v3054
        %v3072 = vadd.f32 %v3036, %v3054
        %v3073 = vadd.f32 %v3037, %v3054
        %v3074 = vadd.f32 %v3038, %v3054
        %v3075 = vadd.f32 %v3039, %v3054
        %v3076 = vadd.f32 %v3040, %v3054
        %v3077 = vadd.f32 %v3041, %v3054
        %v3078 = vadd.f32 %v3042, %v3054
        %v3079 = vadd.f32 %v3043, %v3054
        %v3080 = vadd.f32 %v3044, %v3054
        %v3081 = vadd.f32 %v3045, %v3054
        %v3082 = vadd.f32 %v3046, %v3054
        %v3083 = vadd.f32 %v3047, %v3054
        %v3084 = vadd.f32 %v3048, %v3054
        %v3085 = vadd.f32 %v3049, %v3054
        %v3086 = vadd.f32 %v3050, %v3054
        %v3087 = vadd.f32 %v3051, %v3054
        %v3088 = vmax.f32 %v3056, 0.0
        %v3089 = vmax.f32 %v3057, 0.0
        %v3090 = vmax.f32 %v3058, 0.0
        %v3091 = vmax.f32 %v3059, 0.0
        %v3092 = vmax.f32 %v3060, 0.0
        %v3093 = vmax.f32 %v3061, 0.0
        %v3094 = vmax.f32 %v3062, 0.0
        %v3095 = vmax.f32 %v3063, 0.0
        %v3096 = vmax.f32 %v3064, 0.0
        %v3097 = vmax.f32 %v3065, 0.0
        %v3098 = vmax.f32 %v3066, 0.0
        %v3099 = vmax.f32 %v3067, 0.0
        %v3100 = vmax.f32 %v3068, 0.0
        %v3101 = vmax.f32 %v3069, 0.0
        %v3102 = vmax.f32 %v3070, 0.0
        %v3103 = vmax.f32 %v3071, 0.0
        %v3104 = vmax.f32 %v3072, 0.0
        %v3105 = vmax.f32 %v3073, 0.0
        %v3106 = vmax.f32 %v3074, 0.0
        %v3107 = vmax.f32 %v3075, 0.0
        %v3108 = vmax.f32 %v3076, 0.0
        %v3109 = vmax.f32 %v3077, 0.0
        %v3110 = vmax.f32 %v3078, 0.0
        %v3111 = vmax.f32 %v3079, 0.0
        %v3112 = vmax.f32 %v3080, 0.0
        %v3113 = vmax.f32 %v3081, 0.0
        %v3114 = vmax.f32 %v3082, 0.0
        %v3115 = vmax.f32 %v3083, 0.0
        %v3116 = vmax.f32 %v3084, 0.0
        %v3117 = vmax.f32 %v3085, 0.0
        %v3118 = vmax.f32 %v3086, 0.0
        %v3119 = vmax.f32 %v3087, 0.0
        %v3120 = vld [vmem:[#allocation9] sm:$0xff]
        %v3121 = vld [vmem:[#allocation9 + $0x8] sm:$0xff]
        %v3122 = vld [vmem:[#allocation9 + $0x10] sm:$0xff]
        %v3123 = vld [vmem:[#allocation9 + $0x18] sm:$0xff]
        %v3124 = vld [vmem:[%s6] sm:$0x1]
        %v3126 = vperm.slane %v3124, 0
        %v3129 = vsel %vm539, %v3088, 0
        %v3132 = vsel %vm539, %v3089, 0
        %v3135 = vsel %vm539, %v3090, 0
        %v3138 = vsel %vm539, %v3091, 0
        %v3141 = vsel %vm539, %v3092, 0
        %v3144 = vsel %vm539, %v3093, 0
        %v3147 = vsel %vm539, %v3094, 0
        %v3150 = vsel %vm539, %v3095, 0
        %v3153 = vsel %vm539, %v3096, 0
        %v3156 = vsel %vm539, %v3097, 0
        %v3159 = vsel %vm539, %v3098, 0
        %v3162 = vsel %vm539, %v3099, 0
        %v3165 = vsel %vm539, %v3100, 0
        %v3168 = vsel %vm539, %v3101, 0
        %v3171 = vsel %vm539, %v3102, 0
        %v3174 = vsel %vm539, %v3103, 0
        %v3177 = vsel %vm539, %v3104, 0
        %v3180 = vsel %vm539, %v3105, 0
        %v3183 = vsel %vm539, %v3106, 0
        %v3186 = vsel %vm539, %v3107, 0
        %v3189 = vsel %vm539, %v3108, 0
        %v3192 = vsel %vm539, %v3109, 0
        %v3195 = vsel %vm539, %v3110, 0
        %v3198 = vsel %vm539, %v3111, 0
        %v3201 = vsel %vm539, %v3112, 0
        %v3204 = vsel %vm539, %v3113, 0
        %v3207 = vsel %vm539, %v3114, 0
        %v3210 = vsel %vm539, %v3115, 0
        %v3213 = vsel %vm539, %v3116, 0
        %v3216 = vsel %vm539, %v3117, 0
        %v3219 = vsel %vm539, %v3118, 0
        %v3222 = vsel %vm539, %v3119, 0
        %3224 = vmatpush.msra.mxu0 0.0
        %3225 = vmatpush.msra.mxu0 0.0
        %3226 = vmatpush.msra.mxu0 0.0
        %3227 = vmatpush.msra.mxu0 0.0
        %3228 = vmatpush.msra.mxu0 0.0
        %3229 = vmatpush.msra.mxu0 0.0
        %3230 = vmatpush.msra.mxu0 0.0
        %3231 = vmatpush.msra.mxu0 0.0
        %3232 = vmatpush.msra.mxu0 0.0
        %3233 = vmatpush.msra.mxu0 0.0
        %3234 = vmatpush.msra.mxu0 0.0
        %3235 = vmatpush.msra.mxu0 0.0
        %3236 = vmatpush.msra.mxu0 %v3123
        %3237 = vmatpush.msra.mxu0 %v3122
        %3238 = vmatpush.msra.mxu0 %v3121
        %3239 = vmatpush.msra.mxu0 %v3120
        %3240 = vmatmul.f32.gmra.mxu0 %v3129
        %v3241 = vpop.f32.mrf.mxu0
        %v3242 = vadd.f32 %v3126, %v3241
        %3243 = vmatmul.f32.gmra.mxu0 %v3132
        %v3244 = vpop.f32.mrf.mxu0
        %v3245 = vadd.f32 %v3126, %v3244
        %3246 = vmatmul.f32.gmra.mxu0 %v3135
        %v3247 = vpop.f32.mrf.mxu0
        %v3248 = vadd.f32 %v3126, %v3247
        %3249 = vmatmul.f32.gmra.mxu0 %v3138
        %v3250 = vpop.f32.mrf.mxu0
        %v3251 = vadd.f32 %v3126, %v3250
        %3252 = vmatmul.f32.gmra.mxu0 %v3141
        %v3253 = vpop.f32.mrf.mxu0
        %v3254 = vadd.f32 %v3126, %v3253
        %3255 = vmatmul.f32.gmra.mxu0 %v3144
        %v3256 = vpop.f32.mrf.mxu0
        %v3257 = vadd.f32 %v3126, %v3256
        %3258 = vmatmul.f32.gmra.mxu0 %v3147
        %v3259 = vpop.f32.mrf.mxu0
        %v3260 = vadd.f32 %v3126, %v3259
        %3261 = vmatmul.f32.gmra.mxu0 %v3150
        %v3262 = vpop.f32.mrf.mxu0
        %v3263 = vadd.f32 %v3126, %v3262
        %3264 = vmatmul.f32.gmra.mxu0 %v3153
        %v3265 = vpop.f32.mrf.mxu0
        %v3266 = vadd.f32 %v3126, %v3265
        %3267 = vmatmul.f32.gmra.mxu0 %v3156
        %v3268 = vpop.f32.mrf.mxu0
        %v3269 = vadd.f32 %v3126, %v3268
        %3270 = vmatmul.f32.gmra.mxu0 %v3159
        %v3271 = vpop.f32.mrf.mxu0
        %v3272 = vadd.f32 %v3126, %v3271
        %3273 = vmatmul.f32.gmra.mxu0 %v3162
        %v3274 = vpop.f32.mrf.mxu0
        %v3275 = vadd.f32 %v3126, %v3274
        %3276 = vmatmul.f32.gmra.mxu0 %v3165
        %v3277 = vpop.f32.mrf.mxu0
        %v3278 = vadd.f32 %v3126, %v3277
        %3279 = vmatmul.f32.gmra.mxu0 %v3168
        %v3280 = vpop.f32.mrf.mxu0
        %v3281 = vadd.f32 %v3126, %v3280
        %3282 = vmatmul.f32.gmra.mxu0 %v3171
        %v3283 = vpop.f32.mrf.mxu0
        %v3284 = vadd.f32 %v3126, %v3283
        %3285 = vmatmul.f32.gmra.mxu0 %v3174
        %v3286 = vpop.f32.mrf.mxu0
        %v3287 = vadd.f32 %v3126, %v3286
        %3288 = vmatmul.f32.gmra.mxu0 %v3177
        %v3289 = vpop.f32.mrf.mxu0
        %v3290 = vadd.f32 %v3126, %v3289
        %3291 = vmatmul.f32.gmra.mxu0 %v3180
        %v3292 = vpop.f32.mrf.mxu0
        %v3293 = vadd.f32 %v3126, %v3292
        %3294 = vmatmul.f32.gmra.mxu0 %v3183
        %v3295 = vpop.f32.mrf.mxu0
        %v3296 = vadd.f32 %v3126, %v3295
        %3297 = vmatmul.f32.gmra.mxu0 %v3186
        %v3298 = vpop.f32.mrf.mxu0
        %v3299 = vadd.f32 %v3126, %v3298
        %3300 = vmatmul.f32.gmra.mxu0 %v3189
        %v3301 = vpop.f32.mrf.mxu0
        %v3302 = vadd.f32 %v3126, %v3301
        %3303 = vmatmul.f32.gmra.mxu0 %v3192
        %v3304 = vpop.f32.mrf.mxu0
        %v3305 = vadd.f32 %v3126, %v3304
        %3306 = vmatmul.f32.gmra.mxu0 %v3195
        %v3307 = vpop.f32.mrf.mxu0
        %v3308 = vadd.f32 %v3126, %v3307
        %3309 = vmatmul.f32.gmra.mxu0 %v3198
        %v3310 = vpop.f32.mrf.mxu0
        %v3311 = vadd.f32 %v3126, %v3310
        %3312 = vmatmul.f32.gmra.mxu0 %v3201
        %v3313 = vpop.f32.mrf.mxu0
        %v3314 = vadd.f32 %v3126, %v3313
        %3315 = vmatmul.f32.gmra.mxu0 %v3204
        %v3316 = vpop.f32.mrf.mxu0
        %v3317 = vadd.f32 %v3126, %v3316
        %3318 = vmatmul.f32.gmra.mxu0 %v3207
        %v3319 = vpop.f32.mrf.mxu0
        %v3320 = vadd.f32 %v3126, %v3319
        %3321 = vmatmul.f32.gmra.mxu0 %v3210
        %v3322 = vpop.f32.mrf.mxu0
        %v3323 = vadd.f32 %v3126, %v3322
        %3324 = vmatmul.f32.gmra.mxu0 %v3213
        %v3325 = vpop.f32.mrf.mxu0
        %v3326 = vadd.f32 %v3126, %v3325
        %3327 = vmatmul.f32.gmra.mxu0 %v3216
        %v3328 = vpop.f32.mrf.mxu0
        %v3329 = vadd.f32 %v3126, %v3328
        %3330 = vmatmul.f32.gmra.mxu0 %v3219
        %v3331 = vpop.f32.mrf.mxu0
        %v3332 = vadd.f32 %v3126, %v3331
        %3333 = vmatmul.f32.gmra.mxu0 %v3222
        %v3334 = vpop.f32.mrf.mxu0
        %v3335 = vadd.f32 %v3126, %v3334
        %3336 = vdwg.mxu0
        %v3337 = vadd.f32 %v3242, %v342
        %v3338 = vadd.f32 %v3245, %v343
        %v3339 = vadd.f32 %v3248, %v344
        %v3340 = vadd.f32 %v3251, %v345
        %v3341 = vadd.f32 %v3254, %v346
        %v3342 = vadd.f32 %v3257, %v347
        %v3343 = vadd.f32 %v3260, %v348
        %v3344 = vadd.f32 %v3263, %v349
        %v3345 = vadd.f32 %v3266, %v350
        %v3346 = vadd.f32 %v3269, %v351
        %v3347 = vadd.f32 %v3272, %v352
        %v3348 = vadd.f32 %v3275, %v353
        %v3349 = vadd.f32 %v3278, %v354
        %v3350 = vadd.f32 %v3281, %v355
        %v3351 = vadd.f32 %v3284, %v356
        %v3352 = vadd.f32 %v3287, %v357
        %v3353 = vadd.f32 %v3290, %v358
        %v3354 = vadd.f32 %v3293, %v359
        %v3355 = vadd.f32 %v3296, %v360
        %v3356 = vadd.f32 %v3299, %v361
        %v3357 = vadd.f32 %v3302, %v362
        %v3358 = vadd.f32 %v3305, %v363
        %v3359 = vadd.f32 %v3308, %v364
        %v3360 = vadd.f32 %v3311, %v365
        %v3361 = vadd.f32 %v3314, %v366
        %v3362 = vadd.f32 %v3317, %v367
        %v3363 = vadd.f32 %v3320, %v368
        %v3364 = vadd.f32 %v3323, %v369
        %v3365 = vadd.f32 %v3326, %v370
        %v3366 = vadd.f32 %v3329, %v371
        %v3367 = vadd.f32 %v3332, %v372
        %v3368 = vadd.f32 %v3335, %v373
        %v3369 = vmax.f32 %v3337, 0.0
        %v3370 = vmax.f32 %v3338, 0.0
        %v3371 = vmax.f32 %v3339, 0.0
        %v3372 = vmax.f32 %v3340, 0.0
        %v3373 = vmax.f32 %v3341, 0.0
        %v3374 = vmax.f32 %v3342, 0.0
        %v3375 = vmax.f32 %v3343, 0.0
        %v3376 = vmax.f32 %v3344, 0.0
        %v3377 = vmax.f32 %v3345, 0.0
        %v3378 = vmax.f32 %v3346, 0.0
        %v3379 = vmax.f32 %v3347, 0.0
        %v3380 = vmax.f32 %v3348, 0.0
        %v3381 = vmax.f32 %v3349, 0.0
        %v3382 = vmax.f32 %v3350, 0.0
        %v3383 = vmax.f32 %v3351, 0.0
        %v3384 = vmax.f32 %v3352, 0.0
        %v3385 = vmax.f32 %v3353, 0.0
        %v3386 = vmax.f32 %v3354, 0.0
        %v3387 = vmax.f32 %v3355, 0.0
        %v3388 = vmax.f32 %v3356, 0.0
        %v3389 = vmax.f32 %v3357, 0.0
        %v3390 = vmax.f32 %v3358, 0.0
        %v3391 = vmax.f32 %v3359, 0.0
        %v3392 = vmax.f32 %v3360, 0.0
        %v3393 = vmax.f32 %v3361, 0.0
        %v3394 = vmax.f32 %v3362, 0.0
        %v3395 = vmax.f32 %v3363, 0.0
        %v3396 = vmax.f32 %v3364, 0.0
        %v3397 = vmax.f32 %v3365, 0.0
        %v3398 = vmax.f32 %v3366, 0.0
        %v3399 = vmax.f32 %v3367, 0.0
        %v3400 = vmax.f32 %v3368, 0.0
        %3401 = vst [vmem:[%s336] sm:$0xff] %v3369
        %3402 = vst [vmem:[%s336 + $0x8] sm:$0xff] %v3370
        %3403 = vst [vmem:[%s336 + $0x10] sm:$0xff] %v3371
        %3404 = vst [vmem:[%s336 + $0x18] sm:$0xff] %v3372
        %3405 = vst [vmem:[%s336 + $0x20] sm:$0xff] %v3373
        %3406 = vst [vmem:[%s336 + $0x28] sm:$0xff] %v3374
        %3407 = vst [vmem:[%s336 + $0x30] sm:$0xff] %v3375
        %3408 = vst [vmem:[%s336 + $0x38] sm:$0xff] %v3376
        %3409 = vst [vmem:[%s336 + $0x40] sm:$0xff] %v3377
        %3410 = vst [vmem:[%s336 + $0x48] sm:$0xff] %v3378
        %3411 = vst [vmem:[%s336 + $0x50] sm:$0xff] %v3379
        %3412 = vst [vmem:[%s336 + $0x58] sm:$0xff] %v3380
        %3413 = vst [vmem:[%s336 + $0x60] sm:$0xff] %v3381
        %3414 = vst [vmem:[%s336 + $0x68] sm:$0xff] %v3382
        %3415 = vst [vmem:[%s336 + $0x70] sm:$0xff] %v3383
        %3416 = vst [vmem:[%s336 + $0x78] sm:$0xff] %v3384
        %3417 = vst [vmem:[%s336 + $0x80] sm:$0xff] %v3385
        %3418 = vst [vmem:[%s336 + $0x88] sm:$0xff] %v3386
        %3419 = vst [vmem:[%s336 + $0x90] sm:$0xff] %v3387
        %3420 = vst [vmem:[%s336 + $0x98] sm:$0xff] %v3388
        %3421 = vst [vmem:[%s336 + $0xa0] sm:$0xff] %v3389
        %3422 = vst [vmem:[%s336 + $0xa8] sm:$0xff] %v3390
        %3423 = vst [vmem:[%s336 + $0xb0] sm:$0xff] %v3391
        %3424 = vst [vmem:[%s336 + $0xb8] sm:$0xff] %v3392
        %3425 = vst [vmem:[%s336 + $0xc0] sm:$0xff] %v3393
        %3426 = vst [vmem:[%s336 + $0xc8] sm:$0xff] %v3394
        %3427 = vst [vmem:[%s336 + $0xd0] sm:$0xff] %v3395
        %3428 = vst [vmem:[%s336 + $0xd8] sm:$0xff] %v3396
        %3429 = vst [vmem:[%s336 + $0xe0] sm:$0xff] %v3397
        %3430 = vst [vmem:[%s336 + $0xe8] sm:$0xff] %v3398
        %3431 = vst [vmem:[%s336 + $0xf0] sm:$0xff] %v3399
        %3432 = vst [vmem:[%s336 + $0xf8] sm:$0xff] %v3400
        %s3433 = sand.u32 %s184, 1
        %s3434 = scalar_lea.sflag [#allocation5], %s3433
        %s3435 = sand.u32 %s184, 1
        %s3436 = smul.addr %s3435, 256
        %s3437 = scalar_lea.vmem [#allocation11], %s3436
        // Predicated region
        $region65: #{fwd.3} parent=47 // pred_check
          %p3438 = pneg %p194
        $region66: #{fwd.3} parent=47 // pred_check_branch
          %3440 = sbr.rel (%p3438) target = $region68
        $region67: #{fwd.3} parent=47 // pred_region
          %3442 = vsyncadd %s3434, 0
          %s3443 = smul.addr %s24, 32
          %s3444 = smul.addr %s3443, 8
          %s3445 = scalar_lea.hbm %s7, %s3444
          %s3446 = sshll.u32 %s3437, 4
          %s3447 = int_to_ptr.vmem [resolvable:$true] %s3446
          %s3448 = sshll.u32 %s3445, 4
          %s3449 = int_to_ptr.hbm [resolvable:$true] %s3448
          %3454 = dma.vmem_to_hbm [thread:$0]  %s3447, 4096, %s3449, %s3434, 128, 128, 8
        $region68: #{fwd.3} parent=47 // pred_fallthru
          _
      $region48: #{fwd.3} parent=5 // pred_fallthru
        _
      %p3455 = scmp.le.s32.totalorder 2, %s19
      // Predicated region
      $region69: #{fwd.3} parent=5 // pred_check
        %p3456 = pneg %p3455
      $region70: #{fwd.3} parent=5 // pred_check_branch
        %3458 = sbr.rel (%p3456) target = $region72
      $region71: #{fwd.3} parent=5 // pred_region
        %s3459 = ssub.s32 %s19, 2
        // Predicated region
        $region73: #{fwd.3} parent=71 // pred_check
          %p3460 = pneg %p200
        $region74: #{fwd.3} parent=71 // pred_check_branch
          %3462 = sbr.rel (%p3460) target = $region76
        $region75: #{fwd.3} parent=71 // pred_region
          %s3463 = sand.u32 %s185, 1
          %s3464 = scalar_lea.sflag [#allocation5], %s3463
          %s3465 = sand.u32 %s185, 1
          %s3466 = smul.addr %s3465, 256
          %s3467 = scalar_lea.vmem [#allocation11], %s3466
          %3469 = dma.done %s3464, 4096
        $region76: #{fwd.3} parent=71 // pred_fallthru
          _
      $region72: #{fwd.3} parent=5 // pred_fallthru
        _
    $region6: #{fwd.3} parent=1 // loop_footer
      %s23 = sadd.s32 1, %s19
    $region7: #{fwd.3} parent=1 // loop_footer_branch
      %18 = sbr.rel target = $region3
    $region8: #{fwd.3} parent=1 // loop_exit
      _
    %3470 = vsyncpa [#allocation4], 1
    %s3471 = scalar_lea.sflag [#allocation4], 1
    %3472 = vsyncpa %s3471, 1
    %3473 = vsyncpa [#allocation7], 1
    %3474 = vsyncpa [#allocation10], 1
    %3475 = vsyncpa [#allocation5], 1
    %s3476 = scalar_lea.sflag [#allocation5], 1
    %3477 = vsyncpa %s3476, 1

</llo_original>
